<compile_context>
chip_gen: v7x
topology: tpu7x:2x2x1
jax: 0.10.0
libtpu: 0.0.40
codegen_flags: <defaults>
</compile_context>

<pallas_src>
import functools

import jax
import jax.numpy as jnp
import numpy as np
from jax.experimental import pallas as pl
from jax.experimental.pallas import tpu as pltpu


# --------------------------------- kernel ---------------------------------
def _bottleneck_kernel(x_ref, halo_ref, w1_ref, s1_ref, b1_ref,
                       w2_ref, s2_ref, b2_ref, w3_ref, s3_ref, b3_ref,
                       out_ref, scr_ref, *, dilation: int, img_h: int,
                       pad_tail: int):
    """One (batch, row-tile) step of the bottleneck forward.

    x_ref    : (1, tile_h, W, C) bf16   main rows of this tile
    halo_ref : (1, 1, 2d, W, C)  bf16   halo rows (d above, d below, clamped)
    w1_ref   : (C, P)            bf16   conv1 1x1
    w2_ref   : (3, 3, P, P)      bf16   conv2 3x3 (HWIO)
    w3_ref   : (P, C)            bf16   conv3 1x1
    s*/b*    : (1, chan)         f32    folded BN scale / bias
    out_ref  : (1, tile_h, W, C) bf16
    scr_ref  : (tile_h+2d, W+2d, P) bf16 persistent VMEM scratch
    """
    d = dilation
    _, tile_h, W, C = x_ref.shape
    P = w1_ref.shape[1]
    win_h = tile_h + 2 * d
    M = tile_h * W

    i = pl.program_id(1)
    base = i * tile_h

    # Zero the 2*d pad columns every step (tiny; megacore-safe).
    zcol = jnp.zeros((win_h, d, P), jnp.bfloat16)
    scr_ref[:, 0:d, :] = zcol
    scr_ref[:, d + W:, :] = zcol

    # ---- conv1 (1x1) + BN1 + ReLU on the tile's main rows -> scratch ------
    xm = x_ref[0]                                      # (tile_h, W, C) bf16
    h1 = jnp.dot(xm.reshape(M, C), w1_ref[...],
                 preferred_element_type=jnp.float32)
    h1 = jnp.maximum(h1 * s1_ref[...] + b1_ref[...], 0.0)
    scr_ref[d:d + tile_h, d:d + W, :] = (
        h1.reshape(tile_h, W, P).astype(jnp.bfloat16))

    # ---- conv1 on the 2d halo rows; rows outside the image -> 0 -----------
    xh = halo_ref[0, 0]                                # (2d, W, C) bf16
    hh = jnp.dot(xh.reshape(2 * d * W, C), w1_ref[...],
                 preferred_element_type=jnp.float32)
    hh = jnp.maximum(hh * s1_ref[...] + b1_ref[...], 0.0).reshape(2 * d, W, P)
    r = jax.lax.broadcasted_iota(jnp.int32, (2 * d, 1, 1), 0)
    g = jnp.where(r < d, base - d + r, base + tile_h + (r - d))
    hh = jnp.where((g >= 0) & (g < img_h), hh, 0.0).astype(jnp.bfloat16)
    scr_ref[0:d, d:d + W, :] = hh[:d]
    scr_ref[d + tile_h:, d:d + W, :] = hh[d:]

    # Rows added to round H up to a tile_h multiple must also be zero.
    if pad_tail:
        @pl.when(i == pl.num_programs(1) - 1)
        def _():
            scr_ref[d + tile_h - pad_tail:d + tile_h, d:d + W, :] = (
                jnp.zeros((pad_tail, W, P), jnp.bfloat16))

    # ---- conv2 (3x3, dilated): 9 accumulating MXU taps off the scratch ----
    acc = None
    for ky in range(3):
        for kx in range(3):
            tap = scr_ref[ky * d:ky * d + tile_h, kx * d:kx * d + W, :]
            part = jnp.dot(tap.reshape(M, P), w2_ref[ky, kx],
                           preferred_element_type=jnp.float32)
            acc = part if acc is None else acc + part
    h2 = jnp.maximum(acc * s2_ref[...] + b2_ref[...], 0.0).astype(jnp.bfloat16)

    # ---- conv3 (1x1) + BN3 + identity residual + ReLU ----------------------
    h3 = jnp.dot(h2, w3_ref[...], preferred_element_type=jnp.float32)
    h3 = h3 * s3_ref[...] + b3_ref[...]
    res = xm.reshape(M, C).astype(jnp.float32)
    out = jnp.maximum(h3 + res, 0.0)
    out_ref[0] = out.reshape(tile_h, W, C).astype(out_ref.dtype)


# --------------------------------- wrapper ---------------------------------
def bottleneck_forward(x_nhwc, params, *, dilation: int = 1, tile_h=None):
    """x_nhwc: (N, H, W, C) activations. params: (w1, w2_hwio, w3, s1..b3)."""
    (w1, w2, w3, s1, b1, s2, b2, s3, b3) = params
    N, H, W, C = x_nhwc.shape
    P = w1.shape[1]
    if C != 4 * P:
        raise ValueError("identity residual requires inplanes == planes * 4")
    # TODO(synk): stride > 1 and the optional `downsample` branch are not implemented.
    d = dilation

    if tile_h is None:  # target M = tile_h*W >= 512, multiple of 8, <= padded H
        tile_h = max(8, ((-(-512 // W)) + 7) // 8 * 8)
        tile_h = min(tile_h, max(8, ((H + 7) // 8) * 8), 128)
    n_tiles = pl.cdiv(H, tile_h)
    Hp = n_tiles * tile_h
    win_h = tile_h + 2 * d

    xb = x_nhwc.astype(jnp.bfloat16)
    # Main rows: the activation itself (padded only when H % tile_h != 0) —
    # no extra full-size HBM copies in the wrapper.
    x_main = xb if Hp == H else jnp.pad(
        xb, ((0, 0), (0, Hp - H), (0, 0), (0, 0)))
    # Halo rows: d rows above / below each tile (small gather; out-of-image
    # rows are clamped here and zeroed after conv1 inside the kernel).
    base = np.arange(n_tiles) * tile_h
    halo_idx = np.clip(
        np.concatenate([base[:, None] - d + np.arange(d)[None, :],
                        base[:, None] + tile_h + np.arange(d)[None, :]],
                       axis=1), 0, H - 1)                       # (n_tiles, 2d)
    x_halo = xb[:, halo_idx]                                    # (N, n_tiles, 2d, W, C)

    w1b = w1.astype(jnp.bfloat16)
    w2b = w2.astype(jnp.bfloat16)            # (3, 3, P, P) HWIO
    w3b = w3.astype(jnp.bfloat16)

    grid = (N, n_tiles)

    def _full(arr):
        r = arr.ndim
        return pl.BlockSpec(arr.shape, lambda n, i, r=r: (0,) * r)

    in_specs = [
        pl.BlockSpec((1, tile_h, W, C), lambda n, i: (n, i, 0, 0)),
        pl.BlockSpec((1, 1, 2 * d, W, C), lambda n, i: (n, i, 0, 0, 0)),
        _full(w1b), _full(s1), _full(b1),
        _full(w2b), _full(s2), _full(b2),
        _full(w3b), _full(s3), _full(b3),
    ]
    out_specs = pl.BlockSpec((1, tile_h, W, C), lambda n, i: (n, i, 0, 0))
    out_shape = jax.ShapeDtypeStruct((N, Hp, W, C), jnp.bfloat16)  # bf16 output

    # --- VMEM budget, capped against this generation's physical VMEM -------
    M = tile_h * W
    blk = 2 * (2 * tile_h * W * C * 2 + 2 * d * W * C * 2)   # dbl-buffered in/out blocks
    wts = 2 * ((C * P + 9 * P * P + P * C) * 2 + (4 * P + 2 * C) * 4)
    scr = win_h * (W + 2 * d) * P * 2
    vals = M * (10 * P + 10 * C) + 2 * d * W * P * 4
    need = int(1.5 * (blk + wts + scr + vals)) + (8 << 20)
    try:
        cap = int(getattr(pltpu.get_tpu_info(), "vmem_capacity_bytes", 64 << 20))
    except Exception:
        cap = 64 << 20
    vmem_limit = min(max(need, 32 << 20), int(0.85 * cap))

    flops = 2 * N * Hp * W * (C * P + 9 * P * P + P * C)
    bytes_accessed = int(x_main.size * 2 + x_halo.size * 2
                         + N * Hp * W * C * 2
                         + (C * P + 9 * P * P + P * C) * 2 + (4 * P + 2 * C) * 4)

    kernel = functools.partial(_bottleneck_kernel, dilation=d, img_h=H,
                               pad_tail=Hp - H)
    out = pl.pallas_call(
        kernel,
        grid=grid,
        in_specs=in_specs,
        out_specs=out_specs,
        out_shape=out_shape,
        scratch_shapes=[pltpu.VMEM((win_h, W + 2 * d, P), jnp.bfloat16)],
        compiler_params=pltpu.CompilerParams(
            dimension_semantics=("parallel", "parallel"),
            vmem_limit_bytes=vmem_limit),
        cost_estimate=pl.CostEstimate(flops=flops, transcendentals=0,
                                      bytes_accessed=bytes_accessed),
    )(x_main, x_halo, w1b, s1, b1, w2b, s2, b2, w3b, s3, b3)
    return out[:, :H]


# ------------------------- parameter construction -------------------------
def _fold_bn(gamma, beta, mean, var, eps=1e-5):
    scale = gamma / jnp.sqrt(var + eps)
    bias = beta - mean * scale
    return (scale.reshape(1, -1).astype(jnp.float32),
            bias.reshape(1, -1).astype(jnp.float32))


def make_params(key, inplanes, planes):
    """Deterministic synthetic weights matching Bottleneck.__init__ shapes."""
    k1, k2, k3 = jax.random.split(key, 3)
    cexp = planes * 4  # expansion = 4
    w1 = (jax.random.normal(k1, (inplanes, planes), jnp.float32)
          / np.sqrt(inplanes)).astype(jnp.bfloat16)              # conv1 1x1 -> (Cin, P)
    w2 = (jax.random.normal(k2, (3, 3, planes, planes), jnp.float32)
          / np.sqrt(9 * planes)).astype(jnp.bfloat16)            # conv2 3x3 HWIO
    w3 = (jax.random.normal(k3, (planes, cexp), jnp.float32)
          / np.sqrt(planes)).astype(jnp.bfloat16)                # conv3 1x1 -> (P, Cout)

    def bn(c, off):
        g = 1.0 + 0.05 * jnp.arange(c, dtype=jnp.float32)
        b = 0.02 * jnp.arange(c, dtype=jnp.float32) - off
        m = 0.01 * jnp.arange(c, dtype=jnp.float32)
        v = 1.0 + 0.03 * jnp.arange(c, dtype=jnp.float32)
        return _fold_bn(g, b, m, v)

    s1, b1 = bn(planes, 0.0)
    s2, b2 = bn(planes, 0.1)
    s3, b3 = bn(cexp, 0.2)
    return (w1, w2, w3, s1, b1, s2, b2, s3, b3)


# ------------------------- pure-JAX reference -----------------------------
def reference_forward(x_nhwc, params, *, dilation: int = 1):
    (w1, w2, w3, s1, b1, s2, b2, s3, b3) = params
    dn = ("NHWC", "HWIO", "NHWC")
    d = dilation
    h = jax.lax.conv_general_dilated(
        x_nhwc, w1.reshape(1, 1, *w1.shape), (1, 1), "VALID",
        dimension_numbers=dn, preferred_element_type=jnp.float32)
    h = jnp.maximum(h * s1 + b1, 0.0).astype(jnp.bfloat16)
    h = jax.lax.conv_general_dilated(
        h, w2, (1, 1), [(d, d), (d, d)], rhs_dilation=(d, d),
        dimension_numbers=dn, preferred_element_type=jnp.float32)
    h = jnp.maximum(h * s2 + b2, 0.0).astype(jnp.bfloat16)
    h = jax.lax.conv_general_dilated(
        h, w3.reshape(1, 1, *w3.shape), (1, 1), "VALID",
        dimension_numbers=dn, preferred_element_type=jnp.float32)
    h = h * s3 + b3
    return jnp.maximum(h + x_nhwc.astype(jnp.float32), 0.0)


if __name__ == "__main__":
    # planes=32 -> inplanes = planes*4 = 128 (identity residual, lane-dense C),
    # batch=2, spatial 16x16.  PyTorch-style input is NCHW (2, 128, 16, 16).
    N, planes, H, W = 2, 32, 16, 16
    inplanes = planes * 4

    key = jax.random.PRNGKey(0)
    kx, kp = jax.random.split(key)
    x_nchw = jax.random.normal(kx, (N, inplanes, H, W), jnp.float32)
    x_nhwc = jnp.transpose(x_nchw, (0, 2, 3, 1)).astype(jnp.bfloat16)

    params = make_params(kp, inplanes, planes)

    # PSPNet uses dilated bottlenecks -> exercise both d=1 and d=2.
    for dilation in (1, 2):
        out = jax.block_until_ready(
            bottleneck_forward(x_nhwc, params, dilation=dilation))
        ref = jax.block_until_ready(
            reference_forward(x_nhwc, params, dilation=dilation))
        np.testing.assert_allclose(np.asarray(out, np.float32),
                                   np.asarray(ref, np.float32),
                                   rtol=2e-2, atol=2e-2)
    print("KERNEL_OK")
</pallas_src>

<mosaic_0001>
module attributes {stable_mosaic.version = 11 : i64} {
  func.func @_bottleneck_kernel(%arg0: i32, %arg1: i32, %arg2: memref<1x16x16x128xbf16, #tpu.memory_space<vmem>>, %arg3: memref<1x1x2x16x128xbf16, #tpu.memory_space<vmem>>, %arg4: memref<128x32xbf16, #tpu.memory_space<vmem>>, %arg5: memref<1x32xf32, #tpu.memory_space<vmem>>, %arg6: memref<1x32xf32, #tpu.memory_space<vmem>>, %arg7: memref<3x3x32x32xbf16, #tpu.memory_space<vmem>>, %arg8: memref<1x32xf32, #tpu.memory_space<vmem>>, %arg9: memref<1x32xf32, #tpu.memory_space<vmem>>, %arg10: memref<32x128xbf16, #tpu.memory_space<vmem>>, %arg11: memref<1x128xf32, #tpu.memory_space<vmem>>, %arg12: memref<1x128xf32, #tpu.memory_space<vmem>>, %arg13: memref<1x16x16x128xbf16, #tpu.memory_space<vmem>>, %arg14: memref<18x18x32xbf16, #tpu.memory_space<vmem>>) attributes {dimension_semantics = [#tpu.dimension_semantics<parallel>, #tpu.dimension_semantics<parallel>], iteration_bounds = array<i64: 2, 1>, scalar_prefetch = 0 : i64, scratch_operands = 1 : i64, tpu.core_type = #tpu.core_type<tc>, window_params = [{transform_indices = @transform_0, window_bounds = array<i64: 1, 16, 16, 128>}, {transform_indices = @transform_1, window_bounds = array<i64: 1, 1, 2, 16, 128>}, {pipeline_mode = #tpu.pipeline_mode<synchronous>, transform_indices = @transform_2, window_bounds = array<i64: 128, 32>}, {pipeline_mode = #tpu.pipeline_mode<synchronous>, transform_indices = @transform_3, window_bounds = array<i64: 1, 32>}, {pipeline_mode = #tpu.pipeline_mode<synchronous>, transform_indices = @transform_4, window_bounds = array<i64: 1, 32>}, {pipeline_mode = #tpu.pipeline_mode<synchronous>, transform_indices = @transform_5, window_bounds = array<i64: 3, 3, 32, 32>}, {pipeline_mode = #tpu.pipeline_mode<synchronous>, transform_indices = @transform_6, window_bounds = array<i64: 1, 32>}, {pipeline_mode = #tpu.pipeline_mode<synchronous>, transform_indices = @transform_7, window_bounds = array<i64: 1, 32>}, {pipeline_mode = #tpu.pipeline_mode<synchronous>, transform_indices = @transform_8, window_bounds = array<i64: 32, 128>}, {pipeline_mode = #tpu.pipeline_mode<synchronous>, transform_indices = @transform_9, window_bounds = array<i64: 1, 128>}, {pipeline_mode = #tpu.pipeline_mode<synchronous>, transform_indices = @transform_10, window_bounds = array<i64: 1, 128>}, {transform_indices = @transform_11, window_bounds = array<i64: 1, 16, 16, 128>}]} {
    %c16_i32 = arith.constant 16 : i32
    %0 = arith.muli %arg1, %c16_i32 : i32
    %cst = arith.constant 0.000000e+00 : bf16
    %1 = vector.broadcast %cst : bf16 to vector<18x1x32xbf16>
    %c0 = arith.constant 0 : index
    %c0_0 = arith.constant 0 : index
    %c0_1 = arith.constant 0 : index
    %2 = vector.load %arg14[%c0, %c0_0, %c0_1] : memref<18x18x32xbf16, #tpu.memory_space<vmem>>, vector<18x1x32xbf16>
    tpu.vector_store %arg14[%c0, %c0_0, %c0_1], %1 {strides = array<i32>} : memref<18x18x32xbf16, #tpu.memory_space<vmem>>, vector<18x1x32xbf16>,
    %c0_2 = arith.constant 0 : index
    %c17 = arith.constant 17 : index
    %c0_3 = arith.constant 0 : index
    %3 = vector.load %arg14[%c0_2, %c17, %c0_3] : memref<18x18x32xbf16, #tpu.memory_space<vmem>>, vector<18x1x32xbf16>
    tpu.vector_store %arg14[%c0_2, %c17, %c0_3], %1 {strides = array<i32>} : memref<18x18x32xbf16, #tpu.memory_space<vmem>>, vector<18x1x32xbf16>,
    %c0_4 = arith.constant 0 : index
    %c0_5 = arith.constant 0 : index
    %c0_6 = arith.constant 0 : index
    %c0_7 = arith.constant 0 : index
    %4 = vector.load %arg2[%c0_4, %c0_5, %c0_6, %c0_7] : memref<1x16x16x128xbf16, #tpu.memory_space<vmem>>, vector<1x16x16x128xbf16>
    %5 = vector.shape_cast %4 : vector<1x16x16x128xbf16> to vector<16x16x128xbf16>
    %6 = vector.shape_cast %5 : vector<16x16x128xbf16> to vector<256x128xbf16>
    %c0_8 = arith.constant 0 : index
    %c0_9 = arith.constant 0 : index
    %7 = vector.load %arg4[%c0_8, %c0_9] : memref<128x32xbf16, #tpu.memory_space<vmem>>, vector<128x32xbf16>
    %cst_10 = arith.constant dense<0.000000e+00> : vector<256x32xf32>
    %8 = tpu.matmul %6, %7, %cst_10 {dimension_numbers = #tpu.dot_dimension_numbers<[1], [0], [0], [1], [0, 0, 1, 1], [], []>} : vector<256x128xbf16>, vector<128x32xbf16>, vector<256x32xf32> -> vector<256x32xf32>
    %c0_11 = arith.constant 0 : index
    %c0_12 = arith.constant 0 : index
    %9 = vector.load %arg5[%c0_11, %c0_12] : memref<1x32xf32, #tpu.memory_space<vmem>>, vector<1x32xf32>
    %10 = vector.broadcast %9 : vector<1x32xf32> to vector<256x32xf32>
    %11 = arith.mulf %8, %10 : vector<256x32xf32>
    %c0_13 = arith.constant 0 : index
    %c0_14 = arith.constant 0 : index
    %12 = vector.load %arg6[%c0_13, %c0_14] : memref<1x32xf32, #tpu.memory_space<vmem>>, vector<1x32xf32>
    %13 = vector.broadcast %12 : vector<1x32xf32> to vector<256x32xf32>
    %14 = arith.addf %11, %13 : vector<256x32xf32>
    %cst_15 = arith.constant 0.000000e+00 : f32
    %15 = vector.broadcast %cst_15 : f32 to vector<256x32xf32>
    %16 = arith.maximumf %14, %15 : vector<256x32xf32>
    %17 = vector.shape_cast %16 : vector<256x32xf32> to vector<16x16x32xf32>
    %18 = arith.truncf %17 : vector<16x16x32xf32> to vector<16x16x32xbf16>
    %c1 = arith.constant 1 : index
    %c1_16 = arith.constant 1 : index
    %c0_17 = arith.constant 0 : index
    %19 = vector.load %arg14[%c1, %c1_16, %c0_17] : memref<18x18x32xbf16, #tpu.memory_space<vmem>>, vector<16x16x32xbf16>
    tpu.vector_store %arg14[%c1, %c1_16, %c0_17], %18 {strides = array<i32>} : memref<18x18x32xbf16, #tpu.memory_space<vmem>>, vector<16x16x32xbf16>,
    %c0_18 = arith.constant 0 : index
    %c0_19 = arith.constant 0 : index
    %c0_20 = arith.constant 0 : index
    %c0_21 = arith.constant 0 : index
    %c0_22 = arith.constant 0 : index
    %20 = vector.load %arg3[%c0_18, %c0_19, %c0_20, %c0_21, %c0_22] : memref<1x1x2x16x128xbf16, #tpu.memory_space<vmem>>, vector<1x1x2x16x128xbf16>
    %21 = vector.shape_cast %20 : vector<1x1x2x16x128xbf16> to vector<2x16x128xbf16>
    %22 = vector.shape_cast %21 : vector<2x16x128xbf16> to vector<32x128xbf16>
    %c0_23 = arith.constant 0 : index
    %c0_24 = arith.constant 0 : index
    %23 = vector.load %arg4[%c0_23, %c0_24] : memref<128x32xbf16, #tpu.memory_space<vmem>>, vector<128x32xbf16>
    %cst_25 = arith.constant dense<0.000000e+00> : vector<32x32xf32>
    %24 = tpu.matmul %22, %23, %cst_25 {dimension_numbers = #tpu.dot_dimension_numbers<[1], [0], [0], [1], [0, 0, 1, 1], [], []>} : vector<32x128xbf16>, vector<128x32xbf16>, vector<32x32xf32> -> vector<32x32xf32>
    %c0_26 = arith.constant 0 : index
    %c0_27 = arith.constant 0 : index
    %25 = vector.load %arg5[%c0_26, %c0_27] : memref<1x32xf32, #tpu.memory_space<vmem>>, vector<1x32xf32>
    %26 = vector.broadcast %25 : vector<1x32xf32> to vector<32x32xf32>
    %27 = arith.mulf %24, %26 : vector<32x32xf32>
    %c0_28 = arith.constant 0 : index
    %c0_29 = arith.constant 0 : index
    %28 = vector.load %arg6[%c0_28, %c0_29] : memref<1x32xf32, #tpu.memory_space<vmem>>, vector<1x32xf32>
    %29 = vector.broadcast %28 : vector<1x32xf32> to vector<32x32xf32>
    %30 = arith.addf %27, %29 : vector<32x32xf32>
    %cst_30 = arith.constant 0.000000e+00 : f32
    %31 = vector.broadcast %cst_30 : f32 to vector<32x32xf32>
    %32 = arith.maximumf %30, %31 : vector<32x32xf32>
    %33 = vector.shape_cast %32 : vector<32x32xf32> to vector<2x16x32xf32>
    %34 = tpu.iota {dimensions = array<i32: 0>} : vector<2x1x1xi32>
    %c1_i32 = arith.constant 1 : i32
    %35 = vector.broadcast %c1_i32 : i32 to vector<2x1x1xi32>
    %36 = arith.cmpi slt, %34, %35 : vector<2x1x1xi32>
    %c1_i32_31 = arith.constant 1 : i32
    %37 = arith.subi %0, %c1_i32_31 : i32
    %38 = vector.broadcast %37 : i32 to vector<2x1x1xi32>
    %39 = arith.addi %38, %34 : vector<2x1x1xi32>
    %c16_i32_32 = arith.constant 16 : i32
    %40 = arith.addi %0, %c16_i32_32 : i32
    %c1_i32_33 = arith.constant 1 : i32
    %41 = vector.broadcast %c1_i32_33 : i32 to vector<2x1x1xi32>
    %42 = arith.subi %34, %41 : vector<2x1x1xi32>
    %43 = vector.broadcast %40 : i32 to vector<2x1x1xi32>
    %44 = arith.addi %43, %42 : vector<2x1x1xi32>
    %45 = arith.select %36, %39, %44 : vector<2x1x1xi1>, vector<2x1x1xi32>
    %c0_i32 = arith.constant 0 : i32
    %46 = vector.broadcast %c0_i32 : i32 to vector<2x1x1xi32>
    %47 = arith.cmpi sge, %45, %46 : vector<2x1x1xi32>
    %c16_i32_34 = arith.constant 16 : i32
    %48 = vector.broadcast %c16_i32_34 : i32 to vector<2x1x1xi32>
    %49 = arith.cmpi slt, %45, %48 : vector<2x1x1xi32>
    %50 = arith.andi %47, %49 : vector<2x1x1xi1>
    %cst_35 = arith.constant 0.000000e+00 : f32
    %51 = vector.shape_cast %50 : vector<2x1x1xi1> to vector<2x1x1xi1>
    %52 = vector.broadcast %51 : vector<2x1x1xi1> to vector<2x16x32xi1>
    %53 = vector.broadcast %cst_35 : f32 to vector<2x16x32xf32>
    %54 = arith.select %52, %33, %53 : vector<2x16x32xi1>, vector<2x16x32xf32>
    %55 = arith.truncf %54 : vector<2x16x32xf32> to vector<2x16x32xbf16>
    %56 = vector.extract_strided_slice %55 {offsets = [0, 0, 0], sizes = [1, 16, 32], strides = [1, 1, 1]} : vector<2x16x32xbf16> to vector<1x16x32xbf16>
    %c0_36 = arith.constant 0 : index
    %c1_37 = arith.constant 1 : index
    %c0_38 = arith.constant 0 : index
    %57 = vector.load %arg14[%c0_36, %c1_37, %c0_38] : memref<18x18x32xbf16, #tpu.memory_space<vmem>>, vector<1x16x32xbf16>
    tpu.vector_store %arg14[%c0_36, %c1_37, %c0_38], %56 {strides = array<i32>} : memref<18x18x32xbf16, #tpu.memory_space<vmem>>, vector<1x16x32xbf16>,
    %58 = vector.extract_strided_slice %55 {offsets = [1, 0, 0], sizes = [1, 16, 32], strides = [1, 1, 1]} : vector<2x16x32xbf16> to vector<1x16x32xbf16>
    %c17_39 = arith.constant 17 : index
    %c1_40 = arith.constant 1 : index
    %c0_41 = arith.constant 0 : index
    %59 = vector.load %arg14[%c17_39, %c1_40, %c0_41] : memref<18x18x32xbf16, #tpu.memory_space<vmem>>, vector<1x16x32xbf16>
    tpu.vector_store %arg14[%c17_39, %c1_40, %c0_41], %58 {strides = array<i32>} : memref<18x18x32xbf16, #tpu.memory_space<vmem>>, vector<1x16x32xbf16>,
    %c0_42 = arith.constant 0 : index
    %c0_43 = arith.constant 0 : index
    %c0_44 = arith.constant 0 : index
    %60 = vector.load %arg14[%c0_42, %c0_43, %c0_44] : memref<18x18x32xbf16, #tpu.memory_space<vmem>>, vector<16x16x32xbf16>
    %61 = vector.shape_cast %60 : vector<16x16x32xbf16> to vector<256x32xbf16>
    %c0_45 = arith.constant 0 : index
    %c0_46 = arith.constant 0 : index
    %c0_47 = arith.constant 0 : index
    %c0_48 = arith.constant 0 : index
    %62 = vector.load %arg7[%c0_45, %c0_46, %c0_47, %c0_48] : memref<3x3x32x32xbf16, #tpu.memory_space<vmem>>, vector<1x1x32x32xbf16>
    %63 = vector.shape_cast %62 : vector<1x1x32x32xbf16> to vector<32x32xbf16>
    %cst_49 = arith.constant dense<0.000000e+00> : vector<256x32xf32>
    %64 = tpu.matmul %61, %63, %cst_49 {dimension_numbers = #tpu.dot_dimension_numbers<[1], [0], [0], [1], [0, 0, 1, 1], [], []>} : vector<256x32xbf16>, vector<32x32xbf16>, vector<256x32xf32> -> vector<256x32xf32>
    %c0_50 = arith.constant 0 : index
    %c1_51 = arith.constant 1 : index
    %c0_52 = arith.constant 0 : index
    %65 = vector.load %arg14[%c0_50, %c1_51, %c0_52] : memref<18x18x32xbf16, #tpu.memory_space<vmem>>, vector<16x16x32xbf16>
    %66 = vector.shape_cast %65 : vector<16x16x32xbf16> to vector<256x32xbf16>
    %c0_53 = arith.constant 0 : index
    %c1_54 = arith.constant 1 : index
    %c0_55 = arith.constant 0 : index
    %c0_56 = arith.constant 0 : index
    %67 = vector.load %arg7[%c0_53, %c1_54, %c0_55, %c0_56] : memref<3x3x32x32xbf16, #tpu.memory_space<vmem>>, vector<1x1x32x32xbf16>
    %68 = vector.shape_cast %67 : vector<1x1x32x32xbf16> to vector<32x32xbf16>
    %cst_57 = arith.constant dense<0.000000e+00> : vector<256x32xf32>
    %69 = tpu.matmul %66, %68, %cst_57 {dimension_numbers = #tpu.dot_dimension_numbers<[1], [0], [0], [1], [0, 0, 1, 1], [], []>} : vector<256x32xbf16>, vector<32x32xbf16>, vector<256x32xf32> -> vector<256x32xf32>
    %70 = arith.addf %64, %69 : vector<256x32xf32>
    %c0_58 = arith.constant 0 : index
    %c2 = arith.constant 2 : index
    %c0_59 = arith.constant 0 : index
    %71 = vector.load %arg14[%c0_58, %c2, %c0_59] : memref<18x18x32xbf16, #tpu.memory_space<vmem>>, vector<16x16x32xbf16>
    %72 = vector.shape_cast %71 : vector<16x16x32xbf16> to vector<256x32xbf16>
    %c0_60 = arith.constant 0 : index
    %c2_61 = arith.constant 2 : index
    %c0_62 = arith.constant 0 : index
    %c0_63 = arith.constant 0 : index
    %73 = vector.load %arg7[%c0_60, %c2_61, %c0_62, %c0_63] : memref<3x3x32x32xbf16, #tpu.memory_space<vmem>>, vector<1x1x32x32xbf16>
    %74 = vector.shape_cast %73 : vector<1x1x32x32xbf16> to vector<32x32xbf16>
    %cst_64 = arith.constant dense<0.000000e+00> : vector<256x32xf32>
    %75 = tpu.matmul %72, %74, %cst_64 {dimension_numbers = #tpu.dot_dimension_numbers<[1], [0], [0], [1], [0, 0, 1, 1], [], []>} : vector<256x32xbf16>, vector<32x32xbf16>, vector<256x32xf32> -> vector<256x32xf32>
    %76 = arith.addf %70, %75 : vector<256x32xf32>
    %c1_65 = arith.constant 1 : index
    %c0_66 = arith.constant 0 : index
    %c0_67 = arith.constant 0 : index
    %77 = vector.load %arg14[%c1_65, %c0_66, %c0_67] : memref<18x18x32xbf16, #tpu.memory_space<vmem>>, vector<16x16x32xbf16>
    %78 = vector.shape_cast %77 : vector<16x16x32xbf16> to vector<256x32xbf16>
    %c1_68 = arith.constant 1 : index
    %c0_69 = arith.constant 0 : index
    %c0_70 = arith.constant 0 : index
    %c0_71 = arith.constant 0 : index
    %79 = vector.load %arg7[%c1_68, %c0_69, %c0_70, %c0_71] : memref<3x3x32x32xbf16, #tpu.memory_space<vmem>>, vector<1x1x32x32xbf16>
    %80 = vector.shape_cast %79 : vector<1x1x32x32xbf16> to vector<32x32xbf16>
    %cst_72 = arith.constant dense<0.000000e+00> : vector<256x32xf32>
    %81 = tpu.matmul %78, %80, %cst_72 {dimension_numbers = #tpu.dot_dimension_numbers<[1], [0], [0], [1], [0, 0, 1, 1], [], []>} : vector<256x32xbf16>, vector<32x32xbf16>, vector<256x32xf32> -> vector<256x32xf32>
    %82 = arith.addf %76, %81 : vector<256x32xf32>
    %c1_73 = arith.constant 1 : index
    %c1_74 = arith.constant 1 : index
    %c0_75 = arith.constant 0 : index
    %83 = vector.load %arg14[%c1_73, %c1_74, %c0_75] : memref<18x18x32xbf16, #tpu.memory_space<vmem>>, vector<16x16x32xbf16>
    %84 = vector.shape_cast %83 : vector<16x16x32xbf16> to vector<256x32xbf16>
    %c1_76 = arith.constant 1 : index
    %c1_77 = arith.constant 1 : index
    %c0_78 = arith.constant 0 : index
    %c0_79 = arith.constant 0 : index
    %85 = vector.load %arg7[%c1_76, %c1_77, %c0_78, %c0_79] : memref<3x3x32x32xbf16, #tpu.memory_space<vmem>>, vector<1x1x32x32xbf16>
    %86 = vector.shape_cast %85 : vector<1x1x32x32xbf16> to vector<32x32xbf16>
    %cst_80 = arith.constant dense<0.000000e+00> : vector<256x32xf32>
    %87 = tpu.matmul %84, %86, %cst_80 {dimension_numbers = #tpu.dot_dimension_numbers<[1], [0], [0], [1], [0, 0, 1, 1], [], []>} : vector<256x32xbf16>, vector<32x32xbf16>, vector<256x32xf32> -> vector<256x32xf32>
    %88 = arith.addf %82, %87 : vector<256x32xf32>
    %c1_81 = arith.constant 1 : index
    %c2_82 = arith.constant 2 : index
    %c0_83 = arith.constant 0 : index
    %89 = vector.load %arg14[%c1_81, %c2_82, %c0_83] : memref<18x18x32xbf16, #tpu.memory_space<vmem>>, vector<16x16x32xbf16>
    %90 = vector.shape_cast %89 : vector<16x16x32xbf16> to vector<256x32xbf16>
    %c1_84 = arith.constant 1 : index
    %c2_85 = arith.constant 2 : index
    %c0_86 = arith.constant 0 : index
    %c0_87 = arith.constant 0 : index
    %91 = vector.load %arg7[%c1_84, %c2_85, %c0_86, %c0_87] : memref<3x3x32x32xbf16, #tpu.memory_space<vmem>>, vector<1x1x32x32xbf16>
    %92 = vector.shape_cast %91 : vector<1x1x32x32xbf16> to vector<32x32xbf16>
    %cst_88 = arith.constant dense<0.000000e+00> : vector<256x32xf32>
    %93 = tpu.matmul %90, %92, %cst_88 {dimension_numbers = #tpu.dot_dimension_numbers<[1], [0], [0], [1], [0, 0, 1, 1], [], []>} : vector<256x32xbf16>, vector<32x32xbf16>, vector<256x32xf32> -> vector<256x32xf32>
    %94 = arith.addf %88, %93 : vector<256x32xf32>
    %c2_89 = arith.constant 2 : index
    %c0_90 = arith.constant 0 : index
    %c0_91 = arith.constant 0 : index
    %95 = vector.load %arg14[%c2_89, %c0_90, %c0_91] : memref<18x18x32xbf16, #tpu.memory_space<vmem>>, vector<16x16x32xbf16>
    %96 = vector.shape_cast %95 : vector<16x16x32xbf16> to vector<256x32xbf16>
    %c2_92 = arith.constant 2 : index
    %c0_93 = arith.constant 0 : index
    %c0_94 = arith.constant 0 : index
    %c0_95 = arith.constant 0 : index
    %97 = vector.load %arg7[%c2_92, %c0_93, %c0_94, %c0_95] : memref<3x3x32x32xbf16, #tpu.memory_space<vmem>>, vector<1x1x32x32xbf16>
    %98 = vector.shape_cast %97 : vector<1x1x32x32xbf16> to vector<32x32xbf16>
    %cst_96 = arith.constant dense<0.000000e+00> : vector<256x32xf32>
    %99 = tpu.matmul %96, %98, %cst_96 {dimension_numbers = #tpu.dot_dimension_numbers<[1], [0], [0], [1], [0, 0, 1, 1], [], []>} : vector<256x32xbf16>, vector<32x32xbf16>, vector<256x32xf32> -> vector<256x32xf32>
    %100 = arith.addf %94, %99 : vector<256x32xf32>
    %c2_97 = arith.constant 2 : index
    %c1_98 = arith.constant 1 : index
    %c0_99 = arith.constant 0 : index
    %101 = vector.load %arg14[%c2_97, %c1_98, %c0_99] : memref<18x18x32xbf16, #tpu.memory_space<vmem>>, vector<16x16x32xbf16>
    %102 = vector.shape_cast %101 : vector<16x16x32xbf16> to vector<256x32xbf16>
    %c2_100 = arith.constant 2 : index
    %c1_101 = arith.constant 1 : index
    %c0_102 = arith.constant 0 : index
    %c0_103 = arith.constant 0 : index
    %103 = vector.load %arg7[%c2_100, %c1_101, %c0_102, %c0_103] : memref<3x3x32x32xbf16, #tpu.memory_space<vmem>>, vector<1x1x32x32xbf16>
    %104 = vector.shape_cast %103 : vector<1x1x32x32xbf16> to vector<32x32xbf16>
    %cst_104 = arith.constant dense<0.000000e+00> : vector<256x32xf32>
    %105 = tpu.matmul %102, %104, %cst_104 {dimension_numbers = #tpu.dot_dimension_numbers<[1], [0], [0], [1], [0, 0, 1, 1], [], []>} : vector<256x32xbf16>, vector<32x32xbf16>, vector<256x32xf32> -> vector<256x32xf32>
    %106 = arith.addf %100, %105 : vector<256x32xf32>
    %c2_105 = arith.constant 2 : index
    %c2_106 = arith.constant 2 : index
    %c0_107 = arith.constant 0 : index
    %107 = vector.load %arg14[%c2_105, %c2_106, %c0_107] : memref<18x18x32xbf16, #tpu.memory_space<vmem>>, vector<16x16x32xbf16>
    %108 = vector.shape_cast %107 : vector<16x16x32xbf16> to vector<256x32xbf16>
    %c2_108 = arith.constant 2 : index
    %c2_109 = arith.constant 2 : index
    %c0_110 = arith.constant 0 : index
    %c0_111 = arith.constant 0 : index
    %109 = vector.load %arg7[%c2_108, %c2_109, %c0_110, %c0_111] : memref<3x3x32x32xbf16, #tpu.memory_space<vmem>>, vector<1x1x32x32xbf16>
    %110 = vector.shape_cast %109 : vector<1x1x32x32xbf16> to vector<32x32xbf16>
    %cst_112 = arith.constant dense<0.000000e+00> : vector<256x32xf32>
    %111 = tpu.matmul %108, %110, %cst_112 {dimension_numbers = #tpu.dot_dimension_numbers<[1], [0], [0], [1], [0, 0, 1, 1], [], []>} : vector<256x32xbf16>, vector<32x32xbf16>, vector<256x32xf32> -> vector<256x32xf32>
    %112 = arith.addf %106, %111 : vector<256x32xf32>
    %c0_113 = arith.constant 0 : index
    %c0_114 = arith.constant 0 : index
    %113 = vector.load %arg8[%c0_113, %c0_114] : memref<1x32xf32, #tpu.memory_space<vmem>>, vector<1x32xf32>
    %114 = vector.broadcast %113 : vector<1x32xf32> to vector<256x32xf32>
    %115 = arith.mulf %112, %114 : vector<256x32xf32>
    %c0_115 = arith.constant 0 : index
    %c0_116 = arith.constant 0 : index
    %116 = vector.load %arg9[%c0_115, %c0_116] : memref<1x32xf32, #tpu.memory_space<vmem>>, vector<1x32xf32>
    %117 = vector.broadcast %116 : vector<1x32xf32> to vector<256x32xf32>
    %118 = arith.addf %115, %117 : vector<256x32xf32>
    %cst_117 = arith.constant 0.000000e+00 : f32
    %119 = vector.broadcast %cst_117 : f32 to vector<256x32xf32>
    %120 = arith.maximumf %118, %119 : vector<256x32xf32>
    %121 = arith.truncf %120 : vector<256x32xf32> to vector<256x32xbf16>
    %c0_118 = arith.constant 0 : index
    %c0_119 = arith.constant 0 : index
    %122 = vector.load %arg10[%c0_118, %c0_119] : memref<32x128xbf16, #tpu.memory_space<vmem>>, vector<32x128xbf16>
    %cst_120 = arith.constant dense<0.000000e+00> : vector<256x128xf32>
    %123 = tpu.matmul %121, %122, %cst_120 {dimension_numbers = #tpu.dot_dimension_numbers<[1], [0], [0], [1], [0, 0, 1, 1], [], []>} : vector<256x32xbf16>, vector<32x128xbf16>, vector<256x128xf32> -> vector<256x128xf32>
    %c0_121 = arith.constant 0 : index
    %c0_122 = arith.constant 0 : index
    %124 = vector.load %arg11[%c0_121, %c0_122] : memref<1x128xf32, #tpu.memory_space<vmem>>, vector<1x128xf32>
    %125 = vector.broadcast %124 : vector<1x128xf32> to vector<256x128xf32>
    %126 = arith.mulf %123, %125 : vector<256x128xf32>
    %c0_123 = arith.constant 0 : index
    %c0_124 = arith.constant 0 : index
    %127 = vector.load %arg12[%c0_123, %c0_124] : memref<1x128xf32, #tpu.memory_space<vmem>>, vector<1x128xf32>
    %128 = vector.broadcast %127 : vector<1x128xf32> to vector<256x128xf32>
    %129 = arith.addf %126, %128 : vector<256x128xf32>
    %130 = vector.shape_cast %5 : vector<16x16x128xbf16> to vector<256x128xbf16>
    %131 = arith.extf %130 : vector<256x128xbf16> to vector<256x128xf32>
    %132 = arith.addf %129, %131 : vector<256x128xf32>
    %cst_125 = arith.constant 0.000000e+00 : f32
    %133 = vector.broadcast %cst_125 : f32 to vector<256x128xf32>
    %134 = arith.maximumf %132, %133 : vector<256x128xf32>
    %135 = vector.shape_cast %134 : vector<256x128xf32> to vector<16x16x128xf32>
    %136 = arith.truncf %135 : vector<16x16x128xf32> to vector<16x16x128xbf16>
    %c0_126 = arith.constant 0 : index
    %c0_127 = arith.constant 0 : index
    %c0_128 = arith.constant 0 : index
    %c0_129 = arith.constant 0 : index
    %137 = vector.load %arg13[%c0_126, %c0_127, %c0_128, %c0_129] : memref<1x16x16x128xbf16, #tpu.memory_space<vmem>>, vector<1x16x16x128xbf16>
    %138 = vector.shape_cast %137 : vector<1x16x16x128xbf16> to vector<16x16x128xbf16>
    %139 = vector.shape_cast %136 : vector<16x16x128xbf16> to vector<1x16x16x128xbf16>
    tpu.vector_store %arg13[%c0_126, %c0_127, %c0_128, %c0_129], %139 {strides = array<i32>} : memref<1x16x16x128xbf16, #tpu.memory_space<vmem>>, vector<1x16x16x128xbf16>,
    return
  }
  func.func @transform_0(%arg0: i32, %arg1: i32) -> (i32, i32, i32, i32) {
    %c0_i32 = arith.constant 0 : i32
    %c0_i32_0 = arith.constant 0 : i32
    %c0_i32_1 = arith.constant 0 : i32
    return %arg0, %arg1, %c0_i32, %c0_i32_0 : i32, i32, i32, i32
  }
  func.func @transform_1(%arg0: i32, %arg1: i32) -> (i32, i32, i32, i32, i32) {
    %c0_i32 = arith.constant 0 : i32
    %c0_i32_0 = arith.constant 0 : i32
    %c0_i32_1 = arith.constant 0 : i32
    %c0_i32_2 = arith.constant 0 : i32
    return %arg0, %arg1, %c0_i32, %c0_i32_0, %c0_i32_1 : i32, i32, i32, i32, i32
  }
  func.func @transform_2(%arg0: i32, %arg1: i32) -> (i32, i32) {
    %c0_i32 = arith.constant 0 : i32
    %c0_i32_0 = arith.constant 0 : i32
    %c0_i32_1 = arith.constant 0 : i32
    return %c0_i32, %c0_i32_0 : i32, i32
  }
  func.func @transform_3(%arg0: i32, %arg1: i32) -> (i32, i32) {
    %c0_i32 = arith.constant 0 : i32
    %c0_i32_0 = arith.constant 0 : i32
    %c0_i32_1 = arith.constant 0 : i32
    return %c0_i32, %c0_i32_0 : i32, i32
  }
  func.func @transform_4(%arg0: i32, %arg1: i32) -> (i32, i32) {
    %c0_i32 = arith.constant 0 : i32
    %c0_i32_0 = arith.constant 0 : i32
    %c0_i32_1 = arith.constant 0 : i32
    return %c0_i32, %c0_i32_0 : i32, i32
  }
  func.func @transform_5(%arg0: i32, %arg1: i32) -> (i32, i32, i32, i32) {
    %c0_i32 = arith.constant 0 : i32
    %c0_i32_0 = arith.constant 0 : i32
    %c0_i32_1 = arith.constant 0 : i32
    %c0_i32_2 = arith.constant 0 : i32
    %c0_i32_3 = arith.constant 0 : i32
    return %c0_i32, %c0_i32_0, %c0_i32_1, %c0_i32_2 : i32, i32, i32, i32
  }
  func.func @transform_6(%arg0: i32, %arg1: i32) -> (i32, i32) {
    %c0_i32 = arith.constant 0 : i32
    %c0_i32_0 = arith.constant 0 : i32
    %c0_i32_1 = arith.constant 0 : i32
    return %c0_i32, %c0_i32_0 : i32, i32
  }
  func.func @transform_7(%arg0: i32, %arg1: i32) -> (i32, i32) {
    %c0_i32 = arith.constant 0 : i32
    %c0_i32_0 = arith.constant 0 : i32
    %c0_i32_1 = arith.constant 0 : i32
    return %c0_i32, %c0_i32_0 : i32, i32
  }
  func.func @transform_8(%arg0: i32, %arg1: i32) -> (i32, i32) {
    %c0_i32 = arith.constant 0 : i32
    %c0_i32_0 = arith.constant 0 : i32
    %c0_i32_1 = arith.constant 0 : i32
    return %c0_i32, %c0_i32_0 : i32, i32
  }
  func.func @transform_9(%arg0: i32, %arg1: i32) -> (i32, i32) {
    %c0_i32 = arith.constant 0 : i32
    %c0_i32_0 = arith.constant 0 : i32
    %c0_i32_1 = arith.constant 0 : i32
    return %c0_i32, %c0_i32_0 : i32, i32
  }
  func.func @transform_10(%arg0: i32, %arg1: i32) -> (i32, i32) {
    %c0_i32 = arith.constant 0 : i32
    %c0_i32_0 = arith.constant 0 : i32
    %c0_i32_1 = arith.constant 0 : i32
    return %c0_i32, %c0_i32_0 : i32, i32
  }
  func.func @transform_11(%arg0: i32, %arg1: i32) -> (i32, i32, i32, i32) {
    %c0_i32 = arith.constant 0 : i32
    %c0_i32_0 = arith.constant 0 : i32
    %c0_i32_1 = arith.constant 0 : i32
    return %arg0, %arg1, %c0_i32, %c0_i32_0 : i32, i32, i32, i32
  }
}

</mosaic_0001>

<llo_original>
// kernel: tpu_custom_call.1
$region0: #{tpu_custom_call.1}
  #allocation0 [shape = 'u32[]', space=smem, size = 0x4, offset = 0x4, fixed_abs, tag = 'smem constant byte address 0x4 - core index']
  #allocation1 [shape = 'u32[144,128]{1,0:T(1,128)}', space=vmem, size = 0x12000, scoped, tag = 'internal scratch']
  #allocation2 [shape = 'bf16[18,18,32]{2,1,0:T(8,128)(2,1)}', space=vmem, size = 0x1b000, scoped, tag = 'scratch operand']
  %s0 = inlined_call_operand.hbm [shape: bf16[2,16,16,128], index: 0, kind: input, shape index: {}]
  %s1 = inlined_call_operand.vmem [shape: bf16[2,1,2,16,128], index: 1, kind: input, shape index: {}]
  %s2 = inlined_call_operand.vmem [shape: bf16[128,32], index: 2, kind: input, shape index: {}]
  %s3 = inlined_call_operand.vmem [shape: f32[1,32], index: 3, kind: input, shape index: {}]
  %s4 = inlined_call_operand.vmem [shape: f32[1,32], index: 4, kind: input, shape index: {}]
  %s5 = inlined_call_operand.hbm [shape: bf16[3,3,32,32], index: 5, kind: input, shape index: {}]
  %s6 = inlined_call_operand.vmem [shape: f32[1,32], index: 6, kind: input, shape index: {}]
  %s7 = inlined_call_operand.vmem [shape: f32[1,32], index: 7, kind: input, shape index: {}]
  %s8 = inlined_call_operand.vmem [shape: bf16[32,128], index: 8, kind: input, shape index: {}]
  %s9 = inlined_call_operand.vmem [shape: f32[1,128], index: 9, kind: input, shape index: {}]
  %s10 = inlined_call_operand.vmem [shape: f32[1,128], index: 10, kind: input, shape index: {}]
  %s11 = inlined_call_operand.hbm [shape: bf16[2,16,16,128], index: 11, kind: output, shape index: {}]
  %s12 = sld [smem:[#allocation0]]
  $region85: #{tpu_custom_call.1} parent=0
    _
  %s14 = ssub.s32 1, %s12
  %s15 = scalar_select 0, %s14, %s12
  $region1: #{tpu_custom_call.1} parent=0
    #allocation3 [shape = 'u8[131072]{0}', space=vmem, size = 0x20000, scoped, tag = 'input window, operand 0']
    #allocation4 [shape = 's32[2]{0}', space=sflag, size = 0x8, scoped, tag = 'scoped memory for tpu_custom_call.1']
    #allocation5 [shape = 's32[2]{0}', space=sflag, size = 0x8, scoped, tag = 'scoped memory for tpu_custom_call.1']
    #allocation6 [shape = 'u8[73728]{0}', space=vmem, size = 0x12000, scoped, tag = 'input window, operand 5, single buffered']
    #allocation7 [shape = 's32[1]{0}', space=sflag, size = 0x4, scoped, tag = 'scoped memory for tpu_custom_call.1']
    #allocation8 [shape = 'u8[131072]{0}', space=vmem, size = 0x20000, scoped, tag = 'output window, operand 0']
    %16 = vsyncpa [#allocation4], 0
    %s17 = scalar_lea.sflag [#allocation4], 1
    %18 = vsyncpa %s17, 0
    %19 = vsyncpa [#allocation7], 0
    %20 = vsyncpa [#allocation5], 0
    %s21 = scalar_lea.sflag [#allocation5], 1
    %22 = vsyncpa %s21, 0
    loop: start=0, step=1, limit=4
    $region2: #{tpu_custom_call.1} parent=1 // loop_pre_header
      _
    $region3: #{tpu_custom_call.1} parent=1 // loop_header
      %s24 = sphi 0, %s28
      %p25 = scmp.ge.s32.totalorder %s24, 4
      %s31 = sphi 0, %s43
      %s32 = sphi 0, %s39
      %s33 = sphi 0, %s31
      %s34 = sphi 0, %s32
      %s35 = sphi 0, %s33
      %s36 = sphi 0, %s34
      %s48 = sphi 0, %s50
      %s51 = sphi 0, %s48
      %s52 = sphi 0, %s51
      %s68 = sphi 0, %s52
      %s76 = sphi 0, %s78
      %s79 = sphi 0, %s76
      %s80 = sphi 0, %s79
      %s96 = sphi 0, %s80
      %s100 = sphi 0, %s100
      %s102 = sphi 0, %s100
      %s103 = sphi 0, %s102
      %s117 = sphi 0, %s103
      %s121 = sphi 0, %s121
      %s123 = sphi 0, %s121
      %s124 = sphi 0, %s123
      %s138 = sphi 0, %s124
      %s142 = sphi 0, %s142
      %s144 = sphi 0, %s142
      %s145 = sphi 0, %s144
      %s159 = sphi 0, %s145
      %s163 = sphi 0, %s163
      %s165 = sphi 0, %s163
      %s166 = sphi 0, %s165
      %s180 = sphi 0, %s166
      %s184 = sphi 0, %s184
      %s186 = sphi 0, %s184
      %s187 = sphi 0, %s186
      %s201 = sphi 0, %s187
      %s205 = sphi 0, %s205
      %s207 = sphi 0, %s205
      %s208 = sphi 0, %s207
      %s222 = sphi 0, %s208
      %s226 = sphi 0, %s226
      %s228 = sphi 0, %s226
      %s229 = sphi 0, %s228
      %s243 = sphi 0, %s229
      %s247 = sphi 0, %s247
      %s249 = sphi 0, %s247
      %s250 = sphi 0, %s249
      %s264 = sphi 0, %s250
      %s268 = sphi 0, %s268
      %s270 = sphi 0, %s268
      %s271 = sphi 0, %s270
      %s285 = sphi 0, %s271
      %s293 = sphi 0, %s295
      %s296 = sphi 0, %s293
      %s297 = sphi 0, %s296
      %s313 = sphi 0, %s297
    $region4: #{tpu_custom_call.1} parent=1 // loop_header_branch
      %27 = sbr.rel (%p25) target = $region8
    $region5: #{tpu_custom_call.1} parent=1 // loop_body
      %s29 = ssub.s32 %s24, 1
      %s30 = ssub.s32 %s24, 2
      %s37 = sadd.s32 1, %s32
      %p38 = scmp.ge.s32.totalorder %s37, 1
      %s39 = scalar_select %p38, 0, %s37
      %s40 = sadd.s32 1, %s31
      %s41 = scalar_select %p38, %s40, %s31
      %p42 = scmp.ge.s32.totalorder %s41, 2
      %s43 = scalar_select %p42, 0, %s41
      %s44 = ssub.s32 %s31, %s43
      %s45 = ssub.s32 %s32, %s39
      %s46 = sor.u32 %s44, %s45
      %p47 = scmp.eq.s32.totalorder %s46, 0
      %s49 = sadd.s32 %s48, 1
      %s50 = scalar_select %p47, %s48, %s49
      %p53 = pneg %p47
      %p54 = scmp.eq.s32.totalorder %s24, 1
      %p55 = por %p53, %p54
      %p56 = scmp.ne.s32.totalorder %s48, %s51
      %p57 = scmp.eq.s32.totalorder %s24, 0
      %p58 = por %p56, %p57
      %p59 = scmp.ne.s32.totalorder %s48, %s51
      %p60 = scmp.eq.s32.totalorder %s29, 1
      %p61 = por %p59, %p60
      %p62 = scmp.ne.s32.totalorder %s51, %s52
      %p63 = scmp.eq.s32.totalorder %s29, 0
      %p64 = por %p62, %p63
      %p65 = scmp.ne.s32.totalorder %s51, %s52
      %p66 = scmp.eq.s32.totalorder %s30, 1
      %p67 = por %p65, %p66
      %p69 = scmp.ne.s32.totalorder %s52, %s68
      %p70 = scmp.eq.s32.totalorder %s30, 0
      %p71 = por %p69, %p70
      %s72 = ssub.s32 %s31, %s43
      %s73 = ssub.s32 %s32, %s39
      %s74 = sor.u32 %s72, %s73
      %p75 = scmp.eq.s32.totalorder %s74, 0
      %s77 = sadd.s32 %s76, 1
      %s78 = scalar_select %p75, %s76, %s77
      %p81 = pneg %p75
      %p82 = scmp.eq.s32.totalorder %s24, 1
      %p83 = por %p81, %p82
      %p84 = scmp.ne.s32.totalorder %s76, %s79
      %p85 = scmp.eq.s32.totalorder %s24, 0
      %p86 = por %p84, %p85
      %p87 = scmp.ne.s32.totalorder %s76, %s79
      %p88 = scmp.eq.s32.totalorder %s29, 1
      %p89 = por %p87, %p88
      %p90 = scmp.ne.s32.totalorder %s79, %s80
      %p91 = scmp.eq.s32.totalorder %s29, 0
      %p92 = por %p90, %p91
      %p93 = scmp.ne.s32.totalorder %s79, %s80
      %p94 = scmp.eq.s32.totalorder %s30, 1
      %p95 = por %p93, %p94
      %p97 = scmp.ne.s32.totalorder %s80, %s96
      %p98 = scmp.eq.s32.totalorder %s30, 0
      %p99 = por %p97, %p98
      %s101 = sadd.s32 %s100, 1
      %p104 = scmp.eq.s32.totalorder %s24, 1
      %p105 = scmp.ne.s32.totalorder %s100, %s102
      %p106 = scmp.eq.s32.totalorder %s24, 0
      %p107 = por %p105, %p106
      %p108 = scmp.ne.s32.totalorder %s100, %s102
      %p109 = scmp.eq.s32.totalorder %s29, 1
      %p110 = por %p108, %p109
      %p111 = scmp.ne.s32.totalorder %s102, %s103
      %p112 = scmp.eq.s32.totalorder %s29, 0
      %p113 = por %p111, %p112
      %p114 = scmp.ne.s32.totalorder %s102, %s103
      %p115 = scmp.eq.s32.totalorder %s30, 1
      %p116 = por %p114, %p115
      %p118 = scmp.ne.s32.totalorder %s103, %s117
      %p119 = scmp.eq.s32.totalorder %s30, 0
      %p120 = por %p118, %p119
      %s122 = sadd.s32 %s121, 1
      %p125 = scmp.eq.s32.totalorder %s24, 1
      %p126 = scmp.ne.s32.totalorder %s121, %s123
      %p127 = scmp.eq.s32.totalorder %s24, 0
      %p128 = por %p126, %p127
      %p129 = scmp.ne.s32.totalorder %s121, %s123
      %p130 = scmp.eq.s32.totalorder %s29, 1
      %p131 = por %p129, %p130
      %p132 = scmp.ne.s32.totalorder %s123, %s124
      %p133 = scmp.eq.s32.totalorder %s29, 0
      %p134 = por %p132, %p133
      %p135 = scmp.ne.s32.totalorder %s123, %s124
      %p136 = scmp.eq.s32.totalorder %s30, 1
      %p137 = por %p135, %p136
      %p139 = scmp.ne.s32.totalorder %s124, %s138
      %p140 = scmp.eq.s32.totalorder %s30, 0
      %p141 = por %p139, %p140
      %s143 = sadd.s32 %s142, 1
      %p146 = scmp.eq.s32.totalorder %s24, 1
      %p147 = scmp.ne.s32.totalorder %s142, %s144
      %p148 = scmp.eq.s32.totalorder %s24, 0
      %p149 = por %p147, %p148
      %p150 = scmp.ne.s32.totalorder %s142, %s144
      %p151 = scmp.eq.s32.totalorder %s29, 1
      %p152 = por %p150, %p151
      %p153 = scmp.ne.s32.totalorder %s144, %s145
      %p154 = scmp.eq.s32.totalorder %s29, 0
      %p155 = por %p153, %p154
      %p156 = scmp.ne.s32.totalorder %s144, %s145
      %p157 = scmp.eq.s32.totalorder %s30, 1
      %p158 = por %p156, %p157
      %p160 = scmp.ne.s32.totalorder %s145, %s159
      %p161 = scmp.eq.s32.totalorder %s30, 0
      %p162 = por %p160, %p161
      %s164 = sadd.s32 %s163, 1
      %p167 = scmp.eq.s32.totalorder %s24, 1
      %p168 = scmp.ne.s32.totalorder %s163, %s165
      %p169 = scmp.eq.s32.totalorder %s24, 0
      %p170 = por %p168, %p169
      %p171 = scmp.ne.s32.totalorder %s163, %s165
      %p172 = scmp.eq.s32.totalorder %s29, 1
      %p173 = por %p171, %p172
      %p174 = scmp.ne.s32.totalorder %s165, %s166
      %p175 = scmp.eq.s32.totalorder %s29, 0
      %p176 = por %p174, %p175
      %p177 = scmp.ne.s32.totalorder %s165, %s166
      %p178 = scmp.eq.s32.totalorder %s30, 1
      %p179 = por %p177, %p178
      %p181 = scmp.ne.s32.totalorder %s166, %s180
      %p182 = scmp.eq.s32.totalorder %s30, 0
      %p183 = por %p181, %p182
      %s185 = sadd.s32 %s184, 1
      %p188 = scmp.eq.s32.totalorder %s24, 1
      %p189 = scmp.ne.s32.totalorder %s184, %s186
      %p190 = scmp.eq.s32.totalorder %s24, 0
      %p191 = por %p189, %p190
      %p192 = scmp.ne.s32.totalorder %s184, %s186
      %p193 = scmp.eq.s32.totalorder %s29, 1
      %p194 = por %p192, %p193
      %p195 = scmp.ne.s32.totalorder %s186, %s187
      %p196 = scmp.eq.s32.totalorder %s29, 0
      %p197 = por %p195, %p196
      %p198 = scmp.ne.s32.totalorder %s186, %s187
      %p199 = scmp.eq.s32.totalorder %s30, 1
      %p200 = por %p198, %p199
      %p202 = scmp.ne.s32.totalorder %s187, %s201
      %p203 = scmp.eq.s32.totalorder %s30, 0
      %p204 = por %p202, %p203
      %s206 = sadd.s32 %s205, 1
      %p209 = scmp.eq.s32.totalorder %s24, 1
      %p210 = scmp.ne.s32.totalorder %s205, %s207
      %p211 = scmp.eq.s32.totalorder %s24, 0
      %p212 = por %p210, %p211
      %p213 = scmp.ne.s32.totalorder %s205, %s207
      %p214 = scmp.eq.s32.totalorder %s29, 1
      %p215 = por %p213, %p214
      %p216 = scmp.ne.s32.totalorder %s207, %s208
      %p217 = scmp.eq.s32.totalorder %s29, 0
      %p218 = por %p216, %p217
      %p219 = scmp.ne.s32.totalorder %s207, %s208
      %p220 = scmp.eq.s32.totalorder %s30, 1
      %p221 = por %p219, %p220
      %p223 = scmp.ne.s32.totalorder %s208, %s222
      %p224 = scmp.eq.s32.totalorder %s30, 0
      %p225 = por %p223, %p224
      %s227 = sadd.s32 %s226, 1
      %p230 = scmp.eq.s32.totalorder %s24, 1
      %p231 = scmp.ne.s32.totalorder %s226, %s228
      %p232 = scmp.eq.s32.totalorder %s24, 0
      %p233 = por %p231, %p232
      %p234 = scmp.ne.s32.totalorder %s226, %s228
      %p235 = scmp.eq.s32.totalorder %s29, 1
      %p236 = por %p234, %p235
      %p237 = scmp.ne.s32.totalorder %s228, %s229
      %p238 = scmp.eq.s32.totalorder %s29, 0
      %p239 = por %p237, %p238
      %p240 = scmp.ne.s32.totalorder %s228, %s229
      %p241 = scmp.eq.s32.totalorder %s30, 1
      %p242 = por %p240, %p241
      %p244 = scmp.ne.s32.totalorder %s229, %s243
      %p245 = scmp.eq.s32.totalorder %s30, 0
      %p246 = por %p244, %p245
      %s248 = sadd.s32 %s247, 1
      %p251 = scmp.eq.s32.totalorder %s24, 1
      %p252 = scmp.ne.s32.totalorder %s247, %s249
      %p253 = scmp.eq.s32.totalorder %s24, 0
      %p254 = por %p252, %p253
      %p255 = scmp.ne.s32.totalorder %s247, %s249
      %p256 = scmp.eq.s32.totalorder %s29, 1
      %p257 = por %p255, %p256
      %p258 = scmp.ne.s32.totalorder %s249, %s250
      %p259 = scmp.eq.s32.totalorder %s29, 0
      %p260 = por %p258, %p259
      %p261 = scmp.ne.s32.totalorder %s249, %s250
      %p262 = scmp.eq.s32.totalorder %s30, 1
      %p263 = por %p261, %p262
      %p265 = scmp.ne.s32.totalorder %s250, %s264
      %p266 = scmp.eq.s32.totalorder %s30, 0
      %p267 = por %p265, %p266
      %s269 = sadd.s32 %s268, 1
      %p272 = scmp.eq.s32.totalorder %s24, 1
      %p273 = scmp.ne.s32.totalorder %s268, %s270
      %p274 = scmp.eq.s32.totalorder %s24, 0
      %p275 = por %p273, %p274
      %p276 = scmp.ne.s32.totalorder %s268, %s270
      %p277 = scmp.eq.s32.totalorder %s29, 1
      %p278 = por %p276, %p277
      %p279 = scmp.ne.s32.totalorder %s270, %s271
      %p280 = scmp.eq.s32.totalorder %s29, 0
      %p281 = por %p279, %p280
      %p282 = scmp.ne.s32.totalorder %s270, %s271
      %p283 = scmp.eq.s32.totalorder %s30, 1
      %p284 = por %p282, %p283
      %p286 = scmp.ne.s32.totalorder %s271, %s285
      %p287 = scmp.eq.s32.totalorder %s30, 0
      %p288 = por %p286, %p287
      %s289 = ssub.s32 %s31, %s43
      %s290 = ssub.s32 %s32, %s39
      %s291 = sor.u32 %s289, %s290
      %p292 = scmp.eq.s32.totalorder %s291, 0
      %s294 = sadd.s32 %s293, 1
      %s295 = scalar_select %p292, %s293, %s294
      %p298 = pneg %p292
      %p299 = scmp.eq.s32.totalorder %s24, 1
      %p300 = por %p298, %p299
      %p301 = scmp.ne.s32.totalorder %s293, %s296
      %p302 = scmp.eq.s32.totalorder %s24, 0
      %p303 = por %p301, %p302
      %p304 = scmp.ne.s32.totalorder %s293, %s296
      %p305 = scmp.eq.s32.totalorder %s29, 1
      %p306 = por %p304, %p305
      %p307 = scmp.ne.s32.totalorder %s296, %s297
      %p308 = scmp.eq.s32.totalorder %s29, 0
      %p309 = por %p307, %p308
      %p310 = scmp.ne.s32.totalorder %s296, %s297
      %p311 = scmp.eq.s32.totalorder %s30, 1
      %p312 = por %p310, %p311
      %p314 = scmp.ne.s32.totalorder %s297, %s313
      %p315 = scmp.eq.s32.totalorder %s30, 0
      %p316 = por %p314, %p315
      %p317 = scmp.le.s32.totalorder 1, %s24
      %p318 = scmp.lt.s32.totalorder %s24, 3
      %p319 = pnand %p317, %p318
      %p320 = pneg %p319
      // Predicated region
      $region9: #{tpu_custom_call.1} parent=5 // pred_check
        _
      $region10: #{tpu_custom_call.1} parent=5 // pred_check_branch
        %322 = sbr.rel (%p319) target = $region12
      $region11: #{tpu_custom_call.1} parent=5 // pred_region
        %s323 = ssub.s32 %s24, 1
        // Predicated region
        $region13: #{tpu_custom_call.1} parent=11 // pred_check
          %p324 = pneg %p113
        $region14: #{tpu_custom_call.1} parent=11 // pred_check_branch
          %326 = sbr.rel (%p324) target = $region16
        $region15: #{tpu_custom_call.1} parent=11 // pred_region
          _
        $region16: #{tpu_custom_call.1} parent=11 // pred_fallthru
          _
        // Predicated region
        $region17: #{tpu_custom_call.1} parent=11 // pred_check
          %p327 = pneg %p134
        $region18: #{tpu_custom_call.1} parent=11 // pred_check_branch
          %329 = sbr.rel (%p327) target = $region20
        $region19: #{tpu_custom_call.1} parent=11 // pred_region
          _
        $region20: #{tpu_custom_call.1} parent=11 // pred_fallthru
          _
        // Predicated region
        $region21: #{tpu_custom_call.1} parent=11 // pred_check
          %p330 = pneg %p155
        $region22: #{tpu_custom_call.1} parent=11 // pred_check_branch
          %332 = sbr.rel (%p330) target = $region24
        $region23: #{tpu_custom_call.1} parent=11 // pred_region
          _
        $region24: #{tpu_custom_call.1} parent=11 // pred_fallthru
          _
        // Predicated region
        $region25: #{tpu_custom_call.1} parent=11 // pred_check
          %p333 = pneg %p176
        $region26: #{tpu_custom_call.1} parent=11 // pred_check_branch
          %335 = sbr.rel (%p333) target = $region28
        $region27: #{tpu_custom_call.1} parent=11 // pred_region
          %s337 = ssub.s32 2304, 2304
          %338 = vsyncadd [#allocation7], %s337
          %s339 = sshll.u32 [#allocation6], 4
          %s340 = int_to_ptr.vmem [resolvable:$true] %s339
          %345 = dma.hbm_to_vmem [thread:$0]  %s5, 2304, %s340, [#allocation7], 64, 64, 4
        $region28: #{tpu_custom_call.1} parent=11 // pred_fallthru
          _
        // Predicated region
        $region29: #{tpu_custom_call.1} parent=11 // pred_check
          %p346 = pneg %p197
        $region30: #{tpu_custom_call.1} parent=11 // pred_check_branch
          %348 = sbr.rel (%p346) target = $region32
        $region31: #{tpu_custom_call.1} parent=11 // pred_region
          _
        $region32: #{tpu_custom_call.1} parent=11 // pred_fallthru
          _
        // Predicated region
        $region33: #{tpu_custom_call.1} parent=11 // pred_check
          %p349 = pneg %p218
        $region34: #{tpu_custom_call.1} parent=11 // pred_check_branch
          %351 = sbr.rel (%p349) target = $region36
        $region35: #{tpu_custom_call.1} parent=11 // pred_region
          _
        $region36: #{tpu_custom_call.1} parent=11 // pred_fallthru
          _
        // Predicated region
        $region37: #{tpu_custom_call.1} parent=11 // pred_check
          %p352 = pneg %p239
        $region38: #{tpu_custom_call.1} parent=11 // pred_check_branch
          %354 = sbr.rel (%p352) target = $region40
        $region39: #{tpu_custom_call.1} parent=11 // pred_region
          _
        $region40: #{tpu_custom_call.1} parent=11 // pred_fallthru
          _
        // Predicated region
        $region41: #{tpu_custom_call.1} parent=11 // pred_check
          %p355 = pneg %p260
        $region42: #{tpu_custom_call.1} parent=11 // pred_check_branch
          %357 = sbr.rel (%p355) target = $region44
        $region43: #{tpu_custom_call.1} parent=11 // pred_region
          _
        $region44: #{tpu_custom_call.1} parent=11 // pred_fallthru
          _
        // Predicated region
        $region45: #{tpu_custom_call.1} parent=11 // pred_check
          %p358 = pneg %p281
        $region46: #{tpu_custom_call.1} parent=11 // pred_check_branch
          %360 = sbr.rel (%p358) target = $region48
        $region47: #{tpu_custom_call.1} parent=11 // pred_region
          _
        $region48: #{tpu_custom_call.1} parent=11 // pred_fallthru
          _
      $region12: #{tpu_custom_call.1} parent=5 // pred_fallthru
        _
      %p361 = scmp.lt.s32.totalorder %s24, 2
      // Predicated region
      $region49: #{tpu_custom_call.1} parent=5 // pred_check
        %p362 = pneg %p361
      $region50: #{tpu_custom_call.1} parent=5 // pred_check_branch
        %364 = sbr.rel (%p362) target = $region52
      $region51: #{tpu_custom_call.1} parent=5 // pred_region
        // Predicated region
        $region53: #{tpu_custom_call.1} parent=51 // pred_check
          %p365 = pneg %p58
        $region54: #{tpu_custom_call.1} parent=51 // pred_check_branch
          %367 = sbr.rel (%p365) target = $region56
        $region55: #{tpu_custom_call.1} parent=51 // pred_region
          %s368 = sand.u32 %s48, 1
          %s369 = scalar_lea.sflag [#allocation4], %s368
          %s370 = sand.u32 %s48, 1
          %s371 = smul.addr %s370, 128
          %s372 = scalar_lea.vmem [#allocation3], %s371
          %s373 = smul.u32 16, %s32
          %s375 = ssub.s32 2048, 2048
          %376 = vsyncadd %s369, %s375
          %s377 = smul.addr %s373, 2
          %s378 = smul.addr %s31, 32
          %s379 = sadd.s32 %s377, %s378
          %s380 = smul.addr %s379, 64
          %s381 = scalar_lea.hbm %s0, %s380
          %s382 = sshll.u32 %s372, 4
          %s383 = int_to_ptr.vmem [resolvable:$true] %s382
          %388 = dma.hbm_to_vmem [thread:$0]  %s381, 2048, %s383, %s369, 64, 64, 4
        $region56: #{tpu_custom_call.1} parent=51 // pred_fallthru
          _
        // Predicated region
        $region57: #{tpu_custom_call.1} parent=51 // pred_check
          %p389 = pneg %p86
        $region58: #{tpu_custom_call.1} parent=51 // pred_check_branch
          %391 = sbr.rel (%p389) target = $region60
        $region59: #{tpu_custom_call.1} parent=51 // pred_region
          %p392 = scmp.lt.s32.totalorder %s31, 1
          %s393 = scalar_select %p392, %s31, 1
          %p394 = scmp.lt.s32.totalorder %s32, 0
          %s395 = scalar_select %p394, %s32, 0
          %s396 = smul.addr %s395, 4
          %s397 = smul.addr %s393, 4
          %s398 = sadd.s32 %s396, %s397
          %s399 = smul.addr %s398, 4
          %s400 = scalar_lea.vmem %s1, %s399
        $region60: #{tpu_custom_call.1} parent=51 // pred_fallthru
          _
      $region52: #{tpu_custom_call.1} parent=5 // pred_fallthru
        _
      %p401 = scmp.le.s32.totalorder 1, %s24
      %p402 = scmp.lt.s32.totalorder %s24, 3
      %p403 = pnand %p401, %p402
      %p404 = pneg %p403
      // Predicated region
      $region61: #{tpu_custom_call.1} parent=5 // pred_check
        _
      $region62: #{tpu_custom_call.1} parent=5 // pred_check_branch
        %406 = sbr.rel (%p403) target = $region64
      $region63: #{tpu_custom_call.1} parent=5 // pred_region
        %s407 = ssub.s32 %s24, 1
        %s408 = sand.u32 %s51, 1
        %s409 = scalar_lea.sflag [#allocation4], %s408
        %s410 = sand.u32 %s51, 1
        %s411 = smul.addr %s410, 128
        %s412 = scalar_lea.vmem [#allocation3], %s411
        // Predicated region
        $region65: #{tpu_custom_call.1} parent=63 // pred_check
          %p413 = pneg %p64
        $region66: #{tpu_custom_call.1} parent=63 // pred_check_branch
          %415 = sbr.rel (%p413) target = $region68
        $region67: #{tpu_custom_call.1} parent=63 // pred_region
          %416 = dma.done %s409, 2048
        $region68: #{tpu_custom_call.1} parent=63 // pred_fallthru
          _
        // Predicated region
        $region69: #{tpu_custom_call.1} parent=63 // pred_check
          %p417 = pneg %p176
        $region70: #{tpu_custom_call.1} parent=63 // pred_check_branch
          %419 = sbr.rel (%p417) target = $region72
        $region71: #{tpu_custom_call.1} parent=63 // pred_region
          %420 = dma.done [#allocation7], 2304
        $region72: #{tpu_custom_call.1} parent=63 // pred_fallthru
          _
        %s421 = sand.u32 %s51, 1
        %s422 = scalar_lea.sflag [#allocation4], %s421
        %s423 = sand.u32 %s51, 1
        %s424 = smul.addr %s423, 128
        %s425 = scalar_lea.vmem [#allocation3], %s424
        %p426 = pneg %p64
        %p427 = pneg %p61
        %p428 = scmp.lt.s32.totalorder %s33, 1
        %s429 = scalar_select %p428, %s33, 1
        %p430 = scmp.lt.s32.totalorder %s34, 0
        %s431 = scalar_select %p430, %s34, 0
        %s432 = smul.addr %s431, 4
        %s433 = smul.addr %s429, 4
        %s434 = sadd.s32 %s432, %s433
        %s435 = smul.addr %s434, 4
        %s436 = scalar_lea.vmem %s1, %s435
        %p437 = pneg %p92
        %p438 = pneg %p89
        %p439 = pneg %p113
        %p440 = pneg %p110
        %p441 = pneg %p134
        %p442 = pneg %p131
        %p443 = pneg %p155
        %p444 = pneg %p152
        %p445 = pneg %p176
        %p446 = pneg %p173
        %p447 = pneg %p197
        %p448 = pneg %p194
        %p449 = pneg %p218
        %p450 = pneg %p215
        %p451 = pneg %p239
        %p452 = pneg %p236
        %p453 = pneg %p260
        %p454 = pneg %p257
        %p455 = pneg %p281
        %p456 = pneg %p278
        %p457 = pneg %p309
        %p458 = pneg %p306
        %s459 = sand.u32 %s296, 1
        %s460 = scalar_lea.sflag [#allocation5], %s459
        %s461 = sand.u32 %s296, 1
        %s462 = smul.addr %s461, 128
        %s463 = scalar_lea.vmem [#allocation8], %s462
        %s464 = smul.u32 16, %s34
        %p465 = scmp.lt.s32.totalorder %s33, 1
        %s466 = scalar_select %p465, %s33, 1
        %p467 = scmp.lt.s32.totalorder %s34, 0
        %s468 = scalar_select %p467, %s34, 0
        %s469 = smul.addr %s468, 4
        %s470 = smul.addr %s466, 4
        %s471 = sadd.s32 %s469, %s470
        %s472 = smul.addr %s471, 4
        %s473 = scalar_lea.vmem %s1, %s472
        %s474 = smul.u32 16, %s34
        %s476 = smul.u32 %s34, 16
        %vm477 = vcmask 253952
        %vm478 = vsmask.f32 256
        %vm479 = vmand %vm477, %vm478
        %v480 = vld [vmem:[#allocation2] sm:$0x1]
        %v481 = vsel %vm479, 0, %v480
        %482 = vst [vmem:[#allocation2] sm:$0x1] %v481
        %v483 = vld [vmem:[#allocation2 + $0xc] sm:$0x1]
        %v484 = vsel %vm479, 0, %v483
        %485 = vst [vmem:[#allocation2 + $0xc] sm:$0x1] %v484
        %v486 = vld [vmem:[#allocation2 + $0x18] sm:$0x1]
        %v487 = vsel %vm479, 0, %v486
        %488 = vst [vmem:[#allocation2 + $0x18] sm:$0x1] %v487
        %v489 = vld [vmem:[#allocation2 + $0x24] sm:$0x1]
        %v490 = vsel %vm479, 0, %v489
        %491 = vst [vmem:[#allocation2 + $0x24] sm:$0x1] %v490
        %v492 = vld [vmem:[#allocation2 + $0x30] sm:$0x1]
        %v493 = vsel %vm479, 0, %v492
        %494 = vst [vmem:[#allocation2 + $0x30] sm:$0x1] %v493
        %v495 = vld [vmem:[#allocation2 + $0x3c] sm:$0x1]
        %v496 = vsel %vm479, 0, %v495
        %497 = vst [vmem:[#allocation2 + $0x3c] sm:$0x1] %v496
        %v498 = vld [vmem:[#allocation2 + $0x48] sm:$0x1]
        %v499 = vsel %vm479, 0, %v498
        %500 = vst [vmem:[#allocation2 + $0x48] sm:$0x1] %v499
        %v501 = vld [vmem:[#allocation2 + $0x54] sm:$0x1]
        %v502 = vsel %vm479, 0, %v501
        %503 = vst [vmem:[#allocation2 + $0x54] sm:$0x1] %v502
        %v504 = vld [vmem:[#allocation2 + $0x60] sm:$0x1]
        %v505 = vsel %vm479, 0, %v504
        %506 = vst [vmem:[#allocation2 + $0x60] sm:$0x1] %v505
        %v507 = vld [vmem:[#allocation2 + $0x6c] sm:$0x1]
        %v508 = vsel %vm479, 0, %v507
        %509 = vst [vmem:[#allocation2 + $0x6c] sm:$0x1] %v508
        %v510 = vld [vmem:[#allocation2 + $0x78] sm:$0x1]
        %v511 = vsel %vm479, 0, %v510
        %512 = vst [vmem:[#allocation2 + $0x78] sm:$0x1] %v511
        %v513 = vld [vmem:[#allocation2 + $0x84] sm:$0x1]
        %v514 = vsel %vm479, 0, %v513
        %515 = vst [vmem:[#allocation2 + $0x84] sm:$0x1] %v514
        %v516 = vld [vmem:[#allocation2 + $0x90] sm:$0x1]
        %v517 = vsel %vm479, 0, %v516
        %518 = vst [vmem:[#allocation2 + $0x90] sm:$0x1] %v517
        %v519 = vld [vmem:[#allocation2 + $0x9c] sm:$0x1]
        %v520 = vsel %vm479, 0, %v519
        %521 = vst [vmem:[#allocation2 + $0x9c] sm:$0x1] %v520
        %v522 = vld [vmem:[#allocation2 + $0xa8] sm:$0x1]
        %v523 = vsel %vm479, 0, %v522
        %524 = vst [vmem:[#allocation2 + $0xa8] sm:$0x1] %v523
        %v525 = vld [vmem:[#allocation2 + $0xb4] sm:$0x1]
        %v526 = vsel %vm479, 0, %v525
        %527 = vst [vmem:[#allocation2 + $0xb4] sm:$0x1] %v526
        %v528 = vld [vmem:[#allocation2 + $0xc0] sm:$0x1]
        %v529 = vsel %vm479, 0, %v528
        %530 = vst [vmem:[#allocation2 + $0xc0] sm:$0x1] %v529
        %v531 = vld [vmem:[#allocation2 + $0xcc] sm:$0x1]
        %v532 = vsel %vm479, 0, %v531
        %533 = vst [vmem:[#allocation2 + $0xcc] sm:$0x1] %v532
        %vm534 = vsmask.f32 7938
        %vm535 = vmand %vm477, %vm534
        %v536 = vld [vmem:[#allocation2 + $0x8] sm:$0x1]
        %v537 = vsel %vm535, 0, %v536
        %538 = vst [vmem:[#allocation2 + $0x8] sm:$0x1] %v537
        %v539 = vld [vmem:[#allocation2 + $0x14] sm:$0x1]
        %v540 = vsel %vm535, 0, %v539
        %541 = vst [vmem:[#allocation2 + $0x14] sm:$0x1] %v540
        %v542 = vld [vmem:[#allocation2 + $0x20] sm:$0x1]
        %v543 = vsel %vm535, 0, %v542
        %544 = vst [vmem:[#allocation2 + $0x20] sm:$0x1] %v543
        %v545 = vld [vmem:[#allocation2 + $0x2c] sm:$0x1]
        %v546 = vsel %vm535, 0, %v545
        %547 = vst [vmem:[#allocation2 + $0x2c] sm:$0x1] %v546
        %v548 = vld [vmem:[#allocation2 + $0x38] sm:$0x1]
        %v549 = vsel %vm535, 0, %v548
        %550 = vst [vmem:[#allocation2 + $0x38] sm:$0x1] %v549
        %v551 = vld [vmem:[#allocation2 + $0x44] sm:$0x1]
        %v552 = vsel %vm535, 0, %v551
        %553 = vst [vmem:[#allocation2 + $0x44] sm:$0x1] %v552
        %v554 = vld [vmem:[#allocation2 + $0x50] sm:$0x1]
        %v555 = vsel %vm535, 0, %v554
        %556 = vst [vmem:[#allocation2 + $0x50] sm:$0x1] %v555
        %v557 = vld [vmem:[#allocation2 + $0x5c] sm:$0x1]
        %v558 = vsel %vm535, 0, %v557
        %559 = vst [vmem:[#allocation2 + $0x5c] sm:$0x1] %v558
        %v560 = vld [vmem:[#allocation2 + $0x68] sm:$0x1]
        %v561 = vsel %vm535, 0, %v560
        %562 = vst [vmem:[#allocation2 + $0x68] sm:$0x1] %v561
        %v563 = vld [vmem:[#allocation2 + $0x74] sm:$0x1]
        %v564 = vsel %vm535, 0, %v563
        %565 = vst [vmem:[#allocation2 + $0x74] sm:$0x1] %v564
        %v566 = vld [vmem:[#allocation2 + $0x80] sm:$0x1]
        %v567 = vsel %vm535, 0, %v566
        %568 = vst [vmem:[#allocation2 + $0x80] sm:$0x1] %v567
        %v569 = vld [vmem:[#allocation2 + $0x8c] sm:$0x1]
        %v570 = vsel %vm535, 0, %v569
        %571 = vst [vmem:[#allocation2 + $0x8c] sm:$0x1] %v570
        %v572 = vld [vmem:[#allocation2 + $0x98] sm:$0x1]
        %v573 = vsel %vm535, 0, %v572
        %574 = vst [vmem:[#allocation2 + $0x98] sm:$0x1] %v573
        %v575 = vld [vmem:[#allocation2 + $0xa4] sm:$0x1]
        %v576 = vsel %vm535, 0, %v575
        %577 = vst [vmem:[#allocation2 + $0xa4] sm:$0x1] %v576
        %v578 = vld [vmem:[#allocation2 + $0xb0] sm:$0x1]
        %v579 = vsel %vm535, 0, %v578
        %580 = vst [vmem:[#allocation2 + $0xb0] sm:$0x1] %v579
        %v581 = vld [vmem:[#allocation2 + $0xbc] sm:$0x1]
        %v582 = vsel %vm535, 0, %v581
        %583 = vst [vmem:[#allocation2 + $0xbc] sm:$0x1] %v582
        %v584 = vld [vmem:[#allocation2 + $0xc8] sm:$0x1]
        %v585 = vsel %vm535, 0, %v584
        %586 = vst [vmem:[#allocation2 + $0xc8] sm:$0x1] %v585
        %v587 = vld [vmem:[#allocation2 + $0xd4] sm:$0x1]
        %v588 = vsel %vm535, 0, %v587
        %589 = vst [vmem:[#allocation2 + $0xd4] sm:$0x1] %v588
        %v590 = vld [vmem:[%s412] sm:$0xf]
        %v591 = vld [vmem:[%s412 + $0x4] sm:$0xf]
        %v592 = vld [vmem:[%s412 + $0x8] sm:$0xf]
        %v593 = vld [vmem:[%s412 + $0xc] sm:$0xf]
        %v594 = vld [vmem:[%s412 + $0x10] sm:$0xf]
        %v595 = vld [vmem:[%s412 + $0x14] sm:$0xf]
        %v596 = vld [vmem:[%s412 + $0x18] sm:$0xf]
        %v597 = vld [vmem:[%s412 + $0x1c] sm:$0xf]
        %v598 = vld [vmem:[%s412 + $0x20] sm:$0xf]
        %v599 = vld [vmem:[%s412 + $0x24] sm:$0xf]
        %v600 = vld [vmem:[%s412 + $0x28] sm:$0xf]
        %v601 = vld [vmem:[%s412 + $0x2c] sm:$0xf]
        %v602 = vld [vmem:[%s412 + $0x30] sm:$0xf]
        %v603 = vld [vmem:[%s412 + $0x34] sm:$0xf]
        %v604 = vld [vmem:[%s412 + $0x38] sm:$0xf]
        %v605 = vld [vmem:[%s412 + $0x3c] sm:$0xf]
        %v606 = vld [vmem:[%s412 + $0x40] sm:$0xf]
        %v607 = vld [vmem:[%s412 + $0x44] sm:$0xf]
        %v608 = vld [vmem:[%s412 + $0x48] sm:$0xf]
        %v609 = vld [vmem:[%s412 + $0x4c] sm:$0xf]
        %v610 = vld [vmem:[%s412 + $0x50] sm:$0xf]
        %v611 = vld [vmem:[%s412 + $0x54] sm:$0xf]
        %v612 = vld [vmem:[%s412 + $0x58] sm:$0xf]
        %v613 = vld [vmem:[%s412 + $0x5c] sm:$0xf]
        %v614 = vld [vmem:[%s412 + $0x60] sm:$0xf]
        %v615 = vld [vmem:[%s412 + $0x64] sm:$0xf]
        %v616 = vld [vmem:[%s412 + $0x68] sm:$0xf]
        %v617 = vld [vmem:[%s412 + $0x6c] sm:$0xf]
        %v618 = vld [vmem:[%s412 + $0x70] sm:$0xf]
        %v619 = vld [vmem:[%s412 + $0x74] sm:$0xf]
        %v620 = vld [vmem:[%s412 + $0x78] sm:$0xf]
        %v621 = vld [vmem:[%s412 + $0x7c] sm:$0xf]
        %v622 = vld [vmem:[%s2] sm:$0xf]
        %v623 = vld [vmem:[%s2 + $0x4] sm:$0xf]
        %v624 = vld [vmem:[%s2 + $0x8] sm:$0xf]
        %v625 = vld [vmem:[%s2 + $0xc] sm:$0xf]
        %v626 = vld [vmem:[%s2 + $0x10] sm:$0xf]
        %v627 = vld [vmem:[%s2 + $0x14] sm:$0xf]
        %v628 = vld [vmem:[%s2 + $0x18] sm:$0xf]
        %v629 = vld [vmem:[%s2 + $0x1c] sm:$0xf]
        %v630 = vld [vmem:[%s2 + $0x20] sm:$0xf]
        %v631 = vld [vmem:[%s2 + $0x24] sm:$0xf]
        %v632 = vld [vmem:[%s2 + $0x28] sm:$0xf]
        %v633 = vld [vmem:[%s2 + $0x2c] sm:$0xf]
        %v634 = vld [vmem:[%s2 + $0x30] sm:$0xf]
        %v635 = vld [vmem:[%s2 + $0x34] sm:$0xf]
        %v636 = vld [vmem:[%s2 + $0x38] sm:$0xf]
        %v637 = vld [vmem:[%s2 + $0x3c] sm:$0xf]
        %v670 = vunpack.c.l.b16 %v590
        %v671 = vunpack.c.l.b16 %v591
        %v672 = vunpack.c.l.b16 %v592
        %v673 = vunpack.c.l.b16 %v593
        %v674 = vunpack.c.l.b16 %v594
        %v675 = vunpack.c.l.b16 %v595
        %v676 = vunpack.c.l.b16 %v596
        %v677 = vunpack.c.l.b16 %v597
        %v678 = vunpack.c.l.b16 %v598
        %v679 = vunpack.c.l.b16 %v599
        %v680 = vunpack.c.l.b16 %v600
        %v681 = vunpack.c.l.b16 %v601
        %v682 = vunpack.c.l.b16 %v602
        %v683 = vunpack.c.l.b16 %v603
        %v684 = vunpack.c.l.b16 %v604
        %v685 = vunpack.c.l.b16 %v605
        %v686 = vunpack.c.l.b16 %v606
        %v687 = vunpack.c.l.b16 %v607
        %v688 = vunpack.c.l.b16 %v608
        %v689 = vunpack.c.l.b16 %v609
        %v690 = vunpack.c.l.b16 %v610
        %v691 = vunpack.c.l.b16 %v611
        %v692 = vunpack.c.l.b16 %v612
        %v693 = vunpack.c.l.b16 %v613
        %v694 = vunpack.c.l.b16 %v614
        %v695 = vunpack.c.l.b16 %v615
        %v696 = vunpack.c.l.b16 %v616
        %v697 = vunpack.c.l.b16 %v617
        %v698 = vunpack.c.l.b16 %v618
        %v699 = vunpack.c.l.b16 %v619
        %v700 = vunpack.c.l.b16 %v620
        %v701 = vunpack.c.l.b16 %v621
        %v702 = vpack.c.b16 %v671, %v670
        %v703 = vpack.c.b16 %v673, %v672
        %v704 = vpack.c.b16 %v675, %v674
        %v705 = vpack.c.b16 %v677, %v676
        %v706 = vpack.c.b16 %v679, %v678
        %v707 = vpack.c.b16 %v681, %v680
        %v708 = vpack.c.b16 %v683, %v682
        %v709 = vpack.c.b16 %v685, %v684
        %v710 = vpack.c.b16 %v687, %v686
        %v711 = vpack.c.b16 %v689, %v688
        %v712 = vpack.c.b16 %v691, %v690
        %v713 = vpack.c.b16 %v693, %v692
        %v714 = vpack.c.b16 %v695, %v694
        %v715 = vpack.c.b16 %v697, %v696
        %v716 = vpack.c.b16 %v699, %v698
        %v717 = vpack.c.b16 %v701, %v700
        %v750 = vunpack.c.l.b16 %v622
        %v751 = vunpack.c.l.b16 %v623
        %v752 = vunpack.c.l.b16 %v624
        %v753 = vunpack.c.l.b16 %v625
        %v754 = vunpack.c.l.b16 %v626
        %v755 = vunpack.c.l.b16 %v627
        %v756 = vunpack.c.l.b16 %v628
        %v757 = vunpack.c.l.b16 %v629
        %v758 = vunpack.c.l.b16 %v630
        %v759 = vunpack.c.l.b16 %v631
        %v760 = vunpack.c.l.b16 %v632
        %v761 = vunpack.c.l.b16 %v633
        %v762 = vunpack.c.l.b16 %v634
        %v763 = vunpack.c.l.b16 %v635
        %v764 = vunpack.c.l.b16 %v636
        %v765 = vunpack.c.l.b16 %v637
        %v766 = vpack.c.b16 %v751, %v750
        %v767 = vpack.c.b16 %v753, %v752
        %v768 = vpack.c.b16 %v755, %v754
        %v769 = vpack.c.b16 %v757, %v756
        %v770 = vpack.c.b16 %v759, %v758
        %v771 = vpack.c.b16 %v761, %v760
        %v772 = vpack.c.b16 %v763, %v762
        %v773 = vpack.c.b16 %v765, %v764
        %782 = vmatprep.subr.bf16.mxu0 0
        %783 = vmatpush1.bf16.msra.mxu0 %v766
        %784 = vmatprep.subr.bf16.mxu0 0
        %785 = vmatpush1.bf16.msra.mxu0 %v767
        %786 = vmatprep.subr.bf16.mxu0 0
        %787 = vmatpush1.bf16.msra.mxu0 %v768
        %788 = vmatprep.subr.bf16.mxu0 0
        %789 = vmatpush1.bf16.msra.mxu0 %v769
        %790 = vmatprep.subr.bf16.mxu0 0
        %791 = vmatpush1.bf16.msra.mxu0 %v770
        %792 = vmatprep.subr.bf16.mxu0 0
        %793 = vmatpush1.bf16.msra.mxu0 %v771
        %794 = vmatprep.subr.bf16.mxu0 0
        %795 = vmatpush1.bf16.msra.mxu0 %v772
        %796 = vmatprep.subr.bf16.mxu0 0
        %797 = vmatpush1.bf16.msra.mxu0 %v773
        %798 = vmatprep.subr.bf16.mxu0 0
        %799 = vmatpush1.bf16.msra.mxu0 0
        %800 = vmatprep.subr.bf16.mxu0 0
        %801 = vmatpush1.bf16.msra.mxu0 0
        %802 = vmatprep.subr.bf16.mxu0 0
        %803 = vmatpush1.bf16.msra.mxu0 0
        %804 = vmatprep.subr.bf16.mxu0 0
        %805 = vmatpush1.bf16.msra.mxu0 0
        %806 = vmatprep.subr.bf16.mxu0 0
        %807 = vmatpush1.bf16.msra.mxu0 0
        %808 = vmatprep.subr.bf16.mxu0 0
        %809 = vmatpush1.bf16.msra.mxu0 0
        %810 = vmatprep.subr.bf16.mxu0 0
        %811 = vmatpush1.bf16.msra.mxu0 0
        %812 = vmatprep.subr.bf16.mxu0 0
        %813 = vmatpush1.bf16.msra.mxu0 0
        %814 = vmatprep.mubr.bf16.mxu0 0
        %815 = vmatmul.mubr.bf16.gmra.mrb[0].mxu0 %v702
        %v816 = vpop.f32.mrb[0].mxu0
        %v817 = vadd.f32 0.0, %v816
        %v818 = vpop.f32.mrb[0].mxu0
        %v819 = vpop.f32.mrb[0].mxu0
        %v820 = vadd.f32 0.0, %v819
        %v821 = vpop.f32.mrb[0].mxu0
        %822 = vmatprep.mubr.bf16.mxu0 0
        %823 = vmatmul.mubr.bf16.gmra.mrb[0].mxu0 %v703
        %v824 = vpop.f32.mrb[0].mxu0
        %v825 = vadd.f32 0.0, %v824
        %v826 = vpop.f32.mrb[0].mxu0
        %v827 = vpop.f32.mrb[0].mxu0
        %v828 = vadd.f32 0.0, %v827
        %v829 = vpop.f32.mrb[0].mxu0
        %830 = vmatprep.mubr.bf16.mxu0 0
        %831 = vmatmul.mubr.bf16.gmra.mrb[0].mxu0 %v704
        %v832 = vpop.f32.mrb[0].mxu0
        %v833 = vadd.f32 0.0, %v832
        %v834 = vpop.f32.mrb[0].mxu0
        %v835 = vpop.f32.mrb[0].mxu0
        %v836 = vadd.f32 0.0, %v835
        %v837 = vpop.f32.mrb[0].mxu0
        %838 = vmatprep.mubr.bf16.mxu0 0
        %839 = vmatmul.mubr.bf16.gmra.mrb[0].mxu0 %v705
        %v840 = vpop.f32.mrb[0].mxu0
        %v841 = vadd.f32 0.0, %v840
        %v842 = vpop.f32.mrb[0].mxu0
        %v843 = vpop.f32.mrb[0].mxu0
        %v844 = vadd.f32 0.0, %v843
        %v845 = vpop.f32.mrb[0].mxu0
        %846 = vmatprep.mubr.bf16.mxu0 0
        %847 = vmatmul.mubr.bf16.gmra.mrb[0].mxu0 %v706
        %v848 = vpop.f32.mrb[0].mxu0
        %v849 = vadd.f32 0.0, %v848
        %v850 = vpop.f32.mrb[0].mxu0
        %v851 = vpop.f32.mrb[0].mxu0
        %v852 = vadd.f32 0.0, %v851
        %v853 = vpop.f32.mrb[0].mxu0
        %854 = vmatprep.mubr.bf16.mxu0 0
        %855 = vmatmul.mubr.bf16.gmra.mrb[0].mxu0 %v707
        %v856 = vpop.f32.mrb[0].mxu0
        %v857 = vadd.f32 0.0, %v856
        %v858 = vpop.f32.mrb[0].mxu0
        %v859 = vpop.f32.mrb[0].mxu0
        %v860 = vadd.f32 0.0, %v859
        %v861 = vpop.f32.mrb[0].mxu0
        %862 = vmatprep.mubr.bf16.mxu0 0
        %863 = vmatmul.mubr.bf16.gmra.mrb[0].mxu0 %v708
        %v864 = vpop.f32.mrb[0].mxu0
        %v865 = vadd.f32 0.0, %v864
        %v866 = vpop.f32.mrb[0].mxu0
        %v867 = vpop.f32.mrb[0].mxu0
        %v868 = vadd.f32 0.0, %v867
        %v869 = vpop.f32.mrb[0].mxu0
        %870 = vmatprep.mubr.bf16.mxu0 0
        %871 = vmatmul.mubr.bf16.gmra.mrb[0].mxu0 %v709
        %v872 = vpop.f32.mrb[0].mxu0
        %v873 = vadd.f32 0.0, %v872
        %v874 = vpop.f32.mrb[0].mxu0
        %v875 = vpop.f32.mrb[0].mxu0
        %v876 = vadd.f32 0.0, %v875
        %v877 = vpop.f32.mrb[0].mxu0
        %878 = vmatprep.mubr.bf16.mxu0 0
        %879 = vmatmul.mubr.bf16.gmra.mrb[0].mxu0 %v710
        %v880 = vpop.f32.mrb[0].mxu0
        %v881 = vadd.f32 0.0, %v880
        %v882 = vpop.f32.mrb[0].mxu0
        %v883 = vpop.f32.mrb[0].mxu0
        %v884 = vadd.f32 0.0, %v883
        %v885 = vpop.f32.mrb[0].mxu0
        %886 = vmatprep.mubr.bf16.mxu0 0
        %887 = vmatmul.mubr.bf16.gmra.mrb[0].mxu0 %v711
        %v888 = vpop.f32.mrb[0].mxu0
        %v889 = vadd.f32 0.0, %v888
        %v890 = vpop.f32.mrb[0].mxu0
        %v891 = vpop.f32.mrb[0].mxu0
        %v892 = vadd.f32 0.0, %v891
        %v893 = vpop.f32.mrb[0].mxu0
        %894 = vmatprep.mubr.bf16.mxu0 0
        %895 = vmatmul.mubr.bf16.gmra.mrb[0].mxu0 %v712
        %v896 = vpop.f32.mrb[0].mxu0
        %v897 = vadd.f32 0.0, %v896
        %v898 = vpop.f32.mrb[0].mxu0
        %v899 = vpop.f32.mrb[0].mxu0
        %v900 = vadd.f32 0.0, %v899
        %v901 = vpop.f32.mrb[0].mxu0
        %902 = vmatprep.mubr.bf16.mxu0 0
        %903 = vmatmul.mubr.bf16.gmra.mrb[0].mxu0 %v713
        %v904 = vpop.f32.mrb[0].mxu0
        %v905 = vadd.f32 0.0, %v904
        %v906 = vpop.f32.mrb[0].mxu0
        %v907 = vpop.f32.mrb[0].mxu0
        %v908 = vadd.f32 0.0, %v907
        %v909 = vpop.f32.mrb[0].mxu0
        %910 = vmatprep.mubr.bf16.mxu0 0
        %911 = vmatmul.mubr.bf16.gmra.mrb[0].mxu0 %v714
        %v912 = vpop.f32.mrb[0].mxu0
        %v913 = vadd.f32 0.0, %v912
        %v914 = vpop.f32.mrb[0].mxu0
        %v915 = vpop.f32.mrb[0].mxu0
        %v916 = vadd.f32 0.0, %v915
        %v917 = vpop.f32.mrb[0].mxu0
        %918 = vmatprep.mubr.bf16.mxu0 0
        %919 = vmatmul.mubr.bf16.gmra.mrb[0].mxu0 %v715
        %v920 = vpop.f32.mrb[0].mxu0
        %v921 = vadd.f32 0.0, %v920
        %v922 = vpop.f32.mrb[0].mxu0
        %v923 = vpop.f32.mrb[0].mxu0
        %v924 = vadd.f32 0.0, %v923
        %v925 = vpop.f32.mrb[0].mxu0
        %926 = vmatprep.mubr.bf16.mxu0 0
        %927 = vmatmul.mubr.bf16.gmra.mrb[0].mxu0 %v716
        %v928 = vpop.f32.mrb[0].mxu0
        %v929 = vadd.f32 0.0, %v928
        %v930 = vpop.f32.mrb[0].mxu0
        %v931 = vpop.f32.mrb[0].mxu0
        %v932 = vadd.f32 0.0, %v931
        %v933 = vpop.f32.mrb[0].mxu0
        %934 = vmatprep.mubr.bf16.mxu0 0
        %935 = vmatmul.mubr.bf16.gmra.mrb[0].mxu0 %v717
        %v936 = vpop.f32.mrb[0].mxu0
        %v937 = vadd.f32 0.0, %v936
        %v938 = vpop.f32.mrb[0].mxu0
        %v939 = vpop.f32.mrb[0].mxu0
        %v940 = vadd.f32 0.0, %v939
        %v941 = vpop.f32.mrb[0].mxu0
        %942 = vdwg.mxu0
        %v943 = vld [vmem:[%s3] sm:$0x1]
        %v945 = vlaneseq
        %v946 = vshrl.u32 %v945, 7
        %v947 = vsub.s32 0, %v946
        %v948 = vrot.slane %v943, %v947
        %v950 = vmul.f32 %v817, %v948
        %v951 = vmul.f32 %v820, %v948
        %v952 = vmul.f32 %v825, %v948
        %v953 = vmul.f32 %v828, %v948
        %v954 = vmul.f32 %v833, %v948
        %v955 = vmul.f32 %v836, %v948
        %v956 = vmul.f32 %v841, %v948
        %v957 = vmul.f32 %v844, %v948
        %v958 = vmul.f32 %v849, %v948
        %v959 = vmul.f32 %v852, %v948
        %v960 = vmul.f32 %v857, %v948
        %v961 = vmul.f32 %v860, %v948
        %v962 = vmul.f32 %v865, %v948
        %v963 = vmul.f32 %v868, %v948
        %v964 = vmul.f32 %v873, %v948
        %v965 = vmul.f32 %v876, %v948
        %v966 = vmul.f32 %v881, %v948
        %v967 = vmul.f32 %v884, %v948
        %v968 = vmul.f32 %v889, %v948
        %v969 = vmul.f32 %v892, %v948
        %v970 = vmul.f32 %v897, %v948
        %v971 = vmul.f32 %v900, %v948
        %v972 = vmul.f32 %v905, %v948
        %v973 = vmul.f32 %v908, %v948
        %v974 = vmul.f32 %v913, %v948
        %v975 = vmul.f32 %v916, %v948
        %v976 = vmul.f32 %v921, %v948
        %v977 = vmul.f32 %v924, %v948
        %v978 = vmul.f32 %v929, %v948
        %v979 = vmul.f32 %v932, %v948
        %v980 = vmul.f32 %v937, %v948
        %v981 = vmul.f32 %v940, %v948
        %v982 = vld [vmem:[%s4] sm:$0x1]
        %v984 = vlaneseq
        %v985 = vshrl.u32 %v984, 7
        %v986 = vsub.s32 0, %v985
        %v987 = vrot.slane %v982, %v986
        %v989 = vadd.f32 %v950, %v987
        %v990 = vadd.f32 %v951, %v987
        %v991 = vadd.f32 %v952, %v987
        %v992 = vadd.f32 %v953, %v987
        %v993 = vadd.f32 %v954, %v987
        %v994 = vadd.f32 %v955, %v987
        %v995 = vadd.f32 %v956, %v987
        %v996 = vadd.f32 %v957, %v987
        %v997 = vadd.f32 %v958, %v987
        %v998 = vadd.f32 %v959, %v987
        %v999 = vadd.f32 %v960, %v987
        %v1000 = vadd.f32 %v961, %v987
        %v1001 = vadd.f32 %v962, %v987
        %v1002 = vadd.f32 %v963, %v987
        %v1003 = vadd.f32 %v964, %v987
        %v1004 = vadd.f32 %v965, %v987
        %v1005 = vadd.f32 %v966, %v987
        %v1006 = vadd.f32 %v967, %v987
        %v1007 = vadd.f32 %v968, %v987
        %v1008 = vadd.f32 %v969, %v987
        %v1009 = vadd.f32 %v970, %v987
        %v1010 = vadd.f32 %v971, %v987
        %v1011 = vadd.f32 %v972, %v987
        %v1012 = vadd.f32 %v973, %v987
        %v1013 = vadd.f32 %v974, %v987
        %v1014 = vadd.f32 %v975, %v987
        %v1015 = vadd.f32 %v976, %v987
        %v1016 = vadd.f32 %v977, %v987
        %v1017 = vadd.f32 %v978, %v987
        %v1018 = vadd.f32 %v979, %v987
        %v1019 = vadd.f32 %v980, %v987
        %v1020 = vadd.f32 %v981, %v987
        %v1021 = vmax.f32 %v989, 0.0
        %v1022 = vmax.f32 %v990, 0.0
        %v1023 = vmax.f32 %v991, 0.0
        %v1024 = vmax.f32 %v992, 0.0
        %v1025 = vmax.f32 %v993, 0.0
        %v1026 = vmax.f32 %v994, 0.0
        %v1027 = vmax.f32 %v995, 0.0
        %v1028 = vmax.f32 %v996, 0.0
        %v1029 = vmax.f32 %v997, 0.0
        %v1030 = vmax.f32 %v998, 0.0
        %v1031 = vmax.f32 %v999, 0.0
        %v1032 = vmax.f32 %v1000, 0.0
        %v1033 = vmax.f32 %v1001, 0.0
        %v1034 = vmax.f32 %v1002, 0.0
        %v1035 = vmax.f32 %v1003, 0.0
        %v1036 = vmax.f32 %v1004, 0.0
        %v1037 = vmax.f32 %v1005, 0.0
        %v1038 = vmax.f32 %v1006, 0.0
        %v1039 = vmax.f32 %v1007, 0.0
        %v1040 = vmax.f32 %v1008, 0.0
        %v1041 = vmax.f32 %v1009, 0.0
        %v1042 = vmax.f32 %v1010, 0.0
        %v1043 = vmax.f32 %v1011, 0.0
        %v1044 = vmax.f32 %v1012, 0.0
        %v1045 = vmax.f32 %v1013, 0.0
        %v1046 = vmax.f32 %v1014, 0.0
        %v1047 = vmax.f32 %v1015, 0.0
        %v1048 = vmax.f32 %v1016, 0.0
        %v1049 = vmax.f32 %v1017, 0.0
        %v1050 = vmax.f32 %v1018, 0.0
        %v1051 = vmax.f32 %v1019, 0.0
        %v1052 = vmax.f32 %v1020, 0.0
        %v1053 = vpack.c.bf16 %v1022, %v1021
        %v1054 = vpack.c.bf16 %v1024, %v1023
        %v1055 = vpack.c.bf16 %v1026, %v1025
        %v1056 = vpack.c.bf16 %v1028, %v1027
        %v1057 = vpack.c.bf16 %v1030, %v1029
        %v1058 = vpack.c.bf16 %v1032, %v1031
        %v1059 = vpack.c.bf16 %v1034, %v1033
        %v1060 = vpack.c.bf16 %v1036, %v1035
        %v1061 = vpack.c.bf16 %v1038, %v1037
        %v1062 = vpack.c.bf16 %v1040, %v1039
        %v1063 = vpack.c.bf16 %v1042, %v1041
        %v1064 = vpack.c.bf16 %v1044, %v1043
        %v1065 = vpack.c.bf16 %v1046, %v1045
        %v1066 = vpack.c.bf16 %v1048, %v1047
        %v1067 = vpack.c.bf16 %v1050, %v1049
        %v1068 = vpack.c.bf16 %v1052, %v1051
        %v1085 = vunpack.c.l.b16 %v1053
        %v1086 = vunpack.c.h.b16 %v1053
        %v1087 = vunpack.c.l.b16 %v1054
        %v1088 = vunpack.c.h.b16 %v1054
        %v1089 = vunpack.c.l.b16 %v1055
        %v1090 = vunpack.c.h.b16 %v1055
        %v1091 = vunpack.c.l.b16 %v1056
        %v1092 = vunpack.c.h.b16 %v1056
        %v1093 = vunpack.c.l.b16 %v1057
        %v1094 = vunpack.c.h.b16 %v1057
        %v1095 = vunpack.c.l.b16 %v1058
        %v1096 = vunpack.c.h.b16 %v1058
        %v1097 = vunpack.c.l.b16 %v1059
        %v1098 = vunpack.c.h.b16 %v1059
        %v1099 = vunpack.c.l.b16 %v1060
        %v1100 = vunpack.c.h.b16 %v1060
        %v1101 = vunpack.c.l.b16 %v1061
        %v1102 = vunpack.c.h.b16 %v1061
        %v1103 = vunpack.c.l.b16 %v1062
        %v1104 = vunpack.c.h.b16 %v1062
        %v1105 = vunpack.c.l.b16 %v1063
        %v1106 = vunpack.c.h.b16 %v1063
        %v1107 = vunpack.c.l.b16 %v1064
        %v1108 = vunpack.c.h.b16 %v1064
        %v1109 = vunpack.c.l.b16 %v1065
        %v1110 = vunpack.c.h.b16 %v1065
        %v1111 = vunpack.c.l.b16 %v1066
        %v1112 = vunpack.c.h.b16 %v1066
        %v1113 = vunpack.c.l.b16 %v1067
        %v1114 = vunpack.c.h.b16 %v1067
        %v1115 = vunpack.c.l.b16 %v1068
        %v1116 = vunpack.c.h.b16 %v1068
        %v1117 = vpack.c.b16 %v1085, %v1085
        %v1118 = vpack.c.b16 %v1086, %v1086
        %v1119 = vpack.c.b16 %v1087, %v1087
        %v1120 = vpack.c.b16 %v1088, %v1088
        %v1121 = vpack.c.b16 %v1089, %v1089
        %v1122 = vpack.c.b16 %v1090, %v1090
        %v1123 = vpack.c.b16 %v1091, %v1091
        %v1124 = vpack.c.b16 %v1092, %v1092
        %v1125 = vpack.c.b16 %v1093, %v1093
        %v1126 = vpack.c.b16 %v1094, %v1094
        %v1127 = vpack.c.b16 %v1095, %v1095
        %v1128 = vpack.c.b16 %v1096, %v1096
        %v1129 = vpack.c.b16 %v1097, %v1097
        %v1130 = vpack.c.b16 %v1098, %v1098
        %v1131 = vpack.c.b16 %v1099, %v1099
        %v1132 = vpack.c.b16 %v1100, %v1100
        %v1133 = vpack.c.b16 %v1101, %v1101
        %v1134 = vpack.c.b16 %v1102, %v1102
        %v1135 = vpack.c.b16 %v1103, %v1103
        %v1136 = vpack.c.b16 %v1104, %v1104
        %v1137 = vpack.c.b16 %v1105, %v1105
        %v1138 = vpack.c.b16 %v1106, %v1106
        %v1139 = vpack.c.b16 %v1107, %v1107
        %v1140 = vpack.c.b16 %v1108, %v1108
        %v1141 = vpack.c.b16 %v1109, %v1109
        %v1142 = vpack.c.b16 %v1110, %v1110
        %v1143 = vpack.c.b16 %v1111, %v1111
        %v1144 = vpack.c.b16 %v1112, %v1112
        %v1145 = vpack.c.b16 %v1113, %v1113
        %v1146 = vpack.c.b16 %v1114, %v1114
        %v1147 = vpack.c.b16 %v1115, %v1115
        %v1148 = vpack.c.b16 %v1116, %v1116
        %vm1149 = vsmask.f32 4368
        %vm1150 = vmor %vm478, %vm1149
        %v1152 = vshrl.u32 %v1117, 16
        %v1154 = vrot.slane %v1152, 7
        %v1155 = vshll.u32 %v1117, 16
        %v1157 = vor.u32 %v1154, %v1155
        %v1158 = vrot.slane %v1154, 4
        %v1160 = vshrl.u32 %v1118, 16
        %v1162 = vrot.slane %v1160, 7
        %v1163 = vshll.u32 %v1118, 16
        %v1165 = vor.u32 %v1162, %v1163
        %v1166 = vsel %vm1150, %v1158, %v1165
        %v1167 = vrot.slane %v1162, 4
        %v1169 = vshrl.u32 %v1119, 16
        %v1171 = vrot.slane %v1169, 7
        %v1172 = vshll.u32 %v1119, 16
        %v1174 = vor.u32 %v1171, %v1172
        %v1175 = vrot.slane %v1171, 4
        %v1177 = vshrl.u32 %v1120, 16
        %v1179 = vrot.slane %v1177, 7
        %v1180 = vshll.u32 %v1120, 16
        %v1182 = vor.u32 %v1179, %v1180
        %v1183 = vsel %vm1150, %v1175, %v1182
        %v1184 = vrot.slane %v1179, 4
        %v1186 = vshrl.u32 %v1121, 16
        %v1188 = vrot.slane %v1186, 7
        %v1189 = vshll.u32 %v1121, 16
        %v1191 = vor.u32 %v1188, %v1189
        %v1192 = vrot.slane %v1188, 4
        %v1194 = vshrl.u32 %v1122, 16
        %v1196 = vrot.slane %v1194, 7
        %v1197 = vshll.u32 %v1122, 16
        %v1199 = vor.u32 %v1196, %v1197
        %v1200 = vsel %vm1150, %v1192, %v1199
        %v1201 = vrot.slane %v1196, 4
        %v1203 = vshrl.u32 %v1123, 16
        %v1205 = vrot.slane %v1203, 7
        %v1206 = vshll.u32 %v1123, 16
        %v1208 = vor.u32 %v1205, %v1206
        %v1209 = vrot.slane %v1205, 4
        %v1211 = vshrl.u32 %v1124, 16
        %v1213 = vrot.slane %v1211, 7
        %v1214 = vshll.u32 %v1124, 16
        %v1216 = vor.u32 %v1213, %v1214
        %v1217 = vsel %vm1150, %v1209, %v1216
        %v1218 = vrot.slane %v1213, 4
        %v1220 = vshrl.u32 %v1125, 16
        %v1222 = vrot.slane %v1220, 7
        %v1223 = vshll.u32 %v1125, 16
        %v1225 = vor.u32 %v1222, %v1223
        %v1226 = vrot.slane %v1222, 4
        %v1228 = vshrl.u32 %v1126, 16
        %v1230 = vrot.slane %v1228, 7
        %v1231 = vshll.u32 %v1126, 16
        %v1233 = vor.u32 %v1230, %v1231
        %v1234 = vsel %vm1150, %v1226, %v1233
        %v1235 = vrot.slane %v1230, 4
        %v1237 = vshrl.u32 %v1127, 16
        %v1239 = vrot.slane %v1237, 7
        %v1240 = vshll.u32 %v1127, 16
        %v1242 = vor.u32 %v1239, %v1240
        %v1243 = vrot.slane %v1239, 4
        %v1245 = vshrl.u32 %v1128, 16
        %v1247 = vrot.slane %v1245, 7
        %v1248 = vshll.u32 %v1128, 16
        %v1250 = vor.u32 %v1247, %v1248
        %v1251 = vsel %vm1150, %v1243, %v1250
        %v1252 = vrot.slane %v1247, 4
        %v1254 = vshrl.u32 %v1129, 16
        %v1256 = vrot.slane %v1254, 7
        %v1257 = vshll.u32 %v1129, 16
        %v1259 = vor.u32 %v1256, %v1257
        %v1260 = vrot.slane %v1256, 4
        %v1262 = vshrl.u32 %v1130, 16
        %v1264 = vrot.slane %v1262, 7
        %v1265 = vshll.u32 %v1130, 16
        %v1267 = vor.u32 %v1264, %v1265
        %v1268 = vsel %vm1150, %v1260, %v1267
        %v1269 = vrot.slane %v1264, 4
        %v1271 = vshrl.u32 %v1131, 16
        %v1273 = vrot.slane %v1271, 7
        %v1274 = vshll.u32 %v1131, 16
        %v1276 = vor.u32 %v1273, %v1274
        %v1277 = vrot.slane %v1273, 4
        %v1279 = vshrl.u32 %v1132, 16
        %v1281 = vrot.slane %v1279, 7
        %v1282 = vshll.u32 %v1132, 16
        %v1284 = vor.u32 %v1281, %v1282
        %v1285 = vsel %vm1150, %v1277, %v1284
        %v1286 = vrot.slane %v1281, 4
        %v1288 = vshrl.u32 %v1133, 16
        %v1290 = vrot.slane %v1288, 7
        %v1291 = vshll.u32 %v1133, 16
        %v1293 = vor.u32 %v1290, %v1291
        %v1294 = vrot.slane %v1290, 4
        %v1296 = vshrl.u32 %v1134, 16
        %v1298 = vrot.slane %v1296, 7
        %v1299 = vshll.u32 %v1134, 16
        %v1301 = vor.u32 %v1298, %v1299
        %v1302 = vsel %vm1150, %v1294, %v1301
        %v1303 = vrot.slane %v1298, 4
        %v1305 = vshrl.u32 %v1135, 16
        %v1307 = vrot.slane %v1305, 7
        %v1308 = vshll.u32 %v1135, 16
        %v1310 = vor.u32 %v1307, %v1308
        %v1311 = vrot.slane %v1307, 4
        %v1313 = vshrl.u32 %v1136, 16
        %v1315 = vrot.slane %v1313, 7
        %v1316 = vshll.u32 %v1136, 16
        %v1318 = vor.u32 %v1315, %v1316
        %v1319 = vsel %vm1150, %v1311, %v1318
        %v1320 = vrot.slane %v1315, 4
        %v1322 = vshrl.u32 %v1137, 16
        %v1324 = vrot.slane %v1322, 7
        %v1325 = vshll.u32 %v1137, 16
        %v1327 = vor.u32 %v1324, %v1325
        %v1328 = vrot.slane %v1324, 4
        %v1330 = vshrl.u32 %v1138, 16
        %v1332 = vrot.slane %v1330, 7
        %v1333 = vshll.u32 %v1138, 16
        %v1335 = vor.u32 %v1332, %v1333
        %v1336 = vsel %vm1150, %v1328, %v1335
        %v1337 = vrot.slane %v1332, 4
        %v1339 = vshrl.u32 %v1139, 16
        %v1341 = vrot.slane %v1339, 7
        %v1342 = vshll.u32 %v1139, 16
        %v1344 = vor.u32 %v1341, %v1342
        %v1345 = vrot.slane %v1341, 4
        %v1347 = vshrl.u32 %v1140, 16
        %v1349 = vrot.slane %v1347, 7
        %v1350 = vshll.u32 %v1140, 16
        %v1352 = vor.u32 %v1349, %v1350
        %v1353 = vsel %vm1150, %v1345, %v1352
        %v1354 = vrot.slane %v1349, 4
        %v1356 = vshrl.u32 %v1141, 16
        %v1358 = vrot.slane %v1356, 7
        %v1359 = vshll.u32 %v1141, 16
        %v1361 = vor.u32 %v1358, %v1359
        %v1362 = vrot.slane %v1358, 4
        %v1364 = vshrl.u32 %v1142, 16
        %v1366 = vrot.slane %v1364, 7
        %v1367 = vshll.u32 %v1142, 16
        %v1369 = vor.u32 %v1366, %v1367
        %v1370 = vsel %vm1150, %v1362, %v1369
        %v1371 = vrot.slane %v1366, 4
        %v1373 = vshrl.u32 %v1143, 16
        %v1375 = vrot.slane %v1373, 7
        %v1376 = vshll.u32 %v1143, 16
        %v1378 = vor.u32 %v1375, %v1376
        %v1379 = vrot.slane %v1375, 4
        %v1381 = vshrl.u32 %v1144, 16
        %v1383 = vrot.slane %v1381, 7
        %v1384 = vshll.u32 %v1144, 16
        %v1386 = vor.u32 %v1383, %v1384
        %v1387 = vsel %vm1150, %v1379, %v1386
        %v1388 = vrot.slane %v1383, 4
        %v1390 = vshrl.u32 %v1145, 16
        %v1392 = vrot.slane %v1390, 7
        %v1393 = vshll.u32 %v1145, 16
        %v1395 = vor.u32 %v1392, %v1393
        %v1396 = vrot.slane %v1392, 4
        %v1398 = vshrl.u32 %v1146, 16
        %v1400 = vrot.slane %v1398, 7
        %v1401 = vshll.u32 %v1146, 16
        %v1403 = vor.u32 %v1400, %v1401
        %v1404 = vsel %vm1150, %v1396, %v1403
        %v1405 = vrot.slane %v1400, 4
        %v1407 = vshrl.u32 %v1147, 16
        %v1409 = vrot.slane %v1407, 7
        %v1410 = vshll.u32 %v1147, 16
        %v1412 = vor.u32 %v1409, %v1410
        %v1413 = vrot.slane %v1409, 4
        %v1415 = vshrl.u32 %v1148, 16
        %v1417 = vrot.slane %v1415, 7
        %v1418 = vshll.u32 %v1148, 16
        %v1420 = vor.u32 %v1417, %v1418
        %v1421 = vsel %vm1150, %v1413, %v1420
        %v1422 = vrot.slane %v1417, 4
        %s1471 = scalar_lea.vmem [#allocation2], 12
        %vm1472 = vcmask 257024
        %vm1473 = vmand %vm1472, %vm534
        %v1474 = vld [vmem:[%s1471] sm:$0xf]
        %v1475 = vsel %vm1473, %v1157, %v1474
        %1476 = vst [vmem:[%s1471] sm:$0xf] %v1475
        %vm1477 = vcmask 257024
        %1478 = vst.msk [vmem:[%s1471 + $0x4] sm:$0xf] %vm1477, %v1166
        %v1479 = vld [vmem:[%s1471 + $0x8] sm:$0x1]
        %v1480 = vsel %vm479, %v1167, %v1479
        %1481 = vst [vmem:[%s1471 + $0x8] sm:$0x1] %v1480
        %v1482 = vld [vmem:[%s1471 + $0xc] sm:$0xf]
        %v1483 = vsel %vm1473, %v1174, %v1482
        %1484 = vst [vmem:[%s1471 + $0xc] sm:$0xf] %v1483
        %1485 = vst.msk [vmem:[%s1471 + $0x10] sm:$0xf] %vm1477, %v1183
        %v1486 = vld [vmem:[%s1471 + $0x14] sm:$0x1]
        %v1487 = vsel %vm479, %v1184, %v1486
        %1488 = vst [vmem:[%s1471 + $0x14] sm:$0x1] %v1487
        %v1489 = vld [vmem:[%s1471 + $0x18] sm:$0xf]
        %v1490 = vsel %vm1473, %v1191, %v1489
        %1491 = vst [vmem:[%s1471 + $0x18] sm:$0xf] %v1490
        %1492 = vst.msk [vmem:[%s1471 + $0x1c] sm:$0xf] %vm1477, %v1200
        %v1493 = vld [vmem:[%s1471 + $0x20] sm:$0x1]
        %v1494 = vsel %vm479, %v1201, %v1493
        %1495 = vst [vmem:[%s1471 + $0x20] sm:$0x1] %v1494
        %v1496 = vld [vmem:[%s1471 + $0x24] sm:$0xf]
        %v1497 = vsel %vm1473, %v1208, %v1496
        %1498 = vst [vmem:[%s1471 + $0x24] sm:$0xf] %v1497
        %1499 = vst.msk [vmem:[%s1471 + $0x28] sm:$0xf] %vm1477, %v1217
        %v1500 = vld [vmem:[%s1471 + $0x2c] sm:$0x1]
        %v1501 = vsel %vm479, %v1218, %v1500
        %1502 = vst [vmem:[%s1471 + $0x2c] sm:$0x1] %v1501
        %v1503 = vld [vmem:[%s1471 + $0x30] sm:$0xf]
        %v1504 = vsel %vm1473, %v1225, %v1503
        %1505 = vst [vmem:[%s1471 + $0x30] sm:$0xf] %v1504
        %1506 = vst.msk [vmem:[%s1471 + $0x34] sm:$0xf] %vm1477, %v1234
        %v1507 = vld [vmem:[%s1471 + $0x38] sm:$0x1]
        %v1508 = vsel %vm479, %v1235, %v1507
        %1509 = vst [vmem:[%s1471 + $0x38] sm:$0x1] %v1508
        %v1510 = vld [vmem:[%s1471 + $0x3c] sm:$0xf]
        %v1511 = vsel %vm1473, %v1242, %v1510
        %1512 = vst [vmem:[%s1471 + $0x3c] sm:$0xf] %v1511
        %1513 = vst.msk [vmem:[%s1471 + $0x40] sm:$0xf] %vm1477, %v1251
        %v1514 = vld [vmem:[%s1471 + $0x44] sm:$0x1]
        %v1515 = vsel %vm479, %v1252, %v1514
        %1516 = vst [vmem:[%s1471 + $0x44] sm:$0x1] %v1515
        %v1517 = vld [vmem:[%s1471 + $0x48] sm:$0xf]
        %v1518 = vsel %vm1473, %v1259, %v1517
        %1519 = vst [vmem:[%s1471 + $0x48] sm:$0xf] %v1518
        %1520 = vst.msk [vmem:[%s1471 + $0x4c] sm:$0xf] %vm1477, %v1268
        %v1521 = vld [vmem:[%s1471 + $0x50] sm:$0x1]
        %v1522 = vsel %vm479, %v1269, %v1521
        %1523 = vst [vmem:[%s1471 + $0x50] sm:$0x1] %v1522
        %v1524 = vld [vmem:[%s1471 + $0x54] sm:$0xf]
        %v1525 = vsel %vm1473, %v1276, %v1524
        %1526 = vst [vmem:[%s1471 + $0x54] sm:$0xf] %v1525
        %1527 = vst.msk [vmem:[%s1471 + $0x58] sm:$0xf] %vm1477, %v1285
        %v1528 = vld [vmem:[%s1471 + $0x5c] sm:$0x1]
        %v1529 = vsel %vm479, %v1286, %v1528
        %1530 = vst [vmem:[%s1471 + $0x5c] sm:$0x1] %v1529
        %v1531 = vld [vmem:[%s1471 + $0x60] sm:$0xf]
        %v1532 = vsel %vm1473, %v1293, %v1531
        %1533 = vst [vmem:[%s1471 + $0x60] sm:$0xf] %v1532
        %1534 = vst.msk [vmem:[%s1471 + $0x64] sm:$0xf] %vm1477, %v1302
        %v1535 = vld [vmem:[%s1471 + $0x68] sm:$0x1]
        %v1536 = vsel %vm479, %v1303, %v1535
        %1537 = vst [vmem:[%s1471 + $0x68] sm:$0x1] %v1536
        %v1538 = vld [vmem:[%s1471 + $0x6c] sm:$0xf]
        %v1539 = vsel %vm1473, %v1310, %v1538
        %1540 = vst [vmem:[%s1471 + $0x6c] sm:$0xf] %v1539
        %1541 = vst.msk [vmem:[%s1471 + $0x70] sm:$0xf] %vm1477, %v1319
        %v1542 = vld [vmem:[%s1471 + $0x74] sm:$0x1]
        %v1543 = vsel %vm479, %v1320, %v1542
        %1544 = vst [vmem:[%s1471 + $0x74] sm:$0x1] %v1543
        %v1545 = vld [vmem:[%s1471 + $0x78] sm:$0xf]
        %v1546 = vsel %vm1473, %v1327, %v1545
        %1547 = vst [vmem:[%s1471 + $0x78] sm:$0xf] %v1546
        %1548 = vst.msk [vmem:[%s1471 + $0x7c] sm:$0xf] %vm1477, %v1336
        %v1549 = vld [vmem:[%s1471 + $0x80] sm:$0x1]
        %v1550 = vsel %vm479, %v1337, %v1549
        %1551 = vst [vmem:[%s1471 + $0x80] sm:$0x1] %v1550
        %v1552 = vld [vmem:[%s1471 + $0x84] sm:$0xf]
        %v1553 = vsel %vm1473, %v1344, %v1552
        %1554 = vst [vmem:[%s1471 + $0x84] sm:$0xf] %v1553
        %1555 = vst.msk [vmem:[%s1471 + $0x88] sm:$0xf] %vm1477, %v1353
        %v1556 = vld [vmem:[%s1471 + $0x8c] sm:$0x1]
        %v1557 = vsel %vm479, %v1354, %v1556
        %1558 = vst [vmem:[%s1471 + $0x8c] sm:$0x1] %v1557
        %v1559 = vld [vmem:[%s1471 + $0x90] sm:$0xf]
        %v1560 = vsel %vm1473, %v1361, %v1559
        %1561 = vst [vmem:[%s1471 + $0x90] sm:$0xf] %v1560
        %1562 = vst.msk [vmem:[%s1471 + $0x94] sm:$0xf] %vm1477, %v1370
        %v1563 = vld [vmem:[%s1471 + $0x98] sm:$0x1]
        %v1564 = vsel %vm479, %v1371, %v1563
        %1565 = vst [vmem:[%s1471 + $0x98] sm:$0x1] %v1564
        %v1566 = vld [vmem:[%s1471 + $0x9c] sm:$0xf]
        %v1567 = vsel %vm1473, %v1378, %v1566
        %1568 = vst [vmem:[%s1471 + $0x9c] sm:$0xf] %v1567
        %1569 = vst.msk [vmem:[%s1471 + $0xa0] sm:$0xf] %vm1477, %v1387
        %v1570 = vld [vmem:[%s1471 + $0xa4] sm:$0x1]
        %v1571 = vsel %vm479, %v1388, %v1570
        %1572 = vst [vmem:[%s1471 + $0xa4] sm:$0x1] %v1571
        %v1573 = vld [vmem:[%s1471 + $0xa8] sm:$0xf]
        %v1574 = vsel %vm1473, %v1395, %v1573
        %1575 = vst [vmem:[%s1471 + $0xa8] sm:$0xf] %v1574
        %1576 = vst.msk [vmem:[%s1471 + $0xac] sm:$0xf] %vm1477, %v1404
        %v1577 = vld [vmem:[%s1471 + $0xb0] sm:$0x1]
        %v1578 = vsel %vm479, %v1405, %v1577
        %1579 = vst [vmem:[%s1471 + $0xb0] sm:$0x1] %v1578
        %v1580 = vld [vmem:[%s1471 + $0xb4] sm:$0xf]
        %v1581 = vsel %vm1473, %v1412, %v1580
        %1582 = vst [vmem:[%s1471 + $0xb4] sm:$0xf] %v1581
        %1583 = vst.msk [vmem:[%s1471 + $0xb8] sm:$0xf] %vm1477, %v1421
        %v1584 = vld [vmem:[%s1471 + $0xbc] sm:$0x1]
        %v1585 = vsel %vm479, %v1422, %v1584
        %1586 = vst [vmem:[%s1471 + $0xbc] sm:$0x1] %v1585
        %v1587 = vld [vmem:[%s473] sm:$0xf]
        %v1588 = vld [vmem:[%s473 + $0x4] sm:$0xf]
        %v1589 = vld [vmem:[%s473 + $0x8] sm:$0xf]
        %v1590 = vld [vmem:[%s473 + $0xc] sm:$0xf]
        %v1591 = vld [vmem:[%s2] sm:$0xf]
        %v1592 = vld [vmem:[%s2 + $0x4] sm:$0xf]
        %v1593 = vld [vmem:[%s2 + $0x8] sm:$0xf]
        %v1594 = vld [vmem:[%s2 + $0xc] sm:$0xf]
        %v1595 = vld [vmem:[%s2 + $0x10] sm:$0xf]
        %v1596 = vld [vmem:[%s2 + $0x14] sm:$0xf]
        %v1597 = vld [vmem:[%s2 + $0x18] sm:$0xf]
        %v1598 = vld [vmem:[%s2 + $0x1c] sm:$0xf]
        %v1599 = vld [vmem:[%s2 + $0x20] sm:$0xf]
        %v1600 = vld [vmem:[%s2 + $0x24] sm:$0xf]
        %v1601 = vld [vmem:[%s2 + $0x28] sm:$0xf]
        %v1602 = vld [vmem:[%s2 + $0x2c] sm:$0xf]
        %v1603 = vld [vmem:[%s2 + $0x30] sm:$0xf]
        %v1604 = vld [vmem:[%s2 + $0x34] sm:$0xf]
        %v1605 = vld [vmem:[%s2 + $0x38] sm:$0xf]
        %v1606 = vld [vmem:[%s2 + $0x3c] sm:$0xf]
        %v1611 = vunpack.c.l.b16 %v1587
        %v1612 = vunpack.c.l.b16 %v1588
        %v1613 = vunpack.c.l.b16 %v1589
        %v1614 = vunpack.c.l.b16 %v1590
        %v1615 = vpack.c.b16 %v1612, %v1611
        %v1616 = vpack.c.b16 %v1614, %v1613
        %v1635 = vunpack.c.l.b16 %v1591
        %v1636 = vunpack.c.l.b16 %v1592
        %v1637 = vunpack.c.l.b16 %v1593
        %v1638 = vunpack.c.l.b16 %v1594
        %v1639 = vunpack.c.l.b16 %v1595
        %v1640 = vunpack.c.l.b16 %v1596
        %v1641 = vunpack.c.l.b16 %v1597
        %v1642 = vunpack.c.l.b16 %v1598
        %v1643 = vunpack.c.l.b16 %v1599
        %v1644 = vunpack.c.l.b16 %v1600
        %v1645 = vunpack.c.l.b16 %v1601
        %v1646 = vunpack.c.l.b16 %v1602
        %v1647 = vunpack.c.l.b16 %v1603
        %v1648 = vunpack.c.l.b16 %v1604
        %v1649 = vunpack.c.l.b16 %v1605
        %v1650 = vunpack.c.l.b16 %v1606
        %v1651 = vpack.c.b16 %v1636, %v1635
        %v1652 = vpack.c.b16 %v1638, %v1637
        %v1653 = vpack.c.b16 %v1640, %v1639
        %v1654 = vpack.c.b16 %v1642, %v1641
        %v1655 = vpack.c.b16 %v1644, %v1643
        %v1656 = vpack.c.b16 %v1646, %v1645
        %v1657 = vpack.c.b16 %v1648, %v1647
        %v1658 = vpack.c.b16 %v1650, %v1649
        %1667 = vmatprep.subr.bf16.mxu0 0
        %1668 = vmatpush1.bf16.msra.mxu0 %v1651
        %1669 = vmatprep.subr.bf16.mxu0 0
        %1670 = vmatpush1.bf16.msra.mxu0 %v1652
        %1671 = vmatprep.subr.bf16.mxu0 0
        %1672 = vmatpush1.bf16.msra.mxu0 %v1653
        %1673 = vmatprep.subr.bf16.mxu0 0
        %1674 = vmatpush1.bf16.msra.mxu0 %v1654
        %1675 = vmatprep.subr.bf16.mxu0 0
        %1676 = vmatpush1.bf16.msra.mxu0 %v1655
        %1677 = vmatprep.subr.bf16.mxu0 0
        %1678 = vmatpush1.bf16.msra.mxu0 %v1656
        %1679 = vmatprep.subr.bf16.mxu0 0
        %1680 = vmatpush1.bf16.msra.mxu0 %v1657
        %1681 = vmatprep.subr.bf16.mxu0 0
        %1682 = vmatpush1.bf16.msra.mxu0 %v1658
        %1683 = vmatprep.subr.bf16.mxu0 0
        %1684 = vmatpush1.bf16.msra.mxu0 0
        %1685 = vmatprep.subr.bf16.mxu0 0
        %1686 = vmatpush1.bf16.msra.mxu0 0
        %1687 = vmatprep.subr.bf16.mxu0 0
        %1688 = vmatpush1.bf16.msra.mxu0 0
        %1689 = vmatprep.subr.bf16.mxu0 0
        %1690 = vmatpush1.bf16.msra.mxu0 0
        %1691 = vmatprep.subr.bf16.mxu0 0
        %1692 = vmatpush1.bf16.msra.mxu0 0
        %1693 = vmatprep.subr.bf16.mxu0 0
        %1694 = vmatpush1.bf16.msra.mxu0 0
        %1695 = vmatprep.subr.bf16.mxu0 0
        %1696 = vmatpush1.bf16.msra.mxu0 0
        %1697 = vmatprep.subr.bf16.mxu0 0
        %1698 = vmatpush1.bf16.msra.mxu0 0
        %1699 = vmatprep.mubr.bf16.mxu0 0
        %1700 = vmatmul.mubr.bf16.gmra.mrb[0].mxu0 %v1615
        %v1701 = vpop.f32.mrb[0].mxu0
        %v1702 = vadd.f32 0.0, %v1701
        %v1703 = vpop.f32.mrb[0].mxu0
        %v1704 = vpop.f32.mrb[0].mxu0
        %v1705 = vadd.f32 0.0, %v1704
        %v1706 = vpop.f32.mrb[0].mxu0
        %1707 = vmatprep.mubr.bf16.mxu0 0
        %1708 = vmatmul.mubr.bf16.gmra.mrb[0].mxu0 %v1616
        %v1709 = vpop.f32.mrb[0].mxu0
        %v1710 = vadd.f32 0.0, %v1709
        %v1711 = vpop.f32.mrb[0].mxu0
        %v1712 = vpop.f32.mrb[0].mxu0
        %v1713 = vadd.f32 0.0, %v1712
        %v1714 = vpop.f32.mrb[0].mxu0
        %1715 = vdwg.mxu0
        %v1716 = vld [vmem:[%s3] sm:$0x1]
        %v1718 = vlaneseq
        %v1719 = vshrl.u32 %v1718, 7
        %v1720 = vsub.s32 0, %v1719
        %v1721 = vrot.slane %v1716, %v1720
        %v1723 = vmul.f32 %v1702, %v1721
        %v1724 = vmul.f32 %v1705, %v1721
        %v1725 = vmul.f32 %v1710, %v1721
        %v1726 = vmul.f32 %v1713, %v1721
        %v1727 = vld [vmem:[%s4] sm:$0x1]
        %v1729 = vlaneseq
        %v1730 = vshrl.u32 %v1729, 7
        %v1731 = vsub.s32 0, %v1730
        %v1732 = vrot.slane %v1727, %v1731
        %v1734 = vadd.f32 %v1723, %v1732
        %v1735 = vadd.f32 %v1724, %v1732
        %v1736 = vadd.f32 %v1725, %v1732
        %v1737 = vadd.f32 %v1726, %v1732
        %v1738 = vmax.f32 %v1734, 0.0
        %v1739 = vmax.f32 %v1735, 0.0
        %v1740 = vmax.f32 %v1736, 0.0
        %v1741 = vmax.f32 %v1737, 0.0
        %s1742 = ssub.s32 %s476, 1
        %v1743 = vstv %s1742
        %s1744 = sadd.s32 %s476, 16
        %v1745 = vstv %s1744
        %vm1746 = vcmp.ge.s32.totalorder %v1743, 0
        %vm1747 = vcmp.ge.s32.totalorder %v1745, 0
        %vm1748 = vcmp.lt.s32.totalorder %v1743, 16
        %vm1749 = vcmp.lt.s32.totalorder %v1745, 16
        %vm1750 = vmand %vm1746, %vm1748
        %vm1751 = vmand %vm1747, %vm1749
        %v1752 = vsel %vm1750, 1, 0
        %v1753 = vsel %vm1751, 1, 0
        %vm1754 = vcmp.eq.s32.totalorder %v1752, 1
        %vm1755 = vcmp.eq.s32.totalorder %v1753, 1
        %v1756 = vsel %vm1754, %v1738, 0.0
        %v1757 = vsel %vm1754, %v1739, 0.0
        %v1758 = vsel %vm1755, %v1740, 0.0
        %v1759 = vsel %vm1755, %v1741, 0.0
        %v1760 = vpack.c.bf16 %v1757, %v1756
        %v1761 = vpack.c.bf16 %v1759, %v1758
        %v1763 = vunpack.c.l.b16 %v1760
        %v1764 = vunpack.c.h.b16 %v1760
        %v1765 = vpack.c.b16 %v1763, %v1763
        %v1766 = vpack.c.b16 %v1764, %v1764
        %v1768 = vshrl.u32 %v1765, 16
        %v1770 = vrot.slane %v1768, 7
        %v1771 = vshll.u32 %v1765, 16
        %v1773 = vor.u32 %v1770, %v1771
        %v1774 = vrot.slane %v1770, 4
        %v1776 = vshrl.u32 %v1766, 16
        %v1778 = vrot.slane %v1776, 7
        %v1779 = vshll.u32 %v1766, 16
        %v1781 = vor.u32 %v1778, %v1779
        %v1782 = vsel %vm1150, %v1774, %v1781
        %v1783 = vrot.slane %v1778, 4
        %v1787 = vld [vmem:[#allocation2] sm:$0xf]
        %v1788 = vsel %vm1473, %v1773, %v1787
        %1789 = vst [vmem:[#allocation2] sm:$0xf] %v1788
        %1790 = vst.msk [vmem:[#allocation2 + $0x4] sm:$0xf] %vm1477, %v1782
        %v1791 = vld [vmem:[#allocation2 + $0x8] sm:$0x1]
        %v1792 = vsel %vm479, %v1783, %v1791
        %1793 = vst [vmem:[#allocation2 + $0x8] sm:$0x1] %v1792
        %v1795 = vunpack.c.l.b16 %v1761
        %v1796 = vunpack.c.h.b16 %v1761
        %v1797 = vpack.c.b16 %v1795, %v1795
        %v1798 = vpack.c.b16 %v1796, %v1796
        %v1800 = vshrl.u32 %v1797, 16
        %v1802 = vrot.slane %v1800, 7
        %v1803 = vshll.u32 %v1797, 16
        %v1805 = vor.u32 %v1802, %v1803
        %v1806 = vrot.slane %v1802, 4
        %v1808 = vshrl.u32 %v1798, 16
        %v1810 = vrot.slane %v1808, 7
        %v1811 = vshll.u32 %v1798, 16
        %v1813 = vor.u32 %v1810, %v1811
        %v1814 = vsel %vm1150, %v1806, %v1813
        %v1815 = vrot.slane %v1810, 4
        %s1819 = scalar_lea.vmem [#allocation2], 204
        %v1820 = vld [vmem:[%s1819] sm:$0xf]
        %v1821 = vsel %vm1473, %v1805, %v1820
        %1822 = vst [vmem:[%s1819] sm:$0xf] %v1821
        %1823 = vst.msk [vmem:[%s1819 + $0x4] sm:$0xf] %vm1477, %v1814
        %v1824 = vld [vmem:[%s1819 + $0x8] sm:$0x1]
        %v1825 = vsel %vm479, %v1815, %v1824
        %1826 = vst [vmem:[%s1819 + $0x8] sm:$0x1] %v1825
        %v1827 = vld [vmem:[#allocation2] sm:$0xf]
        %v1828 = vld [vmem:[#allocation2 + $0x4] sm:$0xf]
        %v1829 = vld [vmem:[#allocation2 + $0xc] sm:$0xf]
        %v1830 = vld [vmem:[#allocation2 + $0x10] sm:$0xf]
        %v1831 = vld [vmem:[#allocation2 + $0x18] sm:$0xf]
        %v1832 = vld [vmem:[#allocation2 + $0x1c] sm:$0xf]
        %v1833 = vld [vmem:[#allocation2 + $0x24] sm:$0xf]
        %v1834 = vld [vmem:[#allocation2 + $0x28] sm:$0xf]
        %v1835 = vld [vmem:[#allocation2 + $0x30] sm:$0xf]
        %v1836 = vld [vmem:[#allocation2 + $0x34] sm:$0xf]
        %v1837 = vld [vmem:[#allocation2 + $0x3c] sm:$0xf]
        %v1838 = vld [vmem:[#allocation2 + $0x40] sm:$0xf]
        %v1839 = vld [vmem:[#allocation2 + $0x48] sm:$0xf]
        %v1840 = vld [vmem:[#allocation2 + $0x4c] sm:$0xf]
        %v1841 = vld [vmem:[#allocation2 + $0x54] sm:$0xf]
        %v1842 = vld [vmem:[#allocation2 + $0x58] sm:$0xf]
        %v1843 = vld [vmem:[#allocation2 + $0x60] sm:$0xf]
        %v1844 = vld [vmem:[#allocation2 + $0x64] sm:$0xf]
        %v1845 = vld [vmem:[#allocation2 + $0x6c] sm:$0xf]
        %v1846 = vld [vmem:[#allocation2 + $0x70] sm:$0xf]
        %v1847 = vld [vmem:[#allocation2 + $0x78] sm:$0xf]
        %v1848 = vld [vmem:[#allocation2 + $0x7c] sm:$0xf]
        %v1849 = vld [vmem:[#allocation2 + $0x84] sm:$0xf]
        %v1850 = vld [vmem:[#allocation2 + $0x88] sm:$0xf]
        %v1851 = vld [vmem:[#allocation2 + $0x90] sm:$0xf]
        %v1852 = vld [vmem:[#allocation2 + $0x94] sm:$0xf]
        %v1853 = vld [vmem:[#allocation2 + $0x9c] sm:$0xf]
        %v1854 = vld [vmem:[#allocation2 + $0xa0] sm:$0xf]
        %v1855 = vld [vmem:[#allocation2 + $0xa8] sm:$0xf]
        %v1856 = vld [vmem:[#allocation2 + $0xac] sm:$0xf]
        %v1857 = vld [vmem:[#allocation2 + $0xb4] sm:$0xf]
        %v1858 = vld [vmem:[#allocation2 + $0xb8] sm:$0xf]
        %v1859 = vld [vmem:[#allocation6] sm:$0xf]
        %v1860 = vld [vmem:[#allocation6 + $0x4] sm:$0xf]
        %v1861 = vld [vmem:[#allocation6 + $0x8] sm:$0xf]
        %v1862 = vld [vmem:[#allocation6 + $0xc] sm:$0xf]
        %v1863 = vld [vmem:[#allocation2 + $0x8] sm:$0x1]
        %v1864 = vld [vmem:[#allocation2 + $0x14] sm:$0x1]
        %v1865 = vld [vmem:[#allocation2 + $0x20] sm:$0x1]
        %v1866 = vld [vmem:[#allocation2 + $0x2c] sm:$0x1]
        %v1867 = vld [vmem:[#allocation2 + $0x38] sm:$0x1]
        %v1868 = vld [vmem:[#allocation2 + $0x44] sm:$0x1]
        %v1869 = vld [vmem:[#allocation2 + $0x50] sm:$0x1]
        %v1870 = vld [vmem:[#allocation2 + $0x5c] sm:$0x1]
        %v1871 = vld [vmem:[#allocation2 + $0x68] sm:$0x1]
        %v1872 = vld [vmem:[#allocation2 + $0x74] sm:$0x1]
        %v1873 = vld [vmem:[#allocation2 + $0x80] sm:$0x1]
        %v1874 = vld [vmem:[#allocation2 + $0x8c] sm:$0x1]
        %v1875 = vld [vmem:[#allocation2 + $0x98] sm:$0x1]
        %v1876 = vld [vmem:[#allocation2 + $0xa4] sm:$0x1]
        %v1877 = vld [vmem:[#allocation2 + $0xb0] sm:$0x1]
        %v1878 = vld [vmem:[#allocation2 + $0xbc] sm:$0x1]
        %vm1879 = vsmask.f32 3328
        %vm1880 = vsmask.f32 7440
        %vm1881 = vmor %vm1879, %vm1880
        %v1883 = vshrl.u32 %v1827, 16
        %v1885 = vrot.slane %v1883, 4
        %v1886 = vshll.u32 %v1827, 16
        %v1888 = vrot.slane %v1886, 5
        %v1889 = vor.u32 %v1885, %v1888
        %v1890 = vrot.slane %v1889, 4
        %v1892 = vshll.u32 %v1828, 16
        %v1894 = vrot.slane %v1892, 5
        %v1895 = vsel %vm1881, %v1890, %v1894
        %v1896 = vshrl.u32 %v1828, 16
        %v1898 = vrot.slane %v1896, 4
        %v1899 = vor.u32 %v1898, %v1894
        %v1900 = vrot.slane %v1899, 4
        %v1902 = vshll.u32 %v1863, 16
        %v1904 = vrot.slane %v1902, 5
        %v1905 = vsel %vm1881, %v1900, %v1904
        %v1907 = vshrl.u32 %v1829, 16
        %v1909 = vrot.slane %v1907, 4
        %v1910 = vshll.u32 %v1829, 16
        %v1912 = vrot.slane %v1910, 5
        %v1913 = vor.u32 %v1909, %v1912
        %v1914 = vrot.slane %v1913, 4
        %v1916 = vshll.u32 %v1830, 16
        %v1918 = vrot.slane %v1916, 5
        %v1919 = vsel %vm1881, %v1914, %v1918
        %v1920 = vshrl.u32 %v1830, 16
        %v1922 = vrot.slane %v1920, 4
        %v1923 = vor.u32 %v1922, %v1918
        %v1924 = vrot.slane %v1923, 4
        %v1926 = vshll.u32 %v1864, 16
        %v1928 = vrot.slane %v1926, 5
        %v1929 = vsel %vm1881, %v1924, %v1928
        %v1931 = vshrl.u32 %v1831, 16
        %v1933 = vrot.slane %v1931, 4
        %v1934 = vshll.u32 %v1831, 16
        %v1936 = vrot.slane %v1934, 5
        %v1937 = vor.u32 %v1933, %v1936
        %v1938 = vrot.slane %v1937, 4
        %v1940 = vshll.u32 %v1832, 16
        %v1942 = vrot.slane %v1940, 5
        %v1943 = vsel %vm1881, %v1938, %v1942
        %v1944 = vshrl.u32 %v1832, 16
        %v1946 = vrot.slane %v1944, 4
        %v1947 = vor.u32 %v1946, %v1942
        %v1948 = vrot.slane %v1947, 4
        %v1950 = vshll.u32 %v1865, 16
        %v1952 = vrot.slane %v1950, 5
        %v1953 = vsel %vm1881, %v1948, %v1952
        %v1955 = vshrl.u32 %v1833, 16
        %v1957 = vrot.slane %v1955, 4
        %v1958 = vshll.u32 %v1833, 16
        %v1960 = vrot.slane %v1958, 5
        %v1961 = vor.u32 %v1957, %v1960
        %v1962 = vrot.slane %v1961, 4
        %v1964 = vshll.u32 %v1834, 16
        %v1966 = vrot.slane %v1964, 5
        %v1967 = vsel %vm1881, %v1962, %v1966
        %v1968 = vshrl.u32 %v1834, 16
        %v1970 = vrot.slane %v1968, 4
        %v1971 = vor.u32 %v1970, %v1966
        %v1972 = vrot.slane %v1971, 4
        %v1974 = vshll.u32 %v1866, 16
        %v1976 = vrot.slane %v1974, 5
        %v1977 = vsel %vm1881, %v1972, %v1976
        %v1979 = vshrl.u32 %v1835, 16
        %v1981 = vrot.slane %v1979, 4
        %v1982 = vshll.u32 %v1835, 16
        %v1984 = vrot.slane %v1982, 5
        %v1985 = vor.u32 %v1981, %v1984
        %v1986 = vrot.slane %v1985, 4
        %v1988 = vshll.u32 %v1836, 16
        %v1990 = vrot.slane %v1988, 5
        %v1991 = vsel %vm1881, %v1986, %v1990
        %v1992 = vshrl.u32 %v1836, 16
        %v1994 = vrot.slane %v1992, 4
        %v1995 = vor.u32 %v1994, %v1990
        %v1996 = vrot.slane %v1995, 4
        %v1998 = vshll.u32 %v1867, 16
        %v2000 = vrot.slane %v1998, 5
        %v2001 = vsel %vm1881, %v1996, %v2000
        %v2003 = vshrl.u32 %v1837, 16
        %v2005 = vrot.slane %v2003, 4
        %v2006 = vshll.u32 %v1837, 16
        %v2008 = vrot.slane %v2006, 5
        %v2009 = vor.u32 %v2005, %v2008
        %v2010 = vrot.slane %v2009, 4
        %v2012 = vshll.u32 %v1838, 16
        %v2014 = vrot.slane %v2012, 5
        %v2015 = vsel %vm1881, %v2010, %v2014
        %v2016 = vshrl.u32 %v1838, 16
        %v2018 = vrot.slane %v2016, 4
        %v2019 = vor.u32 %v2018, %v2014
        %v2020 = vrot.slane %v2019, 4
        %v2022 = vshll.u32 %v1868, 16
        %v2024 = vrot.slane %v2022, 5
        %v2025 = vsel %vm1881, %v2020, %v2024
        %v2027 = vshrl.u32 %v1839, 16
        %v2029 = vrot.slane %v2027, 4
        %v2030 = vshll.u32 %v1839, 16
        %v2032 = vrot.slane %v2030, 5
        %v2033 = vor.u32 %v2029, %v2032
        %v2034 = vrot.slane %v2033, 4
        %v2036 = vshll.u32 %v1840, 16
        %v2038 = vrot.slane %v2036, 5
        %v2039 = vsel %vm1881, %v2034, %v2038
        %v2040 = vshrl.u32 %v1840, 16
        %v2042 = vrot.slane %v2040, 4
        %v2043 = vor.u32 %v2042, %v2038
        %v2044 = vrot.slane %v2043, 4
        %v2046 = vshll.u32 %v1869, 16
        %v2048 = vrot.slane %v2046, 5
        %v2049 = vsel %vm1881, %v2044, %v2048
        %v2051 = vshrl.u32 %v1841, 16
        %v2053 = vrot.slane %v2051, 4
        %v2054 = vshll.u32 %v1841, 16
        %v2056 = vrot.slane %v2054, 5
        %v2057 = vor.u32 %v2053, %v2056
        %v2058 = vrot.slane %v2057, 4
        %v2060 = vshll.u32 %v1842, 16
        %v2062 = vrot.slane %v2060, 5
        %v2063 = vsel %vm1881, %v2058, %v2062
        %v2064 = vshrl.u32 %v1842, 16
        %v2066 = vrot.slane %v2064, 4
        %v2067 = vor.u32 %v2066, %v2062
        %v2068 = vrot.slane %v2067, 4
        %v2070 = vshll.u32 %v1870, 16
        %v2072 = vrot.slane %v2070, 5
        %v2073 = vsel %vm1881, %v2068, %v2072
        %v2075 = vshrl.u32 %v1843, 16
        %v2077 = vrot.slane %v2075, 4
        %v2078 = vshll.u32 %v1843, 16
        %v2080 = vrot.slane %v2078, 5
        %v2081 = vor.u32 %v2077, %v2080
        %v2082 = vrot.slane %v2081, 4
        %v2084 = vshll.u32 %v1844, 16
        %v2086 = vrot.slane %v2084, 5
        %v2087 = vsel %vm1881, %v2082, %v2086
        %v2088 = vshrl.u32 %v1844, 16
        %v2090 = vrot.slane %v2088, 4
        %v2091 = vor.u32 %v2090, %v2086
        %v2092 = vrot.slane %v2091, 4
        %v2094 = vshll.u32 %v1871, 16
        %v2096 = vrot.slane %v2094, 5
        %v2097 = vsel %vm1881, %v2092, %v2096
        %v2099 = vshrl.u32 %v1845, 16
        %v2101 = vrot.slane %v2099, 4
        %v2102 = vshll.u32 %v1845, 16
        %v2104 = vrot.slane %v2102, 5
        %v2105 = vor.u32 %v2101, %v2104
        %v2106 = vrot.slane %v2105, 4
        %v2108 = vshll.u32 %v1846, 16
        %v2110 = vrot.slane %v2108, 5
        %v2111 = vsel %vm1881, %v2106, %v2110
        %v2112 = vshrl.u32 %v1846, 16
        %v2114 = vrot.slane %v2112, 4
        %v2115 = vor.u32 %v2114, %v2110
        %v2116 = vrot.slane %v2115, 4
        %v2118 = vshll.u32 %v1872, 16
        %v2120 = vrot.slane %v2118, 5
        %v2121 = vsel %vm1881, %v2116, %v2120
        %v2123 = vshrl.u32 %v1847, 16
        %v2125 = vrot.slane %v2123, 4
        %v2126 = vshll.u32 %v1847, 16
        %v2128 = vrot.slane %v2126, 5
        %v2129 = vor.u32 %v2125, %v2128
        %v2130 = vrot.slane %v2129, 4
        %v2132 = vshll.u32 %v1848, 16
        %v2134 = vrot.slane %v2132, 5
        %v2135 = vsel %vm1881, %v2130, %v2134
        %v2136 = vshrl.u32 %v1848, 16
        %v2138 = vrot.slane %v2136, 4
        %v2139 = vor.u32 %v2138, %v2134
        %v2140 = vrot.slane %v2139, 4
        %v2142 = vshll.u32 %v1873, 16
        %v2144 = vrot.slane %v2142, 5
        %v2145 = vsel %vm1881, %v2140, %v2144
        %v2147 = vshrl.u32 %v1849, 16
        %v2149 = vrot.slane %v2147, 4
        %v2150 = vshll.u32 %v1849, 16
        %v2152 = vrot.slane %v2150, 5
        %v2153 = vor.u32 %v2149, %v2152
        %v2154 = vrot.slane %v2153, 4
        %v2156 = vshll.u32 %v1850, 16
        %v2158 = vrot.slane %v2156, 5
        %v2159 = vsel %vm1881, %v2154, %v2158
        %v2160 = vshrl.u32 %v1850, 16
        %v2162 = vrot.slane %v2160, 4
        %v2163 = vor.u32 %v2162, %v2158
        %v2164 = vrot.slane %v2163, 4
        %v2166 = vshll.u32 %v1874, 16
        %v2168 = vrot.slane %v2166, 5
        %v2169 = vsel %vm1881, %v2164, %v2168
        %v2171 = vshrl.u32 %v1851, 16
        %v2173 = vrot.slane %v2171, 4
        %v2174 = vshll.u32 %v1851, 16
        %v2176 = vrot.slane %v2174, 5
        %v2177 = vor.u32 %v2173, %v2176
        %v2178 = vrot.slane %v2177, 4
        %v2180 = vshll.u32 %v1852, 16
        %v2182 = vrot.slane %v2180, 5
        %v2183 = vsel %vm1881, %v2178, %v2182
        %v2184 = vshrl.u32 %v1852, 16
        %v2186 = vrot.slane %v2184, 4
        %v2187 = vor.u32 %v2186, %v2182
        %v2188 = vrot.slane %v2187, 4
        %v2190 = vshll.u32 %v1875, 16
        %v2192 = vrot.slane %v2190, 5
        %v2193 = vsel %vm1881, %v2188, %v2192
        %v2195 = vshrl.u32 %v1853, 16
        %v2197 = vrot.slane %v2195, 4
        %v2198 = vshll.u32 %v1853, 16
        %v2200 = vrot.slane %v2198, 5
        %v2201 = vor.u32 %v2197, %v2200
        %v2202 = vrot.slane %v2201, 4
        %v2204 = vshll.u32 %v1854, 16
        %v2206 = vrot.slane %v2204, 5
        %v2207 = vsel %vm1881, %v2202, %v2206
        %v2208 = vshrl.u32 %v1854, 16
        %v2210 = vrot.slane %v2208, 4
        %v2211 = vor.u32 %v2210, %v2206
        %v2212 = vrot.slane %v2211, 4
        %v2214 = vshll.u32 %v1876, 16
        %v2216 = vrot.slane %v2214, 5
        %v2217 = vsel %vm1881, %v2212, %v2216
        %v2219 = vshrl.u32 %v1855, 16
        %v2221 = vrot.slane %v2219, 4
        %v2222 = vshll.u32 %v1855, 16
        %v2224 = vrot.slane %v2222, 5
        %v2225 = vor.u32 %v2221, %v2224
        %v2226 = vrot.slane %v2225, 4
        %v2228 = vshll.u32 %v1856, 16
        %v2230 = vrot.slane %v2228, 5
        %v2231 = vsel %vm1881, %v2226, %v2230
        %v2232 = vshrl.u32 %v1856, 16
        %v2234 = vrot.slane %v2232, 4
        %v2235 = vor.u32 %v2234, %v2230
        %v2236 = vrot.slane %v2235, 4
        %v2238 = vshll.u32 %v1877, 16
        %v2240 = vrot.slane %v2238, 5
        %v2241 = vsel %vm1881, %v2236, %v2240
        %v2243 = vshrl.u32 %v1857, 16
        %v2245 = vrot.slane %v2243, 4
        %v2246 = vshll.u32 %v1857, 16
        %v2248 = vrot.slane %v2246, 5
        %v2249 = vor.u32 %v2245, %v2248
        %v2250 = vrot.slane %v2249, 4
        %v2252 = vshll.u32 %v1858, 16
        %v2254 = vrot.slane %v2252, 5
        %v2255 = vsel %vm1881, %v2250, %v2254
        %v2256 = vshrl.u32 %v1858, 16
        %v2258 = vrot.slane %v2256, 4
        %v2259 = vor.u32 %v2258, %v2254
        %v2260 = vrot.slane %v2259, 4
        %v2262 = vshll.u32 %v1878, 16
        %v2264 = vrot.slane %v2262, 5
        %v2265 = vsel %vm1881, %v2260, %v2264
        %s2266 = scalar_lea.vmem [#allocation6], 16
        %v2267 = vld [vmem:[%s2266] sm:$0xf]
        %v2268 = vld [vmem:[%s2266 + $0x4] sm:$0xf]
        %v2269 = vld [vmem:[%s2266 + $0x8] sm:$0xf]
        %v2270 = vld [vmem:[%s2266 + $0xc] sm:$0xf]
        %v2271 = vunpack.c.l.b16 %v1895
        %v2272 = vunpack.c.l.b16 %v1905
        %v2273 = vunpack.c.l.b16 %v1919
        %v2274 = vunpack.c.l.b16 %v1929
        %v2275 = vunpack.c.l.b16 %v1943
        %v2276 = vunpack.c.l.b16 %v1953
        %v2277 = vunpack.c.l.b16 %v1967
        %v2278 = vunpack.c.l.b16 %v1977
        %v2279 = vunpack.c.l.b16 %v1991
        %v2280 = vunpack.c.l.b16 %v2001
        %v2281 = vunpack.c.l.b16 %v2015
        %v2282 = vunpack.c.l.b16 %v2025
        %v2283 = vunpack.c.l.b16 %v2039
        %v2284 = vunpack.c.l.b16 %v2049
        %v2285 = vunpack.c.l.b16 %v2063
        %v2286 = vunpack.c.l.b16 %v2073
        %v2287 = vunpack.c.l.b16 %v2087
        %v2288 = vunpack.c.l.b16 %v2097
        %v2289 = vunpack.c.l.b16 %v2111
        %v2290 = vunpack.c.l.b16 %v2121
        %v2291 = vunpack.c.l.b16 %v2135
        %v2292 = vunpack.c.l.b16 %v2145
        %v2293 = vunpack.c.l.b16 %v2159
        %v2294 = vunpack.c.l.b16 %v2169
        %v2295 = vunpack.c.l.b16 %v2183
        %v2296 = vunpack.c.l.b16 %v2193
        %v2297 = vunpack.c.l.b16 %v2207
        %v2298 = vunpack.c.l.b16 %v2217
        %v2299 = vunpack.c.l.b16 %v2231
        %v2300 = vunpack.c.l.b16 %v2241
        %v2301 = vunpack.c.l.b16 %v2255
        %v2302 = vunpack.c.l.b16 %v2265
        %v2303 = vpack.c.b16 %v2272, %v2271
        %v2304 = vpack.c.b16 %v2274, %v2273
        %v2305 = vpack.c.b16 %v2276, %v2275
        %v2306 = vpack.c.b16 %v2278, %v2277
        %v2307 = vpack.c.b16 %v2280, %v2279
        %v2308 = vpack.c.b16 %v2282, %v2281
        %v2309 = vpack.c.b16 %v2284, %v2283
        %v2310 = vpack.c.b16 %v2286, %v2285
        %v2311 = vpack.c.b16 %v2288, %v2287
        %v2312 = vpack.c.b16 %v2290, %v2289
        %v2313 = vpack.c.b16 %v2292, %v2291
        %v2314 = vpack.c.b16 %v2294, %v2293
        %v2315 = vpack.c.b16 %v2296, %v2295
        %v2316 = vpack.c.b16 %v2298, %v2297
        %v2317 = vpack.c.b16 %v2300, %v2299
        %v2318 = vpack.c.b16 %v2302, %v2301
        %v2323 = vunpack.c.l.b16 %v2267
        %v2324 = vunpack.c.l.b16 %v2268
        %v2325 = vunpack.c.l.b16 %v2269
        %v2326 = vunpack.c.l.b16 %v2270
        %v2327 = vpack.c.b16 %v2324, %v2323
        %v2328 = vpack.c.b16 %v2326, %v2325
        %vm2331 = vcmask 261120
        %v2333 = vsel %vm2331, %v2303, 0
        %v2336 = vsel %vm2331, %v2304, 0
        %v2339 = vsel %vm2331, %v2305, 0
        %v2342 = vsel %vm2331, %v2306, 0
        %v2345 = vsel %vm2331, %v2307, 0
        %v2348 = vsel %vm2331, %v2308, 0
        %v2351 = vsel %vm2331, %v2309, 0
        %v2354 = vsel %vm2331, %v2310, 0
        %v2357 = vsel %vm2331, %v2311, 0
        %v2360 = vsel %vm2331, %v2312, 0
        %v2363 = vsel %vm2331, %v2313, 0
        %v2366 = vsel %vm2331, %v2314, 0
        %v2369 = vsel %vm2331, %v2315, 0
        %v2372 = vsel %vm2331, %v2316, 0
        %v2375 = vsel %vm2331, %v2317, 0
        %v2378 = vsel %vm2331, %v2318, 0
        %2380 = vmatprep.subr.bf16.mxu0 0
        %2381 = vmatpush1.bf16.msra.mxu0 %v2327
        %2382 = vmatprep.subr.bf16.mxu0 0
        %2383 = vmatpush1.bf16.msra.mxu0 %v2328
        %2384 = vmatprep.subr.bf16.mxu0 0
        %2385 = vmatpush1.bf16.msra.mxu0 0
        %2386 = vmatprep.subr.bf16.mxu0 0
        %2387 = vmatpush1.bf16.msra.mxu0 0
        %2388 = vmatprep.subr.bf16.mxu0 0
        %2389 = vmatpush1.bf16.msra.mxu0 0
        %2390 = vmatprep.subr.bf16.mxu0 0
        %2391 = vmatpush1.bf16.msra.mxu0 0
        %2392 = vmatprep.subr.bf16.mxu0 0
        %2393 = vmatpush1.bf16.msra.mxu0 0
        %2394 = vmatprep.subr.bf16.mxu0 0
        %2395 = vmatpush1.bf16.msra.mxu0 0
        %2396 = vmatprep.subr.bf16.mxu0 0
        %2397 = vmatpush1.bf16.msra.mxu0 0
        %2398 = vmatprep.subr.bf16.mxu0 0
        %2399 = vmatpush1.bf16.msra.mxu0 0
        %2400 = vmatprep.subr.bf16.mxu0 0
        %2401 = vmatpush1.bf16.msra.mxu0 0
        %2402 = vmatprep.subr.bf16.mxu0 0
        %2403 = vmatpush1.bf16.msra.mxu0 0
        %2404 = vmatprep.subr.bf16.mxu0 0
        %2405 = vmatpush1.bf16.msra.mxu0 0
        %2406 = vmatprep.subr.bf16.mxu0 0
        %2407 = vmatpush1.bf16.msra.mxu0 0
        %2408 = vmatprep.subr.bf16.mxu0 0
        %2409 = vmatpush1.bf16.msra.mxu0 0
        %2410 = vmatprep.subr.bf16.mxu0 0
        %2411 = vmatpush1.bf16.msra.mxu0 0
        %2412 = vmatprep.mubr.bf16.mxu0 0
        %2413 = vmatmul.mubr.bf16.gmra.mrb[0].mxu0 %v2333
        %v2414 = vpop.f32.mrb[0].mxu0
        %v2415 = vadd.f32 0.0, %v2414
        %v2416 = vpop.f32.mrb[0].mxu0
        %v2417 = vpop.f32.mrb[0].mxu0
        %v2418 = vadd.f32 0.0, %v2417
        %v2419 = vpop.f32.mrb[0].mxu0
        %2420 = vmatprep.mubr.bf16.mxu0 0
        %2421 = vmatmul.mubr.bf16.gmra.mrb[0].mxu0 %v2336
        %v2422 = vpop.f32.mrb[0].mxu0
        %v2423 = vadd.f32 0.0, %v2422
        %v2424 = vpop.f32.mrb[0].mxu0
        %v2425 = vpop.f32.mrb[0].mxu0
        %v2426 = vadd.f32 0.0, %v2425
        %v2427 = vpop.f32.mrb[0].mxu0
        %2428 = vmatprep.mubr.bf16.mxu0 0
        %2429 = vmatmul.mubr.bf16.gmra.mrb[0].mxu0 %v2339
        %v2430 = vpop.f32.mrb[0].mxu0
        %v2431 = vadd.f32 0.0, %v2430
        %v2432 = vpop.f32.mrb[0].mxu0
        %v2433 = vpop.f32.mrb[0].mxu0
        %v2434 = vadd.f32 0.0, %v2433
        %v2435 = vpop.f32.mrb[0].mxu0
        %2436 = vmatprep.mubr.bf16.mxu0 0
        %2437 = vmatmul.mubr.bf16.gmra.mrb[0].mxu0 %v2342
        %v2438 = vpop.f32.mrb[0].mxu0
        %v2439 = vadd.f32 0.0, %v2438
        %v2440 = vpop.f32.mrb[0].mxu0
        %v2441 = vpop.f32.mrb[0].mxu0
        %v2442 = vadd.f32 0.0, %v2441
        %v2443 = vpop.f32.mrb[0].mxu0
        %2444 = vmatprep.mubr.bf16.mxu0 0
        %2445 = vmatmul.mubr.bf16.gmra.mrb[0].mxu0 %v2345
        %v2446 = vpop.f32.mrb[0].mxu0
        %v2447 = vadd.f32 0.0, %v2446
        %v2448 = vpop.f32.mrb[0].mxu0
        %v2449 = vpop.f32.mrb[0].mxu0
        %v2450 = vadd.f32 0.0, %v2449
        %v2451 = vpop.f32.mrb[0].mxu0
        %2452 = vmatprep.mubr.bf16.mxu0 0
        %2453 = vmatmul.mubr.bf16.gmra.mrb[0].mxu0 %v2348
        %v2454 = vpop.f32.mrb[0].mxu0
        %v2455 = vadd.f32 0.0, %v2454
        %v2456 = vpop.f32.mrb[0].mxu0
        %v2457 = vpop.f32.mrb[0].mxu0
        %v2458 = vadd.f32 0.0, %v2457
        %v2459 = vpop.f32.mrb[0].mxu0
        %2460 = vmatprep.mubr.bf16.mxu0 0
        %2461 = vmatmul.mubr.bf16.gmra.mrb[0].mxu0 %v2351
        %v2462 = vpop.f32.mrb[0].mxu0
        %v2463 = vadd.f32 0.0, %v2462
        %v2464 = vpop.f32.mrb[0].mxu0
        %v2465 = vpop.f32.mrb[0].mxu0
        %v2466 = vadd.f32 0.0, %v2465
        %v2467 = vpop.f32.mrb[0].mxu0
        %2468 = vmatprep.mubr.bf16.mxu0 0
        %2469 = vmatmul.mubr.bf16.gmra.mrb[0].mxu0 %v2354
        %v2470 = vpop.f32.mrb[0].mxu0
        %v2471 = vadd.f32 0.0, %v2470
        %v2472 = vpop.f32.mrb[0].mxu0
        %v2473 = vpop.f32.mrb[0].mxu0
        %v2474 = vadd.f32 0.0, %v2473
        %v2475 = vpop.f32.mrb[0].mxu0
        %2476 = vmatprep.mubr.bf16.mxu0 0
        %2477 = vmatmul.mubr.bf16.gmra.mrb[0].mxu0 %v2357
        %v2478 = vpop.f32.mrb[0].mxu0
        %v2479 = vadd.f32 0.0, %v2478
        %v2480 = vpop.f32.mrb[0].mxu0
        %v2481 = vpop.f32.mrb[0].mxu0
        %v2482 = vadd.f32 0.0, %v2481
        %v2483 = vpop.f32.mrb[0].mxu0
        %2484 = vmatprep.mubr.bf16.mxu0 0
        %2485 = vmatmul.mubr.bf16.gmra.mrb[0].mxu0 %v2360
        %v2486 = vpop.f32.mrb[0].mxu0
        %v2487 = vadd.f32 0.0, %v2486
        %v2488 = vpop.f32.mrb[0].mxu0
        %v2489 = vpop.f32.mrb[0].mxu0
        %v2490 = vadd.f32 0.0, %v2489
        %v2491 = vpop.f32.mrb[0].mxu0
        %2492 = vmatprep.mubr.bf16.mxu0 0
        %2493 = vmatmul.mubr.bf16.gmra.mrb[0].mxu0 %v2363
        %v2494 = vpop.f32.mrb[0].mxu0
        %v2495 = vadd.f32 0.0, %v2494
        %v2496 = vpop.f32.mrb[0].mxu0
        %v2497 = vpop.f32.mrb[0].mxu0
        %v2498 = vadd.f32 0.0, %v2497
        %v2499 = vpop.f32.mrb[0].mxu0
        %2500 = vmatprep.mubr.bf16.mxu0 0
        %2501 = vmatmul.mubr.bf16.gmra.mrb[0].mxu0 %v2366
        %v2502 = vpop.f32.mrb[0].mxu0
        %v2503 = vadd.f32 0.0, %v2502
        %v2504 = vpop.f32.mrb[0].mxu0
        %v2505 = vpop.f32.mrb[0].mxu0
        %v2506 = vadd.f32 0.0, %v2505
        %v2507 = vpop.f32.mrb[0].mxu0
        %2508 = vmatprep.mubr.bf16.mxu0 0
        %2509 = vmatmul.mubr.bf16.gmra.mrb[0].mxu0 %v2369
        %v2510 = vpop.f32.mrb[0].mxu0
        %v2511 = vadd.f32 0.0, %v2510
        %v2512 = vpop.f32.mrb[0].mxu0
        %v2513 = vpop.f32.mrb[0].mxu0
        %v2514 = vadd.f32 0.0, %v2513
        %v2515 = vpop.f32.mrb[0].mxu0
        %2516 = vmatprep.mubr.bf16.mxu0 0
        %2517 = vmatmul.mubr.bf16.gmra.mrb[0].mxu0 %v2372
        %v2518 = vpop.f32.mrb[0].mxu0
        %v2519 = vadd.f32 0.0, %v2518
        %v2520 = vpop.f32.mrb[0].mxu0
        %v2521 = vpop.f32.mrb[0].mxu0
        %v2522 = vadd.f32 0.0, %v2521
        %v2523 = vpop.f32.mrb[0].mxu0
        %2524 = vmatprep.mubr.bf16.mxu0 0
        %2525 = vmatmul.mubr.bf16.gmra.mrb[0].mxu0 %v2375
        %v2526 = vpop.f32.mrb[0].mxu0
        %v2527 = vadd.f32 0.0, %v2526
        %v2528 = vpop.f32.mrb[0].mxu0
        %v2529 = vpop.f32.mrb[0].mxu0
        %v2530 = vadd.f32 0.0, %v2529
        %v2531 = vpop.f32.mrb[0].mxu0
        %2532 = vmatprep.mubr.bf16.mxu0 0
        %2533 = vmatmul.mubr.bf16.gmra.mrb[0].mxu0 %v2378
        %v2534 = vpop.f32.mrb[0].mxu0
        %v2535 = vadd.f32 0.0, %v2534
        %v2536 = vpop.f32.mrb[0].mxu0
        %v2537 = vpop.f32.mrb[0].mxu0
        %v2538 = vadd.f32 0.0, %v2537
        %v2539 = vpop.f32.mrb[0].mxu0
        %2540 = vdwg.mxu0
        %v2573 = vunpack.c.l.b16 %v1827
        %v2574 = vunpack.c.l.b16 %v1828
        %v2575 = vunpack.c.l.b16 %v1829
        %v2576 = vunpack.c.l.b16 %v1830
        %v2577 = vunpack.c.l.b16 %v1831
        %v2578 = vunpack.c.l.b16 %v1832
        %v2579 = vunpack.c.l.b16 %v1833
        %v2580 = vunpack.c.l.b16 %v1834
        %v2581 = vunpack.c.l.b16 %v1835
        %v2582 = vunpack.c.l.b16 %v1836
        %v2583 = vunpack.c.l.b16 %v1837
        %v2584 = vunpack.c.l.b16 %v1838
        %v2585 = vunpack.c.l.b16 %v1839
        %v2586 = vunpack.c.l.b16 %v1840
        %v2587 = vunpack.c.l.b16 %v1841
        %v2588 = vunpack.c.l.b16 %v1842
        %v2589 = vunpack.c.l.b16 %v1843
        %v2590 = vunpack.c.l.b16 %v1844
        %v2591 = vunpack.c.l.b16 %v1845
        %v2592 = vunpack.c.l.b16 %v1846
        %v2593 = vunpack.c.l.b16 %v1847
        %v2594 = vunpack.c.l.b16 %v1848
        %v2595 = vunpack.c.l.b16 %v1849
        %v2596 = vunpack.c.l.b16 %v1850
        %v2597 = vunpack.c.l.b16 %v1851
        %v2598 = vunpack.c.l.b16 %v1852
        %v2599 = vunpack.c.l.b16 %v1853
        %v2600 = vunpack.c.l.b16 %v1854
        %v2601 = vunpack.c.l.b16 %v1855
        %v2602 = vunpack.c.l.b16 %v1856
        %v2603 = vunpack.c.l.b16 %v1857
        %v2604 = vunpack.c.l.b16 %v1858
        %v2605 = vpack.c.b16 %v2574, %v2573
        %v2606 = vpack.c.b16 %v2576, %v2575
        %v2607 = vpack.c.b16 %v2578, %v2577
        %v2608 = vpack.c.b16 %v2580, %v2579
        %v2609 = vpack.c.b16 %v2582, %v2581
        %v2610 = vpack.c.b16 %v2584, %v2583
        %v2611 = vpack.c.b16 %v2586, %v2585
        %v2612 = vpack.c.b16 %v2588, %v2587
        %v2613 = vpack.c.b16 %v2590, %v2589
        %v2614 = vpack.c.b16 %v2592, %v2591
        %v2615 = vpack.c.b16 %v2594, %v2593
        %v2616 = vpack.c.b16 %v2596, %v2595
        %v2617 = vpack.c.b16 %v2598, %v2597
        %v2618 = vpack.c.b16 %v2600, %v2599
        %v2619 = vpack.c.b16 %v2602, %v2601
        %v2620 = vpack.c.b16 %v2604, %v2603
        %v2625 = vunpack.c.l.b16 %v1859
        %v2626 = vunpack.c.l.b16 %v1860
        %v2627 = vunpack.c.l.b16 %v1861
        %v2628 = vunpack.c.l.b16 %v1862
        %v2629 = vpack.c.b16 %v2626, %v2625
        %v2630 = vpack.c.b16 %v2628, %v2627
        %v2634 = vsel %vm2331, %v2605, 0
        %v2637 = vsel %vm2331, %v2606, 0
        %v2640 = vsel %vm2331, %v2607, 0
        %v2643 = vsel %vm2331, %v2608, 0
        %v2646 = vsel %vm2331, %v2609, 0
        %v2649 = vsel %vm2331, %v2610, 0
        %v2652 = vsel %vm2331, %v2611, 0
        %v2655 = vsel %vm2331, %v2612, 0
        %v2658 = vsel %vm2331, %v2613, 0
        %v2661 = vsel %vm2331, %v2614, 0
        %v2664 = vsel %vm2331, %v2615, 0
        %v2667 = vsel %vm2331, %v2616, 0
        %v2670 = vsel %vm2331, %v2617, 0
        %v2673 = vsel %vm2331, %v2618, 0
        %v2676 = vsel %vm2331, %v2619, 0
        %v2679 = vsel %vm2331, %v2620, 0
        %2681 = vmatprep.subr.bf16.mxu0 0
        %2682 = vmatpush1.bf16.msra.mxu0 %v2629
        %2683 = vmatprep.subr.bf16.mxu0 0
        %2684 = vmatpush1.bf16.msra.mxu0 %v2630
        %2685 = vmatprep.subr.bf16.mxu0 0
        %2686 = vmatpush1.bf16.msra.mxu0 0
        %2687 = vmatprep.subr.bf16.mxu0 0
        %2688 = vmatpush1.bf16.msra.mxu0 0
        %2689 = vmatprep.subr.bf16.mxu0 0
        %2690 = vmatpush1.bf16.msra.mxu0 0
        %2691 = vmatprep.subr.bf16.mxu0 0
        %2692 = vmatpush1.bf16.msra.mxu0 0
        %2693 = vmatprep.subr.bf16.mxu0 0
        %2694 = vmatpush1.bf16.msra.mxu0 0
        %2695 = vmatprep.subr.bf16.mxu0 0
        %2696 = vmatpush1.bf16.msra.mxu0 0
        %2697 = vmatprep.subr.bf16.mxu0 0
        %2698 = vmatpush1.bf16.msra.mxu0 0
        %2699 = vmatprep.subr.bf16.mxu0 0
        %2700 = vmatpush1.bf16.msra.mxu0 0
        %2701 = vmatprep.subr.bf16.mxu0 0
        %2702 = vmatpush1.bf16.msra.mxu0 0
        %2703 = vmatprep.subr.bf16.mxu0 0
        %2704 = vmatpush1.bf16.msra.mxu0 0
        %2705 = vmatprep.subr.bf16.mxu0 0
        %2706 = vmatpush1.bf16.msra.mxu0 0
        %2707 = vmatprep.subr.bf16.mxu0 0
        %2708 = vmatpush1.bf16.msra.mxu0 0
        %2709 = vmatprep.subr.bf16.mxu0 0
        %2710 = vmatpush1.bf16.msra.mxu0 0
        %2711 = vmatprep.subr.bf16.mxu0 0
        %2712 = vmatpush1.bf16.msra.mxu0 0
        %2713 = vmatprep.mubr.bf16.mxu0 0
        %2714 = vmatmul.mubr.bf16.gmra.mrb[0].mxu0 %v2634
        %v2715 = vpop.f32.mrb[0].mxu0
        %v2716 = vadd.f32 %v2415, %v2715
        %v2717 = vpop.f32.mrb[0].mxu0
        %v2718 = vpop.f32.mrb[0].mxu0
        %v2719 = vadd.f32 %v2418, %v2718
        %v2720 = vpop.f32.mrb[0].mxu0
        %2721 = vmatprep.mubr.bf16.mxu0 0
        %2722 = vmatmul.mubr.bf16.gmra.mrb[0].mxu0 %v2637
        %v2723 = vpop.f32.mrb[0].mxu0
        %v2724 = vadd.f32 %v2423, %v2723
        %v2725 = vpop.f32.mrb[0].mxu0
        %v2726 = vpop.f32.mrb[0].mxu0
        %v2727 = vadd.f32 %v2426, %v2726
        %v2728 = vpop.f32.mrb[0].mxu0
        %2729 = vmatprep.mubr.bf16.mxu0 0
        %2730 = vmatmul.mubr.bf16.gmra.mrb[0].mxu0 %v2640
        %v2731 = vpop.f32.mrb[0].mxu0
        %v2732 = vadd.f32 %v2431, %v2731
        %v2733 = vpop.f32.mrb[0].mxu0
        %v2734 = vpop.f32.mrb[0].mxu0
        %v2735 = vadd.f32 %v2434, %v2734
        %v2736 = vpop.f32.mrb[0].mxu0
        %2737 = vmatprep.mubr.bf16.mxu0 0
        %2738 = vmatmul.mubr.bf16.gmra.mrb[0].mxu0 %v2643
        %v2739 = vpop.f32.mrb[0].mxu0
        %v2740 = vadd.f32 %v2439, %v2739
        %v2741 = vpop.f32.mrb[0].mxu0
        %v2742 = vpop.f32.mrb[0].mxu0
        %v2743 = vadd.f32 %v2442, %v2742
        %v2744 = vpop.f32.mrb[0].mxu0
        %2745 = vmatprep.mubr.bf16.mxu0 0
        %2746 = vmatmul.mubr.bf16.gmra.mrb[0].mxu0 %v2646
        %v2747 = vpop.f32.mrb[0].mxu0
        %v2748 = vadd.f32 %v2447, %v2747
        %v2749 = vpop.f32.mrb[0].mxu0
        %v2750 = vpop.f32.mrb[0].mxu0
        %v2751 = vadd.f32 %v2450, %v2750
        %v2752 = vpop.f32.mrb[0].mxu0
        %2753 = vmatprep.mubr.bf16.mxu0 0
        %2754 = vmatmul.mubr.bf16.gmra.mrb[0].mxu0 %v2649
        %v2755 = vpop.f32.mrb[0].mxu0
        %v2756 = vadd.f32 %v2455, %v2755
        %v2757 = vpop.f32.mrb[0].mxu0
        %v2758 = vpop.f32.mrb[0].mxu0
        %v2759 = vadd.f32 %v2458, %v2758
        %v2760 = vpop.f32.mrb[0].mxu0
        %2761 = vmatprep.mubr.bf16.mxu0 0
        %2762 = vmatmul.mubr.bf16.gmra.mrb[0].mxu0 %v2652
        %v2763 = vpop.f32.mrb[0].mxu0
        %v2764 = vadd.f32 %v2463, %v2763
        %v2765 = vpop.f32.mrb[0].mxu0
        %v2766 = vpop.f32.mrb[0].mxu0
        %v2767 = vadd.f32 %v2466, %v2766
        %v2768 = vpop.f32.mrb[0].mxu0
        %2769 = vmatprep.mubr.bf16.mxu0 0
        %2770 = vmatmul.mubr.bf16.gmra.mrb[0].mxu0 %v2655
        %v2771 = vpop.f32.mrb[0].mxu0
        %v2772 = vadd.f32 %v2471, %v2771
        %v2773 = vpop.f32.mrb[0].mxu0
        %v2774 = vpop.f32.mrb[0].mxu0
        %v2775 = vadd.f32 %v2474, %v2774
        %v2776 = vpop.f32.mrb[0].mxu0
        %2777 = vmatprep.mubr.bf16.mxu0 0
        %2778 = vmatmul.mubr.bf16.gmra.mrb[0].mxu0 %v2658
        %v2779 = vpop.f32.mrb[0].mxu0
        %v2780 = vadd.f32 %v2479, %v2779
        %v2781 = vpop.f32.mrb[0].mxu0
        %v2782 = vpop.f32.mrb[0].mxu0
        %v2783 = vadd.f32 %v2482, %v2782
        %v2784 = vpop.f32.mrb[0].mxu0
        %2785 = vmatprep.mubr.bf16.mxu0 0
        %2786 = vmatmul.mubr.bf16.gmra.mrb[0].mxu0 %v2661
        %v2787 = vpop.f32.mrb[0].mxu0
        %v2788 = vadd.f32 %v2487, %v2787
        %v2789 = vpop.f32.mrb[0].mxu0
        %v2790 = vpop.f32.mrb[0].mxu0
        %v2791 = vadd.f32 %v2490, %v2790
        %v2792 = vpop.f32.mrb[0].mxu0
        %2793 = vmatprep.mubr.bf16.mxu0 0
        %2794 = vmatmul.mubr.bf16.gmra.mrb[0].mxu0 %v2664
        %v2795 = vpop.f32.mrb[0].mxu0
        %v2796 = vadd.f32 %v2495, %v2795
        %v2797 = vpop.f32.mrb[0].mxu0
        %v2798 = vpop.f32.mrb[0].mxu0
        %v2799 = vadd.f32 %v2498, %v2798
        %v2800 = vpop.f32.mrb[0].mxu0
        %2801 = vmatprep.mubr.bf16.mxu0 0
        %2802 = vmatmul.mubr.bf16.gmra.mrb[0].mxu0 %v2667
        %v2803 = vpop.f32.mrb[0].mxu0
        %v2804 = vadd.f32 %v2503, %v2803
        %v2805 = vpop.f32.mrb[0].mxu0
        %v2806 = vpop.f32.mrb[0].mxu0
        %v2807 = vadd.f32 %v2506, %v2806
        %v2808 = vpop.f32.mrb[0].mxu0
        %2809 = vmatprep.mubr.bf16.mxu0 0
        %2810 = vmatmul.mubr.bf16.gmra.mrb[0].mxu0 %v2670
        %v2811 = vpop.f32.mrb[0].mxu0
        %v2812 = vadd.f32 %v2511, %v2811
        %v2813 = vpop.f32.mrb[0].mxu0
        %v2814 = vpop.f32.mrb[0].mxu0
        %v2815 = vadd.f32 %v2514, %v2814
        %v2816 = vpop.f32.mrb[0].mxu0
        %2817 = vmatprep.mubr.bf16.mxu0 0
        %2818 = vmatmul.mubr.bf16.gmra.mrb[0].mxu0 %v2673
        %v2819 = vpop.f32.mrb[0].mxu0
        %v2820 = vadd.f32 %v2519, %v2819
        %v2821 = vpop.f32.mrb[0].mxu0
        %v2822 = vpop.f32.mrb[0].mxu0
        %v2823 = vadd.f32 %v2522, %v2822
        %v2824 = vpop.f32.mrb[0].mxu0
        %2825 = vmatprep.mubr.bf16.mxu0 0
        %2826 = vmatmul.mubr.bf16.gmra.mrb[0].mxu0 %v2676
        %v2827 = vpop.f32.mrb[0].mxu0
        %v2828 = vadd.f32 %v2527, %v2827
        %v2829 = vpop.f32.mrb[0].mxu0
        %v2830 = vpop.f32.mrb[0].mxu0
        %v2831 = vadd.f32 %v2530, %v2830
        %v2832 = vpop.f32.mrb[0].mxu0
        %2833 = vmatprep.mubr.bf16.mxu0 0
        %2834 = vmatmul.mubr.bf16.gmra.mrb[0].mxu0 %v2679
        %v2835 = vpop.f32.mrb[0].mxu0
        %v2836 = vadd.f32 %v2535, %v2835
        %v2837 = vpop.f32.mrb[0].mxu0
        %v2838 = vpop.f32.mrb[0].mxu0
        %v2839 = vadd.f32 %v2538, %v2838
        %v2840 = vpop.f32.mrb[0].mxu0
        %2841 = vdwg.mxu0
        %v2842 = vld [vmem:[#allocation2] sm:$0xe]
        %v2843 = vld [vmem:[#allocation2 + $0xc] sm:$0xe]
        %v2844 = vld [vmem:[#allocation2 + $0x18] sm:$0xe]
        %v2845 = vld [vmem:[#allocation2 + $0x24] sm:$0xe]
        %v2846 = vld [vmem:[#allocation2 + $0x30] sm:$0xe]
        %v2847 = vld [vmem:[#allocation2 + $0x3c] sm:$0xe]
        %v2848 = vld [vmem:[#allocation2 + $0x48] sm:$0xe]
        %v2849 = vld [vmem:[#allocation2 + $0x54] sm:$0xe]
        %v2850 = vld [vmem:[#allocation2 + $0x60] sm:$0xe]
        %v2851 = vld [vmem:[#allocation2 + $0x6c] sm:$0xe]
        %v2852 = vld [vmem:[#allocation2 + $0x78] sm:$0xe]
        %v2853 = vld [vmem:[#allocation2 + $0x84] sm:$0xe]
        %v2854 = vld [vmem:[#allocation2 + $0x90] sm:$0xe]
        %v2855 = vld [vmem:[#allocation2 + $0x9c] sm:$0xe]
        %v2856 = vld [vmem:[#allocation2 + $0xa8] sm:$0xe]
        %v2857 = vld [vmem:[#allocation2 + $0xb4] sm:$0xe]
        %vm2890 = vcmask 1042432
        %vm2891 = vcmask 1046532
        %vm2892 = vmor %vm2890, %vm2891
        %v2893 = vrot.slane %v2842, 5
        %v2894 = vrot.slane %v2893, 4
        %v2895 = vrot.slane %v1828, 5
        %v2896 = vsel %vm2892, %v2894, %v2895
        %v2897 = vrot.slane %v2895, 4
        %v2898 = vrot.slane %v1863, 5
        %v2899 = vsel %vm2892, %v2897, %v2898
        %v2900 = vrot.slane %v2843, 5
        %v2901 = vrot.slane %v2900, 4
        %v2902 = vrot.slane %v1830, 5
        %v2903 = vsel %vm2892, %v2901, %v2902
        %v2904 = vrot.slane %v2902, 4
        %v2905 = vrot.slane %v1864, 5
        %v2906 = vsel %vm2892, %v2904, %v2905
        %v2907 = vrot.slane %v2844, 5
        %v2908 = vrot.slane %v2907, 4
        %v2909 = vrot.slane %v1832, 5
        %v2910 = vsel %vm2892, %v2908, %v2909
        %v2911 = vrot.slane %v2909, 4
        %v2912 = vrot.slane %v1865, 5
        %v2913 = vsel %vm2892, %v2911, %v2912
        %v2914 = vrot.slane %v2845, 5
        %v2915 = vrot.slane %v2914, 4
        %v2916 = vrot.slane %v1834, 5
        %v2917 = vsel %vm2892, %v2915, %v2916
        %v2918 = vrot.slane %v2916, 4
        %v2919 = vrot.slane %v1866, 5
        %v2920 = vsel %vm2892, %v2918, %v2919
        %v2921 = vrot.slane %v2846, 5
        %v2922 = vrot.slane %v2921, 4
        %v2923 = vrot.slane %v1836, 5
        %v2924 = vsel %vm2892, %v2922, %v2923
        %v2925 = vrot.slane %v2923, 4
        %v2926 = vrot.slane %v1867, 5
        %v2927 = vsel %vm2892, %v2925, %v2926
        %v2928 = vrot.slane %v2847, 5
        %v2929 = vrot.slane %v2928, 4
        %v2930 = vrot.slane %v1838, 5
        %v2931 = vsel %vm2892, %v2929, %v2930
        %v2932 = vrot.slane %v2930, 4
        %v2933 = vrot.slane %v1868, 5
        %v2934 = vsel %vm2892, %v2932, %v2933
        %v2935 = vrot.slane %v2848, 5
        %v2936 = vrot.slane %v2935, 4
        %v2937 = vrot.slane %v1840, 5
        %v2938 = vsel %vm2892, %v2936, %v2937
        %v2939 = vrot.slane %v2937, 4
        %v2940 = vrot.slane %v1869, 5
        %v2941 = vsel %vm2892, %v2939, %v2940
        %v2942 = vrot.slane %v2849, 5
        %v2943 = vrot.slane %v2942, 4
        %v2944 = vrot.slane %v1842, 5
        %v2945 = vsel %vm2892, %v2943, %v2944
        %v2946 = vrot.slane %v2944, 4
        %v2947 = vrot.slane %v1870, 5
        %v2948 = vsel %vm2892, %v2946, %v2947
        %v2949 = vrot.slane %v2850, 5
        %v2950 = vrot.slane %v2949, 4
        %v2951 = vrot.slane %v1844, 5
        %v2952 = vsel %vm2892, %v2950, %v2951
        %v2953 = vrot.slane %v2951, 4
        %v2954 = vrot.slane %v1871, 5
        %v2955 = vsel %vm2892, %v2953, %v2954
        %v2956 = vrot.slane %v2851, 5
        %v2957 = vrot.slane %v2956, 4
        %v2958 = vrot.slane %v1846, 5
        %v2959 = vsel %vm2892, %v2957, %v2958
        %v2960 = vrot.slane %v2958, 4
        %v2961 = vrot.slane %v1872, 5
        %v2962 = vsel %vm2892, %v2960, %v2961
        %v2963 = vrot.slane %v2852, 5
        %v2964 = vrot.slane %v2963, 4
        %v2965 = vrot.slane %v1848, 5
        %v2966 = vsel %vm2892, %v2964, %v2965
        %v2967 = vrot.slane %v2965, 4
        %v2968 = vrot.slane %v1873, 5
        %v2969 = vsel %vm2892, %v2967, %v2968
        %v2970 = vrot.slane %v2853, 5
        %v2971 = vrot.slane %v2970, 4
        %v2972 = vrot.slane %v1850, 5
        %v2973 = vsel %vm2892, %v2971, %v2972
        %v2974 = vrot.slane %v2972, 4
        %v2975 = vrot.slane %v1874, 5
        %v2976 = vsel %vm2892, %v2974, %v2975
        %v2977 = vrot.slane %v2854, 5
        %v2978 = vrot.slane %v2977, 4
        %v2979 = vrot.slane %v1852, 5
        %v2980 = vsel %vm2892, %v2978, %v2979
        %v2981 = vrot.slane %v2979, 4
        %v2982 = vrot.slane %v1875, 5
        %v2983 = vsel %vm2892, %v2981, %v2982
        %v2984 = vrot.slane %v2855, 5
        %v2985 = vrot.slane %v2984, 4
        %v2986 = vrot.slane %v1854, 5
        %v2987 = vsel %vm2892, %v2985, %v2986
        %v2988 = vrot.slane %v2986, 4
        %v2989 = vrot.slane %v1876, 5
        %v2990 = vsel %vm2892, %v2988, %v2989
        %v2991 = vrot.slane %v2856, 5
        %v2992 = vrot.slane %v2991, 4
        %v2993 = vrot.slane %v1856, 5
        %v2994 = vsel %vm2892, %v2992, %v2993
        %v2995 = vrot.slane %v2993, 4
        %v2996 = vrot.slane %v1877, 5
        %v2997 = vsel %vm2892, %v2995, %v2996
        %v2998 = vrot.slane %v2857, 5
        %v2999 = vrot.slane %v2998, 4
        %v3000 = vrot.slane %v1858, 5
        %v3001 = vsel %vm2892, %v2999, %v3000
        %v3002 = vrot.slane %v3000, 4
        %v3003 = vrot.slane %v1878, 5
        %v3004 = vsel %vm2892, %v3002, %v3003
        %s3005 = scalar_lea.vmem [#allocation6], 32
        %v3006 = vld [vmem:[%s3005] sm:$0xf]
        %v3007 = vld [vmem:[%s3005 + $0x4] sm:$0xf]
        %v3008 = vld [vmem:[%s3005 + $0x8] sm:$0xf]
        %v3009 = vld [vmem:[%s3005 + $0xc] sm:$0xf]
        %v3010 = vunpack.c.l.b16 %v2896
        %v3011 = vunpack.c.l.b16 %v2899
        %v3012 = vunpack.c.l.b16 %v2903
        %v3013 = vunpack.c.l.b16 %v2906
        %v3014 = vunpack.c.l.b16 %v2910
        %v3015 = vunpack.c.l.b16 %v2913
        %v3016 = vunpack.c.l.b16 %v2917
        %v3017 = vunpack.c.l.b16 %v2920
        %v3018 = vunpack.c.l.b16 %v2924
        %v3019 = vunpack.c.l.b16 %v2927
        %v3020 = vunpack.c.l.b16 %v2931
        %v3021 = vunpack.c.l.b16 %v2934
        %v3022 = vunpack.c.l.b16 %v2938
        %v3023 = vunpack.c.l.b16 %v2941
        %v3024 = vunpack.c.l.b16 %v2945
        %v3025 = vunpack.c.l.b16 %v2948
        %v3026 = vunpack.c.l.b16 %v2952
        %v3027 = vunpack.c.l.b16 %v2955
        %v3028 = vunpack.c.l.b16 %v2959
        %v3029 = vunpack.c.l.b16 %v2962
        %v3030 = vunpack.c.l.b16 %v2966
        %v3031 = vunpack.c.l.b16 %v2969
        %v3032 = vunpack.c.l.b16 %v2973
        %v3033 = vunpack.c.l.b16 %v2976
        %v3034 = vunpack.c.l.b16 %v2980
        %v3035 = vunpack.c.l.b16 %v2983
        %v3036 = vunpack.c.l.b16 %v2987
        %v3037 = vunpack.c.l.b16 %v2990
        %v3038 = vunpack.c.l.b16 %v2994
        %v3039 = vunpack.c.l.b16 %v2997
        %v3040 = vunpack.c.l.b16 %v3001
        %v3041 = vunpack.c.l.b16 %v3004
        %v3042 = vpack.c.b16 %v3011, %v3010
        %v3043 = vpack.c.b16 %v3013, %v3012
        %v3044 = vpack.c.b16 %v3015, %v3014
        %v3045 = vpack.c.b16 %v3017, %v3016
        %v3046 = vpack.c.b16 %v3019, %v3018
        %v3047 = vpack.c.b16 %v3021, %v3020
        %v3048 = vpack.c.b16 %v3023, %v3022
        %v3049 = vpack.c.b16 %v3025, %v3024
        %v3050 = vpack.c.b16 %v3027, %v3026
        %v3051 = vpack.c.b16 %v3029, %v3028
        %v3052 = vpack.c.b16 %v3031, %v3030
        %v3053 = vpack.c.b16 %v3033, %v3032
        %v3054 = vpack.c.b16 %v3035, %v3034
        %v3055 = vpack.c.b16 %v3037, %v3036
        %v3056 = vpack.c.b16 %v3039, %v3038
        %v3057 = vpack.c.b16 %v3041, %v3040
        %v3062 = vunpack.c.l.b16 %v3006
        %v3063 = vunpack.c.l.b16 %v3007
        %v3064 = vunpack.c.l.b16 %v3008
        %v3065 = vunpack.c.l.b16 %v3009
        %v3066 = vpack.c.b16 %v3063, %v3062
        %v3067 = vpack.c.b16 %v3065, %v3064
        %v3071 = vsel %vm2331, %v3042, 0
        %v3074 = vsel %vm2331, %v3043, 0
        %v3077 = vsel %vm2331, %v3044, 0
        %v3080 = vsel %vm2331, %v3045, 0
        %v3083 = vsel %vm2331, %v3046, 0
        %v3086 = vsel %vm2331, %v3047, 0
        %v3089 = vsel %vm2331, %v3048, 0
        %v3092 = vsel %vm2331, %v3049, 0
        %v3095 = vsel %vm2331, %v3050, 0
        %v3098 = vsel %vm2331, %v3051, 0
        %v3101 = vsel %vm2331, %v3052, 0
        %v3104 = vsel %vm2331, %v3053, 0
        %v3107 = vsel %vm2331, %v3054, 0
        %v3110 = vsel %vm2331, %v3055, 0
        %v3113 = vsel %vm2331, %v3056, 0
        %v3116 = vsel %vm2331, %v3057, 0
        %3118 = vmatprep.subr.bf16.mxu0 0
        %3119 = vmatpush1.bf16.msra.mxu0 %v3066
        %3120 = vmatprep.subr.bf16.mxu0 0
        %3121 = vmatpush1.bf16.msra.mxu0 %v3067
        %3122 = vmatprep.subr.bf16.mxu0 0
        %3123 = vmatpush1.bf16.msra.mxu0 0
        %3124 = vmatprep.subr.bf16.mxu0 0
        %3125 = vmatpush1.bf16.msra.mxu0 0
        %3126 = vmatprep.subr.bf16.mxu0 0
        %3127 = vmatpush1.bf16.msra.mxu0 0
        %3128 = vmatprep.subr.bf16.mxu0 0
        %3129 = vmatpush1.bf16.msra.mxu0 0
        %3130 = vmatprep.subr.bf16.mxu0 0
        %3131 = vmatpush1.bf16.msra.mxu0 0
        %3132 = vmatprep.subr.bf16.mxu0 0
        %3133 = vmatpush1.bf16.msra.mxu0 0
        %3134 = vmatprep.subr.bf16.mxu0 0
        %3135 = vmatpush1.bf16.msra.mxu0 0
        %3136 = vmatprep.subr.bf16.mxu0 0
        %3137 = vmatpush1.bf16.msra.mxu0 0
        %3138 = vmatprep.subr.bf16.mxu0 0
        %3139 = vmatpush1.bf16.msra.mxu0 0
        %3140 = vmatprep.subr.bf16.mxu0 0
        %3141 = vmatpush1.bf16.msra.mxu0 0
        %3142 = vmatprep.subr.bf16.mxu0 0
        %3143 = vmatpush1.bf16.msra.mxu0 0
        %3144 = vmatprep.subr.bf16.mxu0 0
        %3145 = vmatpush1.bf16.msra.mxu0 0
        %3146 = vmatprep.subr.bf16.mxu0 0
        %3147 = vmatpush1.bf16.msra.mxu0 0
        %3148 = vmatprep.subr.bf16.mxu0 0
        %3149 = vmatpush1.bf16.msra.mxu0 0
        %3150 = vmatprep.mubr.bf16.mxu0 0
        %3151 = vmatmul.mubr.bf16.gmra.mrb[0].mxu0 %v3071
        %v3152 = vpop.f32.mrb[0].mxu0
        %v3153 = vadd.f32 0.0, %v3152
        %v3154 = vpop.f32.mrb[0].mxu0
        %v3155 = vpop.f32.mrb[0].mxu0
        %v3156 = vadd.f32 0.0, %v3155
        %v3157 = vpop.f32.mrb[0].mxu0
        %3158 = vmatprep.mubr.bf16.mxu0 0
        %3159 = vmatmul.mubr.bf16.gmra.mrb[0].mxu0 %v3074
        %v3160 = vpop.f32.mrb[0].mxu0
        %v3161 = vadd.f32 0.0, %v3160
        %v3162 = vpop.f32.mrb[0].mxu0
        %v3163 = vpop.f32.mrb[0].mxu0
        %v3164 = vadd.f32 0.0, %v3163
        %v3165 = vpop.f32.mrb[0].mxu0
        %3166 = vmatprep.mubr.bf16.mxu0 0
        %3167 = vmatmul.mubr.bf16.gmra.mrb[0].mxu0 %v3077
        %v3168 = vpop.f32.mrb[0].mxu0
        %v3169 = vadd.f32 0.0, %v3168
        %v3170 = vpop.f32.mrb[0].mxu0
        %v3171 = vpop.f32.mrb[0].mxu0
        %v3172 = vadd.f32 0.0, %v3171
        %v3173 = vpop.f32.mrb[0].mxu0
        %3174 = vmatprep.mubr.bf16.mxu0 0
        %3175 = vmatmul.mubr.bf16.gmra.mrb[0].mxu0 %v3080
        %v3176 = vpop.f32.mrb[0].mxu0
        %v3177 = vadd.f32 0.0, %v3176
        %v3178 = vpop.f32.mrb[0].mxu0
        %v3179 = vpop.f32.mrb[0].mxu0
        %v3180 = vadd.f32 0.0, %v3179
        %v3181 = vpop.f32.mrb[0].mxu0
        %3182 = vmatprep.mubr.bf16.mxu0 0
        %3183 = vmatmul.mubr.bf16.gmra.mrb[0].mxu0 %v3083
        %v3184 = vpop.f32.mrb[0].mxu0
        %v3185 = vadd.f32 0.0, %v3184
        %v3186 = vpop.f32.mrb[0].mxu0
        %v3187 = vpop.f32.mrb[0].mxu0
        %v3188 = vadd.f32 0.0, %v3187
        %v3189 = vpop.f32.mrb[0].mxu0
        %3190 = vmatprep.mubr.bf16.mxu0 0
        %3191 = vmatmul.mubr.bf16.gmra.mrb[0].mxu0 %v3086
        %v3192 = vpop.f32.mrb[0].mxu0
        %v3193 = vadd.f32 0.0, %v3192
        %v3194 = vpop.f32.mrb[0].mxu0
        %v3195 = vpop.f32.mrb[0].mxu0
        %v3196 = vadd.f32 0.0, %v3195
        %v3197 = vpop.f32.mrb[0].mxu0
        %3198 = vmatprep.mubr.bf16.mxu0 0
        %3199 = vmatmul.mubr.bf16.gmra.mrb[0].mxu0 %v3089
        %v3200 = vpop.f32.mrb[0].mxu0
        %v3201 = vadd.f32 0.0, %v3200
        %v3202 = vpop.f32.mrb[0].mxu0
        %v3203 = vpop.f32.mrb[0].mxu0
        %v3204 = vadd.f32 0.0, %v3203
        %v3205 = vpop.f32.mrb[0].mxu0
        %3206 = vmatprep.mubr.bf16.mxu0 0
        %3207 = vmatmul.mubr.bf16.gmra.mrb[0].mxu0 %v3092
        %v3208 = vpop.f32.mrb[0].mxu0
        %v3209 = vadd.f32 0.0, %v3208
        %v3210 = vpop.f32.mrb[0].mxu0
        %v3211 = vpop.f32.mrb[0].mxu0
        %v3212 = vadd.f32 0.0, %v3211
        %v3213 = vpop.f32.mrb[0].mxu0
        %3214 = vmatprep.mubr.bf16.mxu0 0
        %3215 = vmatmul.mubr.bf16.gmra.mrb[0].mxu0 %v3095
        %v3216 = vpop.f32.mrb[0].mxu0
        %v3217 = vadd.f32 0.0, %v3216
        %v3218 = vpop.f32.mrb[0].mxu0
        %v3219 = vpop.f32.mrb[0].mxu0
        %v3220 = vadd.f32 0.0, %v3219
        %v3221 = vpop.f32.mrb[0].mxu0
        %3222 = vmatprep.mubr.bf16.mxu0 0
        %3223 = vmatmul.mubr.bf16.gmra.mrb[0].mxu0 %v3098
        %v3224 = vpop.f32.mrb[0].mxu0
        %v3225 = vadd.f32 0.0, %v3224
        %v3226 = vpop.f32.mrb[0].mxu0
        %v3227 = vpop.f32.mrb[0].mxu0
        %v3228 = vadd.f32 0.0, %v3227
        %v3229 = vpop.f32.mrb[0].mxu0
        %3230 = vmatprep.mubr.bf16.mxu0 0
        %3231 = vmatmul.mubr.bf16.gmra.mrb[0].mxu0 %v3101
        %v3232 = vpop.f32.mrb[0].mxu0
        %v3233 = vadd.f32 0.0, %v3232
        %v3234 = vpop.f32.mrb[0].mxu0
        %v3235 = vpop.f32.mrb[0].mxu0
        %v3236 = vadd.f32 0.0, %v3235
        %v3237 = vpop.f32.mrb[0].mxu0
        %3238 = vmatprep.mubr.bf16.mxu0 0
        %3239 = vmatmul.mubr.bf16.gmra.mrb[0].mxu0 %v3104
        %v3240 = vpop.f32.mrb[0].mxu0
        %v3241 = vadd.f32 0.0, %v3240
        %v3242 = vpop.f32.mrb[0].mxu0
        %v3243 = vpop.f32.mrb[0].mxu0
        %v3244 = vadd.f32 0.0, %v3243
        %v3245 = vpop.f32.mrb[0].mxu0
        %3246 = vmatprep.mubr.bf16.mxu0 0
        %3247 = vmatmul.mubr.bf16.gmra.mrb[0].mxu0 %v3107
        %v3248 = vpop.f32.mrb[0].mxu0
        %v3249 = vadd.f32 0.0, %v3248
        %v3250 = vpop.f32.mrb[0].mxu0
        %v3251 = vpop.f32.mrb[0].mxu0
        %v3252 = vadd.f32 0.0, %v3251
        %v3253 = vpop.f32.mrb[0].mxu0
        %3254 = vmatprep.mubr.bf16.mxu0 0
        %3255 = vmatmul.mubr.bf16.gmra.mrb[0].mxu0 %v3110
        %v3256 = vpop.f32.mrb[0].mxu0
        %v3257 = vadd.f32 0.0, %v3256
        %v3258 = vpop.f32.mrb[0].mxu0
        %v3259 = vpop.f32.mrb[0].mxu0
        %v3260 = vadd.f32 0.0, %v3259
        %v3261 = vpop.f32.mrb[0].mxu0
        %3262 = vmatprep.mubr.bf16.mxu0 0
        %3263 = vmatmul.mubr.bf16.gmra.mrb[0].mxu0 %v3113
        %v3264 = vpop.f32.mrb[0].mxu0
        %v3265 = vadd.f32 0.0, %v3264
        %v3266 = vpop.f32.mrb[0].mxu0
        %v3267 = vpop.f32.mrb[0].mxu0
        %v3268 = vadd.f32 0.0, %v3267
        %v3269 = vpop.f32.mrb[0].mxu0
        %3270 = vmatprep.mubr.bf16.mxu0 0
        %3271 = vmatmul.mubr.bf16.gmra.mrb[0].mxu0 %v3116
        %v3272 = vpop.f32.mrb[0].mxu0
        %v3273 = vadd.f32 0.0, %v3272
        %v3274 = vpop.f32.mrb[0].mxu0
        %v3275 = vpop.f32.mrb[0].mxu0
        %v3276 = vadd.f32 0.0, %v3275
        %v3277 = vpop.f32.mrb[0].mxu0
        %3278 = vdwg.mxu0
        %v3279 = vadd.f32 %v2716, %v3153
        %v3280 = vadd.f32 %v2719, %v3156
        %v3281 = vadd.f32 %v2724, %v3161
        %v3282 = vadd.f32 %v2727, %v3164
        %v3283 = vadd.f32 %v2732, %v3169
        %v3284 = vadd.f32 %v2735, %v3172
        %v3285 = vadd.f32 %v2740, %v3177
        %v3286 = vadd.f32 %v2743, %v3180
        %v3287 = vadd.f32 %v2748, %v3185
        %v3288 = vadd.f32 %v2751, %v3188
        %v3289 = vadd.f32 %v2756, %v3193
        %v3290 = vadd.f32 %v2759, %v3196
        %v3291 = vadd.f32 %v2764, %v3201
        %v3292 = vadd.f32 %v2767, %v3204
        %v3293 = vadd.f32 %v2772, %v3209
        %v3294 = vadd.f32 %v2775, %v3212
        %v3295 = vadd.f32 %v2780, %v3217
        %v3296 = vadd.f32 %v2783, %v3220
        %v3297 = vadd.f32 %v2788, %v3225
        %v3298 = vadd.f32 %v2791, %v3228
        %v3299 = vadd.f32 %v2796, %v3233
        %v3300 = vadd.f32 %v2799, %v3236
        %v3301 = vadd.f32 %v2804, %v3241
        %v3302 = vadd.f32 %v2807, %v3244
        %v3303 = vadd.f32 %v2812, %v3249
        %v3304 = vadd.f32 %v2815, %v3252
        %v3305 = vadd.f32 %v2820, %v3257
        %v3306 = vadd.f32 %v2823, %v3260
        %v3307 = vadd.f32 %v2828, %v3265
        %v3308 = vadd.f32 %v2831, %v3268
        %v3309 = vadd.f32 %v2836, %v3273
        %v3310 = vadd.f32 %v2839, %v3276
        %v3311 = vld [vmem:[%s1471] sm:$0xf]
        %v3312 = vld [vmem:[%s1471 + $0x4] sm:$0xf]
        %v3313 = vld [vmem:[%s1471 + $0xc] sm:$0xf]
        %v3314 = vld [vmem:[%s1471 + $0x10] sm:$0xf]
        %v3315 = vld [vmem:[%s1471 + $0x18] sm:$0xf]
        %v3316 = vld [vmem:[%s1471 + $0x1c] sm:$0xf]
        %v3317 = vld [vmem:[%s1471 + $0x24] sm:$0xf]
        %v3318 = vld [vmem:[%s1471 + $0x28] sm:$0xf]
        %v3319 = vld [vmem:[%s1471 + $0x30] sm:$0xf]
        %v3320 = vld [vmem:[%s1471 + $0x34] sm:$0xf]
        %v3321 = vld [vmem:[%s1471 + $0x3c] sm:$0xf]
        %v3322 = vld [vmem:[%s1471 + $0x40] sm:$0xf]
        %v3323 = vld [vmem:[%s1471 + $0x48] sm:$0xf]
        %v3324 = vld [vmem:[%s1471 + $0x4c] sm:$0xf]
        %v3325 = vld [vmem:[%s1471 + $0x54] sm:$0xf]
        %v3326 = vld [vmem:[%s1471 + $0x58] sm:$0xf]
        %v3327 = vld [vmem:[%s1471 + $0x60] sm:$0xf]
        %v3328 = vld [vmem:[%s1471 + $0x64] sm:$0xf]
        %v3329 = vld [vmem:[%s1471 + $0x6c] sm:$0xf]
        %v3330 = vld [vmem:[%s1471 + $0x70] sm:$0xf]
        %v3331 = vld [vmem:[%s1471 + $0x78] sm:$0xf]
        %v3332 = vld [vmem:[%s1471 + $0x7c] sm:$0xf]
        %v3333 = vld [vmem:[%s1471 + $0x84] sm:$0xf]
        %v3334 = vld [vmem:[%s1471 + $0x88] sm:$0xf]
        %v3335 = vld [vmem:[%s1471 + $0x90] sm:$0xf]
        %v3336 = vld [vmem:[%s1471 + $0x94] sm:$0xf]
        %v3337 = vld [vmem:[%s1471 + $0x9c] sm:$0xf]
        %v3338 = vld [vmem:[%s1471 + $0xa0] sm:$0xf]
        %v3339 = vld [vmem:[%s1471 + $0xa8] sm:$0xf]
        %v3340 = vld [vmem:[%s1471 + $0xac] sm:$0xf]
        %v3341 = vld [vmem:[%s1471 + $0xb4] sm:$0xf]
        %v3342 = vld [vmem:[%s1471 + $0xb8] sm:$0xf]
        %s3343 = scalar_lea.vmem [#allocation6], 48
        %v3344 = vld [vmem:[%s3343] sm:$0xf]
        %v3345 = vld [vmem:[%s3343 + $0x4] sm:$0xf]
        %v3346 = vld [vmem:[%s3343 + $0x8] sm:$0xf]
        %v3347 = vld [vmem:[%s3343 + $0xc] sm:$0xf]
        %v3380 = vunpack.c.l.b16 %v3311
        %v3381 = vunpack.c.l.b16 %v3312
        %v3382 = vunpack.c.l.b16 %v3313
        %v3383 = vunpack.c.l.b16 %v3314
        %v3384 = vunpack.c.l.b16 %v3315
        %v3385 = vunpack.c.l.b16 %v3316
        %v3386 = vunpack.c.l.b16 %v3317
        %v3387 = vunpack.c.l.b16 %v3318
        %v3388 = vunpack.c.l.b16 %v3319
        %v3389 = vunpack.c.l.b16 %v3320
        %v3390 = vunpack.c.l.b16 %v3321
        %v3391 = vunpack.c.l.b16 %v3322
        %v3392 = vunpack.c.l.b16 %v3323
        %v3393 = vunpack.c.l.b16 %v3324
        %v3394 = vunpack.c.l.b16 %v3325
        %v3395 = vunpack.c.l.b16 %v3326
        %v3396 = vunpack.c.l.b16 %v3327
        %v3397 = vunpack.c.l.b16 %v3328
        %v3398 = vunpack.c.l.b16 %v3329
        %v3399 = vunpack.c.l.b16 %v3330
        %v3400 = vunpack.c.l.b16 %v3331
        %v3401 = vunpack.c.l.b16 %v3332
        %v3402 = vunpack.c.l.b16 %v3333
        %v3403 = vunpack.c.l.b16 %v3334
        %v3404 = vunpack.c.l.b16 %v3335
        %v3405 = vunpack.c.l.b16 %v3336
        %v3406 = vunpack.c.l.b16 %v3337
        %v3407 = vunpack.c.l.b16 %v3338
        %v3408 = vunpack.c.l.b16 %v3339
        %v3409 = vunpack.c.l.b16 %v3340
        %v3410 = vunpack.c.l.b16 %v3341
        %v3411 = vunpack.c.l.b16 %v3342
        %v3412 = vpack.c.b16 %v3381, %v3380
        %v3413 = vpack.c.b16 %v3383, %v3382
        %v3414 = vpack.c.b16 %v3385, %v3384
        %v3415 = vpack.c.b16 %v3387, %v3386
        %v3416 = vpack.c.b16 %v3389, %v3388
        %v3417 = vpack.c.b16 %v3391, %v3390
        %v3418 = vpack.c.b16 %v3393, %v3392
        %v3419 = vpack.c.b16 %v3395, %v3394
        %v3420 = vpack.c.b16 %v3397, %v3396
        %v3421 = vpack.c.b16 %v3399, %v3398
        %v3422 = vpack.c.b16 %v3401, %v3400
        %v3423 = vpack.c.b16 %v3403, %v3402
        %v3424 = vpack.c.b16 %v3405, %v3404
        %v3425 = vpack.c.b16 %v3407, %v3406
        %v3426 = vpack.c.b16 %v3409, %v3408
        %v3427 = vpack.c.b16 %v3411, %v3410
        %v3432 = vunpack.c.l.b16 %v3344
        %v3433 = vunpack.c.l.b16 %v3345
        %v3434 = vunpack.c.l.b16 %v3346
        %v3435 = vunpack.c.l.b16 %v3347
        %v3436 = vpack.c.b16 %v3433, %v3432
        %v3437 = vpack.c.b16 %v3435, %v3434
        %v3441 = vsel %vm2331, %v3412, 0
        %v3444 = vsel %vm2331, %v3413, 0
        %v3447 = vsel %vm2331, %v3414, 0
        %v3450 = vsel %vm2331, %v3415, 0
        %v3453 = vsel %vm2331, %v3416, 0
        %v3456 = vsel %vm2331, %v3417, 0
        %v3459 = vsel %vm2331, %v3418, 0
        %v3462 = vsel %vm2331, %v3419, 0
        %v3465 = vsel %vm2331, %v3420, 0
        %v3468 = vsel %vm2331, %v3421, 0
        %v3471 = vsel %vm2331, %v3422, 0
        %v3474 = vsel %vm2331, %v3423, 0
        %v3477 = vsel %vm2331, %v3424, 0
        %v3480 = vsel %vm2331, %v3425, 0
        %v3483 = vsel %vm2331, %v3426, 0
        %v3486 = vsel %vm2331, %v3427, 0
        %3488 = vmatprep.subr.bf16.mxu0 0
        %3489 = vmatpush1.bf16.msra.mxu0 %v3436
        %3490 = vmatprep.subr.bf16.mxu0 0
        %3491 = vmatpush1.bf16.msra.mxu0 %v3437
        %3492 = vmatprep.subr.bf16.mxu0 0
        %3493 = vmatpush1.bf16.msra.mxu0 0
        %3494 = vmatprep.subr.bf16.mxu0 0
        %3495 = vmatpush1.bf16.msra.mxu0 0
        %3496 = vmatprep.subr.bf16.mxu0 0
        %3497 = vmatpush1.bf16.msra.mxu0 0
        %3498 = vmatprep.subr.bf16.mxu0 0
        %3499 = vmatpush1.bf16.msra.mxu0 0
        %3500 = vmatprep.subr.bf16.mxu0 0
        %3501 = vmatpush1.bf16.msra.mxu0 0
        %3502 = vmatprep.subr.bf16.mxu0 0
        %3503 = vmatpush1.bf16.msra.mxu0 0
        %3504 = vmatprep.subr.bf16.mxu0 0
        %3505 = vmatpush1.bf16.msra.mxu0 0
        %3506 = vmatprep.subr.bf16.mxu0 0
        %3507 = vmatpush1.bf16.msra.mxu0 0
        %3508 = vmatprep.subr.bf16.mxu0 0
        %3509 = vmatpush1.bf16.msra.mxu0 0
        %3510 = vmatprep.subr.bf16.mxu0 0
        %3511 = vmatpush1.bf16.msra.mxu0 0
        %3512 = vmatprep.subr.bf16.mxu0 0
        %3513 = vmatpush1.bf16.msra.mxu0 0
        %3514 = vmatprep.subr.bf16.mxu0 0
        %3515 = vmatpush1.bf16.msra.mxu0 0
        %3516 = vmatprep.subr.bf16.mxu0 0
        %3517 = vmatpush1.bf16.msra.mxu0 0
        %3518 = vmatprep.subr.bf16.mxu0 0
        %3519 = vmatpush1.bf16.msra.mxu0 0
        %3520 = vmatprep.mubr.bf16.mxu0 0
        %3521 = vmatmul.mubr.bf16.gmra.mrb[0].mxu0 %v3441
        %v3522 = vpop.f32.mrb[0].mxu0
        %v3523 = vadd.f32 0.0, %v3522
        %v3524 = vpop.f32.mrb[0].mxu0
        %v3525 = vpop.f32.mrb[0].mxu0
        %v3526 = vadd.f32 0.0, %v3525
        %v3527 = vpop.f32.mrb[0].mxu0
        %3528 = vmatprep.mubr.bf16.mxu0 0
        %3529 = vmatmul.mubr.bf16.gmra.mrb[0].mxu0 %v3444
        %v3530 = vpop.f32.mrb[0].mxu0
        %v3531 = vadd.f32 0.0, %v3530
        %v3532 = vpop.f32.mrb[0].mxu0
        %v3533 = vpop.f32.mrb[0].mxu0
        %v3534 = vadd.f32 0.0, %v3533
        %v3535 = vpop.f32.mrb[0].mxu0
        %3536 = vmatprep.mubr.bf16.mxu0 0
        %3537 = vmatmul.mubr.bf16.gmra.mrb[0].mxu0 %v3447
        %v3538 = vpop.f32.mrb[0].mxu0
        %v3539 = vadd.f32 0.0, %v3538
        %v3540 = vpop.f32.mrb[0].mxu0
        %v3541 = vpop.f32.mrb[0].mxu0
        %v3542 = vadd.f32 0.0, %v3541
        %v3543 = vpop.f32.mrb[0].mxu0
        %3544 = vmatprep.mubr.bf16.mxu0 0
        %3545 = vmatmul.mubr.bf16.gmra.mrb[0].mxu0 %v3450
        %v3546 = vpop.f32.mrb[0].mxu0
        %v3547 = vadd.f32 0.0, %v3546
        %v3548 = vpop.f32.mrb[0].mxu0
        %v3549 = vpop.f32.mrb[0].mxu0
        %v3550 = vadd.f32 0.0, %v3549
        %v3551 = vpop.f32.mrb[0].mxu0
        %3552 = vmatprep.mubr.bf16.mxu0 0
        %3553 = vmatmul.mubr.bf16.gmra.mrb[0].mxu0 %v3453
        %v3554 = vpop.f32.mrb[0].mxu0
        %v3555 = vadd.f32 0.0, %v3554
        %v3556 = vpop.f32.mrb[0].mxu0
        %v3557 = vpop.f32.mrb[0].mxu0
        %v3558 = vadd.f32 0.0, %v3557
        %v3559 = vpop.f32.mrb[0].mxu0
        %3560 = vmatprep.mubr.bf16.mxu0 0
        %3561 = vmatmul.mubr.bf16.gmra.mrb[0].mxu0 %v3456
        %v3562 = vpop.f32.mrb[0].mxu0
        %v3563 = vadd.f32 0.0, %v3562
        %v3564 = vpop.f32.mrb[0].mxu0
        %v3565 = vpop.f32.mrb[0].mxu0
        %v3566 = vadd.f32 0.0, %v3565
        %v3567 = vpop.f32.mrb[0].mxu0
        %3568 = vmatprep.mubr.bf16.mxu0 0
        %3569 = vmatmul.mubr.bf16.gmra.mrb[0].mxu0 %v3459
        %v3570 = vpop.f32.mrb[0].mxu0
        %v3571 = vadd.f32 0.0, %v3570
        %v3572 = vpop.f32.mrb[0].mxu0
        %v3573 = vpop.f32.mrb[0].mxu0
        %v3574 = vadd.f32 0.0, %v3573
        %v3575 = vpop.f32.mrb[0].mxu0
        %3576 = vmatprep.mubr.bf16.mxu0 0
        %3577 = vmatmul.mubr.bf16.gmra.mrb[0].mxu0 %v3462
        %v3578 = vpop.f32.mrb[0].mxu0
        %v3579 = vadd.f32 0.0, %v3578
        %v3580 = vpop.f32.mrb[0].mxu0
        %v3581 = vpop.f32.mrb[0].mxu0
        %v3582 = vadd.f32 0.0, %v3581
        %v3583 = vpop.f32.mrb[0].mxu0
        %3584 = vmatprep.mubr.bf16.mxu0 0
        %3585 = vmatmul.mubr.bf16.gmra.mrb[0].mxu0 %v3465
        %v3586 = vpop.f32.mrb[0].mxu0
        %v3587 = vadd.f32 0.0, %v3586
        %v3588 = vpop.f32.mrb[0].mxu0
        %v3589 = vpop.f32.mrb[0].mxu0
        %v3590 = vadd.f32 0.0, %v3589
        %v3591 = vpop.f32.mrb[0].mxu0
        %3592 = vmatprep.mubr.bf16.mxu0 0
        %3593 = vmatmul.mubr.bf16.gmra.mrb[0].mxu0 %v3468
        %v3594 = vpop.f32.mrb[0].mxu0
        %v3595 = vadd.f32 0.0, %v3594
        %v3596 = vpop.f32.mrb[0].mxu0
        %v3597 = vpop.f32.mrb[0].mxu0
        %v3598 = vadd.f32 0.0, %v3597
        %v3599 = vpop.f32.mrb[0].mxu0
        %3600 = vmatprep.mubr.bf16.mxu0 0
        %3601 = vmatmul.mubr.bf16.gmra.mrb[0].mxu0 %v3471
        %v3602 = vpop.f32.mrb[0].mxu0
        %v3603 = vadd.f32 0.0, %v3602
        %v3604 = vpop.f32.mrb[0].mxu0
        %v3605 = vpop.f32.mrb[0].mxu0
        %v3606 = vadd.f32 0.0, %v3605
        %v3607 = vpop.f32.mrb[0].mxu0
        %3608 = vmatprep.mubr.bf16.mxu0 0
        %3609 = vmatmul.mubr.bf16.gmra.mrb[0].mxu0 %v3474
        %v3610 = vpop.f32.mrb[0].mxu0
        %v3611 = vadd.f32 0.0, %v3610
        %v3612 = vpop.f32.mrb[0].mxu0
        %v3613 = vpop.f32.mrb[0].mxu0
        %v3614 = vadd.f32 0.0, %v3613
        %v3615 = vpop.f32.mrb[0].mxu0
        %3616 = vmatprep.mubr.bf16.mxu0 0
        %3617 = vmatmul.mubr.bf16.gmra.mrb[0].mxu0 %v3477
        %v3618 = vpop.f32.mrb[0].mxu0
        %v3619 = vadd.f32 0.0, %v3618
        %v3620 = vpop.f32.mrb[0].mxu0
        %v3621 = vpop.f32.mrb[0].mxu0
        %v3622 = vadd.f32 0.0, %v3621
        %v3623 = vpop.f32.mrb[0].mxu0
        %3624 = vmatprep.mubr.bf16.mxu0 0
        %3625 = vmatmul.mubr.bf16.gmra.mrb[0].mxu0 %v3480
        %v3626 = vpop.f32.mrb[0].mxu0
        %v3627 = vadd.f32 0.0, %v3626
        %v3628 = vpop.f32.mrb[0].mxu0
        %v3629 = vpop.f32.mrb[0].mxu0
        %v3630 = vadd.f32 0.0, %v3629
        %v3631 = vpop.f32.mrb[0].mxu0
        %3632 = vmatprep.mubr.bf16.mxu0 0
        %3633 = vmatmul.mubr.bf16.gmra.mrb[0].mxu0 %v3483
        %v3634 = vpop.f32.mrb[0].mxu0
        %v3635 = vadd.f32 0.0, %v3634
        %v3636 = vpop.f32.mrb[0].mxu0
        %v3637 = vpop.f32.mrb[0].mxu0
        %v3638 = vadd.f32 0.0, %v3637
        %v3639 = vpop.f32.mrb[0].mxu0
        %3640 = vmatprep.mubr.bf16.mxu0 0
        %3641 = vmatmul.mubr.bf16.gmra.mrb[0].mxu0 %v3486
        %v3642 = vpop.f32.mrb[0].mxu0
        %v3643 = vadd.f32 0.0, %v3642
        %v3644 = vpop.f32.mrb[0].mxu0
        %v3645 = vpop.f32.mrb[0].mxu0
        %v3646 = vadd.f32 0.0, %v3645
        %v3647 = vpop.f32.mrb[0].mxu0
        %3648 = vdwg.mxu0
        %v3649 = vadd.f32 %v3279, %v3523
        %v3650 = vadd.f32 %v3280, %v3526
        %v3651 = vadd.f32 %v3281, %v3531
        %v3652 = vadd.f32 %v3282, %v3534
        %v3653 = vadd.f32 %v3283, %v3539
        %v3654 = vadd.f32 %v3284, %v3542
        %v3655 = vadd.f32 %v3285, %v3547
        %v3656 = vadd.f32 %v3286, %v3550
        %v3657 = vadd.f32 %v3287, %v3555
        %v3658 = vadd.f32 %v3288, %v3558
        %v3659 = vadd.f32 %v3289, %v3563
        %v3660 = vadd.f32 %v3290, %v3566
        %v3661 = vadd.f32 %v3291, %v3571
        %v3662 = vadd.f32 %v3292, %v3574
        %v3663 = vadd.f32 %v3293, %v3579
        %v3664 = vadd.f32 %v3294, %v3582
        %v3665 = vadd.f32 %v3295, %v3587
        %v3666 = vadd.f32 %v3296, %v3590
        %v3667 = vadd.f32 %v3297, %v3595
        %v3668 = vadd.f32 %v3298, %v3598
        %v3669 = vadd.f32 %v3299, %v3603
        %v3670 = vadd.f32 %v3300, %v3606
        %v3671 = vadd.f32 %v3301, %v3611
        %v3672 = vadd.f32 %v3302, %v3614
        %v3673 = vadd.f32 %v3303, %v3619
        %v3674 = vadd.f32 %v3304, %v3622
        %v3675 = vadd.f32 %v3305, %v3627
        %v3676 = vadd.f32 %v3306, %v3630
        %v3677 = vadd.f32 %v3307, %v3635
        %v3678 = vadd.f32 %v3308, %v3638
        %v3679 = vadd.f32 %v3309, %v3643
        %v3680 = vadd.f32 %v3310, %v3646
        %v3681 = vld [vmem:[%s1471] sm:$0xf]
        %v3682 = vld [vmem:[%s1471 + $0x4] sm:$0xf]
        %v3683 = vld [vmem:[%s1471 + $0x8] sm:$0x1]
        %v3684 = vld [vmem:[%s1471 + $0xc] sm:$0xf]
        %v3685 = vld [vmem:[%s1471 + $0x10] sm:$0xf]
        %v3686 = vld [vmem:[%s1471 + $0x14] sm:$0x1]
        %v3687 = vld [vmem:[%s1471 + $0x18] sm:$0xf]
        %v3688 = vld [vmem:[%s1471 + $0x1c] sm:$0xf]
        %v3689 = vld [vmem:[%s1471 + $0x20] sm:$0x1]
        %v3690 = vld [vmem:[%s1471 + $0x24] sm:$0xf]
        %v3691 = vld [vmem:[%s1471 + $0x28] sm:$0xf]
        %v3692 = vld [vmem:[%s1471 + $0x2c] sm:$0x1]
        %v3693 = vld [vmem:[%s1471 + $0x30] sm:$0xf]
        %v3694 = vld [vmem:[%s1471 + $0x34] sm:$0xf]
        %v3695 = vld [vmem:[%s1471 + $0x38] sm:$0x1]
        %v3696 = vld [vmem:[%s1471 + $0x3c] sm:$0xf]
        %v3697 = vld [vmem:[%s1471 + $0x40] sm:$0xf]
        %v3698 = vld [vmem:[%s1471 + $0x44] sm:$0x1]
        %v3699 = vld [vmem:[%s1471 + $0x48] sm:$0xf]
        %v3700 = vld [vmem:[%s1471 + $0x4c] sm:$0xf]
        %v3701 = vld [vmem:[%s1471 + $0x50] sm:$0x1]
        %v3702 = vld [vmem:[%s1471 + $0x54] sm:$0xf]
        %v3703 = vld [vmem:[%s1471 + $0x58] sm:$0xf]
        %v3704 = vld [vmem:[%s1471 + $0x5c] sm:$0x1]
        %v3705 = vld [vmem:[%s1471 + $0x60] sm:$0xf]
        %v3706 = vld [vmem:[%s1471 + $0x64] sm:$0xf]
        %v3707 = vld [vmem:[%s1471 + $0x68] sm:$0x1]
        %v3708 = vld [vmem:[%s1471 + $0x6c] sm:$0xf]
        %v3709 = vld [vmem:[%s1471 + $0x70] sm:$0xf]
        %v3710 = vld [vmem:[%s1471 + $0x74] sm:$0x1]
        %v3711 = vld [vmem:[%s1471 + $0x78] sm:$0xf]
        %v3712 = vld [vmem:[%s1471 + $0x7c] sm:$0xf]
        %v3713 = vld [vmem:[%s1471 + $0x80] sm:$0x1]
        %v3714 = vld [vmem:[%s1471 + $0x84] sm:$0xf]
        %v3715 = vld [vmem:[%s1471 + $0x88] sm:$0xf]
        %v3716 = vld [vmem:[%s1471 + $0x8c] sm:$0x1]
        %v3717 = vld [vmem:[%s1471 + $0x90] sm:$0xf]
        %v3718 = vld [vmem:[%s1471 + $0x94] sm:$0xf]
        %v3719 = vld [vmem:[%s1471 + $0x98] sm:$0x1]
        %v3720 = vld [vmem:[%s1471 + $0x9c] sm:$0xf]
        %v3721 = vld [vmem:[%s1471 + $0xa0] sm:$0xf]
        %v3722 = vld [vmem:[%s1471 + $0xa4] sm:$0x1]
        %v3723 = vld [vmem:[%s1471 + $0xa8] sm:$0xf]
        %v3724 = vld [vmem:[%s1471 + $0xac] sm:$0xf]
        %v3725 = vld [vmem:[%s1471 + $0xb0] sm:$0x1]
        %v3726 = vld [vmem:[%s1471 + $0xb4] sm:$0xf]
        %v3727 = vld [vmem:[%s1471 + $0xb8] sm:$0xf]
        %v3728 = vld [vmem:[%s1471 + $0xbc] sm:$0x1]
        %v3730 = vshrl.u32 %v3681, 16
        %v3732 = vrot.slane %v3730, 4
        %v3733 = vshll.u32 %v3681, 16
        %v3735 = vrot.slane %v3733, 5
        %v3736 = vor.u32 %v3732, %v3735
        %v3737 = vrot.slane %v3736, 4
        %v3739 = vshll.u32 %v3682, 16
        %v3741 = vrot.slane %v3739, 5
        %v3742 = vsel %vm1881, %v3737, %v3741
        %v3743 = vshrl.u32 %v3682, 16
        %v3745 = vrot.slane %v3743, 4
        %v3746 = vor.u32 %v3745, %v3741
        %v3747 = vrot.slane %v3746, 4
        %v3749 = vshll.u32 %v3683, 16
        %v3751 = vrot.slane %v3749, 5
        %v3752 = vsel %vm1881, %v3747, %v3751
        %v3754 = vshrl.u32 %v3684, 16
        %v3756 = vrot.slane %v3754, 4
        %v3757 = vshll.u32 %v3684, 16
        %v3759 = vrot.slane %v3757, 5
        %v3760 = vor.u32 %v3756, %v3759
        %v3761 = vrot.slane %v3760, 4
        %v3763 = vshll.u32 %v3685, 16
        %v3765 = vrot.slane %v3763, 5
        %v3766 = vsel %vm1881, %v3761, %v3765
        %v3767 = vshrl.u32 %v3685, 16
        %v3769 = vrot.slane %v3767, 4
        %v3770 = vor.u32 %v3769, %v3765
        %v3771 = vrot.slane %v3770, 4
        %v3773 = vshll.u32 %v3686, 16
        %v3775 = vrot.slane %v3773, 5
        %v3776 = vsel %vm1881, %v3771, %v3775
        %v3778 = vshrl.u32 %v3687, 16
        %v3780 = vrot.slane %v3778, 4
        %v3781 = vshll.u32 %v3687, 16
        %v3783 = vrot.slane %v3781, 5
        %v3784 = vor.u32 %v3780, %v3783
        %v3785 = vrot.slane %v3784, 4
        %v3787 = vshll.u32 %v3688, 16
        %v3789 = vrot.slane %v3787, 5
        %v3790 = vsel %vm1881, %v3785, %v3789
        %v3791 = vshrl.u32 %v3688, 16
        %v3793 = vrot.slane %v3791, 4
        %v3794 = vor.u32 %v3793, %v3789
        %v3795 = vrot.slane %v3794, 4
        %v3797 = vshll.u32 %v3689, 16
        %v3799 = vrot.slane %v3797, 5
        %v3800 = vsel %vm1881, %v3795, %v3799
        %v3802 = vshrl.u32 %v3690, 16
        %v3804 = vrot.slane %v3802, 4
        %v3805 = vshll.u32 %v3690, 16
        %v3807 = vrot.slane %v3805, 5
        %v3808 = vor.u32 %v3804, %v3807
        %v3809 = vrot.slane %v3808, 4
        %v3811 = vshll.u32 %v3691, 16
        %v3813 = vrot.slane %v3811, 5
        %v3814 = vsel %vm1881, %v3809, %v3813
        %v3815 = vshrl.u32 %v3691, 16
        %v3817 = vrot.slane %v3815, 4
        %v3818 = vor.u32 %v3817, %v3813
        %v3819 = vrot.slane %v3818, 4
        %v3821 = vshll.u32 %v3692, 16
        %v3823 = vrot.slane %v3821, 5
        %v3824 = vsel %vm1881, %v3819, %v3823
        %v3826 = vshrl.u32 %v3693, 16
        %v3828 = vrot.slane %v3826, 4
        %v3829 = vshll.u32 %v3693, 16
        %v3831 = vrot.slane %v3829, 5
        %v3832 = vor.u32 %v3828, %v3831
        %v3833 = vrot.slane %v3832, 4
        %v3835 = vshll.u32 %v3694, 16
        %v3837 = vrot.slane %v3835, 5
        %v3838 = vsel %vm1881, %v3833, %v3837
        %v3839 = vshrl.u32 %v3694, 16
        %v3841 = vrot.slane %v3839, 4
        %v3842 = vor.u32 %v3841, %v3837
        %v3843 = vrot.slane %v3842, 4
        %v3845 = vshll.u32 %v3695, 16
        %v3847 = vrot.slane %v3845, 5
        %v3848 = vsel %vm1881, %v3843, %v3847
        %v3850 = vshrl.u32 %v3696, 16
        %v3852 = vrot.slane %v3850, 4
        %v3853 = vshll.u32 %v3696, 16
        %v3855 = vrot.slane %v3853, 5
        %v3856 = vor.u32 %v3852, %v3855
        %v3857 = vrot.slane %v3856, 4
        %v3859 = vshll.u32 %v3697, 16
        %v3861 = vrot.slane %v3859, 5
        %v3862 = vsel %vm1881, %v3857, %v3861
        %v3863 = vshrl.u32 %v3697, 16
        %v3865 = vrot.slane %v3863, 4
        %v3866 = vor.u32 %v3865, %v3861
        %v3867 = vrot.slane %v3866, 4
        %v3869 = vshll.u32 %v3698, 16
        %v3871 = vrot.slane %v3869, 5
        %v3872 = vsel %vm1881, %v3867, %v3871
        %v3874 = vshrl.u32 %v3699, 16
        %v3876 = vrot.slane %v3874, 4
        %v3877 = vshll.u32 %v3699, 16
        %v3879 = vrot.slane %v3877, 5
        %v3880 = vor.u32 %v3876, %v3879
        %v3881 = vrot.slane %v3880, 4
        %v3883 = vshll.u32 %v3700, 16
        %v3885 = vrot.slane %v3883, 5
        %v3886 = vsel %vm1881, %v3881, %v3885
        %v3887 = vshrl.u32 %v3700, 16
        %v3889 = vrot.slane %v3887, 4
        %v3890 = vor.u32 %v3889, %v3885
        %v3891 = vrot.slane %v3890, 4
        %v3893 = vshll.u32 %v3701, 16
        %v3895 = vrot.slane %v3893, 5
        %v3896 = vsel %vm1881, %v3891, %v3895
        %v3898 = vshrl.u32 %v3702, 16
        %v3900 = vrot.slane %v3898, 4
        %v3901 = vshll.u32 %v3702, 16
        %v3903 = vrot.slane %v3901, 5
        %v3904 = vor.u32 %v3900, %v3903
        %v3905 = vrot.slane %v3904, 4
        %v3907 = vshll.u32 %v3703, 16
        %v3909 = vrot.slane %v3907, 5
        %v3910 = vsel %vm1881, %v3905, %v3909
        %v3911 = vshrl.u32 %v3703, 16
        %v3913 = vrot.slane %v3911, 4
        %v3914 = vor.u32 %v3913, %v3909
        %v3915 = vrot.slane %v3914, 4
        %v3917 = vshll.u32 %v3704, 16
        %v3919 = vrot.slane %v3917, 5
        %v3920 = vsel %vm1881, %v3915, %v3919
        %v3922 = vshrl.u32 %v3705, 16
        %v3924 = vrot.slane %v3922, 4
        %v3925 = vshll.u32 %v3705, 16
        %v3927 = vrot.slane %v3925, 5
        %v3928 = vor.u32 %v3924, %v3927
        %v3929 = vrot.slane %v3928, 4
        %v3931 = vshll.u32 %v3706, 16
        %v3933 = vrot.slane %v3931, 5
        %v3934 = vsel %vm1881, %v3929, %v3933
        %v3935 = vshrl.u32 %v3706, 16
        %v3937 = vrot.slane %v3935, 4
        %v3938 = vor.u32 %v3937, %v3933
        %v3939 = vrot.slane %v3938, 4
        %v3941 = vshll.u32 %v3707, 16
        %v3943 = vrot.slane %v3941, 5
        %v3944 = vsel %vm1881, %v3939, %v3943
        %v3946 = vshrl.u32 %v3708, 16
        %v3948 = vrot.slane %v3946, 4
        %v3949 = vshll.u32 %v3708, 16
        %v3951 = vrot.slane %v3949, 5
        %v3952 = vor.u32 %v3948, %v3951
        %v3953 = vrot.slane %v3952, 4
        %v3955 = vshll.u32 %v3709, 16
        %v3957 = vrot.slane %v3955, 5
        %v3958 = vsel %vm1881, %v3953, %v3957
        %v3959 = vshrl.u32 %v3709, 16
        %v3961 = vrot.slane %v3959, 4
        %v3962 = vor.u32 %v3961, %v3957
        %v3963 = vrot.slane %v3962, 4
        %v3965 = vshll.u32 %v3710, 16
        %v3967 = vrot.slane %v3965, 5
        %v3968 = vsel %vm1881, %v3963, %v3967
        %v3970 = vshrl.u32 %v3711, 16
        %v3972 = vrot.slane %v3970, 4
        %v3973 = vshll.u32 %v3711, 16
        %v3975 = vrot.slane %v3973, 5
        %v3976 = vor.u32 %v3972, %v3975
        %v3977 = vrot.slane %v3976, 4
        %v3979 = vshll.u32 %v3712, 16
        %v3981 = vrot.slane %v3979, 5
        %v3982 = vsel %vm1881, %v3977, %v3981
        %v3983 = vshrl.u32 %v3712, 16
        %v3985 = vrot.slane %v3983, 4
        %v3986 = vor.u32 %v3985, %v3981
        %v3987 = vrot.slane %v3986, 4
        %v3989 = vshll.u32 %v3713, 16
        %v3991 = vrot.slane %v3989, 5
        %v3992 = vsel %vm1881, %v3987, %v3991
        %v3994 = vshrl.u32 %v3714, 16
        %v3996 = vrot.slane %v3994, 4
        %v3997 = vshll.u32 %v3714, 16
        %v3999 = vrot.slane %v3997, 5
        %v4000 = vor.u32 %v3996, %v3999
        %v4001 = vrot.slane %v4000, 4
        %v4003 = vshll.u32 %v3715, 16
        %v4005 = vrot.slane %v4003, 5
        %v4006 = vsel %vm1881, %v4001, %v4005
        %v4007 = vshrl.u32 %v3715, 16
        %v4009 = vrot.slane %v4007, 4
        %v4010 = vor.u32 %v4009, %v4005
        %v4011 = vrot.slane %v4010, 4
        %v4013 = vshll.u32 %v3716, 16
        %v4015 = vrot.slane %v4013, 5
        %v4016 = vsel %vm1881, %v4011, %v4015
        %v4018 = vshrl.u32 %v3717, 16
        %v4020 = vrot.slane %v4018, 4
        %v4021 = vshll.u32 %v3717, 16
        %v4023 = vrot.slane %v4021, 5
        %v4024 = vor.u32 %v4020, %v4023
        %v4025 = vrot.slane %v4024, 4
        %v4027 = vshll.u32 %v3718, 16
        %v4029 = vrot.slane %v4027, 5
        %v4030 = vsel %vm1881, %v4025, %v4029
        %v4031 = vshrl.u32 %v3718, 16
        %v4033 = vrot.slane %v4031, 4
        %v4034 = vor.u32 %v4033, %v4029
        %v4035 = vrot.slane %v4034, 4
        %v4037 = vshll.u32 %v3719, 16
        %v4039 = vrot.slane %v4037, 5
        %v4040 = vsel %vm1881, %v4035, %v4039
        %v4042 = vshrl.u32 %v3720, 16
        %v4044 = vrot.slane %v4042, 4
        %v4045 = vshll.u32 %v3720, 16
        %v4047 = vrot.slane %v4045, 5
        %v4048 = vor.u32 %v4044, %v4047
        %v4049 = vrot.slane %v4048, 4
        %v4051 = vshll.u32 %v3721, 16
        %v4053 = vrot.slane %v4051, 5
        %v4054 = vsel %vm1881, %v4049, %v4053
        %v4055 = vshrl.u32 %v3721, 16
        %v4057 = vrot.slane %v4055, 4
        %v4058 = vor.u32 %v4057, %v4053
        %v4059 = vrot.slane %v4058, 4
        %v4061 = vshll.u32 %v3722, 16
        %v4063 = vrot.slane %v4061, 5
        %v4064 = vsel %vm1881, %v4059, %v4063
        %v4066 = vshrl.u32 %v3723, 16
        %v4068 = vrot.slane %v4066, 4
        %v4069 = vshll.u32 %v3723, 16
        %v4071 = vrot.slane %v4069, 5
        %v4072 = vor.u32 %v4068, %v4071
        %v4073 = vrot.slane %v4072, 4
        %v4075 = vshll.u32 %v3724, 16
        %v4077 = vrot.slane %v4075, 5
        %v4078 = vsel %vm1881, %v4073, %v4077
        %v4079 = vshrl.u32 %v3724, 16
        %v4081 = vrot.slane %v4079, 4
        %v4082 = vor.u32 %v4081, %v4077
        %v4083 = vrot.slane %v4082, 4
        %v4085 = vshll.u32 %v3725, 16
        %v4087 = vrot.slane %v4085, 5
        %v4088 = vsel %vm1881, %v4083, %v4087
        %v4090 = vshrl.u32 %v3726, 16
        %v4092 = vrot.slane %v4090, 4
        %v4093 = vshll.u32 %v3726, 16
        %v4095 = vrot.slane %v4093, 5
        %v4096 = vor.u32 %v4092, %v4095
        %v4097 = vrot.slane %v4096, 4
        %v4099 = vshll.u32 %v3727, 16
        %v4101 = vrot.slane %v4099, 5
        %v4102 = vsel %vm1881, %v4097, %v4101
        %v4103 = vshrl.u32 %v3727, 16
        %v4105 = vrot.slane %v4103, 4
        %v4106 = vor.u32 %v4105, %v4101
        %v4107 = vrot.slane %v4106, 4
        %v4109 = vshll.u32 %v3728, 16
        %v4111 = vrot.slane %v4109, 5
        %v4112 = vsel %vm1881, %v4107, %v4111
        %s4113 = scalar_lea.vmem [#allocation6], 64
        %v4114 = vld [vmem:[%s4113] sm:$0xf]
        %v4115 = vld [vmem:[%s4113 + $0x4] sm:$0xf]
        %v4116 = vld [vmem:[%s4113 + $0x8] sm:$0xf]
        %v4117 = vld [vmem:[%s4113 + $0xc] sm:$0xf]
        %v4118 = vunpack.c.l.b16 %v3742
        %v4119 = vunpack.c.l.b16 %v3752
        %v4120 = vunpack.c.l.b16 %v3766
        %v4121 = vunpack.c.l.b16 %v3776
        %v4122 = vunpack.c.l.b16 %v3790
        %v4123 = vunpack.c.l.b16 %v3800
        %v4124 = vunpack.c.l.b16 %v3814
        %v4125 = vunpack.c.l.b16 %v3824
        %v4126 = vunpack.c.l.b16 %v3838
        %v4127 = vunpack.c.l.b16 %v3848
        %v4128 = vunpack.c.l.b16 %v3862
        %v4129 = vunpack.c.l.b16 %v3872
        %v4130 = vunpack.c.l.b16 %v3886
        %v4131 = vunpack.c.l.b16 %v3896
        %v4132 = vunpack.c.l.b16 %v3910
        %v4133 = vunpack.c.l.b16 %v3920
        %v4134 = vunpack.c.l.b16 %v3934
        %v4135 = vunpack.c.l.b16 %v3944
        %v4136 = vunpack.c.l.b16 %v3958
        %v4137 = vunpack.c.l.b16 %v3968
        %v4138 = vunpack.c.l.b16 %v3982
        %v4139 = vunpack.c.l.b16 %v3992
        %v4140 = vunpack.c.l.b16 %v4006
        %v4141 = vunpack.c.l.b16 %v4016
        %v4142 = vunpack.c.l.b16 %v4030
        %v4143 = vunpack.c.l.b16 %v4040
        %v4144 = vunpack.c.l.b16 %v4054
        %v4145 = vunpack.c.l.b16 %v4064
        %v4146 = vunpack.c.l.b16 %v4078
        %v4147 = vunpack.c.l.b16 %v4088
        %v4148 = vunpack.c.l.b16 %v4102
        %v4149 = vunpack.c.l.b16 %v4112
        %v4150 = vpack.c.b16 %v4119, %v4118
        %v4151 = vpack.c.b16 %v4121, %v4120
        %v4152 = vpack.c.b16 %v4123, %v4122
        %v4153 = vpack.c.b16 %v4125, %v4124
        %v4154 = vpack.c.b16 %v4127, %v4126
        %v4155 = vpack.c.b16 %v4129, %v4128
        %v4156 = vpack.c.b16 %v4131, %v4130
        %v4157 = vpack.c.b16 %v4133, %v4132
        %v4158 = vpack.c.b16 %v4135, %v4134
        %v4159 = vpack.c.b16 %v4137, %v4136
        %v4160 = vpack.c.b16 %v4139, %v4138
        %v4161 = vpack.c.b16 %v4141, %v4140
        %v4162 = vpack.c.b16 %v4143, %v4142
        %v4163 = vpack.c.b16 %v4145, %v4144
        %v4164 = vpack.c.b16 %v4147, %v4146
        %v4165 = vpack.c.b16 %v4149, %v4148
        %v4170 = vunpack.c.l.b16 %v4114
        %v4171 = vunpack.c.l.b16 %v4115
        %v4172 = vunpack.c.l.b16 %v4116
        %v4173 = vunpack.c.l.b16 %v4117
        %v4174 = vpack.c.b16 %v4171, %v4170
        %v4175 = vpack.c.b16 %v4173, %v4172
        %v4179 = vsel %vm2331, %v4150, 0
        %v4182 = vsel %vm2331, %v4151, 0
        %v4185 = vsel %vm2331, %v4152, 0
        %v4188 = vsel %vm2331, %v4153, 0
        %v4191 = vsel %vm2331, %v4154, 0
        %v4194 = vsel %vm2331, %v4155, 0
        %v4197 = vsel %vm2331, %v4156, 0
        %v4200 = vsel %vm2331, %v4157, 0
        %v4203 = vsel %vm2331, %v4158, 0
        %v4206 = vsel %vm2331, %v4159, 0
        %v4209 = vsel %vm2331, %v4160, 0
        %v4212 = vsel %vm2331, %v4161, 0
        %v4215 = vsel %vm2331, %v4162, 0
        %v4218 = vsel %vm2331, %v4163, 0
        %v4221 = vsel %vm2331, %v4164, 0
        %v4224 = vsel %vm2331, %v4165, 0
        %4226 = vmatprep.subr.bf16.mxu0 0
        %4227 = vmatpush1.bf16.msra.mxu0 %v4174
        %4228 = vmatprep.subr.bf16.mxu0 0
        %4229 = vmatpush1.bf16.msra.mxu0 %v4175
        %4230 = vmatprep.subr.bf16.mxu0 0
        %4231 = vmatpush1.bf16.msra.mxu0 0
        %4232 = vmatprep.subr.bf16.mxu0 0
        %4233 = vmatpush1.bf16.msra.mxu0 0
        %4234 = vmatprep.subr.bf16.mxu0 0
        %4235 = vmatpush1.bf16.msra.mxu0 0
        %4236 = vmatprep.subr.bf16.mxu0 0
        %4237 = vmatpush1.bf16.msra.mxu0 0
        %4238 = vmatprep.subr.bf16.mxu0 0
        %4239 = vmatpush1.bf16.msra.mxu0 0
        %4240 = vmatprep.subr.bf16.mxu0 0
        %4241 = vmatpush1.bf16.msra.mxu0 0
        %4242 = vmatprep.subr.bf16.mxu0 0
        %4243 = vmatpush1.bf16.msra.mxu0 0
        %4244 = vmatprep.subr.bf16.mxu0 0
        %4245 = vmatpush1.bf16.msra.mxu0 0
        %4246 = vmatprep.subr.bf16.mxu0 0
        %4247 = vmatpush1.bf16.msra.mxu0 0
        %4248 = vmatprep.subr.bf16.mxu0 0
        %4249 = vmatpush1.bf16.msra.mxu0 0
        %4250 = vmatprep.subr.bf16.mxu0 0
        %4251 = vmatpush1.bf16.msra.mxu0 0
        %4252 = vmatprep.subr.bf16.mxu0 0
        %4253 = vmatpush1.bf16.msra.mxu0 0
        %4254 = vmatprep.subr.bf16.mxu0 0
        %4255 = vmatpush1.bf16.msra.mxu0 0
        %4256 = vmatprep.subr.bf16.mxu0 0
        %4257 = vmatpush1.bf16.msra.mxu0 0
        %4258 = vmatprep.mubr.bf16.mxu0 0
        %4259 = vmatmul.mubr.bf16.gmra.mrb[0].mxu0 %v4179
        %v4260 = vpop.f32.mrb[0].mxu0
        %v4261 = vadd.f32 0.0, %v4260
        %v4262 = vpop.f32.mrb[0].mxu0
        %v4263 = vpop.f32.mrb[0].mxu0
        %v4264 = vadd.f32 0.0, %v4263
        %v4265 = vpop.f32.mrb[0].mxu0
        %4266 = vmatprep.mubr.bf16.mxu0 0
        %4267 = vmatmul.mubr.bf16.gmra.mrb[0].mxu0 %v4182
        %v4268 = vpop.f32.mrb[0].mxu0
        %v4269 = vadd.f32 0.0, %v4268
        %v4270 = vpop.f32.mrb[0].mxu0
        %v4271 = vpop.f32.mrb[0].mxu0
        %v4272 = vadd.f32 0.0, %v4271
        %v4273 = vpop.f32.mrb[0].mxu0
        %4274 = vmatprep.mubr.bf16.mxu0 0
        %4275 = vmatmul.mubr.bf16.gmra.mrb[0].mxu0 %v4185
        %v4276 = vpop.f32.mrb[0].mxu0
        %v4277 = vadd.f32 0.0, %v4276
        %v4278 = vpop.f32.mrb[0].mxu0
        %v4279 = vpop.f32.mrb[0].mxu0
        %v4280 = vadd.f32 0.0, %v4279
        %v4281 = vpop.f32.mrb[0].mxu0
        %4282 = vmatprep.mubr.bf16.mxu0 0
        %4283 = vmatmul.mubr.bf16.gmra.mrb[0].mxu0 %v4188
        %v4284 = vpop.f32.mrb[0].mxu0
        %v4285 = vadd.f32 0.0, %v4284
        %v4286 = vpop.f32.mrb[0].mxu0
        %v4287 = vpop.f32.mrb[0].mxu0
        %v4288 = vadd.f32 0.0, %v4287
        %v4289 = vpop.f32.mrb[0].mxu0
        %4290 = vmatprep.mubr.bf16.mxu0 0
        %4291 = vmatmul.mubr.bf16.gmra.mrb[0].mxu0 %v4191
        %v4292 = vpop.f32.mrb[0].mxu0
        %v4293 = vadd.f32 0.0, %v4292
        %v4294 = vpop.f32.mrb[0].mxu0
        %v4295 = vpop.f32.mrb[0].mxu0
        %v4296 = vadd.f32 0.0, %v4295
        %v4297 = vpop.f32.mrb[0].mxu0
        %4298 = vmatprep.mubr.bf16.mxu0 0
        %4299 = vmatmul.mubr.bf16.gmra.mrb[0].mxu0 %v4194
        %v4300 = vpop.f32.mrb[0].mxu0
        %v4301 = vadd.f32 0.0, %v4300
        %v4302 = vpop.f32.mrb[0].mxu0
        %v4303 = vpop.f32.mrb[0].mxu0
        %v4304 = vadd.f32 0.0, %v4303
        %v4305 = vpop.f32.mrb[0].mxu0
        %4306 = vmatprep.mubr.bf16.mxu0 0
        %4307 = vmatmul.mubr.bf16.gmra.mrb[0].mxu0 %v4197
        %v4308 = vpop.f32.mrb[0].mxu0
        %v4309 = vadd.f32 0.0, %v4308
        %v4310 = vpop.f32.mrb[0].mxu0
        %v4311 = vpop.f32.mrb[0].mxu0
        %v4312 = vadd.f32 0.0, %v4311
        %v4313 = vpop.f32.mrb[0].mxu0
        %4314 = vmatprep.mubr.bf16.mxu0 0
        %4315 = vmatmul.mubr.bf16.gmra.mrb[0].mxu0 %v4200
        %v4316 = vpop.f32.mrb[0].mxu0
        %v4317 = vadd.f32 0.0, %v4316
        %v4318 = vpop.f32.mrb[0].mxu0
        %v4319 = vpop.f32.mrb[0].mxu0
        %v4320 = vadd.f32 0.0, %v4319
        %v4321 = vpop.f32.mrb[0].mxu0
        %4322 = vmatprep.mubr.bf16.mxu0 0
        %4323 = vmatmul.mubr.bf16.gmra.mrb[0].mxu0 %v4203
        %v4324 = vpop.f32.mrb[0].mxu0
        %v4325 = vadd.f32 0.0, %v4324
        %v4326 = vpop.f32.mrb[0].mxu0
        %v4327 = vpop.f32.mrb[0].mxu0
        %v4328 = vadd.f32 0.0, %v4327
        %v4329 = vpop.f32.mrb[0].mxu0
        %4330 = vmatprep.mubr.bf16.mxu0 0
        %4331 = vmatmul.mubr.bf16.gmra.mrb[0].mxu0 %v4206
        %v4332 = vpop.f32.mrb[0].mxu0
        %v4333 = vadd.f32 0.0, %v4332
        %v4334 = vpop.f32.mrb[0].mxu0
        %v4335 = vpop.f32.mrb[0].mxu0
        %v4336 = vadd.f32 0.0, %v4335
        %v4337 = vpop.f32.mrb[0].mxu0
        %4338 = vmatprep.mubr.bf16.mxu0 0
        %4339 = vmatmul.mubr.bf16.gmra.mrb[0].mxu0 %v4209
        %v4340 = vpop.f32.mrb[0].mxu0
        %v4341 = vadd.f32 0.0, %v4340
        %v4342 = vpop.f32.mrb[0].mxu0
        %v4343 = vpop.f32.mrb[0].mxu0
        %v4344 = vadd.f32 0.0, %v4343
        %v4345 = vpop.f32.mrb[0].mxu0
        %4346 = vmatprep.mubr.bf16.mxu0 0
        %4347 = vmatmul.mubr.bf16.gmra.mrb[0].mxu0 %v4212
        %v4348 = vpop.f32.mrb[0].mxu0
        %v4349 = vadd.f32 0.0, %v4348
        %v4350 = vpop.f32.mrb[0].mxu0
        %v4351 = vpop.f32.mrb[0].mxu0
        %v4352 = vadd.f32 0.0, %v4351
        %v4353 = vpop.f32.mrb[0].mxu0
        %4354 = vmatprep.mubr.bf16.mxu0 0
        %4355 = vmatmul.mubr.bf16.gmra.mrb[0].mxu0 %v4215
        %v4356 = vpop.f32.mrb[0].mxu0
        %v4357 = vadd.f32 0.0, %v4356
        %v4358 = vpop.f32.mrb[0].mxu0
        %v4359 = vpop.f32.mrb[0].mxu0
        %v4360 = vadd.f32 0.0, %v4359
        %v4361 = vpop.f32.mrb[0].mxu0
        %4362 = vmatprep.mubr.bf16.mxu0 0
        %4363 = vmatmul.mubr.bf16.gmra.mrb[0].mxu0 %v4218
        %v4364 = vpop.f32.mrb[0].mxu0
        %v4365 = vadd.f32 0.0, %v4364
        %v4366 = vpop.f32.mrb[0].mxu0
        %v4367 = vpop.f32.mrb[0].mxu0
        %v4368 = vadd.f32 0.0, %v4367
        %v4369 = vpop.f32.mrb[0].mxu0
        %4370 = vmatprep.mubr.bf16.mxu0 0
        %4371 = vmatmul.mubr.bf16.gmra.mrb[0].mxu0 %v4221
        %v4372 = vpop.f32.mrb[0].mxu0
        %v4373 = vadd.f32 0.0, %v4372
        %v4374 = vpop.f32.mrb[0].mxu0
        %v4375 = vpop.f32.mrb[0].mxu0
        %v4376 = vadd.f32 0.0, %v4375
        %v4377 = vpop.f32.mrb[0].mxu0
        %4378 = vmatprep.mubr.bf16.mxu0 0
        %4379 = vmatmul.mubr.bf16.gmra.mrb[0].mxu0 %v4224
        %v4380 = vpop.f32.mrb[0].mxu0
        %v4381 = vadd.f32 0.0, %v4380
        %v4382 = vpop.f32.mrb[0].mxu0
        %v4383 = vpop.f32.mrb[0].mxu0
        %v4384 = vadd.f32 0.0, %v4383
        %v4385 = vpop.f32.mrb[0].mxu0
        %4386 = vdwg.mxu0
        %v4387 = vadd.f32 %v3649, %v4261
        %v4388 = vadd.f32 %v3650, %v4264
        %v4389 = vadd.f32 %v3651, %v4269
        %v4390 = vadd.f32 %v3652, %v4272
        %v4391 = vadd.f32 %v3653, %v4277
        %v4392 = vadd.f32 %v3654, %v4280
        %v4393 = vadd.f32 %v3655, %v4285
        %v4394 = vadd.f32 %v3656, %v4288
        %v4395 = vadd.f32 %v3657, %v4293
        %v4396 = vadd.f32 %v3658, %v4296
        %v4397 = vadd.f32 %v3659, %v4301
        %v4398 = vadd.f32 %v3660, %v4304
        %v4399 = vadd.f32 %v3661, %v4309
        %v4400 = vadd.f32 %v3662, %v4312
        %v4401 = vadd.f32 %v3663, %v4317
        %v4402 = vadd.f32 %v3664, %v4320
        %v4403 = vadd.f32 %v3665, %v4325
        %v4404 = vadd.f32 %v3666, %v4328
        %v4405 = vadd.f32 %v3667, %v4333
        %v4406 = vadd.f32 %v3668, %v4336
        %v4407 = vadd.f32 %v3669, %v4341
        %v4408 = vadd.f32 %v3670, %v4344
        %v4409 = vadd.f32 %v3671, %v4349
        %v4410 = vadd.f32 %v3672, %v4352
        %v4411 = vadd.f32 %v3673, %v4357
        %v4412 = vadd.f32 %v3674, %v4360
        %v4413 = vadd.f32 %v3675, %v4365
        %v4414 = vadd.f32 %v3676, %v4368
        %v4415 = vadd.f32 %v3677, %v4373
        %v4416 = vadd.f32 %v3678, %v4376
        %v4417 = vadd.f32 %v3679, %v4381
        %v4418 = vadd.f32 %v3680, %v4384
        %v4419 = vld [vmem:[%s1471] sm:$0xe]
        %v4420 = vld [vmem:[%s1471 + $0xc] sm:$0xe]
        %v4421 = vld [vmem:[%s1471 + $0x18] sm:$0xe]
        %v4422 = vld [vmem:[%s1471 + $0x24] sm:$0xe]
        %v4423 = vld [vmem:[%s1471 + $0x30] sm:$0xe]
        %v4424 = vld [vmem:[%s1471 + $0x3c] sm:$0xe]
        %v4425 = vld [vmem:[%s1471 + $0x48] sm:$0xe]
        %v4426 = vld [vmem:[%s1471 + $0x54] sm:$0xe]
        %v4427 = vld [vmem:[%s1471 + $0x60] sm:$0xe]
        %v4428 = vld [vmem:[%s1471 + $0x6c] sm:$0xe]
        %v4429 = vld [vmem:[%s1471 + $0x78] sm:$0xe]
        %v4430 = vld [vmem:[%s1471 + $0x84] sm:$0xe]
        %v4431 = vld [vmem:[%s1471 + $0x90] sm:$0xe]
        %v4432 = vld [vmem:[%s1471 + $0x9c] sm:$0xe]
        %v4433 = vld [vmem:[%s1471 + $0xa8] sm:$0xe]
        %v4434 = vld [vmem:[%s1471 + $0xb4] sm:$0xe]
        %v4483 = vrot.slane %v4419, 5
        %v4484 = vrot.slane %v4483, 4
        %v4485 = vrot.slane %v3682, 5
        %v4486 = vsel %vm2892, %v4484, %v4485
        %v4487 = vrot.slane %v4485, 4
        %v4488 = vrot.slane %v3683, 5
        %v4489 = vsel %vm2892, %v4487, %v4488
        %v4490 = vrot.slane %v4420, 5
        %v4491 = vrot.slane %v4490, 4
        %v4492 = vrot.slane %v3685, 5
        %v4493 = vsel %vm2892, %v4491, %v4492
        %v4494 = vrot.slane %v4492, 4
        %v4495 = vrot.slane %v3686, 5
        %v4496 = vsel %vm2892, %v4494, %v4495
        %v4497 = vrot.slane %v4421, 5
        %v4498 = vrot.slane %v4497, 4
        %v4499 = vrot.slane %v3688, 5
        %v4500 = vsel %vm2892, %v4498, %v4499
        %v4501 = vrot.slane %v4499, 4
        %v4502 = vrot.slane %v3689, 5
        %v4503 = vsel %vm2892, %v4501, %v4502
        %v4504 = vrot.slane %v4422, 5
        %v4505 = vrot.slane %v4504, 4
        %v4506 = vrot.slane %v3691, 5
        %v4507 = vsel %vm2892, %v4505, %v4506
        %v4508 = vrot.slane %v4506, 4
        %v4509 = vrot.slane %v3692, 5
        %v4510 = vsel %vm2892, %v4508, %v4509
        %v4511 = vrot.slane %v4423, 5
        %v4512 = vrot.slane %v4511, 4
        %v4513 = vrot.slane %v3694, 5
        %v4514 = vsel %vm2892, %v4512, %v4513
        %v4515 = vrot.slane %v4513, 4
        %v4516 = vrot.slane %v3695, 5
        %v4517 = vsel %vm2892, %v4515, %v4516
        %v4518 = vrot.slane %v4424, 5
        %v4519 = vrot.slane %v4518, 4
        %v4520 = vrot.slane %v3697, 5
        %v4521 = vsel %vm2892, %v4519, %v4520
        %v4522 = vrot.slane %v4520, 4
        %v4523 = vrot.slane %v3698, 5
        %v4524 = vsel %vm2892, %v4522, %v4523
        %v4525 = vrot.slane %v4425, 5
        %v4526 = vrot.slane %v4525, 4
        %v4527 = vrot.slane %v3700, 5
        %v4528 = vsel %vm2892, %v4526, %v4527
        %v4529 = vrot.slane %v4527, 4
        %v4530 = vrot.slane %v3701, 5
        %v4531 = vsel %vm2892, %v4529, %v4530
        %v4532 = vrot.slane %v4426, 5
        %v4533 = vrot.slane %v4532, 4
        %v4534 = vrot.slane %v3703, 5
        %v4535 = vsel %vm2892, %v4533, %v4534
        %v4536 = vrot.slane %v4534, 4
        %v4537 = vrot.slane %v3704, 5
        %v4538 = vsel %vm2892, %v4536, %v4537
        %v4539 = vrot.slane %v4427, 5
        %v4540 = vrot.slane %v4539, 4
        %v4541 = vrot.slane %v3706, 5
        %v4542 = vsel %vm2892, %v4540, %v4541
        %v4543 = vrot.slane %v4541, 4
        %v4544 = vrot.slane %v3707, 5
        %v4545 = vsel %vm2892, %v4543, %v4544
        %v4546 = vrot.slane %v4428, 5
        %v4547 = vrot.slane %v4546, 4
        %v4548 = vrot.slane %v3709, 5
        %v4549 = vsel %vm2892, %v4547, %v4548
        %v4550 = vrot.slane %v4548, 4
        %v4551 = vrot.slane %v3710, 5
        %v4552 = vsel %vm2892, %v4550, %v4551
        %v4553 = vrot.slane %v4429, 5
        %v4554 = vrot.slane %v4553, 4
        %v4555 = vrot.slane %v3712, 5
        %v4556 = vsel %vm2892, %v4554, %v4555
        %v4557 = vrot.slane %v4555, 4
        %v4558 = vrot.slane %v3713, 5
        %v4559 = vsel %vm2892, %v4557, %v4558
        %v4560 = vrot.slane %v4430, 5
        %v4561 = vrot.slane %v4560, 4
        %v4562 = vrot.slane %v3715, 5
        %v4563 = vsel %vm2892, %v4561, %v4562
        %v4564 = vrot.slane %v4562, 4
        %v4565 = vrot.slane %v3716, 5
        %v4566 = vsel %vm2892, %v4564, %v4565
        %v4567 = vrot.slane %v4431, 5
        %v4568 = vrot.slane %v4567, 4
        %v4569 = vrot.slane %v3718, 5
        %v4570 = vsel %vm2892, %v4568, %v4569
        %v4571 = vrot.slane %v4569, 4
        %v4572 = vrot.slane %v3719, 5
        %v4573 = vsel %vm2892, %v4571, %v4572
        %v4574 = vrot.slane %v4432, 5
        %v4575 = vrot.slane %v4574, 4
        %v4576 = vrot.slane %v3721, 5
        %v4577 = vsel %vm2892, %v4575, %v4576
        %v4578 = vrot.slane %v4576, 4
        %v4579 = vrot.slane %v3722, 5
        %v4580 = vsel %vm2892, %v4578, %v4579
        %v4581 = vrot.slane %v4433, 5
        %v4582 = vrot.slane %v4581, 4
        %v4583 = vrot.slane %v3724, 5
        %v4584 = vsel %vm2892, %v4582, %v4583
        %v4585 = vrot.slane %v4583, 4
        %v4586 = vrot.slane %v3725, 5
        %v4587 = vsel %vm2892, %v4585, %v4586
        %v4588 = vrot.slane %v4434, 5
        %v4589 = vrot.slane %v4588, 4
        %v4590 = vrot.slane %v3727, 5
        %v4591 = vsel %vm2892, %v4589, %v4590
        %v4592 = vrot.slane %v4590, 4
        %v4593 = vrot.slane %v3728, 5
        %v4594 = vsel %vm2892, %v4592, %v4593
        %s4595 = scalar_lea.vmem [#allocation6], 80
        %v4596 = vld [vmem:[%s4595] sm:$0xf]
        %v4597 = vld [vmem:[%s4595 + $0x4] sm:$0xf]
        %v4598 = vld [vmem:[%s4595 + $0x8] sm:$0xf]
        %v4599 = vld [vmem:[%s4595 + $0xc] sm:$0xf]
        %v4600 = vunpack.c.l.b16 %v4486
        %v4601 = vunpack.c.l.b16 %v4489
        %v4602 = vunpack.c.l.b16 %v4493
        %v4603 = vunpack.c.l.b16 %v4496
        %v4604 = vunpack.c.l.b16 %v4500
        %v4605 = vunpack.c.l.b16 %v4503
        %v4606 = vunpack.c.l.b16 %v4507
        %v4607 = vunpack.c.l.b16 %v4510
        %v4608 = vunpack.c.l.b16 %v4514
        %v4609 = vunpack.c.l.b16 %v4517
        %v4610 = vunpack.c.l.b16 %v4521
        %v4611 = vunpack.c.l.b16 %v4524
        %v4612 = vunpack.c.l.b16 %v4528
        %v4613 = vunpack.c.l.b16 %v4531
        %v4614 = vunpack.c.l.b16 %v4535
        %v4615 = vunpack.c.l.b16 %v4538
        %v4616 = vunpack.c.l.b16 %v4542
        %v4617 = vunpack.c.l.b16 %v4545
        %v4618 = vunpack.c.l.b16 %v4549
        %v4619 = vunpack.c.l.b16 %v4552
        %v4620 = vunpack.c.l.b16 %v4556
        %v4621 = vunpack.c.l.b16 %v4559
        %v4622 = vunpack.c.l.b16 %v4563
        %v4623 = vunpack.c.l.b16 %v4566
        %v4624 = vunpack.c.l.b16 %v4570
        %v4625 = vunpack.c.l.b16 %v4573
        %v4626 = vunpack.c.l.b16 %v4577
        %v4627 = vunpack.c.l.b16 %v4580
        %v4628 = vunpack.c.l.b16 %v4584
        %v4629 = vunpack.c.l.b16 %v4587
        %v4630 = vunpack.c.l.b16 %v4591
        %v4631 = vunpack.c.l.b16 %v4594
        %v4632 = vpack.c.b16 %v4601, %v4600
        %v4633 = vpack.c.b16 %v4603, %v4602
        %v4634 = vpack.c.b16 %v4605, %v4604
        %v4635 = vpack.c.b16 %v4607, %v4606
        %v4636 = vpack.c.b16 %v4609, %v4608
        %v4637 = vpack.c.b16 %v4611, %v4610
        %v4638 = vpack.c.b16 %v4613, %v4612
        %v4639 = vpack.c.b16 %v4615, %v4614
        %v4640 = vpack.c.b16 %v4617, %v4616
        %v4641 = vpack.c.b16 %v4619, %v4618
        %v4642 = vpack.c.b16 %v4621, %v4620
        %v4643 = vpack.c.b16 %v4623, %v4622
        %v4644 = vpack.c.b16 %v4625, %v4624
        %v4645 = vpack.c.b16 %v4627, %v4626
        %v4646 = vpack.c.b16 %v4629, %v4628
        %v4647 = vpack.c.b16 %v4631, %v4630
        %v4652 = vunpack.c.l.b16 %v4596
        %v4653 = vunpack.c.l.b16 %v4597
        %v4654 = vunpack.c.l.b16 %v4598
        %v4655 = vunpack.c.l.b16 %v4599
        %v4656 = vpack.c.b16 %v4653, %v4652
        %v4657 = vpack.c.b16 %v4655, %v4654
        %v4661 = vsel %vm2331, %v4632, 0
        %v4664 = vsel %vm2331, %v4633, 0
        %v4667 = vsel %vm2331, %v4634, 0
        %v4670 = vsel %vm2331, %v4635, 0
        %v4673 = vsel %vm2331, %v4636, 0
        %v4676 = vsel %vm2331, %v4637, 0
        %v4679 = vsel %vm2331, %v4638, 0
        %v4682 = vsel %vm2331, %v4639, 0
        %v4685 = vsel %vm2331, %v4640, 0
        %v4688 = vsel %vm2331, %v4641, 0
        %v4691 = vsel %vm2331, %v4642, 0
        %v4694 = vsel %vm2331, %v4643, 0
        %v4697 = vsel %vm2331, %v4644, 0
        %v4700 = vsel %vm2331, %v4645, 0
        %v4703 = vsel %vm2331, %v4646, 0
        %v4706 = vsel %vm2331, %v4647, 0
        %4708 = vmatprep.subr.bf16.mxu0 0
        %4709 = vmatpush1.bf16.msra.mxu0 %v4656
        %4710 = vmatprep.subr.bf16.mxu0 0
        %4711 = vmatpush1.bf16.msra.mxu0 %v4657
        %4712 = vmatprep.subr.bf16.mxu0 0
        %4713 = vmatpush1.bf16.msra.mxu0 0
        %4714 = vmatprep.subr.bf16.mxu0 0
        %4715 = vmatpush1.bf16.msra.mxu0 0
        %4716 = vmatprep.subr.bf16.mxu0 0
        %4717 = vmatpush1.bf16.msra.mxu0 0
        %4718 = vmatprep.subr.bf16.mxu0 0
        %4719 = vmatpush1.bf16.msra.mxu0 0
        %4720 = vmatprep.subr.bf16.mxu0 0
        %4721 = vmatpush1.bf16.msra.mxu0 0
        %4722 = vmatprep.subr.bf16.mxu0 0
        %4723 = vmatpush1.bf16.msra.mxu0 0
        %4724 = vmatprep.subr.bf16.mxu0 0
        %4725 = vmatpush1.bf16.msra.mxu0 0
        %4726 = vmatprep.subr.bf16.mxu0 0
        %4727 = vmatpush1.bf16.msra.mxu0 0
        %4728 = vmatprep.subr.bf16.mxu0 0
        %4729 = vmatpush1.bf16.msra.mxu0 0
        %4730 = vmatprep.subr.bf16.mxu0 0
        %4731 = vmatpush1.bf16.msra.mxu0 0
        %4732 = vmatprep.subr.bf16.mxu0 0
        %4733 = vmatpush1.bf16.msra.mxu0 0
        %4734 = vmatprep.subr.bf16.mxu0 0
        %4735 = vmatpush1.bf16.msra.mxu0 0
        %4736 = vmatprep.subr.bf16.mxu0 0
        %4737 = vmatpush1.bf16.msra.mxu0 0
        %4738 = vmatprep.subr.bf16.mxu0 0
        %4739 = vmatpush1.bf16.msra.mxu0 0
        %4740 = vmatprep.mubr.bf16.mxu0 0
        %4741 = vmatmul.mubr.bf16.gmra.mrb[0].mxu0 %v4661
        %v4742 = vpop.f32.mrb[0].mxu0
        %v4743 = vadd.f32 0.0, %v4742
        %v4744 = vpop.f32.mrb[0].mxu0
        %v4745 = vpop.f32.mrb[0].mxu0
        %v4746 = vadd.f32 0.0, %v4745
        %v4747 = vpop.f32.mrb[0].mxu0
        %4748 = vmatprep.mubr.bf16.mxu0 0
        %4749 = vmatmul.mubr.bf16.gmra.mrb[0].mxu0 %v4664
        %v4750 = vpop.f32.mrb[0].mxu0
        %v4751 = vadd.f32 0.0, %v4750
        %v4752 = vpop.f32.mrb[0].mxu0
        %v4753 = vpop.f32.mrb[0].mxu0
        %v4754 = vadd.f32 0.0, %v4753
        %v4755 = vpop.f32.mrb[0].mxu0
        %4756 = vmatprep.mubr.bf16.mxu0 0
        %4757 = vmatmul.mubr.bf16.gmra.mrb[0].mxu0 %v4667
        %v4758 = vpop.f32.mrb[0].mxu0
        %v4759 = vadd.f32 0.0, %v4758
        %v4760 = vpop.f32.mrb[0].mxu0
        %v4761 = vpop.f32.mrb[0].mxu0
        %v4762 = vadd.f32 0.0, %v4761
        %v4763 = vpop.f32.mrb[0].mxu0
        %4764 = vmatprep.mubr.bf16.mxu0 0
        %4765 = vmatmul.mubr.bf16.gmra.mrb[0].mxu0 %v4670
        %v4766 = vpop.f32.mrb[0].mxu0
        %v4767 = vadd.f32 0.0, %v4766
        %v4768 = vpop.f32.mrb[0].mxu0
        %v4769 = vpop.f32.mrb[0].mxu0
        %v4770 = vadd.f32 0.0, %v4769
        %v4771 = vpop.f32.mrb[0].mxu0
        %4772 = vmatprep.mubr.bf16.mxu0 0
        %4773 = vmatmul.mubr.bf16.gmra.mrb[0].mxu0 %v4673
        %v4774 = vpop.f32.mrb[0].mxu0
        %v4775 = vadd.f32 0.0, %v4774
        %v4776 = vpop.f32.mrb[0].mxu0
        %v4777 = vpop.f32.mrb[0].mxu0
        %v4778 = vadd.f32 0.0, %v4777
        %v4779 = vpop.f32.mrb[0].mxu0
        %4780 = vmatprep.mubr.bf16.mxu0 0
        %4781 = vmatmul.mubr.bf16.gmra.mrb[0].mxu0 %v4676
        %v4782 = vpop.f32.mrb[0].mxu0
        %v4783 = vadd.f32 0.0, %v4782
        %v4784 = vpop.f32.mrb[0].mxu0
        %v4785 = vpop.f32.mrb[0].mxu0
        %v4786 = vadd.f32 0.0, %v4785
        %v4787 = vpop.f32.mrb[0].mxu0
        %4788 = vmatprep.mubr.bf16.mxu0 0
        %4789 = vmatmul.mubr.bf16.gmra.mrb[0].mxu0 %v4679
        %v4790 = vpop.f32.mrb[0].mxu0
        %v4791 = vadd.f32 0.0, %v4790
        %v4792 = vpop.f32.mrb[0].mxu0
        %v4793 = vpop.f32.mrb[0].mxu0
        %v4794 = vadd.f32 0.0, %v4793
        %v4795 = vpop.f32.mrb[0].mxu0
        %4796 = vmatprep.mubr.bf16.mxu0 0
        %4797 = vmatmul.mubr.bf16.gmra.mrb[0].mxu0 %v4682
        %v4798 = vpop.f32.mrb[0].mxu0
        %v4799 = vadd.f32 0.0, %v4798
        %v4800 = vpop.f32.mrb[0].mxu0
        %v4801 = vpop.f32.mrb[0].mxu0
        %v4802 = vadd.f32 0.0, %v4801
        %v4803 = vpop.f32.mrb[0].mxu0
        %4804 = vmatprep.mubr.bf16.mxu0 0
        %4805 = vmatmul.mubr.bf16.gmra.mrb[0].mxu0 %v4685
        %v4806 = vpop.f32.mrb[0].mxu0
        %v4807 = vadd.f32 0.0, %v4806
        %v4808 = vpop.f32.mrb[0].mxu0
        %v4809 = vpop.f32.mrb[0].mxu0
        %v4810 = vadd.f32 0.0, %v4809
        %v4811 = vpop.f32.mrb[0].mxu0
        %4812 = vmatprep.mubr.bf16.mxu0 0
        %4813 = vmatmul.mubr.bf16.gmra.mrb[0].mxu0 %v4688
        %v4814 = vpop.f32.mrb[0].mxu0
        %v4815 = vadd.f32 0.0, %v4814
        %v4816 = vpop.f32.mrb[0].mxu0
        %v4817 = vpop.f32.mrb[0].mxu0
        %v4818 = vadd.f32 0.0, %v4817
        %v4819 = vpop.f32.mrb[0].mxu0
        %4820 = vmatprep.mubr.bf16.mxu0 0
        %4821 = vmatmul.mubr.bf16.gmra.mrb[0].mxu0 %v4691
        %v4822 = vpop.f32.mrb[0].mxu0
        %v4823 = vadd.f32 0.0, %v4822
        %v4824 = vpop.f32.mrb[0].mxu0
        %v4825 = vpop.f32.mrb[0].mxu0
        %v4826 = vadd.f32 0.0, %v4825
        %v4827 = vpop.f32.mrb[0].mxu0
        %4828 = vmatprep.mubr.bf16.mxu0 0
        %4829 = vmatmul.mubr.bf16.gmra.mrb[0].mxu0 %v4694
        %v4830 = vpop.f32.mrb[0].mxu0
        %v4831 = vadd.f32 0.0, %v4830
        %v4832 = vpop.f32.mrb[0].mxu0
        %v4833 = vpop.f32.mrb[0].mxu0
        %v4834 = vadd.f32 0.0, %v4833
        %v4835 = vpop.f32.mrb[0].mxu0
        %4836 = vmatprep.mubr.bf16.mxu0 0
        %4837 = vmatmul.mubr.bf16.gmra.mrb[0].mxu0 %v4697
        %v4838 = vpop.f32.mrb[0].mxu0
        %v4839 = vadd.f32 0.0, %v4838
        %v4840 = vpop.f32.mrb[0].mxu0
        %v4841 = vpop.f32.mrb[0].mxu0
        %v4842 = vadd.f32 0.0, %v4841
        %v4843 = vpop.f32.mrb[0].mxu0
        %4844 = vmatprep.mubr.bf16.mxu0 0
        %4845 = vmatmul.mubr.bf16.gmra.mrb[0].mxu0 %v4700
        %v4846 = vpop.f32.mrb[0].mxu0
        %v4847 = vadd.f32 0.0, %v4846
        %v4848 = vpop.f32.mrb[0].mxu0
        %v4849 = vpop.f32.mrb[0].mxu0
        %v4850 = vadd.f32 0.0, %v4849
        %v4851 = vpop.f32.mrb[0].mxu0
        %4852 = vmatprep.mubr.bf16.mxu0 0
        %4853 = vmatmul.mubr.bf16.gmra.mrb[0].mxu0 %v4703
        %v4854 = vpop.f32.mrb[0].mxu0
        %v4855 = vadd.f32 0.0, %v4854
        %v4856 = vpop.f32.mrb[0].mxu0
        %v4857 = vpop.f32.mrb[0].mxu0
        %v4858 = vadd.f32 0.0, %v4857
        %v4859 = vpop.f32.mrb[0].mxu0
        %4860 = vmatprep.mubr.bf16.mxu0 0
        %4861 = vmatmul.mubr.bf16.gmra.mrb[0].mxu0 %v4706
        %v4862 = vpop.f32.mrb[0].mxu0
        %v4863 = vadd.f32 0.0, %v4862
        %v4864 = vpop.f32.mrb[0].mxu0
        %v4865 = vpop.f32.mrb[0].mxu0
        %v4866 = vadd.f32 0.0, %v4865
        %v4867 = vpop.f32.mrb[0].mxu0
        %4868 = vdwg.mxu0
        %v4869 = vadd.f32 %v4387, %v4743
        %v4870 = vadd.f32 %v4388, %v4746
        %v4871 = vadd.f32 %v4389, %v4751
        %v4872 = vadd.f32 %v4390, %v4754
        %v4873 = vadd.f32 %v4391, %v4759
        %v4874 = vadd.f32 %v4392, %v4762
        %v4875 = vadd.f32 %v4393, %v4767
        %v4876 = vadd.f32 %v4394, %v4770
        %v4877 = vadd.f32 %v4395, %v4775
        %v4878 = vadd.f32 %v4396, %v4778
        %v4879 = vadd.f32 %v4397, %v4783
        %v4880 = vadd.f32 %v4398, %v4786
        %v4881 = vadd.f32 %v4399, %v4791
        %v4882 = vadd.f32 %v4400, %v4794
        %v4883 = vadd.f32 %v4401, %v4799
        %v4884 = vadd.f32 %v4402, %v4802
        %v4885 = vadd.f32 %v4403, %v4807
        %v4886 = vadd.f32 %v4404, %v4810
        %v4887 = vadd.f32 %v4405, %v4815
        %v4888 = vadd.f32 %v4406, %v4818
        %v4889 = vadd.f32 %v4407, %v4823
        %v4890 = vadd.f32 %v4408, %v4826
        %v4891 = vadd.f32 %v4409, %v4831
        %v4892 = vadd.f32 %v4410, %v4834
        %v4893 = vadd.f32 %v4411, %v4839
        %v4894 = vadd.f32 %v4412, %v4842
        %v4895 = vadd.f32 %v4413, %v4847
        %v4896 = vadd.f32 %v4414, %v4850
        %v4897 = vadd.f32 %v4415, %v4855
        %v4898 = vadd.f32 %v4416, %v4858
        %v4899 = vadd.f32 %v4417, %v4863
        %v4900 = vadd.f32 %v4418, %v4866
        %s4901 = scalar_lea.vmem [#allocation2], 24
        %v4902 = vld [vmem:[%s4901] sm:$0xf]
        %v4903 = vld [vmem:[%s4901 + $0x4] sm:$0xf]
        %v4904 = vld [vmem:[%s4901 + $0xc] sm:$0xf]
        %v4905 = vld [vmem:[%s4901 + $0x10] sm:$0xf]
        %v4906 = vld [vmem:[%s4901 + $0x18] sm:$0xf]
        %v4907 = vld [vmem:[%s4901 + $0x1c] sm:$0xf]
        %v4908 = vld [vmem:[%s4901 + $0x24] sm:$0xf]
        %v4909 = vld [vmem:[%s4901 + $0x28] sm:$0xf]
        %v4910 = vld [vmem:[%s4901 + $0x30] sm:$0xf]
        %v4911 = vld [vmem:[%s4901 + $0x34] sm:$0xf]
        %v4912 = vld [vmem:[%s4901 + $0x3c] sm:$0xf]
        %v4913 = vld [vmem:[%s4901 + $0x40] sm:$0xf]
        %v4914 = vld [vmem:[%s4901 + $0x48] sm:$0xf]
        %v4915 = vld [vmem:[%s4901 + $0x4c] sm:$0xf]
        %v4916 = vld [vmem:[%s4901 + $0x54] sm:$0xf]
        %v4917 = vld [vmem:[%s4901 + $0x58] sm:$0xf]
        %v4918 = vld [vmem:[%s4901 + $0x60] sm:$0xf]
        %v4919 = vld [vmem:[%s4901 + $0x64] sm:$0xf]
        %v4920 = vld [vmem:[%s4901 + $0x6c] sm:$0xf]
        %v4921 = vld [vmem:[%s4901 + $0x70] sm:$0xf]
        %v4922 = vld [vmem:[%s4901 + $0x78] sm:$0xf]
        %v4923 = vld [vmem:[%s4901 + $0x7c] sm:$0xf]
        %v4924 = vld [vmem:[%s4901 + $0x84] sm:$0xf]
        %v4925 = vld [vmem:[%s4901 + $0x88] sm:$0xf]
        %v4926 = vld [vmem:[%s4901 + $0x90] sm:$0xf]
        %v4927 = vld [vmem:[%s4901 + $0x94] sm:$0xf]
        %v4928 = vld [vmem:[%s4901 + $0x9c] sm:$0xf]
        %v4929 = vld [vmem:[%s4901 + $0xa0] sm:$0xf]
        %v4930 = vld [vmem:[%s4901 + $0xa8] sm:$0xf]
        %v4931 = vld [vmem:[%s4901 + $0xac] sm:$0xf]
        %v4932 = vld [vmem:[%s4901 + $0xb4] sm:$0xf]
        %v4933 = vld [vmem:[%s4901 + $0xb8] sm:$0xf]
        %s4934 = scalar_lea.vmem [#allocation6], 96
        %v4935 = vld [vmem:[%s4934] sm:$0xf]
        %v4936 = vld [vmem:[%s4934 + $0x4] sm:$0xf]
        %v4937 = vld [vmem:[%s4934 + $0x8] sm:$0xf]
        %v4938 = vld [vmem:[%s4934 + $0xc] sm:$0xf]
        %v4971 = vunpack.c.l.b16 %v4902
        %v4972 = vunpack.c.l.b16 %v4903
        %v4973 = vunpack.c.l.b16 %v4904
        %v4974 = vunpack.c.l.b16 %v4905
        %v4975 = vunpack.c.l.b16 %v4906
        %v4976 = vunpack.c.l.b16 %v4907
        %v4977 = vunpack.c.l.b16 %v4908
        %v4978 = vunpack.c.l.b16 %v4909
        %v4979 = vunpack.c.l.b16 %v4910
        %v4980 = vunpack.c.l.b16 %v4911
        %v4981 = vunpack.c.l.b16 %v4912
        %v4982 = vunpack.c.l.b16 %v4913
        %v4983 = vunpack.c.l.b16 %v4914
        %v4984 = vunpack.c.l.b16 %v4915
        %v4985 = vunpack.c.l.b16 %v4916
        %v4986 = vunpack.c.l.b16 %v4917
        %v4987 = vunpack.c.l.b16 %v4918
        %v4988 = vunpack.c.l.b16 %v4919
        %v4989 = vunpack.c.l.b16 %v4920
        %v4990 = vunpack.c.l.b16 %v4921
        %v4991 = vunpack.c.l.b16 %v4922
        %v4992 = vunpack.c.l.b16 %v4923
        %v4993 = vunpack.c.l.b16 %v4924
        %v4994 = vunpack.c.l.b16 %v4925
        %v4995 = vunpack.c.l.b16 %v4926
        %v4996 = vunpack.c.l.b16 %v4927
        %v4997 = vunpack.c.l.b16 %v4928
        %v4998 = vunpack.c.l.b16 %v4929
        %v4999 = vunpack.c.l.b16 %v4930
        %v5000 = vunpack.c.l.b16 %v4931
        %v5001 = vunpack.c.l.b16 %v4932
        %v5002 = vunpack.c.l.b16 %v4933
        %v5003 = vpack.c.b16 %v4972, %v4971
        %v5004 = vpack.c.b16 %v4974, %v4973
        %v5005 = vpack.c.b16 %v4976, %v4975
        %v5006 = vpack.c.b16 %v4978, %v4977
        %v5007 = vpack.c.b16 %v4980, %v4979
        %v5008 = vpack.c.b16 %v4982, %v4981
        %v5009 = vpack.c.b16 %v4984, %v4983
        %v5010 = vpack.c.b16 %v4986, %v4985
        %v5011 = vpack.c.b16 %v4988, %v4987
        %v5012 = vpack.c.b16 %v4990, %v4989
        %v5013 = vpack.c.b16 %v4992, %v4991
        %v5014 = vpack.c.b16 %v4994, %v4993
        %v5015 = vpack.c.b16 %v4996, %v4995
        %v5016 = vpack.c.b16 %v4998, %v4997
        %v5017 = vpack.c.b16 %v5000, %v4999
        %v5018 = vpack.c.b16 %v5002, %v5001
        %v5023 = vunpack.c.l.b16 %v4935
        %v5024 = vunpack.c.l.b16 %v4936
        %v5025 = vunpack.c.l.b16 %v4937
        %v5026 = vunpack.c.l.b16 %v4938
        %v5027 = vpack.c.b16 %v5024, %v5023
        %v5028 = vpack.c.b16 %v5026, %v5025
        %v5032 = vsel %vm2331, %v5003, 0
        %v5035 = vsel %vm2331, %v5004, 0
        %v5038 = vsel %vm2331, %v5005, 0
        %v5041 = vsel %vm2331, %v5006, 0
        %v5044 = vsel %vm2331, %v5007, 0
        %v5047 = vsel %vm2331, %v5008, 0
        %v5050 = vsel %vm2331, %v5009, 0
        %v5053 = vsel %vm2331, %v5010, 0
        %v5056 = vsel %vm2331, %v5011, 0
        %v5059 = vsel %vm2331, %v5012, 0
        %v5062 = vsel %vm2331, %v5013, 0
        %v5065 = vsel %vm2331, %v5014, 0
        %v5068 = vsel %vm2331, %v5015, 0
        %v5071 = vsel %vm2331, %v5016, 0
        %v5074 = vsel %vm2331, %v5017, 0
        %v5077 = vsel %vm2331, %v5018, 0
        %5079 = vmatprep.subr.bf16.mxu0 0
        %5080 = vmatpush1.bf16.msra.mxu0 %v5027
        %5081 = vmatprep.subr.bf16.mxu0 0
        %5082 = vmatpush1.bf16.msra.mxu0 %v5028
        %5083 = vmatprep.subr.bf16.mxu0 0
        %5084 = vmatpush1.bf16.msra.mxu0 0
        %5085 = vmatprep.subr.bf16.mxu0 0
        %5086 = vmatpush1.bf16.msra.mxu0 0
        %5087 = vmatprep.subr.bf16.mxu0 0
        %5088 = vmatpush1.bf16.msra.mxu0 0
        %5089 = vmatprep.subr.bf16.mxu0 0
        %5090 = vmatpush1.bf16.msra.mxu0 0
        %5091 = vmatprep.subr.bf16.mxu0 0
        %5092 = vmatpush1.bf16.msra.mxu0 0
        %5093 = vmatprep.subr.bf16.mxu0 0
        %5094 = vmatpush1.bf16.msra.mxu0 0
        %5095 = vmatprep.subr.bf16.mxu0 0
        %5096 = vmatpush1.bf16.msra.mxu0 0
        %5097 = vmatprep.subr.bf16.mxu0 0
        %5098 = vmatpush1.bf16.msra.mxu0 0
        %5099 = vmatprep.subr.bf16.mxu0 0
        %5100 = vmatpush1.bf16.msra.mxu0 0
        %5101 = vmatprep.subr.bf16.mxu0 0
        %5102 = vmatpush1.bf16.msra.mxu0 0
        %5103 = vmatprep.subr.bf16.mxu0 0
        %5104 = vmatpush1.bf16.msra.mxu0 0
        %5105 = vmatprep.subr.bf16.mxu0 0
        %5106 = vmatpush1.bf16.msra.mxu0 0
        %5107 = vmatprep.subr.bf16.mxu0 0
        %5108 = vmatpush1.bf16.msra.mxu0 0
        %5109 = vmatprep.subr.bf16.mxu0 0
        %5110 = vmatpush1.bf16.msra.mxu0 0
        %5111 = vmatprep.mubr.bf16.mxu0 0
        %5112 = vmatmul.mubr.bf16.gmra.mrb[0].mxu0 %v5032
        %v5113 = vpop.f32.mrb[0].mxu0
        %v5114 = vadd.f32 0.0, %v5113
        %v5115 = vpop.f32.mrb[0].mxu0
        %v5116 = vpop.f32.mrb[0].mxu0
        %v5117 = vadd.f32 0.0, %v5116
        %v5118 = vpop.f32.mrb[0].mxu0
        %5119 = vmatprep.mubr.bf16.mxu0 0
        %5120 = vmatmul.mubr.bf16.gmra.mrb[0].mxu0 %v5035
        %v5121 = vpop.f32.mrb[0].mxu0
        %v5122 = vadd.f32 0.0, %v5121
        %v5123 = vpop.f32.mrb[0].mxu0
        %v5124 = vpop.f32.mrb[0].mxu0
        %v5125 = vadd.f32 0.0, %v5124
        %v5126 = vpop.f32.mrb[0].mxu0
        %5127 = vmatprep.mubr.bf16.mxu0 0
        %5128 = vmatmul.mubr.bf16.gmra.mrb[0].mxu0 %v5038
        %v5129 = vpop.f32.mrb[0].mxu0
        %v5130 = vadd.f32 0.0, %v5129
        %v5131 = vpop.f32.mrb[0].mxu0
        %v5132 = vpop.f32.mrb[0].mxu0
        %v5133 = vadd.f32 0.0, %v5132
        %v5134 = vpop.f32.mrb[0].mxu0
        %5135 = vmatprep.mubr.bf16.mxu0 0
        %5136 = vmatmul.mubr.bf16.gmra.mrb[0].mxu0 %v5041
        %v5137 = vpop.f32.mrb[0].mxu0
        %v5138 = vadd.f32 0.0, %v5137
        %v5139 = vpop.f32.mrb[0].mxu0
        %v5140 = vpop.f32.mrb[0].mxu0
        %v5141 = vadd.f32 0.0, %v5140
        %v5142 = vpop.f32.mrb[0].mxu0
        %5143 = vmatprep.mubr.bf16.mxu0 0
        %5144 = vmatmul.mubr.bf16.gmra.mrb[0].mxu0 %v5044
        %v5145 = vpop.f32.mrb[0].mxu0
        %v5146 = vadd.f32 0.0, %v5145
        %v5147 = vpop.f32.mrb[0].mxu0
        %v5148 = vpop.f32.mrb[0].mxu0
        %v5149 = vadd.f32 0.0, %v5148
        %v5150 = vpop.f32.mrb[0].mxu0
        %5151 = vmatprep.mubr.bf16.mxu0 0
        %5152 = vmatmul.mubr.bf16.gmra.mrb[0].mxu0 %v5047
        %v5153 = vpop.f32.mrb[0].mxu0
        %v5154 = vadd.f32 0.0, %v5153
        %v5155 = vpop.f32.mrb[0].mxu0
        %v5156 = vpop.f32.mrb[0].mxu0
        %v5157 = vadd.f32 0.0, %v5156
        %v5158 = vpop.f32.mrb[0].mxu0
        %5159 = vmatprep.mubr.bf16.mxu0 0
        %5160 = vmatmul.mubr.bf16.gmra.mrb[0].mxu0 %v5050
        %v5161 = vpop.f32.mrb[0].mxu0
        %v5162 = vadd.f32 0.0, %v5161
        %v5163 = vpop.f32.mrb[0].mxu0
        %v5164 = vpop.f32.mrb[0].mxu0
        %v5165 = vadd.f32 0.0, %v5164
        %v5166 = vpop.f32.mrb[0].mxu0
        %5167 = vmatprep.mubr.bf16.mxu0 0
        %5168 = vmatmul.mubr.bf16.gmra.mrb[0].mxu0 %v5053
        %v5169 = vpop.f32.mrb[0].mxu0
        %v5170 = vadd.f32 0.0, %v5169
        %v5171 = vpop.f32.mrb[0].mxu0
        %v5172 = vpop.f32.mrb[0].mxu0
        %v5173 = vadd.f32 0.0, %v5172
        %v5174 = vpop.f32.mrb[0].mxu0
        %5175 = vmatprep.mubr.bf16.mxu0 0
        %5176 = vmatmul.mubr.bf16.gmra.mrb[0].mxu0 %v5056
        %v5177 = vpop.f32.mrb[0].mxu0
        %v5178 = vadd.f32 0.0, %v5177
        %v5179 = vpop.f32.mrb[0].mxu0
        %v5180 = vpop.f32.mrb[0].mxu0
        %v5181 = vadd.f32 0.0, %v5180
        %v5182 = vpop.f32.mrb[0].mxu0
        %5183 = vmatprep.mubr.bf16.mxu0 0
        %5184 = vmatmul.mubr.bf16.gmra.mrb[0].mxu0 %v5059
        %v5185 = vpop.f32.mrb[0].mxu0
        %v5186 = vadd.f32 0.0, %v5185
        %v5187 = vpop.f32.mrb[0].mxu0
        %v5188 = vpop.f32.mrb[0].mxu0
        %v5189 = vadd.f32 0.0, %v5188
        %v5190 = vpop.f32.mrb[0].mxu0
        %5191 = vmatprep.mubr.bf16.mxu0 0
        %5192 = vmatmul.mubr.bf16.gmra.mrb[0].mxu0 %v5062
        %v5193 = vpop.f32.mrb[0].mxu0
        %v5194 = vadd.f32 0.0, %v5193
        %v5195 = vpop.f32.mrb[0].mxu0
        %v5196 = vpop.f32.mrb[0].mxu0
        %v5197 = vadd.f32 0.0, %v5196
        %v5198 = vpop.f32.mrb[0].mxu0
        %5199 = vmatprep.mubr.bf16.mxu0 0
        %5200 = vmatmul.mubr.bf16.gmra.mrb[0].mxu0 %v5065
        %v5201 = vpop.f32.mrb[0].mxu0
        %v5202 = vadd.f32 0.0, %v5201
        %v5203 = vpop.f32.mrb[0].mxu0
        %v5204 = vpop.f32.mrb[0].mxu0
        %v5205 = vadd.f32 0.0, %v5204
        %v5206 = vpop.f32.mrb[0].mxu0
        %5207 = vmatprep.mubr.bf16.mxu0 0
        %5208 = vmatmul.mubr.bf16.gmra.mrb[0].mxu0 %v5068
        %v5209 = vpop.f32.mrb[0].mxu0
        %v5210 = vadd.f32 0.0, %v5209
        %v5211 = vpop.f32.mrb[0].mxu0
        %v5212 = vpop.f32.mrb[0].mxu0
        %v5213 = vadd.f32 0.0, %v5212
        %v5214 = vpop.f32.mrb[0].mxu0
        %5215 = vmatprep.mubr.bf16.mxu0 0
        %5216 = vmatmul.mubr.bf16.gmra.mrb[0].mxu0 %v5071
        %v5217 = vpop.f32.mrb[0].mxu0
        %v5218 = vadd.f32 0.0, %v5217
        %v5219 = vpop.f32.mrb[0].mxu0
        %v5220 = vpop.f32.mrb[0].mxu0
        %v5221 = vadd.f32 0.0, %v5220
        %v5222 = vpop.f32.mrb[0].mxu0
        %5223 = vmatprep.mubr.bf16.mxu0 0
        %5224 = vmatmul.mubr.bf16.gmra.mrb[0].mxu0 %v5074
        %v5225 = vpop.f32.mrb[0].mxu0
        %v5226 = vadd.f32 0.0, %v5225
        %v5227 = vpop.f32.mrb[0].mxu0
        %v5228 = vpop.f32.mrb[0].mxu0
        %v5229 = vadd.f32 0.0, %v5228
        %v5230 = vpop.f32.mrb[0].mxu0
        %5231 = vmatprep.mubr.bf16.mxu0 0
        %5232 = vmatmul.mubr.bf16.gmra.mrb[0].mxu0 %v5077
        %v5233 = vpop.f32.mrb[0].mxu0
        %v5234 = vadd.f32 0.0, %v5233
        %v5235 = vpop.f32.mrb[0].mxu0
        %v5236 = vpop.f32.mrb[0].mxu0
        %v5237 = vadd.f32 0.0, %v5236
        %v5238 = vpop.f32.mrb[0].mxu0
        %5239 = vdwg.mxu0
        %v5240 = vadd.f32 %v4869, %v5114
        %v5241 = vadd.f32 %v4870, %v5117
        %v5242 = vadd.f32 %v4871, %v5122
        %v5243 = vadd.f32 %v4872, %v5125
        %v5244 = vadd.f32 %v4873, %v5130
        %v5245 = vadd.f32 %v4874, %v5133
        %v5246 = vadd.f32 %v4875, %v5138
        %v5247 = vadd.f32 %v4876, %v5141
        %v5248 = vadd.f32 %v4877, %v5146
        %v5249 = vadd.f32 %v4878, %v5149
        %v5250 = vadd.f32 %v4879, %v5154
        %v5251 = vadd.f32 %v4880, %v5157
        %v5252 = vadd.f32 %v4881, %v5162
        %v5253 = vadd.f32 %v4882, %v5165
        %v5254 = vadd.f32 %v4883, %v5170
        %v5255 = vadd.f32 %v4884, %v5173
        %v5256 = vadd.f32 %v4885, %v5178
        %v5257 = vadd.f32 %v4886, %v5181
        %v5258 = vadd.f32 %v4887, %v5186
        %v5259 = vadd.f32 %v4888, %v5189
        %v5260 = vadd.f32 %v4889, %v5194
        %v5261 = vadd.f32 %v4890, %v5197
        %v5262 = vadd.f32 %v4891, %v5202
        %v5263 = vadd.f32 %v4892, %v5205
        %v5264 = vadd.f32 %v4893, %v5210
        %v5265 = vadd.f32 %v4894, %v5213
        %v5266 = vadd.f32 %v4895, %v5218
        %v5267 = vadd.f32 %v4896, %v5221
        %v5268 = vadd.f32 %v4897, %v5226
        %v5269 = vadd.f32 %v4898, %v5229
        %v5270 = vadd.f32 %v4899, %v5234
        %v5271 = vadd.f32 %v4900, %v5237
        %v5272 = vld [vmem:[%s4901] sm:$0xf]
        %v5273 = vld [vmem:[%s4901 + $0x4] sm:$0xf]
        %v5274 = vld [vmem:[%s4901 + $0x8] sm:$0x1]
        %v5275 = vld [vmem:[%s4901 + $0xc] sm:$0xf]
        %v5276 = vld [vmem:[%s4901 + $0x10] sm:$0xf]
        %v5277 = vld [vmem:[%s4901 + $0x14] sm:$0x1]
        %v5278 = vld [vmem:[%s4901 + $0x18] sm:$0xf]
        %v5279 = vld [vmem:[%s4901 + $0x1c] sm:$0xf]
        %v5280 = vld [vmem:[%s4901 + $0x20] sm:$0x1]
        %v5281 = vld [vmem:[%s4901 + $0x24] sm:$0xf]
        %v5282 = vld [vmem:[%s4901 + $0x28] sm:$0xf]
        %v5283 = vld [vmem:[%s4901 + $0x2c] sm:$0x1]
        %v5284 = vld [vmem:[%s4901 + $0x30] sm:$0xf]
        %v5285 = vld [vmem:[%s4901 + $0x34] sm:$0xf]
        %v5286 = vld [vmem:[%s4901 + $0x38] sm:$0x1]
        %v5287 = vld [vmem:[%s4901 + $0x3c] sm:$0xf]
        %v5288 = vld [vmem:[%s4901 + $0x40] sm:$0xf]
        %v5289 = vld [vmem:[%s4901 + $0x44] sm:$0x1]
        %v5290 = vld [vmem:[%s4901 + $0x48] sm:$0xf]
        %v5291 = vld [vmem:[%s4901 + $0x4c] sm:$0xf]
        %v5292 = vld [vmem:[%s4901 + $0x50] sm:$0x1]
        %v5293 = vld [vmem:[%s4901 + $0x54] sm:$0xf]
        %v5294 = vld [vmem:[%s4901 + $0x58] sm:$0xf]
        %v5295 = vld [vmem:[%s4901 + $0x5c] sm:$0x1]
        %v5296 = vld [vmem:[%s4901 + $0x60] sm:$0xf]
        %v5297 = vld [vmem:[%s4901 + $0x64] sm:$0xf]
        %v5298 = vld [vmem:[%s4901 + $0x68] sm:$0x1]
        %v5299 = vld [vmem:[%s4901 + $0x6c] sm:$0xf]
        %v5300 = vld [vmem:[%s4901 + $0x70] sm:$0xf]
        %v5301 = vld [vmem:[%s4901 + $0x74] sm:$0x1]
        %v5302 = vld [vmem:[%s4901 + $0x78] sm:$0xf]
        %v5303 = vld [vmem:[%s4901 + $0x7c] sm:$0xf]
        %v5304 = vld [vmem:[%s4901 + $0x80] sm:$0x1]
        %v5305 = vld [vmem:[%s4901 + $0x84] sm:$0xf]
        %v5306 = vld [vmem:[%s4901 + $0x88] sm:$0xf]
        %v5307 = vld [vmem:[%s4901 + $0x8c] sm:$0x1]
        %v5308 = vld [vmem:[%s4901 + $0x90] sm:$0xf]
        %v5309 = vld [vmem:[%s4901 + $0x94] sm:$0xf]
        %v5310 = vld [vmem:[%s4901 + $0x98] sm:$0x1]
        %v5311 = vld [vmem:[%s4901 + $0x9c] sm:$0xf]
        %v5312 = vld [vmem:[%s4901 + $0xa0] sm:$0xf]
        %v5313 = vld [vmem:[%s4901 + $0xa4] sm:$0x1]
        %v5314 = vld [vmem:[%s4901 + $0xa8] sm:$0xf]
        %v5315 = vld [vmem:[%s4901 + $0xac] sm:$0xf]
        %v5316 = vld [vmem:[%s4901 + $0xb0] sm:$0x1]
        %v5317 = vld [vmem:[%s4901 + $0xb4] sm:$0xf]
        %v5318 = vld [vmem:[%s4901 + $0xb8] sm:$0xf]
        %v5319 = vld [vmem:[%s4901 + $0xbc] sm:$0x1]
        %v5321 = vshrl.u32 %v5272, 16
        %v5323 = vrot.slane %v5321, 4
        %v5324 = vshll.u32 %v5272, 16
        %v5326 = vrot.slane %v5324, 5
        %v5327 = vor.u32 %v5323, %v5326
        %v5328 = vrot.slane %v5327, 4
        %v5330 = vshll.u32 %v5273, 16
        %v5332 = vrot.slane %v5330, 5
        %v5333 = vsel %vm1881, %v5328, %v5332
        %v5334 = vshrl.u32 %v5273, 16
        %v5336 = vrot.slane %v5334, 4
        %v5337 = vor.u32 %v5336, %v5332
        %v5338 = vrot.slane %v5337, 4
        %v5340 = vshll.u32 %v5274, 16
        %v5342 = vrot.slane %v5340, 5
        %v5343 = vsel %vm1881, %v5338, %v5342
        %v5345 = vshrl.u32 %v5275, 16
        %v5347 = vrot.slane %v5345, 4
        %v5348 = vshll.u32 %v5275, 16
        %v5350 = vrot.slane %v5348, 5
        %v5351 = vor.u32 %v5347, %v5350
        %v5352 = vrot.slane %v5351, 4
        %v5354 = vshll.u32 %v5276, 16
        %v5356 = vrot.slane %v5354, 5
        %v5357 = vsel %vm1881, %v5352, %v5356
        %v5358 = vshrl.u32 %v5276, 16
        %v5360 = vrot.slane %v5358, 4
        %v5361 = vor.u32 %v5360, %v5356
        %v5362 = vrot.slane %v5361, 4
        %v5364 = vshll.u32 %v5277, 16
        %v5366 = vrot.slane %v5364, 5
        %v5367 = vsel %vm1881, %v5362, %v5366
        %v5369 = vshrl.u32 %v5278, 16
        %v5371 = vrot.slane %v5369, 4
        %v5372 = vshll.u32 %v5278, 16
        %v5374 = vrot.slane %v5372, 5
        %v5375 = vor.u32 %v5371, %v5374
        %v5376 = vrot.slane %v5375, 4
        %v5378 = vshll.u32 %v5279, 16
        %v5380 = vrot.slane %v5378, 5
        %v5381 = vsel %vm1881, %v5376, %v5380
        %v5382 = vshrl.u32 %v5279, 16
        %v5384 = vrot.slane %v5382, 4
        %v5385 = vor.u32 %v5384, %v5380
        %v5386 = vrot.slane %v5385, 4
        %v5388 = vshll.u32 %v5280, 16
        %v5390 = vrot.slane %v5388, 5
        %v5391 = vsel %vm1881, %v5386, %v5390
        %v5393 = vshrl.u32 %v5281, 16
        %v5395 = vrot.slane %v5393, 4
        %v5396 = vshll.u32 %v5281, 16
        %v5398 = vrot.slane %v5396, 5
        %v5399 = vor.u32 %v5395, %v5398
        %v5400 = vrot.slane %v5399, 4
        %v5402 = vshll.u32 %v5282, 16
        %v5404 = vrot.slane %v5402, 5
        %v5405 = vsel %vm1881, %v5400, %v5404
        %v5406 = vshrl.u32 %v5282, 16
        %v5408 = vrot.slane %v5406, 4
        %v5409 = vor.u32 %v5408, %v5404
        %v5410 = vrot.slane %v5409, 4
        %v5412 = vshll.u32 %v5283, 16
        %v5414 = vrot.slane %v5412, 5
        %v5415 = vsel %vm1881, %v5410, %v5414
        %v5417 = vshrl.u32 %v5284, 16
        %v5419 = vrot.slane %v5417, 4
        %v5420 = vshll.u32 %v5284, 16
        %v5422 = vrot.slane %v5420, 5
        %v5423 = vor.u32 %v5419, %v5422
        %v5424 = vrot.slane %v5423, 4
        %v5426 = vshll.u32 %v5285, 16
        %v5428 = vrot.slane %v5426, 5
        %v5429 = vsel %vm1881, %v5424, %v5428
        %v5430 = vshrl.u32 %v5285, 16
        %v5432 = vrot.slane %v5430, 4
        %v5433 = vor.u32 %v5432, %v5428
        %v5434 = vrot.slane %v5433, 4
        %v5436 = vshll.u32 %v5286, 16
        %v5438 = vrot.slane %v5436, 5
        %v5439 = vsel %vm1881, %v5434, %v5438
        %v5441 = vshrl.u32 %v5287, 16
        %v5443 = vrot.slane %v5441, 4
        %v5444 = vshll.u32 %v5287, 16
        %v5446 = vrot.slane %v5444, 5
        %v5447 = vor.u32 %v5443, %v5446
        %v5448 = vrot.slane %v5447, 4
        %v5450 = vshll.u32 %v5288, 16
        %v5452 = vrot.slane %v5450, 5
        %v5453 = vsel %vm1881, %v5448, %v5452
        %v5454 = vshrl.u32 %v5288, 16
        %v5456 = vrot.slane %v5454, 4
        %v5457 = vor.u32 %v5456, %v5452
        %v5458 = vrot.slane %v5457, 4
        %v5460 = vshll.u32 %v5289, 16
        %v5462 = vrot.slane %v5460, 5
        %v5463 = vsel %vm1881, %v5458, %v5462
        %v5465 = vshrl.u32 %v5290, 16
        %v5467 = vrot.slane %v5465, 4
        %v5468 = vshll.u32 %v5290, 16
        %v5470 = vrot.slane %v5468, 5
        %v5471 = vor.u32 %v5467, %v5470
        %v5472 = vrot.slane %v5471, 4
        %v5474 = vshll.u32 %v5291, 16
        %v5476 = vrot.slane %v5474, 5
        %v5477 = vsel %vm1881, %v5472, %v5476
        %v5478 = vshrl.u32 %v5291, 16
        %v5480 = vrot.slane %v5478, 4
        %v5481 = vor.u32 %v5480, %v5476
        %v5482 = vrot.slane %v5481, 4
        %v5484 = vshll.u32 %v5292, 16
        %v5486 = vrot.slane %v5484, 5
        %v5487 = vsel %vm1881, %v5482, %v5486
        %v5489 = vshrl.u32 %v5293, 16
        %v5491 = vrot.slane %v5489, 4
        %v5492 = vshll.u32 %v5293, 16
        %v5494 = vrot.slane %v5492, 5
        %v5495 = vor.u32 %v5491, %v5494
        %v5496 = vrot.slane %v5495, 4
        %v5498 = vshll.u32 %v5294, 16
        %v5500 = vrot.slane %v5498, 5
        %v5501 = vsel %vm1881, %v5496, %v5500
        %v5502 = vshrl.u32 %v5294, 16
        %v5504 = vrot.slane %v5502, 4
        %v5505 = vor.u32 %v5504, %v5500
        %v5506 = vrot.slane %v5505, 4
        %v5508 = vshll.u32 %v5295, 16
        %v5510 = vrot.slane %v5508, 5
        %v5511 = vsel %vm1881, %v5506, %v5510
        %v5513 = vshrl.u32 %v5296, 16
        %v5515 = vrot.slane %v5513, 4
        %v5516 = vshll.u32 %v5296, 16
        %v5518 = vrot.slane %v5516, 5
        %v5519 = vor.u32 %v5515, %v5518
        %v5520 = vrot.slane %v5519, 4
        %v5522 = vshll.u32 %v5297, 16
        %v5524 = vrot.slane %v5522, 5
        %v5525 = vsel %vm1881, %v5520, %v5524
        %v5526 = vshrl.u32 %v5297, 16
        %v5528 = vrot.slane %v5526, 4
        %v5529 = vor.u32 %v5528, %v5524
        %v5530 = vrot.slane %v5529, 4
        %v5532 = vshll.u32 %v5298, 16
        %v5534 = vrot.slane %v5532, 5
        %v5535 = vsel %vm1881, %v5530, %v5534
        %v5537 = vshrl.u32 %v5299, 16
        %v5539 = vrot.slane %v5537, 4
        %v5540 = vshll.u32 %v5299, 16
        %v5542 = vrot.slane %v5540, 5
        %v5543 = vor.u32 %v5539, %v5542
        %v5544 = vrot.slane %v5543, 4
        %v5546 = vshll.u32 %v5300, 16
        %v5548 = vrot.slane %v5546, 5
        %v5549 = vsel %vm1881, %v5544, %v5548
        %v5550 = vshrl.u32 %v5300, 16
        %v5552 = vrot.slane %v5550, 4
        %v5553 = vor.u32 %v5552, %v5548
        %v5554 = vrot.slane %v5553, 4
        %v5556 = vshll.u32 %v5301, 16
        %v5558 = vrot.slane %v5556, 5
        %v5559 = vsel %vm1881, %v5554, %v5558
        %v5561 = vshrl.u32 %v5302, 16
        %v5563 = vrot.slane %v5561, 4
        %v5564 = vshll.u32 %v5302, 16
        %v5566 = vrot.slane %v5564, 5
        %v5567 = vor.u32 %v5563, %v5566
        %v5568 = vrot.slane %v5567, 4
        %v5570 = vshll.u32 %v5303, 16
        %v5572 = vrot.slane %v5570, 5
        %v5573 = vsel %vm1881, %v5568, %v5572
        %v5574 = vshrl.u32 %v5303, 16
        %v5576 = vrot.slane %v5574, 4
        %v5577 = vor.u32 %v5576, %v5572
        %v5578 = vrot.slane %v5577, 4
        %v5580 = vshll.u32 %v5304, 16
        %v5582 = vrot.slane %v5580, 5
        %v5583 = vsel %vm1881, %v5578, %v5582
        %v5585 = vshrl.u32 %v5305, 16
        %v5587 = vrot.slane %v5585, 4
        %v5588 = vshll.u32 %v5305, 16
        %v5590 = vrot.slane %v5588, 5
        %v5591 = vor.u32 %v5587, %v5590
        %v5592 = vrot.slane %v5591, 4
        %v5594 = vshll.u32 %v5306, 16
        %v5596 = vrot.slane %v5594, 5
        %v5597 = vsel %vm1881, %v5592, %v5596
        %v5598 = vshrl.u32 %v5306, 16
        %v5600 = vrot.slane %v5598, 4
        %v5601 = vor.u32 %v5600, %v5596
        %v5602 = vrot.slane %v5601, 4
        %v5604 = vshll.u32 %v5307, 16
        %v5606 = vrot.slane %v5604, 5
        %v5607 = vsel %vm1881, %v5602, %v5606
        %v5609 = vshrl.u32 %v5308, 16
        %v5611 = vrot.slane %v5609, 4
        %v5612 = vshll.u32 %v5308, 16
        %v5614 = vrot.slane %v5612, 5
        %v5615 = vor.u32 %v5611, %v5614
        %v5616 = vrot.slane %v5615, 4
        %v5618 = vshll.u32 %v5309, 16
        %v5620 = vrot.slane %v5618, 5
        %v5621 = vsel %vm1881, %v5616, %v5620
        %v5622 = vshrl.u32 %v5309, 16
        %v5624 = vrot.slane %v5622, 4
        %v5625 = vor.u32 %v5624, %v5620
        %v5626 = vrot.slane %v5625, 4
        %v5628 = vshll.u32 %v5310, 16
        %v5630 = vrot.slane %v5628, 5
        %v5631 = vsel %vm1881, %v5626, %v5630
        %v5633 = vshrl.u32 %v5311, 16
        %v5635 = vrot.slane %v5633, 4
        %v5636 = vshll.u32 %v5311, 16
        %v5638 = vrot.slane %v5636, 5
        %v5639 = vor.u32 %v5635, %v5638
        %v5640 = vrot.slane %v5639, 4
        %v5642 = vshll.u32 %v5312, 16
        %v5644 = vrot.slane %v5642, 5
        %v5645 = vsel %vm1881, %v5640, %v5644
        %v5646 = vshrl.u32 %v5312, 16
        %v5648 = vrot.slane %v5646, 4
        %v5649 = vor.u32 %v5648, %v5644
        %v5650 = vrot.slane %v5649, 4
        %v5652 = vshll.u32 %v5313, 16
        %v5654 = vrot.slane %v5652, 5
        %v5655 = vsel %vm1881, %v5650, %v5654
        %v5657 = vshrl.u32 %v5314, 16
        %v5659 = vrot.slane %v5657, 4
        %v5660 = vshll.u32 %v5314, 16
        %v5662 = vrot.slane %v5660, 5
        %v5663 = vor.u32 %v5659, %v5662
        %v5664 = vrot.slane %v5663, 4
        %v5666 = vshll.u32 %v5315, 16
        %v5668 = vrot.slane %v5666, 5
        %v5669 = vsel %vm1881, %v5664, %v5668
        %v5670 = vshrl.u32 %v5315, 16
        %v5672 = vrot.slane %v5670, 4
        %v5673 = vor.u32 %v5672, %v5668
        %v5674 = vrot.slane %v5673, 4
        %v5676 = vshll.u32 %v5316, 16
        %v5678 = vrot.slane %v5676, 5
        %v5679 = vsel %vm1881, %v5674, %v5678
        %v5681 = vshrl.u32 %v5317, 16
        %v5683 = vrot.slane %v5681, 4
        %v5684 = vshll.u32 %v5317, 16
        %v5686 = vrot.slane %v5684, 5
        %v5687 = vor.u32 %v5683, %v5686
        %v5688 = vrot.slane %v5687, 4
        %v5690 = vshll.u32 %v5318, 16
        %v5692 = vrot.slane %v5690, 5
        %v5693 = vsel %vm1881, %v5688, %v5692
        %v5694 = vshrl.u32 %v5318, 16
        %v5696 = vrot.slane %v5694, 4
        %v5697 = vor.u32 %v5696, %v5692
        %v5698 = vrot.slane %v5697, 4
        %v5700 = vshll.u32 %v5319, 16
        %v5702 = vrot.slane %v5700, 5
        %v5703 = vsel %vm1881, %v5698, %v5702
        %s5704 = scalar_lea.vmem [#allocation6], 112
        %v5705 = vld [vmem:[%s5704] sm:$0xf]
        %v5706 = vld [vmem:[%s5704 + $0x4] sm:$0xf]
        %v5707 = vld [vmem:[%s5704 + $0x8] sm:$0xf]
        %v5708 = vld [vmem:[%s5704 + $0xc] sm:$0xf]
        %v5709 = vunpack.c.l.b16 %v5333
        %v5710 = vunpack.c.l.b16 %v5343
        %v5711 = vunpack.c.l.b16 %v5357
        %v5712 = vunpack.c.l.b16 %v5367
        %v5713 = vunpack.c.l.b16 %v5381
        %v5714 = vunpack.c.l.b16 %v5391
        %v5715 = vunpack.c.l.b16 %v5405
        %v5716 = vunpack.c.l.b16 %v5415
        %v5717 = vunpack.c.l.b16 %v5429
        %v5718 = vunpack.c.l.b16 %v5439
        %v5719 = vunpack.c.l.b16 %v5453
        %v5720 = vunpack.c.l.b16 %v5463
        %v5721 = vunpack.c.l.b16 %v5477
        %v5722 = vunpack.c.l.b16 %v5487
        %v5723 = vunpack.c.l.b16 %v5501
        %v5724 = vunpack.c.l.b16 %v5511
        %v5725 = vunpack.c.l.b16 %v5525
        %v5726 = vunpack.c.l.b16 %v5535
        %v5727 = vunpack.c.l.b16 %v5549
        %v5728 = vunpack.c.l.b16 %v5559
        %v5729 = vunpack.c.l.b16 %v5573
        %v5730 = vunpack.c.l.b16 %v5583
        %v5731 = vunpack.c.l.b16 %v5597
        %v5732 = vunpack.c.l.b16 %v5607
        %v5733 = vunpack.c.l.b16 %v5621
        %v5734 = vunpack.c.l.b16 %v5631
        %v5735 = vunpack.c.l.b16 %v5645
        %v5736 = vunpack.c.l.b16 %v5655
        %v5737 = vunpack.c.l.b16 %v5669
        %v5738 = vunpack.c.l.b16 %v5679
        %v5739 = vunpack.c.l.b16 %v5693
        %v5740 = vunpack.c.l.b16 %v5703
        %v5741 = vpack.c.b16 %v5710, %v5709
        %v5742 = vpack.c.b16 %v5712, %v5711
        %v5743 = vpack.c.b16 %v5714, %v5713
        %v5744 = vpack.c.b16 %v5716, %v5715
        %v5745 = vpack.c.b16 %v5718, %v5717
        %v5746 = vpack.c.b16 %v5720, %v5719
        %v5747 = vpack.c.b16 %v5722, %v5721
        %v5748 = vpack.c.b16 %v5724, %v5723
        %v5749 = vpack.c.b16 %v5726, %v5725
        %v5750 = vpack.c.b16 %v5728, %v5727
        %v5751 = vpack.c.b16 %v5730, %v5729
        %v5752 = vpack.c.b16 %v5732, %v5731
        %v5753 = vpack.c.b16 %v5734, %v5733
        %v5754 = vpack.c.b16 %v5736, %v5735
        %v5755 = vpack.c.b16 %v5738, %v5737
        %v5756 = vpack.c.b16 %v5740, %v5739
        %v5761 = vunpack.c.l.b16 %v5705
        %v5762 = vunpack.c.l.b16 %v5706
        %v5763 = vunpack.c.l.b16 %v5707
        %v5764 = vunpack.c.l.b16 %v5708
        %v5765 = vpack.c.b16 %v5762, %v5761
        %v5766 = vpack.c.b16 %v5764, %v5763
        %v5770 = vsel %vm2331, %v5741, 0
        %v5773 = vsel %vm2331, %v5742, 0
        %v5776 = vsel %vm2331, %v5743, 0
        %v5779 = vsel %vm2331, %v5744, 0
        %v5782 = vsel %vm2331, %v5745, 0
        %v5785 = vsel %vm2331, %v5746, 0
        %v5788 = vsel %vm2331, %v5747, 0
        %v5791 = vsel %vm2331, %v5748, 0
        %v5794 = vsel %vm2331, %v5749, 0
        %v5797 = vsel %vm2331, %v5750, 0
        %v5800 = vsel %vm2331, %v5751, 0
        %v5803 = vsel %vm2331, %v5752, 0
        %v5806 = vsel %vm2331, %v5753, 0
        %v5809 = vsel %vm2331, %v5754, 0
        %v5812 = vsel %vm2331, %v5755, 0
        %v5815 = vsel %vm2331, %v5756, 0
        %5817 = vmatprep.subr.bf16.mxu0 0
        %5818 = vmatpush1.bf16.msra.mxu0 %v5765
        %5819 = vmatprep.subr.bf16.mxu0 0
        %5820 = vmatpush1.bf16.msra.mxu0 %v5766
        %5821 = vmatprep.subr.bf16.mxu0 0
        %5822 = vmatpush1.bf16.msra.mxu0 0
        %5823 = vmatprep.subr.bf16.mxu0 0
        %5824 = vmatpush1.bf16.msra.mxu0 0
        %5825 = vmatprep.subr.bf16.mxu0 0
        %5826 = vmatpush1.bf16.msra.mxu0 0
        %5827 = vmatprep.subr.bf16.mxu0 0
        %5828 = vmatpush1.bf16.msra.mxu0 0
        %5829 = vmatprep.subr.bf16.mxu0 0
        %5830 = vmatpush1.bf16.msra.mxu0 0
        %5831 = vmatprep.subr.bf16.mxu0 0
        %5832 = vmatpush1.bf16.msra.mxu0 0
        %5833 = vmatprep.subr.bf16.mxu0 0
        %5834 = vmatpush1.bf16.msra.mxu0 0
        %5835 = vmatprep.subr.bf16.mxu0 0
        %5836 = vmatpush1.bf16.msra.mxu0 0
        %5837 = vmatprep.subr.bf16.mxu0 0
        %5838 = vmatpush1.bf16.msra.mxu0 0
        %5839 = vmatprep.subr.bf16.mxu0 0
        %5840 = vmatpush1.bf16.msra.mxu0 0
        %5841 = vmatprep.subr.bf16.mxu0 0
        %5842 = vmatpush1.bf16.msra.mxu0 0
        %5843 = vmatprep.subr.bf16.mxu0 0
        %5844 = vmatpush1.bf16.msra.mxu0 0
        %5845 = vmatprep.subr.bf16.mxu0 0
        %5846 = vmatpush1.bf16.msra.mxu0 0
        %5847 = vmatprep.subr.bf16.mxu0 0
        %5848 = vmatpush1.bf16.msra.mxu0 0
        %5849 = vmatprep.mubr.bf16.mxu0 0
        %5850 = vmatmul.mubr.bf16.gmra.mrb[0].mxu0 %v5770
        %v5851 = vpop.f32.mrb[0].mxu0
        %v5852 = vadd.f32 0.0, %v5851
        %v5853 = vpop.f32.mrb[0].mxu0
        %v5854 = vpop.f32.mrb[0].mxu0
        %v5855 = vadd.f32 0.0, %v5854
        %v5856 = vpop.f32.mrb[0].mxu0
        %5857 = vmatprep.mubr.bf16.mxu0 0
        %5858 = vmatmul.mubr.bf16.gmra.mrb[0].mxu0 %v5773
        %v5859 = vpop.f32.mrb[0].mxu0
        %v5860 = vadd.f32 0.0, %v5859
        %v5861 = vpop.f32.mrb[0].mxu0
        %v5862 = vpop.f32.mrb[0].mxu0
        %v5863 = vadd.f32 0.0, %v5862
        %v5864 = vpop.f32.mrb[0].mxu0
        %5865 = vmatprep.mubr.bf16.mxu0 0
        %5866 = vmatmul.mubr.bf16.gmra.mrb[0].mxu0 %v5776
        %v5867 = vpop.f32.mrb[0].mxu0
        %v5868 = vadd.f32 0.0, %v5867
        %v5869 = vpop.f32.mrb[0].mxu0
        %v5870 = vpop.f32.mrb[0].mxu0
        %v5871 = vadd.f32 0.0, %v5870
        %v5872 = vpop.f32.mrb[0].mxu0
        %5873 = vmatprep.mubr.bf16.mxu0 0
        %5874 = vmatmul.mubr.bf16.gmra.mrb[0].mxu0 %v5779
        %v5875 = vpop.f32.mrb[0].mxu0
        %v5876 = vadd.f32 0.0, %v5875
        %v5877 = vpop.f32.mrb[0].mxu0
        %v5878 = vpop.f32.mrb[0].mxu0
        %v5879 = vadd.f32 0.0, %v5878
        %v5880 = vpop.f32.mrb[0].mxu0
        %5881 = vmatprep.mubr.bf16.mxu0 0
        %5882 = vmatmul.mubr.bf16.gmra.mrb[0].mxu0 %v5782
        %v5883 = vpop.f32.mrb[0].mxu0
        %v5884 = vadd.f32 0.0, %v5883
        %v5885 = vpop.f32.mrb[0].mxu0
        %v5886 = vpop.f32.mrb[0].mxu0
        %v5887 = vadd.f32 0.0, %v5886
        %v5888 = vpop.f32.mrb[0].mxu0
        %5889 = vmatprep.mubr.bf16.mxu0 0
        %5890 = vmatmul.mubr.bf16.gmra.mrb[0].mxu0 %v5785
        %v5891 = vpop.f32.mrb[0].mxu0
        %v5892 = vadd.f32 0.0, %v5891
        %v5893 = vpop.f32.mrb[0].mxu0
        %v5894 = vpop.f32.mrb[0].mxu0
        %v5895 = vadd.f32 0.0, %v5894
        %v5896 = vpop.f32.mrb[0].mxu0
        %5897 = vmatprep.mubr.bf16.mxu0 0
        %5898 = vmatmul.mubr.bf16.gmra.mrb[0].mxu0 %v5788
        %v5899 = vpop.f32.mrb[0].mxu0
        %v5900 = vadd.f32 0.0, %v5899
        %v5901 = vpop.f32.mrb[0].mxu0
        %v5902 = vpop.f32.mrb[0].mxu0
        %v5903 = vadd.f32 0.0, %v5902
        %v5904 = vpop.f32.mrb[0].mxu0
        %5905 = vmatprep.mubr.bf16.mxu0 0
        %5906 = vmatmul.mubr.bf16.gmra.mrb[0].mxu0 %v5791
        %v5907 = vpop.f32.mrb[0].mxu0
        %v5908 = vadd.f32 0.0, %v5907
        %v5909 = vpop.f32.mrb[0].mxu0
        %v5910 = vpop.f32.mrb[0].mxu0
        %v5911 = vadd.f32 0.0, %v5910
        %v5912 = vpop.f32.mrb[0].mxu0
        %5913 = vmatprep.mubr.bf16.mxu0 0
        %5914 = vmatmul.mubr.bf16.gmra.mrb[0].mxu0 %v5794
        %v5915 = vpop.f32.mrb[0].mxu0
        %v5916 = vadd.f32 0.0, %v5915
        %v5917 = vpop.f32.mrb[0].mxu0
        %v5918 = vpop.f32.mrb[0].mxu0
        %v5919 = vadd.f32 0.0, %v5918
        %v5920 = vpop.f32.mrb[0].mxu0
        %5921 = vmatprep.mubr.bf16.mxu0 0
        %5922 = vmatmul.mubr.bf16.gmra.mrb[0].mxu0 %v5797
        %v5923 = vpop.f32.mrb[0].mxu0
        %v5924 = vadd.f32 0.0, %v5923
        %v5925 = vpop.f32.mrb[0].mxu0
        %v5926 = vpop.f32.mrb[0].mxu0
        %v5927 = vadd.f32 0.0, %v5926
        %v5928 = vpop.f32.mrb[0].mxu0
        %5929 = vmatprep.mubr.bf16.mxu0 0
        %5930 = vmatmul.mubr.bf16.gmra.mrb[0].mxu0 %v5800
        %v5931 = vpop.f32.mrb[0].mxu0
        %v5932 = vadd.f32 0.0, %v5931
        %v5933 = vpop.f32.mrb[0].mxu0
        %v5934 = vpop.f32.mrb[0].mxu0
        %v5935 = vadd.f32 0.0, %v5934
        %v5936 = vpop.f32.mrb[0].mxu0
        %5937 = vmatprep.mubr.bf16.mxu0 0
        %5938 = vmatmul.mubr.bf16.gmra.mrb[0].mxu0 %v5803
        %v5939 = vpop.f32.mrb[0].mxu0
        %v5940 = vadd.f32 0.0, %v5939
        %v5941 = vpop.f32.mrb[0].mxu0
        %v5942 = vpop.f32.mrb[0].mxu0
        %v5943 = vadd.f32 0.0, %v5942
        %v5944 = vpop.f32.mrb[0].mxu0
        %5945 = vmatprep.mubr.bf16.mxu0 0
        %5946 = vmatmul.mubr.bf16.gmra.mrb[0].mxu0 %v5806
        %v5947 = vpop.f32.mrb[0].mxu0
        %v5948 = vadd.f32 0.0, %v5947
        %v5949 = vpop.f32.mrb[0].mxu0
        %v5950 = vpop.f32.mrb[0].mxu0
        %v5951 = vadd.f32 0.0, %v5950
        %v5952 = vpop.f32.mrb[0].mxu0
        %5953 = vmatprep.mubr.bf16.mxu0 0
        %5954 = vmatmul.mubr.bf16.gmra.mrb[0].mxu0 %v5809
        %v5955 = vpop.f32.mrb[0].mxu0
        %v5956 = vadd.f32 0.0, %v5955
        %v5957 = vpop.f32.mrb[0].mxu0
        %v5958 = vpop.f32.mrb[0].mxu0
        %v5959 = vadd.f32 0.0, %v5958
        %v5960 = vpop.f32.mrb[0].mxu0
        %5961 = vmatprep.mubr.bf16.mxu0 0
        %5962 = vmatmul.mubr.bf16.gmra.mrb[0].mxu0 %v5812
        %v5963 = vpop.f32.mrb[0].mxu0
        %v5964 = vadd.f32 0.0, %v5963
        %v5965 = vpop.f32.mrb[0].mxu0
        %v5966 = vpop.f32.mrb[0].mxu0
        %v5967 = vadd.f32 0.0, %v5966
        %v5968 = vpop.f32.mrb[0].mxu0
        %5969 = vmatprep.mubr.bf16.mxu0 0
        %5970 = vmatmul.mubr.bf16.gmra.mrb[0].mxu0 %v5815
        %v5971 = vpop.f32.mrb[0].mxu0
        %v5972 = vadd.f32 0.0, %v5971
        %v5973 = vpop.f32.mrb[0].mxu0
        %v5974 = vpop.f32.mrb[0].mxu0
        %v5975 = vadd.f32 0.0, %v5974
        %v5976 = vpop.f32.mrb[0].mxu0
        %5977 = vdwg.mxu0
        %v5978 = vadd.f32 %v5240, %v5852
        %v5979 = vadd.f32 %v5241, %v5855
        %v5980 = vadd.f32 %v5242, %v5860
        %v5981 = vadd.f32 %v5243, %v5863
        %v5982 = vadd.f32 %v5244, %v5868
        %v5983 = vadd.f32 %v5245, %v5871
        %v5984 = vadd.f32 %v5246, %v5876
        %v5985 = vadd.f32 %v5247, %v5879
        %v5986 = vadd.f32 %v5248, %v5884
        %v5987 = vadd.f32 %v5249, %v5887
        %v5988 = vadd.f32 %v5250, %v5892
        %v5989 = vadd.f32 %v5251, %v5895
        %v5990 = vadd.f32 %v5252, %v5900
        %v5991 = vadd.f32 %v5253, %v5903
        %v5992 = vadd.f32 %v5254, %v5908
        %v5993 = vadd.f32 %v5255, %v5911
        %v5994 = vadd.f32 %v5256, %v5916
        %v5995 = vadd.f32 %v5257, %v5919
        %v5996 = vadd.f32 %v5258, %v5924
        %v5997 = vadd.f32 %v5259, %v5927
        %v5998 = vadd.f32 %v5260, %v5932
        %v5999 = vadd.f32 %v5261, %v5935
        %v6000 = vadd.f32 %v5262, %v5940
        %v6001 = vadd.f32 %v5263, %v5943
        %v6002 = vadd.f32 %v5264, %v5948
        %v6003 = vadd.f32 %v5265, %v5951
        %v6004 = vadd.f32 %v5266, %v5956
        %v6005 = vadd.f32 %v5267, %v5959
        %v6006 = vadd.f32 %v5268, %v5964
        %v6007 = vadd.f32 %v5269, %v5967
        %v6008 = vadd.f32 %v5270, %v5972
        %v6009 = vadd.f32 %v5271, %v5975
        %v6010 = vld [vmem:[%s4901] sm:$0xe]
        %v6011 = vld [vmem:[%s4901 + $0xc] sm:$0xe]
        %v6012 = vld [vmem:[%s4901 + $0x18] sm:$0xe]
        %v6013 = vld [vmem:[%s4901 + $0x24] sm:$0xe]
        %v6014 = vld [vmem:[%s4901 + $0x30] sm:$0xe]
        %v6015 = vld [vmem:[%s4901 + $0x3c] sm:$0xe]
        %v6016 = vld [vmem:[%s4901 + $0x48] sm:$0xe]
        %v6017 = vld [vmem:[%s4901 + $0x54] sm:$0xe]
        %v6018 = vld [vmem:[%s4901 + $0x60] sm:$0xe]
        %v6019 = vld [vmem:[%s4901 + $0x6c] sm:$0xe]
        %v6020 = vld [vmem:[%s4901 + $0x78] sm:$0xe]
        %v6021 = vld [vmem:[%s4901 + $0x84] sm:$0xe]
        %v6022 = vld [vmem:[%s4901 + $0x90] sm:$0xe]
        %v6023 = vld [vmem:[%s4901 + $0x9c] sm:$0xe]
        %v6024 = vld [vmem:[%s4901 + $0xa8] sm:$0xe]
        %v6025 = vld [vmem:[%s4901 + $0xb4] sm:$0xe]
        %v6074 = vrot.slane %v6010, 5
        %v6075 = vrot.slane %v6074, 4
        %v6076 = vrot.slane %v5273, 5
        %v6077 = vsel %vm2892, %v6075, %v6076
        %v6078 = vrot.slane %v6076, 4
        %v6079 = vrot.slane %v5274, 5
        %v6080 = vsel %vm2892, %v6078, %v6079
        %v6081 = vrot.slane %v6011, 5
        %v6082 = vrot.slane %v6081, 4
        %v6083 = vrot.slane %v5276, 5
        %v6084 = vsel %vm2892, %v6082, %v6083
        %v6085 = vrot.slane %v6083, 4
        %v6086 = vrot.slane %v5277, 5
        %v6087 = vsel %vm2892, %v6085, %v6086
        %v6088 = vrot.slane %v6012, 5
        %v6089 = vrot.slane %v6088, 4
        %v6090 = vrot.slane %v5279, 5
        %v6091 = vsel %vm2892, %v6089, %v6090
        %v6092 = vrot.slane %v6090, 4
        %v6093 = vrot.slane %v5280, 5
        %v6094 = vsel %vm2892, %v6092, %v6093
        %v6095 = vrot.slane %v6013, 5
        %v6096 = vrot.slane %v6095, 4
        %v6097 = vrot.slane %v5282, 5
        %v6098 = vsel %vm2892, %v6096, %v6097
        %v6099 = vrot.slane %v6097, 4
        %v6100 = vrot.slane %v5283, 5
        %v6101 = vsel %vm2892, %v6099, %v6100
        %v6102 = vrot.slane %v6014, 5
        %v6103 = vrot.slane %v6102, 4
        %v6104 = vrot.slane %v5285, 5
        %v6105 = vsel %vm2892, %v6103, %v6104
        %v6106 = vrot.slane %v6104, 4
        %v6107 = vrot.slane %v5286, 5
        %v6108 = vsel %vm2892, %v6106, %v6107
        %v6109 = vrot.slane %v6015, 5
        %v6110 = vrot.slane %v6109, 4
        %v6111 = vrot.slane %v5288, 5
        %v6112 = vsel %vm2892, %v6110, %v6111
        %v6113 = vrot.slane %v6111, 4
        %v6114 = vrot.slane %v5289, 5
        %v6115 = vsel %vm2892, %v6113, %v6114
        %v6116 = vrot.slane %v6016, 5
        %v6117 = vrot.slane %v6116, 4
        %v6118 = vrot.slane %v5291, 5
        %v6119 = vsel %vm2892, %v6117, %v6118
        %v6120 = vrot.slane %v6118, 4
        %v6121 = vrot.slane %v5292, 5
        %v6122 = vsel %vm2892, %v6120, %v6121
        %v6123 = vrot.slane %v6017, 5
        %v6124 = vrot.slane %v6123, 4
        %v6125 = vrot.slane %v5294, 5
        %v6126 = vsel %vm2892, %v6124, %v6125
        %v6127 = vrot.slane %v6125, 4
        %v6128 = vrot.slane %v5295, 5
        %v6129 = vsel %vm2892, %v6127, %v6128
        %v6130 = vrot.slane %v6018, 5
        %v6131 = vrot.slane %v6130, 4
        %v6132 = vrot.slane %v5297, 5
        %v6133 = vsel %vm2892, %v6131, %v6132
        %v6134 = vrot.slane %v6132, 4
        %v6135 = vrot.slane %v5298, 5
        %v6136 = vsel %vm2892, %v6134, %v6135
        %v6137 = vrot.slane %v6019, 5
        %v6138 = vrot.slane %v6137, 4
        %v6139 = vrot.slane %v5300, 5
        %v6140 = vsel %vm2892, %v6138, %v6139
        %v6141 = vrot.slane %v6139, 4
        %v6142 = vrot.slane %v5301, 5
        %v6143 = vsel %vm2892, %v6141, %v6142
        %v6144 = vrot.slane %v6020, 5
        %v6145 = vrot.slane %v6144, 4
        %v6146 = vrot.slane %v5303, 5
        %v6147 = vsel %vm2892, %v6145, %v6146
        %v6148 = vrot.slane %v6146, 4
        %v6149 = vrot.slane %v5304, 5
        %v6150 = vsel %vm2892, %v6148, %v6149
        %v6151 = vrot.slane %v6021, 5
        %v6152 = vrot.slane %v6151, 4
        %v6153 = vrot.slane %v5306, 5
        %v6154 = vsel %vm2892, %v6152, %v6153
        %v6155 = vrot.slane %v6153, 4
        %v6156 = vrot.slane %v5307, 5
        %v6157 = vsel %vm2892, %v6155, %v6156
        %v6158 = vrot.slane %v6022, 5
        %v6159 = vrot.slane %v6158, 4
        %v6160 = vrot.slane %v5309, 5
        %v6161 = vsel %vm2892, %v6159, %v6160
        %v6162 = vrot.slane %v6160, 4
        %v6163 = vrot.slane %v5310, 5
        %v6164 = vsel %vm2892, %v6162, %v6163
        %v6165 = vrot.slane %v6023, 5
        %v6166 = vrot.slane %v6165, 4
        %v6167 = vrot.slane %v5312, 5
        %v6168 = vsel %vm2892, %v6166, %v6167
        %v6169 = vrot.slane %v6167, 4
        %v6170 = vrot.slane %v5313, 5
        %v6171 = vsel %vm2892, %v6169, %v6170
        %v6172 = vrot.slane %v6024, 5
        %v6173 = vrot.slane %v6172, 4
        %v6174 = vrot.slane %v5315, 5
        %v6175 = vsel %vm2892, %v6173, %v6174
        %v6176 = vrot.slane %v6174, 4
        %v6177 = vrot.slane %v5316, 5
        %v6178 = vsel %vm2892, %v6176, %v6177
        %v6179 = vrot.slane %v6025, 5
        %v6180 = vrot.slane %v6179, 4
        %v6181 = vrot.slane %v5318, 5
        %v6182 = vsel %vm2892, %v6180, %v6181
        %v6183 = vrot.slane %v6181, 4
        %v6184 = vrot.slane %v5319, 5
        %v6185 = vsel %vm2892, %v6183, %v6184
        %s6186 = scalar_lea.vmem [#allocation6], 128
        %v6187 = vld [vmem:[%s6186] sm:$0xf]
        %v6188 = vld [vmem:[%s6186 + $0x4] sm:$0xf]
        %v6189 = vld [vmem:[%s6186 + $0x8] sm:$0xf]
        %v6190 = vld [vmem:[%s6186 + $0xc] sm:$0xf]
        %v6191 = vunpack.c.l.b16 %v6077
        %v6192 = vunpack.c.l.b16 %v6080
        %v6193 = vunpack.c.l.b16 %v6084
        %v6194 = vunpack.c.l.b16 %v6087
        %v6195 = vunpack.c.l.b16 %v6091
        %v6196 = vunpack.c.l.b16 %v6094
        %v6197 = vunpack.c.l.b16 %v6098
        %v6198 = vunpack.c.l.b16 %v6101
        %v6199 = vunpack.c.l.b16 %v6105
        %v6200 = vunpack.c.l.b16 %v6108
        %v6201 = vunpack.c.l.b16 %v6112
        %v6202 = vunpack.c.l.b16 %v6115
        %v6203 = vunpack.c.l.b16 %v6119
        %v6204 = vunpack.c.l.b16 %v6122
        %v6205 = vunpack.c.l.b16 %v6126
        %v6206 = vunpack.c.l.b16 %v6129
        %v6207 = vunpack.c.l.b16 %v6133
        %v6208 = vunpack.c.l.b16 %v6136
        %v6209 = vunpack.c.l.b16 %v6140
        %v6210 = vunpack.c.l.b16 %v6143
        %v6211 = vunpack.c.l.b16 %v6147
        %v6212 = vunpack.c.l.b16 %v6150
        %v6213 = vunpack.c.l.b16 %v6154
        %v6214 = vunpack.c.l.b16 %v6157
        %v6215 = vunpack.c.l.b16 %v6161
        %v6216 = vunpack.c.l.b16 %v6164
        %v6217 = vunpack.c.l.b16 %v6168
        %v6218 = vunpack.c.l.b16 %v6171
        %v6219 = vunpack.c.l.b16 %v6175
        %v6220 = vunpack.c.l.b16 %v6178
        %v6221 = vunpack.c.l.b16 %v6182
        %v6222 = vunpack.c.l.b16 %v6185
        %v6223 = vpack.c.b16 %v6192, %v6191
        %v6224 = vpack.c.b16 %v6194, %v6193
        %v6225 = vpack.c.b16 %v6196, %v6195
        %v6226 = vpack.c.b16 %v6198, %v6197
        %v6227 = vpack.c.b16 %v6200, %v6199
        %v6228 = vpack.c.b16 %v6202, %v6201
        %v6229 = vpack.c.b16 %v6204, %v6203
        %v6230 = vpack.c.b16 %v6206, %v6205
        %v6231 = vpack.c.b16 %v6208, %v6207
        %v6232 = vpack.c.b16 %v6210, %v6209
        %v6233 = vpack.c.b16 %v6212, %v6211
        %v6234 = vpack.c.b16 %v6214, %v6213
        %v6235 = vpack.c.b16 %v6216, %v6215
        %v6236 = vpack.c.b16 %v6218, %v6217
        %v6237 = vpack.c.b16 %v6220, %v6219
        %v6238 = vpack.c.b16 %v6222, %v6221
        %v6243 = vunpack.c.l.b16 %v6187
        %v6244 = vunpack.c.l.b16 %v6188
        %v6245 = vunpack.c.l.b16 %v6189
        %v6246 = vunpack.c.l.b16 %v6190
        %v6247 = vpack.c.b16 %v6244, %v6243
        %v6248 = vpack.c.b16 %v6246, %v6245
        %v6252 = vsel %vm2331, %v6223, 0
        %v6255 = vsel %vm2331, %v6224, 0
        %v6258 = vsel %vm2331, %v6225, 0
        %v6261 = vsel %vm2331, %v6226, 0
        %v6264 = vsel %vm2331, %v6227, 0
        %v6267 = vsel %vm2331, %v6228, 0
        %v6270 = vsel %vm2331, %v6229, 0
        %v6273 = vsel %vm2331, %v6230, 0
        %v6276 = vsel %vm2331, %v6231, 0
        %v6279 = vsel %vm2331, %v6232, 0
        %v6282 = vsel %vm2331, %v6233, 0
        %v6285 = vsel %vm2331, %v6234, 0
        %v6288 = vsel %vm2331, %v6235, 0
        %v6291 = vsel %vm2331, %v6236, 0
        %v6294 = vsel %vm2331, %v6237, 0
        %v6297 = vsel %vm2331, %v6238, 0
        %6299 = vmatprep.subr.bf16.mxu0 0
        %6300 = vmatpush1.bf16.msra.mxu0 %v6247
        %6301 = vmatprep.subr.bf16.mxu0 0
        %6302 = vmatpush1.bf16.msra.mxu0 %v6248
        %6303 = vmatprep.subr.bf16.mxu0 0
        %6304 = vmatpush1.bf16.msra.mxu0 0
        %6305 = vmatprep.subr.bf16.mxu0 0
        %6306 = vmatpush1.bf16.msra.mxu0 0
        %6307 = vmatprep.subr.bf16.mxu0 0
        %6308 = vmatpush1.bf16.msra.mxu0 0
        %6309 = vmatprep.subr.bf16.mxu0 0
        %6310 = vmatpush1.bf16.msra.mxu0 0
        %6311 = vmatprep.subr.bf16.mxu0 0
        %6312 = vmatpush1.bf16.msra.mxu0 0
        %6313 = vmatprep.subr.bf16.mxu0 0
        %6314 = vmatpush1.bf16.msra.mxu0 0
        %6315 = vmatprep.subr.bf16.mxu0 0
        %6316 = vmatpush1.bf16.msra.mxu0 0
        %6317 = vmatprep.subr.bf16.mxu0 0
        %6318 = vmatpush1.bf16.msra.mxu0 0
        %6319 = vmatprep.subr.bf16.mxu0 0
        %6320 = vmatpush1.bf16.msra.mxu0 0
        %6321 = vmatprep.subr.bf16.mxu0 0
        %6322 = vmatpush1.bf16.msra.mxu0 0
        %6323 = vmatprep.subr.bf16.mxu0 0
        %6324 = vmatpush1.bf16.msra.mxu0 0
        %6325 = vmatprep.subr.bf16.mxu0 0
        %6326 = vmatpush1.bf16.msra.mxu0 0
        %6327 = vmatprep.subr.bf16.mxu0 0
        %6328 = vmatpush1.bf16.msra.mxu0 0
        %6329 = vmatprep.subr.bf16.mxu0 0
        %6330 = vmatpush1.bf16.msra.mxu0 0
        %6331 = vmatprep.mubr.bf16.mxu0 0
        %6332 = vmatmul.mubr.bf16.gmra.mrb[0].mxu0 %v6252
        %v6333 = vpop.f32.mrb[0].mxu0
        %v6334 = vadd.f32 0.0, %v6333
        %v6335 = vpop.f32.mrb[0].mxu0
        %v6336 = vpop.f32.mrb[0].mxu0
        %v6337 = vadd.f32 0.0, %v6336
        %v6338 = vpop.f32.mrb[0].mxu0
        %6339 = vmatprep.mubr.bf16.mxu0 0
        %6340 = vmatmul.mubr.bf16.gmra.mrb[0].mxu0 %v6255
        %v6341 = vpop.f32.mrb[0].mxu0
        %v6342 = vadd.f32 0.0, %v6341
        %v6343 = vpop.f32.mrb[0].mxu0
        %v6344 = vpop.f32.mrb[0].mxu0
        %v6345 = vadd.f32 0.0, %v6344
        %v6346 = vpop.f32.mrb[0].mxu0
        %6347 = vmatprep.mubr.bf16.mxu0 0
        %6348 = vmatmul.mubr.bf16.gmra.mrb[0].mxu0 %v6258
        %v6349 = vpop.f32.mrb[0].mxu0
        %v6350 = vadd.f32 0.0, %v6349
        %v6351 = vpop.f32.mrb[0].mxu0
        %v6352 = vpop.f32.mrb[0].mxu0
        %v6353 = vadd.f32 0.0, %v6352
        %v6354 = vpop.f32.mrb[0].mxu0
        %6355 = vmatprep.mubr.bf16.mxu0 0
        %6356 = vmatmul.mubr.bf16.gmra.mrb[0].mxu0 %v6261
        %v6357 = vpop.f32.mrb[0].mxu0
        %v6358 = vadd.f32 0.0, %v6357
        %v6359 = vpop.f32.mrb[0].mxu0
        %v6360 = vpop.f32.mrb[0].mxu0
        %v6361 = vadd.f32 0.0, %v6360
        %v6362 = vpop.f32.mrb[0].mxu0
        %6363 = vmatprep.mubr.bf16.mxu0 0
        %6364 = vmatmul.mubr.bf16.gmra.mrb[0].mxu0 %v6264
        %v6365 = vpop.f32.mrb[0].mxu0
        %v6366 = vadd.f32 0.0, %v6365
        %v6367 = vpop.f32.mrb[0].mxu0
        %v6368 = vpop.f32.mrb[0].mxu0
        %v6369 = vadd.f32 0.0, %v6368
        %v6370 = vpop.f32.mrb[0].mxu0
        %6371 = vmatprep.mubr.bf16.mxu0 0
        %6372 = vmatmul.mubr.bf16.gmra.mrb[0].mxu0 %v6267
        %v6373 = vpop.f32.mrb[0].mxu0
        %v6374 = vadd.f32 0.0, %v6373
        %v6375 = vpop.f32.mrb[0].mxu0
        %v6376 = vpop.f32.mrb[0].mxu0
        %v6377 = vadd.f32 0.0, %v6376
        %v6378 = vpop.f32.mrb[0].mxu0
        %6379 = vmatprep.mubr.bf16.mxu0 0
        %6380 = vmatmul.mubr.bf16.gmra.mrb[0].mxu0 %v6270
        %v6381 = vpop.f32.mrb[0].mxu0
        %v6382 = vadd.f32 0.0, %v6381
        %v6383 = vpop.f32.mrb[0].mxu0
        %v6384 = vpop.f32.mrb[0].mxu0
        %v6385 = vadd.f32 0.0, %v6384
        %v6386 = vpop.f32.mrb[0].mxu0
        %6387 = vmatprep.mubr.bf16.mxu0 0
        %6388 = vmatmul.mubr.bf16.gmra.mrb[0].mxu0 %v6273
        %v6389 = vpop.f32.mrb[0].mxu0
        %v6390 = vadd.f32 0.0, %v6389
        %v6391 = vpop.f32.mrb[0].mxu0
        %v6392 = vpop.f32.mrb[0].mxu0
        %v6393 = vadd.f32 0.0, %v6392
        %v6394 = vpop.f32.mrb[0].mxu0
        %6395 = vmatprep.mubr.bf16.mxu0 0
        %6396 = vmatmul.mubr.bf16.gmra.mrb[0].mxu0 %v6276
        %v6397 = vpop.f32.mrb[0].mxu0
        %v6398 = vadd.f32 0.0, %v6397
        %v6399 = vpop.f32.mrb[0].mxu0
        %v6400 = vpop.f32.mrb[0].mxu0
        %v6401 = vadd.f32 0.0, %v6400
        %v6402 = vpop.f32.mrb[0].mxu0
        %6403 = vmatprep.mubr.bf16.mxu0 0
        %6404 = vmatmul.mubr.bf16.gmra.mrb[0].mxu0 %v6279
        %v6405 = vpop.f32.mrb[0].mxu0
        %v6406 = vadd.f32 0.0, %v6405
        %v6407 = vpop.f32.mrb[0].mxu0
        %v6408 = vpop.f32.mrb[0].mxu0
        %v6409 = vadd.f32 0.0, %v6408
        %v6410 = vpop.f32.mrb[0].mxu0
        %6411 = vmatprep.mubr.bf16.mxu0 0
        %6412 = vmatmul.mubr.bf16.gmra.mrb[0].mxu0 %v6282
        %v6413 = vpop.f32.mrb[0].mxu0
        %v6414 = vadd.f32 0.0, %v6413
        %v6415 = vpop.f32.mrb[0].mxu0
        %v6416 = vpop.f32.mrb[0].mxu0
        %v6417 = vadd.f32 0.0, %v6416
        %v6418 = vpop.f32.mrb[0].mxu0
        %6419 = vmatprep.mubr.bf16.mxu0 0
        %6420 = vmatmul.mubr.bf16.gmra.mrb[0].mxu0 %v6285
        %v6421 = vpop.f32.mrb[0].mxu0
        %v6422 = vadd.f32 0.0, %v6421
        %v6423 = vpop.f32.mrb[0].mxu0
        %v6424 = vpop.f32.mrb[0].mxu0
        %v6425 = vadd.f32 0.0, %v6424
        %v6426 = vpop.f32.mrb[0].mxu0
        %6427 = vmatprep.mubr.bf16.mxu0 0
        %6428 = vmatmul.mubr.bf16.gmra.mrb[0].mxu0 %v6288
        %v6429 = vpop.f32.mrb[0].mxu0
        %v6430 = vadd.f32 0.0, %v6429
        %v6431 = vpop.f32.mrb[0].mxu0
        %v6432 = vpop.f32.mrb[0].mxu0
        %v6433 = vadd.f32 0.0, %v6432
        %v6434 = vpop.f32.mrb[0].mxu0
        %6435 = vmatprep.mubr.bf16.mxu0 0
        %6436 = vmatmul.mubr.bf16.gmra.mrb[0].mxu0 %v6291
        %v6437 = vpop.f32.mrb[0].mxu0
        %v6438 = vadd.f32 0.0, %v6437
        %v6439 = vpop.f32.mrb[0].mxu0
        %v6440 = vpop.f32.mrb[0].mxu0
        %v6441 = vadd.f32 0.0, %v6440
        %v6442 = vpop.f32.mrb[0].mxu0
        %6443 = vmatprep.mubr.bf16.mxu0 0
        %6444 = vmatmul.mubr.bf16.gmra.mrb[0].mxu0 %v6294
        %v6445 = vpop.f32.mrb[0].mxu0
        %v6446 = vadd.f32 0.0, %v6445
        %v6447 = vpop.f32.mrb[0].mxu0
        %v6448 = vpop.f32.mrb[0].mxu0
        %v6449 = vadd.f32 0.0, %v6448
        %v6450 = vpop.f32.mrb[0].mxu0
        %6451 = vmatprep.mubr.bf16.mxu0 0
        %6452 = vmatmul.mubr.bf16.gmra.mrb[0].mxu0 %v6297
        %v6453 = vpop.f32.mrb[0].mxu0
        %v6454 = vadd.f32 0.0, %v6453
        %v6455 = vpop.f32.mrb[0].mxu0
        %v6456 = vpop.f32.mrb[0].mxu0
        %v6457 = vadd.f32 0.0, %v6456
        %v6458 = vpop.f32.mrb[0].mxu0
        %6459 = vdwg.mxu0
        %v6460 = vadd.f32 %v5978, %v6334
        %v6461 = vadd.f32 %v5979, %v6337
        %v6462 = vadd.f32 %v5980, %v6342
        %v6463 = vadd.f32 %v5981, %v6345
        %v6464 = vadd.f32 %v5982, %v6350
        %v6465 = vadd.f32 %v5983, %v6353
        %v6466 = vadd.f32 %v5984, %v6358
        %v6467 = vadd.f32 %v5985, %v6361
        %v6468 = vadd.f32 %v5986, %v6366
        %v6469 = vadd.f32 %v5987, %v6369
        %v6470 = vadd.f32 %v5988, %v6374
        %v6471 = vadd.f32 %v5989, %v6377
        %v6472 = vadd.f32 %v5990, %v6382
        %v6473 = vadd.f32 %v5991, %v6385
        %v6474 = vadd.f32 %v5992, %v6390
        %v6475 = vadd.f32 %v5993, %v6393
        %v6476 = vadd.f32 %v5994, %v6398
        %v6477 = vadd.f32 %v5995, %v6401
        %v6478 = vadd.f32 %v5996, %v6406
        %v6479 = vadd.f32 %v5997, %v6409
        %v6480 = vadd.f32 %v5998, %v6414
        %v6481 = vadd.f32 %v5999, %v6417
        %v6482 = vadd.f32 %v6000, %v6422
        %v6483 = vadd.f32 %v6001, %v6425
        %v6484 = vadd.f32 %v6002, %v6430
        %v6485 = vadd.f32 %v6003, %v6433
        %v6486 = vadd.f32 %v6004, %v6438
        %v6487 = vadd.f32 %v6005, %v6441
        %v6488 = vadd.f32 %v6006, %v6446
        %v6489 = vadd.f32 %v6007, %v6449
        %v6490 = vadd.f32 %v6008, %v6454
        %v6491 = vadd.f32 %v6009, %v6457
        %v6492 = vld [vmem:[%s6] sm:$0x1]
        %v6494 = vlaneseq
        %v6495 = vshrl.u32 %v6494, 7
        %v6496 = vsub.s32 0, %v6495
        %v6497 = vrot.slane %v6492, %v6496
        %v6499 = vmul.f32 %v6460, %v6497
        %v6500 = vmul.f32 %v6461, %v6497
        %v6501 = vmul.f32 %v6462, %v6497
        %v6502 = vmul.f32 %v6463, %v6497
        %v6503 = vmul.f32 %v6464, %v6497
        %v6504 = vmul.f32 %v6465, %v6497
        %v6505 = vmul.f32 %v6466, %v6497
        %v6506 = vmul.f32 %v6467, %v6497
        %v6507 = vmul.f32 %v6468, %v6497
        %v6508 = vmul.f32 %v6469, %v6497
        %v6509 = vmul.f32 %v6470, %v6497
        %v6510 = vmul.f32 %v6471, %v6497
        %v6511 = vmul.f32 %v6472, %v6497
        %v6512 = vmul.f32 %v6473, %v6497
        %v6513 = vmul.f32 %v6474, %v6497
        %v6514 = vmul.f32 %v6475, %v6497
        %v6515 = vmul.f32 %v6476, %v6497
        %v6516 = vmul.f32 %v6477, %v6497
        %v6517 = vmul.f32 %v6478, %v6497
        %v6518 = vmul.f32 %v6479, %v6497
        %v6519 = vmul.f32 %v6480, %v6497
        %v6520 = vmul.f32 %v6481, %v6497
        %v6521 = vmul.f32 %v6482, %v6497
        %v6522 = vmul.f32 %v6483, %v6497
        %v6523 = vmul.f32 %v6484, %v6497
        %v6524 = vmul.f32 %v6485, %v6497
        %v6525 = vmul.f32 %v6486, %v6497
        %v6526 = vmul.f32 %v6487, %v6497
        %v6527 = vmul.f32 %v6488, %v6497
        %v6528 = vmul.f32 %v6489, %v6497
        %v6529 = vmul.f32 %v6490, %v6497
        %v6530 = vmul.f32 %v6491, %v6497
        %v6531 = vld [vmem:[%s7] sm:$0x1]
        %v6533 = vlaneseq
        %v6534 = vshrl.u32 %v6533, 7
        %v6535 = vsub.s32 0, %v6534
        %v6536 = vrot.slane %v6531, %v6535
        %v6538 = vadd.f32 %v6499, %v6536
        %v6539 = vadd.f32 %v6500, %v6536
        %v6540 = vadd.f32 %v6501, %v6536
        %v6541 = vadd.f32 %v6502, %v6536
        %v6542 = vadd.f32 %v6503, %v6536
        %v6543 = vadd.f32 %v6504, %v6536
        %v6544 = vadd.f32 %v6505, %v6536
        %v6545 = vadd.f32 %v6506, %v6536
        %v6546 = vadd.f32 %v6507, %v6536
        %v6547 = vadd.f32 %v6508, %v6536
        %v6548 = vadd.f32 %v6509, %v6536
        %v6549 = vadd.f32 %v6510, %v6536
        %v6550 = vadd.f32 %v6511, %v6536
        %v6551 = vadd.f32 %v6512, %v6536
        %v6552 = vadd.f32 %v6513, %v6536
        %v6553 = vadd.f32 %v6514, %v6536
        %v6554 = vadd.f32 %v6515, %v6536
        %v6555 = vadd.f32 %v6516, %v6536
        %v6556 = vadd.f32 %v6517, %v6536
        %v6557 = vadd.f32 %v6518, %v6536
        %v6558 = vadd.f32 %v6519, %v6536
        %v6559 = vadd.f32 %v6520, %v6536
        %v6560 = vadd.f32 %v6521, %v6536
        %v6561 = vadd.f32 %v6522, %v6536
        %v6562 = vadd.f32 %v6523, %v6536
        %v6563 = vadd.f32 %v6524, %v6536
        %v6564 = vadd.f32 %v6525, %v6536
        %v6565 = vadd.f32 %v6526, %v6536
        %v6566 = vadd.f32 %v6527, %v6536
        %v6567 = vadd.f32 %v6528, %v6536
        %v6568 = vadd.f32 %v6529, %v6536
        %v6569 = vadd.f32 %v6530, %v6536
        %v6570 = vmax.f32 %v6538, 0.0
        %v6571 = vmax.f32 %v6539, 0.0
        %v6572 = vmax.f32 %v6540, 0.0
        %v6573 = vmax.f32 %v6541, 0.0
        %v6574 = vmax.f32 %v6542, 0.0
        %v6575 = vmax.f32 %v6543, 0.0
        %v6576 = vmax.f32 %v6544, 0.0
        %v6577 = vmax.f32 %v6545, 0.0
        %v6578 = vmax.f32 %v6546, 0.0
        %v6579 = vmax.f32 %v6547, 0.0
        %v6580 = vmax.f32 %v6548, 0.0
        %v6581 = vmax.f32 %v6549, 0.0
        %v6582 = vmax.f32 %v6550, 0.0
        %v6583 = vmax.f32 %v6551, 0.0
        %v6584 = vmax.f32 %v6552, 0.0
        %v6585 = vmax.f32 %v6553, 0.0
        %v6586 = vmax.f32 %v6554, 0.0
        %v6587 = vmax.f32 %v6555, 0.0
        %v6588 = vmax.f32 %v6556, 0.0
        %v6589 = vmax.f32 %v6557, 0.0
        %v6590 = vmax.f32 %v6558, 0.0
        %v6591 = vmax.f32 %v6559, 0.0
        %v6592 = vmax.f32 %v6560, 0.0
        %v6593 = vmax.f32 %v6561, 0.0
        %v6594 = vmax.f32 %v6562, 0.0
        %v6595 = vmax.f32 %v6563, 0.0
        %v6596 = vmax.f32 %v6564, 0.0
        %v6597 = vmax.f32 %v6565, 0.0
        %v6598 = vmax.f32 %v6566, 0.0
        %v6599 = vmax.f32 %v6567, 0.0
        %v6600 = vmax.f32 %v6568, 0.0
        %v6601 = vmax.f32 %v6569, 0.0
        %v6602 = vpack.c.bf16 %v6571, %v6570
        %v6603 = vpack.c.bf16 %v6573, %v6572
        %v6604 = vpack.c.bf16 %v6575, %v6574
        %v6605 = vpack.c.bf16 %v6577, %v6576
        %v6606 = vpack.c.bf16 %v6579, %v6578
        %v6607 = vpack.c.bf16 %v6581, %v6580
        %v6608 = vpack.c.bf16 %v6583, %v6582
        %v6609 = vpack.c.bf16 %v6585, %v6584
        %v6610 = vpack.c.bf16 %v6587, %v6586
        %v6611 = vpack.c.bf16 %v6589, %v6588
        %v6612 = vpack.c.bf16 %v6591, %v6590
        %v6613 = vpack.c.bf16 %v6593, %v6592
        %v6614 = vpack.c.bf16 %v6595, %v6594
        %v6615 = vpack.c.bf16 %v6597, %v6596
        %v6616 = vpack.c.bf16 %v6599, %v6598
        %v6617 = vpack.c.bf16 %v6601, %v6600
        %v6618 = vld [vmem:[%s8] sm:$0xf]
        %v6619 = vld [vmem:[%s8 + $0x4] sm:$0xf]
        %v6620 = vld [vmem:[%s8 + $0x8] sm:$0xf]
        %v6621 = vld [vmem:[%s8 + $0xc] sm:$0xf]
        %v6626 = vunpack.c.l.b16 %v6618
        %v6627 = vunpack.c.l.b16 %v6619
        %v6628 = vunpack.c.l.b16 %v6620
        %v6629 = vunpack.c.l.b16 %v6621
        %v6630 = vpack.c.b16 %v6627, %v6626
        %v6631 = vpack.c.b16 %v6629, %v6628
        %v6635 = vsel %vm2331, %v6602, 0
        %v6638 = vsel %vm2331, %v6603, 0
        %v6641 = vsel %vm2331, %v6604, 0
        %v6644 = vsel %vm2331, %v6605, 0
        %v6647 = vsel %vm2331, %v6606, 0
        %v6650 = vsel %vm2331, %v6607, 0
        %v6653 = vsel %vm2331, %v6608, 0
        %v6656 = vsel %vm2331, %v6609, 0
        %v6659 = vsel %vm2331, %v6610, 0
        %v6662 = vsel %vm2331, %v6611, 0
        %v6665 = vsel %vm2331, %v6612, 0
        %v6668 = vsel %vm2331, %v6613, 0
        %v6671 = vsel %vm2331, %v6614, 0
        %v6674 = vsel %vm2331, %v6615, 0
        %v6677 = vsel %vm2331, %v6616, 0
        %v6680 = vsel %vm2331, %v6617, 0
        %6682 = vmatprep.subr.bf16.mxu0 0
        %6683 = vmatpush1.bf16.msra.mxu0 %v6630
        %6684 = vmatprep.subr.bf16.mxu0 0
        %6685 = vmatpush1.bf16.msra.mxu0 %v6631
        %6686 = vmatprep.subr.bf16.mxu0 0
        %6687 = vmatpush1.bf16.msra.mxu0 0
        %6688 = vmatprep.subr.bf16.mxu0 0
        %6689 = vmatpush1.bf16.msra.mxu0 0
        %6690 = vmatprep.subr.bf16.mxu0 0
        %6691 = vmatpush1.bf16.msra.mxu0 0
        %6692 = vmatprep.subr.bf16.mxu0 0
        %6693 = vmatpush1.bf16.msra.mxu0 0
        %6694 = vmatprep.subr.bf16.mxu0 0
        %6695 = vmatpush1.bf16.msra.mxu0 0
        %6696 = vmatprep.subr.bf16.mxu0 0
        %6697 = vmatpush1.bf16.msra.mxu0 0
        %6698 = vmatprep.subr.bf16.mxu0 0
        %6699 = vmatpush1.bf16.msra.mxu0 0
        %6700 = vmatprep.subr.bf16.mxu0 0
        %6701 = vmatpush1.bf16.msra.mxu0 0
        %6702 = vmatprep.subr.bf16.mxu0 0
        %6703 = vmatpush1.bf16.msra.mxu0 0
        %6704 = vmatprep.subr.bf16.mxu0 0
        %6705 = vmatpush1.bf16.msra.mxu0 0
        %6706 = vmatprep.subr.bf16.mxu0 0
        %6707 = vmatpush1.bf16.msra.mxu0 0
        %6708 = vmatprep.subr.bf16.mxu0 0
        %6709 = vmatpush1.bf16.msra.mxu0 0
        %6710 = vmatprep.subr.bf16.mxu0 0
        %6711 = vmatpush1.bf16.msra.mxu0 0
        %6712 = vmatprep.subr.bf16.mxu0 0
        %6713 = vmatpush1.bf16.msra.mxu0 0
        %6714 = vmatprep.mubr.bf16.mxu0 0
        %6715 = vmatmul.mubr.bf16.gmra.mrb[0].mxu0 %v6635
        %v6716 = vpop.f32.mrb[0].mxu0
        %v6717 = vadd.f32 0.0, %v6716
        %v6718 = vpop.f32.mrb[0].mxu0
        %v6719 = vpop.f32.mrb[0].mxu0
        %v6720 = vadd.f32 0.0, %v6719
        %v6721 = vpop.f32.mrb[0].mxu0
        %6722 = vmatprep.mubr.bf16.mxu0 0
        %6723 = vmatmul.mubr.bf16.gmra.mrb[0].mxu0 %v6638
        %v6724 = vpop.f32.mrb[0].mxu0
        %v6725 = vadd.f32 0.0, %v6724
        %v6726 = vpop.f32.mrb[0].mxu0
        %v6727 = vpop.f32.mrb[0].mxu0
        %v6728 = vadd.f32 0.0, %v6727
        %v6729 = vpop.f32.mrb[0].mxu0
        %6730 = vmatprep.mubr.bf16.mxu0 0
        %6731 = vmatmul.mubr.bf16.gmra.mrb[0].mxu0 %v6641
        %v6732 = vpop.f32.mrb[0].mxu0
        %v6733 = vadd.f32 0.0, %v6732
        %v6734 = vpop.f32.mrb[0].mxu0
        %v6735 = vpop.f32.mrb[0].mxu0
        %v6736 = vadd.f32 0.0, %v6735
        %v6737 = vpop.f32.mrb[0].mxu0
        %6738 = vmatprep.mubr.bf16.mxu0 0
        %6739 = vmatmul.mubr.bf16.gmra.mrb[0].mxu0 %v6644
        %v6740 = vpop.f32.mrb[0].mxu0
        %v6741 = vadd.f32 0.0, %v6740
        %v6742 = vpop.f32.mrb[0].mxu0
        %v6743 = vpop.f32.mrb[0].mxu0
        %v6744 = vadd.f32 0.0, %v6743
        %v6745 = vpop.f32.mrb[0].mxu0
        %6746 = vmatprep.mubr.bf16.mxu0 0
        %6747 = vmatmul.mubr.bf16.gmra.mrb[0].mxu0 %v6647
        %v6748 = vpop.f32.mrb[0].mxu0
        %v6749 = vadd.f32 0.0, %v6748
        %v6750 = vpop.f32.mrb[0].mxu0
        %v6751 = vpop.f32.mrb[0].mxu0
        %v6752 = vadd.f32 0.0, %v6751
        %v6753 = vpop.f32.mrb[0].mxu0
        %6754 = vmatprep.mubr.bf16.mxu0 0
        %6755 = vmatmul.mubr.bf16.gmra.mrb[0].mxu0 %v6650
        %v6756 = vpop.f32.mrb[0].mxu0
        %v6757 = vadd.f32 0.0, %v6756
        %v6758 = vpop.f32.mrb[0].mxu0
        %v6759 = vpop.f32.mrb[0].mxu0
        %v6760 = vadd.f32 0.0, %v6759
        %v6761 = vpop.f32.mrb[0].mxu0
        %6762 = vmatprep.mubr.bf16.mxu0 0
        %6763 = vmatmul.mubr.bf16.gmra.mrb[0].mxu0 %v6653
        %v6764 = vpop.f32.mrb[0].mxu0
        %v6765 = vadd.f32 0.0, %v6764
        %v6766 = vpop.f32.mrb[0].mxu0
        %v6767 = vpop.f32.mrb[0].mxu0
        %v6768 = vadd.f32 0.0, %v6767
        %v6769 = vpop.f32.mrb[0].mxu0
        %6770 = vmatprep.mubr.bf16.mxu0 0
        %6771 = vmatmul.mubr.bf16.gmra.mrb[0].mxu0 %v6656
        %v6772 = vpop.f32.mrb[0].mxu0
        %v6773 = vadd.f32 0.0, %v6772
        %v6774 = vpop.f32.mrb[0].mxu0
        %v6775 = vpop.f32.mrb[0].mxu0
        %v6776 = vadd.f32 0.0, %v6775
        %v6777 = vpop.f32.mrb[0].mxu0
        %6778 = vmatprep.mubr.bf16.mxu0 0
        %6779 = vmatmul.mubr.bf16.gmra.mrb[0].mxu0 %v6659
        %v6780 = vpop.f32.mrb[0].mxu0
        %v6781 = vadd.f32 0.0, %v6780
        %v6782 = vpop.f32.mrb[0].mxu0
        %v6783 = vpop.f32.mrb[0].mxu0
        %v6784 = vadd.f32 0.0, %v6783
        %v6785 = vpop.f32.mrb[0].mxu0
        %6786 = vmatprep.mubr.bf16.mxu0 0
        %6787 = vmatmul.mubr.bf16.gmra.mrb[0].mxu0 %v6662
        %v6788 = vpop.f32.mrb[0].mxu0
        %v6789 = vadd.f32 0.0, %v6788
        %v6790 = vpop.f32.mrb[0].mxu0
        %v6791 = vpop.f32.mrb[0].mxu0
        %v6792 = vadd.f32 0.0, %v6791
        %v6793 = vpop.f32.mrb[0].mxu0
        %6794 = vmatprep.mubr.bf16.mxu0 0
        %6795 = vmatmul.mubr.bf16.gmra.mrb[0].mxu0 %v6665
        %v6796 = vpop.f32.mrb[0].mxu0
        %v6797 = vadd.f32 0.0, %v6796
        %v6798 = vpop.f32.mrb[0].mxu0
        %v6799 = vpop.f32.mrb[0].mxu0
        %v6800 = vadd.f32 0.0, %v6799
        %v6801 = vpop.f32.mrb[0].mxu0
        %6802 = vmatprep.mubr.bf16.mxu0 0
        %6803 = vmatmul.mubr.bf16.gmra.mrb[0].mxu0 %v6668
        %v6804 = vpop.f32.mrb[0].mxu0
        %v6805 = vadd.f32 0.0, %v6804
        %v6806 = vpop.f32.mrb[0].mxu0
        %v6807 = vpop.f32.mrb[0].mxu0
        %v6808 = vadd.f32 0.0, %v6807
        %v6809 = vpop.f32.mrb[0].mxu0
        %6810 = vmatprep.mubr.bf16.mxu0 0
        %6811 = vmatmul.mubr.bf16.gmra.mrb[0].mxu0 %v6671
        %v6812 = vpop.f32.mrb[0].mxu0
        %v6813 = vadd.f32 0.0, %v6812
        %v6814 = vpop.f32.mrb[0].mxu0
        %v6815 = vpop.f32.mrb[0].mxu0
        %v6816 = vadd.f32 0.0, %v6815
        %v6817 = vpop.f32.mrb[0].mxu0
        %6818 = vmatprep.mubr.bf16.mxu0 0
        %6819 = vmatmul.mubr.bf16.gmra.mrb[0].mxu0 %v6674
        %v6820 = vpop.f32.mrb[0].mxu0
        %v6821 = vadd.f32 0.0, %v6820
        %v6822 = vpop.f32.mrb[0].mxu0
        %v6823 = vpop.f32.mrb[0].mxu0
        %v6824 = vadd.f32 0.0, %v6823
        %v6825 = vpop.f32.mrb[0].mxu0
        %6826 = vmatprep.mubr.bf16.mxu0 0
        %6827 = vmatmul.mubr.bf16.gmra.mrb[0].mxu0 %v6677
        %v6828 = vpop.f32.mrb[0].mxu0
        %v6829 = vadd.f32 0.0, %v6828
        %v6830 = vpop.f32.mrb[0].mxu0
        %v6831 = vpop.f32.mrb[0].mxu0
        %v6832 = vadd.f32 0.0, %v6831
        %v6833 = vpop.f32.mrb[0].mxu0
        %6834 = vmatprep.mubr.bf16.mxu0 0
        %6835 = vmatmul.mubr.bf16.gmra.mrb[0].mxu0 %v6680
        %v6836 = vpop.f32.mrb[0].mxu0
        %v6837 = vadd.f32 0.0, %v6836
        %v6838 = vpop.f32.mrb[0].mxu0
        %v6839 = vpop.f32.mrb[0].mxu0
        %v6840 = vadd.f32 0.0, %v6839
        %v6841 = vpop.f32.mrb[0].mxu0
        %6842 = vdwg.mxu0
        %v6843 = vld [vmem:[%s9] sm:$0x1]
        %v6845 = vlaneseq
        %v6846 = vshrl.u32 %v6845, 7
        %v6847 = vsub.s32 0, %v6846
        %v6848 = vrot.slane %v6843, %v6847
        %v6850 = vmul.f32 %v6717, %v6848
        %v6851 = vmul.f32 %v6720, %v6848
        %v6852 = vmul.f32 %v6725, %v6848
        %v6853 = vmul.f32 %v6728, %v6848
        %v6854 = vmul.f32 %v6733, %v6848
        %v6855 = vmul.f32 %v6736, %v6848
        %v6856 = vmul.f32 %v6741, %v6848
        %v6857 = vmul.f32 %v6744, %v6848
        %v6858 = vmul.f32 %v6749, %v6848
        %v6859 = vmul.f32 %v6752, %v6848
        %v6860 = vmul.f32 %v6757, %v6848
        %v6861 = vmul.f32 %v6760, %v6848
        %v6862 = vmul.f32 %v6765, %v6848
        %v6863 = vmul.f32 %v6768, %v6848
        %v6864 = vmul.f32 %v6773, %v6848
        %v6865 = vmul.f32 %v6776, %v6848
        %v6866 = vmul.f32 %v6781, %v6848
        %v6867 = vmul.f32 %v6784, %v6848
        %v6868 = vmul.f32 %v6789, %v6848
        %v6869 = vmul.f32 %v6792, %v6848
        %v6870 = vmul.f32 %v6797, %v6848
        %v6871 = vmul.f32 %v6800, %v6848
        %v6872 = vmul.f32 %v6805, %v6848
        %v6873 = vmul.f32 %v6808, %v6848
        %v6874 = vmul.f32 %v6813, %v6848
        %v6875 = vmul.f32 %v6816, %v6848
        %v6876 = vmul.f32 %v6821, %v6848
        %v6877 = vmul.f32 %v6824, %v6848
        %v6878 = vmul.f32 %v6829, %v6848
        %v6879 = vmul.f32 %v6832, %v6848
        %v6880 = vmul.f32 %v6837, %v6848
        %v6881 = vmul.f32 %v6840, %v6848
        %v6882 = vld [vmem:[%s10] sm:$0x1]
        %v6884 = vlaneseq
        %v6885 = vshrl.u32 %v6884, 7
        %v6886 = vsub.s32 0, %v6885
        %v6887 = vrot.slane %v6882, %v6886
        %v6889 = vadd.f32 %v6850, %v6887
        %v6890 = vadd.f32 %v6851, %v6887
        %v6891 = vadd.f32 %v6852, %v6887
        %v6892 = vadd.f32 %v6853, %v6887
        %v6893 = vadd.f32 %v6854, %v6887
        %v6894 = vadd.f32 %v6855, %v6887
        %v6895 = vadd.f32 %v6856, %v6887
        %v6896 = vadd.f32 %v6857, %v6887
        %v6897 = vadd.f32 %v6858, %v6887
        %v6898 = vadd.f32 %v6859, %v6887
        %v6899 = vadd.f32 %v6860, %v6887
        %v6900 = vadd.f32 %v6861, %v6887
        %v6901 = vadd.f32 %v6862, %v6887
        %v6902 = vadd.f32 %v6863, %v6887
        %v6903 = vadd.f32 %v6864, %v6887
        %v6904 = vadd.f32 %v6865, %v6887
        %v6905 = vadd.f32 %v6866, %v6887
        %v6906 = vadd.f32 %v6867, %v6887
        %v6907 = vadd.f32 %v6868, %v6887
        %v6908 = vadd.f32 %v6869, %v6887
        %v6909 = vadd.f32 %v6870, %v6887
        %v6910 = vadd.f32 %v6871, %v6887
        %v6911 = vadd.f32 %v6872, %v6887
        %v6912 = vadd.f32 %v6873, %v6887
        %v6913 = vadd.f32 %v6874, %v6887
        %v6914 = vadd.f32 %v6875, %v6887
        %v6915 = vadd.f32 %v6876, %v6887
        %v6916 = vadd.f32 %v6877, %v6887
        %v6917 = vadd.f32 %v6878, %v6887
        %v6918 = vadd.f32 %v6879, %v6887
        %v6919 = vadd.f32 %v6880, %v6887
        %v6920 = vadd.f32 %v6881, %v6887
        %v6921 = vunpack.c.l.bf16 %v590
        %v6922 = vunpack.c.l.bf16 %v591
        %v6923 = vunpack.c.l.bf16 %v592
        %v6924 = vunpack.c.l.bf16 %v593
        %v6925 = vunpack.c.l.bf16 %v594
        %v6926 = vunpack.c.l.bf16 %v595
        %v6927 = vunpack.c.l.bf16 %v596
        %v6928 = vunpack.c.l.bf16 %v597
        %v6929 = vunpack.c.l.bf16 %v598
        %v6930 = vunpack.c.l.bf16 %v599
        %v6931 = vunpack.c.l.bf16 %v600
        %v6932 = vunpack.c.l.bf16 %v601
        %v6933 = vunpack.c.l.bf16 %v602
        %v6934 = vunpack.c.l.bf16 %v603
        %v6935 = vunpack.c.l.bf16 %v604
        %v6936 = vunpack.c.l.bf16 %v605
        %v6937 = vunpack.c.l.bf16 %v606
        %v6938 = vunpack.c.l.bf16 %v607
        %v6939 = vunpack.c.l.bf16 %v608
        %v6940 = vunpack.c.l.bf16 %v609
        %v6941 = vunpack.c.l.bf16 %v610
        %v6942 = vunpack.c.l.bf16 %v611
        %v6943 = vunpack.c.l.bf16 %v612
        %v6944 = vunpack.c.l.bf16 %v613
        %v6945 = vunpack.c.l.bf16 %v614
        %v6946 = vunpack.c.l.bf16 %v615
        %v6947 = vunpack.c.l.bf16 %v616
        %v6948 = vunpack.c.l.bf16 %v617
        %v6949 = vunpack.c.l.bf16 %v618
        %v6950 = vunpack.c.l.bf16 %v619
        %v6951 = vunpack.c.l.bf16 %v620
        %v6952 = vunpack.c.l.bf16 %v621
        %v6953 = vadd.f32 %v6889, %v6921
        %v6954 = vadd.f32 %v6890, %v6922
        %v6955 = vadd.f32 %v6891, %v6923
        %v6956 = vadd.f32 %v6892, %v6924
        %v6957 = vadd.f32 %v6893, %v6925
        %v6958 = vadd.f32 %v6894, %v6926
        %v6959 = vadd.f32 %v6895, %v6927
        %v6960 = vadd.f32 %v6896, %v6928
        %v6961 = vadd.f32 %v6897, %v6929
        %v6962 = vadd.f32 %v6898, %v6930
        %v6963 = vadd.f32 %v6899, %v6931
        %v6964 = vadd.f32 %v6900, %v6932
        %v6965 = vadd.f32 %v6901, %v6933
        %v6966 = vadd.f32 %v6902, %v6934
        %v6967 = vadd.f32 %v6903, %v6935
        %v6968 = vadd.f32 %v6904, %v6936
        %v6969 = vadd.f32 %v6905, %v6937
        %v6970 = vadd.f32 %v6906, %v6938
        %v6971 = vadd.f32 %v6907, %v6939
        %v6972 = vadd.f32 %v6908, %v6940
        %v6973 = vadd.f32 %v6909, %v6941
        %v6974 = vadd.f32 %v6910, %v6942
        %v6975 = vadd.f32 %v6911, %v6943
        %v6976 = vadd.f32 %v6912, %v6944
        %v6977 = vadd.f32 %v6913, %v6945
        %v6978 = vadd.f32 %v6914, %v6946
        %v6979 = vadd.f32 %v6915, %v6947
        %v6980 = vadd.f32 %v6916, %v6948
        %v6981 = vadd.f32 %v6917, %v6949
        %v6982 = vadd.f32 %v6918, %v6950
        %v6983 = vadd.f32 %v6919, %v6951
        %v6984 = vadd.f32 %v6920, %v6952
        %v6985 = vmax.f32 %v6953, 0.0
        %v6986 = vmax.f32 %v6954, 0.0
        %v6987 = vmax.f32 %v6955, 0.0
        %v6988 = vmax.f32 %v6956, 0.0
        %v6989 = vmax.f32 %v6957, 0.0
        %v6990 = vmax.f32 %v6958, 0.0
        %v6991 = vmax.f32 %v6959, 0.0
        %v6992 = vmax.f32 %v6960, 0.0
        %v6993 = vmax.f32 %v6961, 0.0
        %v6994 = vmax.f32 %v6962, 0.0
        %v6995 = vmax.f32 %v6963, 0.0
        %v6996 = vmax.f32 %v6964, 0.0
        %v6997 = vmax.f32 %v6965, 0.0
        %v6998 = vmax.f32 %v6966, 0.0
        %v6999 = vmax.f32 %v6967, 0.0
        %v7000 = vmax.f32 %v6968, 0.0
        %v7001 = vmax.f32 %v6969, 0.0
        %v7002 = vmax.f32 %v6970, 0.0
        %v7003 = vmax.f32 %v6971, 0.0
        %v7004 = vmax.f32 %v6972, 0.0
        %v7005 = vmax.f32 %v6973, 0.0
        %v7006 = vmax.f32 %v6974, 0.0
        %v7007 = vmax.f32 %v6975, 0.0
        %v7008 = vmax.f32 %v6976, 0.0
        %v7009 = vmax.f32 %v6977, 0.0
        %v7010 = vmax.f32 %v6978, 0.0
        %v7011 = vmax.f32 %v6979, 0.0
        %v7012 = vmax.f32 %v6980, 0.0
        %v7013 = vmax.f32 %v6981, 0.0
        %v7014 = vmax.f32 %v6982, 0.0
        %v7015 = vmax.f32 %v6983, 0.0
        %v7016 = vmax.f32 %v6984, 0.0
        %v7017 = vpack.c.bf16 %v6986, %v6985
        %v7018 = vpack.c.bf16 %v6988, %v6987
        %v7019 = vpack.c.bf16 %v6990, %v6989
        %v7020 = vpack.c.bf16 %v6992, %v6991
        %v7021 = vpack.c.bf16 %v6994, %v6993
        %v7022 = vpack.c.bf16 %v6996, %v6995
        %v7023 = vpack.c.bf16 %v6998, %v6997
        %v7024 = vpack.c.bf16 %v7000, %v6999
        %v7025 = vpack.c.bf16 %v7002, %v7001
        %v7026 = vpack.c.bf16 %v7004, %v7003
        %v7027 = vpack.c.bf16 %v7006, %v7005
        %v7028 = vpack.c.bf16 %v7008, %v7007
        %v7029 = vpack.c.bf16 %v7010, %v7009
        %v7030 = vpack.c.bf16 %v7012, %v7011
        %v7031 = vpack.c.bf16 %v7014, %v7013
        %v7032 = vpack.c.bf16 %v7016, %v7015
        %v7049 = vunpack.c.l.b16 %v7017
        %v7050 = vunpack.c.h.b16 %v7017
        %v7051 = vunpack.c.l.b16 %v7018
        %v7052 = vunpack.c.h.b16 %v7018
        %v7053 = vunpack.c.l.b16 %v7019
        %v7054 = vunpack.c.h.b16 %v7019
        %v7055 = vunpack.c.l.b16 %v7020
        %v7056 = vunpack.c.h.b16 %v7020
        %v7057 = vunpack.c.l.b16 %v7021
        %v7058 = vunpack.c.h.b16 %v7021
        %v7059 = vunpack.c.l.b16 %v7022
        %v7060 = vunpack.c.h.b16 %v7022
        %v7061 = vunpack.c.l.b16 %v7023
        %v7062 = vunpack.c.h.b16 %v7023
        %v7063 = vunpack.c.l.b16 %v7024
        %v7064 = vunpack.c.h.b16 %v7024
        %v7065 = vunpack.c.l.b16 %v7025
        %v7066 = vunpack.c.h.b16 %v7025
        %v7067 = vunpack.c.l.b16 %v7026
        %v7068 = vunpack.c.h.b16 %v7026
        %v7069 = vunpack.c.l.b16 %v7027
        %v7070 = vunpack.c.h.b16 %v7027
        %v7071 = vunpack.c.l.b16 %v7028
        %v7072 = vunpack.c.h.b16 %v7028
        %v7073 = vunpack.c.l.b16 %v7029
        %v7074 = vunpack.c.h.b16 %v7029
        %v7075 = vunpack.c.l.b16 %v7030
        %v7076 = vunpack.c.h.b16 %v7030
        %v7077 = vunpack.c.l.b16 %v7031
        %v7078 = vunpack.c.h.b16 %v7031
        %v7079 = vunpack.c.l.b16 %v7032
        %v7080 = vunpack.c.h.b16 %v7032
        %v7081 = vpack.c.b16 %v7049, %v7049
        %v7082 = vpack.c.b16 %v7050, %v7050
        %v7083 = vpack.c.b16 %v7051, %v7051
        %v7084 = vpack.c.b16 %v7052, %v7052
        %v7085 = vpack.c.b16 %v7053, %v7053
        %v7086 = vpack.c.b16 %v7054, %v7054
        %v7087 = vpack.c.b16 %v7055, %v7055
        %v7088 = vpack.c.b16 %v7056, %v7056
        %v7089 = vpack.c.b16 %v7057, %v7057
        %v7090 = vpack.c.b16 %v7058, %v7058
        %v7091 = vpack.c.b16 %v7059, %v7059
        %v7092 = vpack.c.b16 %v7060, %v7060
        %v7093 = vpack.c.b16 %v7061, %v7061
        %v7094 = vpack.c.b16 %v7062, %v7062
        %v7095 = vpack.c.b16 %v7063, %v7063
        %v7096 = vpack.c.b16 %v7064, %v7064
        %v7097 = vpack.c.b16 %v7065, %v7065
        %v7098 = vpack.c.b16 %v7066, %v7066
        %v7099 = vpack.c.b16 %v7067, %v7067
        %v7100 = vpack.c.b16 %v7068, %v7068
        %v7101 = vpack.c.b16 %v7069, %v7069
        %v7102 = vpack.c.b16 %v7070, %v7070
        %v7103 = vpack.c.b16 %v7071, %v7071
        %v7104 = vpack.c.b16 %v7072, %v7072
        %v7105 = vpack.c.b16 %v7073, %v7073
        %v7106 = vpack.c.b16 %v7074, %v7074
        %v7107 = vpack.c.b16 %v7075, %v7075
        %v7108 = vpack.c.b16 %v7076, %v7076
        %v7109 = vpack.c.b16 %v7077, %v7077
        %v7110 = vpack.c.b16 %v7078, %v7078
        %v7111 = vpack.c.b16 %v7079, %v7079
        %v7112 = vpack.c.b16 %v7080, %v7080
        %7145 = vst [vmem:[%s463] sm:$0xf] %v7081
        %7146 = vst [vmem:[%s463 + $0x4] sm:$0xf] %v7082
        %7147 = vst [vmem:[%s463 + $0x8] sm:$0xf] %v7083
        %7148 = vst [vmem:[%s463 + $0xc] sm:$0xf] %v7084
        %7149 = vst [vmem:[%s463 + $0x10] sm:$0xf] %v7085
        %7150 = vst [vmem:[%s463 + $0x14] sm:$0xf] %v7086
        %7151 = vst [vmem:[%s463 + $0x18] sm:$0xf] %v7087
        %7152 = vst [vmem:[%s463 + $0x1c] sm:$0xf] %v7088
        %7153 = vst [vmem:[%s463 + $0x20] sm:$0xf] %v7089
        %7154 = vst [vmem:[%s463 + $0x24] sm:$0xf] %v7090
        %7155 = vst [vmem:[%s463 + $0x28] sm:$0xf] %v7091
        %7156 = vst [vmem:[%s463 + $0x2c] sm:$0xf] %v7092
        %7157 = vst [vmem:[%s463 + $0x30] sm:$0xf] %v7093
        %7158 = vst [vmem:[%s463 + $0x34] sm:$0xf] %v7094
        %7159 = vst [vmem:[%s463 + $0x38] sm:$0xf] %v7095
        %7160 = vst [vmem:[%s463 + $0x3c] sm:$0xf] %v7096
        %7161 = vst [vmem:[%s463 + $0x40] sm:$0xf] %v7097
        %7162 = vst [vmem:[%s463 + $0x44] sm:$0xf] %v7098
        %7163 = vst [vmem:[%s463 + $0x48] sm:$0xf] %v7099
        %7164 = vst [vmem:[%s463 + $0x4c] sm:$0xf] %v7100
        %7165 = vst [vmem:[%s463 + $0x50] sm:$0xf] %v7101
        %7166 = vst [vmem:[%s463 + $0x54] sm:$0xf] %v7102
        %7167 = vst [vmem:[%s463 + $0x58] sm:$0xf] %v7103
        %7168 = vst [vmem:[%s463 + $0x5c] sm:$0xf] %v7104
        %7169 = vst [vmem:[%s463 + $0x60] sm:$0xf] %v7105
        %7170 = vst [vmem:[%s463 + $0x64] sm:$0xf] %v7106
        %7171 = vst [vmem:[%s463 + $0x68] sm:$0xf] %v7107
        %7172 = vst [vmem:[%s463 + $0x6c] sm:$0xf] %v7108
        %7173 = vst [vmem:[%s463 + $0x70] sm:$0xf] %v7109
        %7174 = vst [vmem:[%s463 + $0x74] sm:$0xf] %v7110
        %7175 = vst [vmem:[%s463 + $0x78] sm:$0xf] %v7111
        %7176 = vst [vmem:[%s463 + $0x7c] sm:$0xf] %v7112
        %s7177 = sand.u32 %s296, 1
        %s7178 = scalar_lea.sflag [#allocation5], %s7177
        %s7179 = sand.u32 %s296, 1
        %s7180 = smul.addr %s7179, 128
        %s7181 = scalar_lea.vmem [#allocation8], %s7180
        // Predicated region
        $region73: #{tpu_custom_call.1} parent=63 // pred_check
          %p7182 = pneg %p306
        $region74: #{tpu_custom_call.1} parent=63 // pred_check_branch
          %7184 = sbr.rel (%p7182) target = $region76
        $region75: #{tpu_custom_call.1} parent=63 // pred_region
          %s7185 = smul.u32 16, %s34
          %s7187 = ssub.s32 2048, 2048
          %7188 = vsyncadd %s7178, %s7187
          %s7189 = smul.addr %s7185, 2
          %s7190 = smul.addr %s33, 32
          %s7191 = sadd.s32 %s7189, %s7190
          %s7192 = smul.addr %s7191, 64
          %s7193 = scalar_lea.hbm %s11, %s7192
          %s7194 = sshll.u32 %s7181, 4
          %s7195 = int_to_ptr.vmem [resolvable:$true] %s7194
          %7200 = dma.vmem_to_hbm [thread:$0]  %s7195, 2048, %s7193, %s7178, 64, 64, 4
        $region76: #{tpu_custom_call.1} parent=63 // pred_fallthru
          _
      $region64: #{tpu_custom_call.1} parent=5 // pred_fallthru
        _
      %p7201 = scmp.le.s32.totalorder 2, %s24
      // Predicated region
      $region77: #{tpu_custom_call.1} parent=5 // pred_check
        %p7202 = pneg %p7201
      $region78: #{tpu_custom_call.1} parent=5 // pred_check_branch
        %7204 = sbr.rel (%p7202) target = $region80
      $region79: #{tpu_custom_call.1} parent=5 // pred_region
        %s7205 = ssub.s32 %s24, 2
        // Predicated region
        $region81: #{tpu_custom_call.1} parent=79 // pred_check
          %p7206 = pneg %p312
        $region82: #{tpu_custom_call.1} parent=79 // pred_check_branch
          %7208 = sbr.rel (%p7206) target = $region84
        $region83: #{tpu_custom_call.1} parent=79 // pred_region
          %s7209 = sand.u32 %s297, 1
          %s7210 = scalar_lea.sflag [#allocation5], %s7209
          %s7211 = sand.u32 %s297, 1
          %s7212 = smul.addr %s7211, 128
          %s7213 = scalar_lea.vmem [#allocation8], %s7212
          %7214 = dma.done %s7210, 2048
        $region84: #{tpu_custom_call.1} parent=79 // pred_fallthru
          _
      $region80: #{tpu_custom_call.1} parent=5 // pred_fallthru
        _
    $region6: #{tpu_custom_call.1} parent=1 // loop_footer
      %s28 = sadd.s32 1, %s24
    $region7: #{tpu_custom_call.1} parent=1 // loop_footer_branch
      %23 = sbr.rel target = $region3
    $region8: #{tpu_custom_call.1} parent=1 // loop_exit
      _
    %7215 = vsyncpa [#allocation4], 1
    %s7216 = scalar_lea.sflag [#allocation4], 1
    %7217 = vsyncpa %s7216, 1
    %7218 = vsyncpa [#allocation7], 1
    %7219 = vsyncpa [#allocation5], 1
    %s7220 = scalar_lea.sflag [#allocation5], 1
    %7221 = vsyncpa %s7220, 1

</llo_original>
